<compile_context>
chip_gen: v7x
topology: tpu7x:2x2x1
jax: 0.10.0
libtpu: 0.0.40
codegen_flags: <defaults>
</compile_context>

<pallas_src>
import functools

import jax
import jax.numpy as jnp
import numpy as np
from jax.experimental import pallas as pl
from jax.experimental.pallas import tpu as pltpu

EPS = 1e-5  # LayerNorm variance epsilon (matches the PyTorch LayerNorm)


# ----------------------------- Pallas kernel ------------------------------- #

def _mlp(x_bf16, w_ref, b_ref, g_ref, be_ref):
    """Linear (bf16 MXU operands, f32 accum) + LayerNorm(last dim, f32) + ReLU."""
    y = jnp.dot(x_bf16, w_ref[...], preferred_element_type=jnp.float32) + b_ref[...]
    u = jnp.mean(y, axis=-1, keepdims=True)
    s = jnp.mean((y - u) ** 2, axis=-1, keepdims=True)
    y = (y - u) * jax.lax.rsqrt(s + EPS)          # rsqrt -> EUP slot, mul -> VPU
    y = g_ref[...] * y + be_ref[...]
    return jnp.maximum(y, 0.0)


def point_level_subgraph_kernel(
        x_ref,                                              # (TB, T, V)  bf16, batch-major
        w0_ref, b0_ref, g0_ref, be0_ref,                    # layer_0         (W bf16)
        w0a_ref, b0a_ref, g0a_ref, be0a_ref,                # layer_0_again   (W bf16)
        wih0_ref, bih0_ref, whh0_ref, bhh0_ref,             # GRU layer 0     (W bf16)
        w1rz_ref, b1rz_ref,                                 # fused layer-1 r/z: (2H,2H) bf16
        wih1n_ref, bih1n_ref, whh1n_ref, bhh1n_ref,         # layer-1 n slabs: (H,H) bf16
        out_ref,                                            # (TB, H)  f32
        gi0_ref,                                            # scratch  (T, TB, 3H) bf16
        *, gates_bf16: bool):
    TB, T, V = x_ref.shape
    H = out_ref.shape[-1]
    f32, bf16 = jnp.float32, jnp.bfloat16
    gdt = bf16 if gates_bf16 else f32             # gate pre-activation dtype for the EUP

    def sig(x):
        # sigmoid(x) = 0.5*(tanh(0.5x)+1): guaranteed single EUP push per gate.
        return 0.5 * (jnp.tanh(0.5 * x) + 1.0)

    # ---- layer_0 : MLP(vector_size -> hidden), all TB*T points in one big-M matmul ----
    # (batch-major row order b*T + t; per-point MLPs are order-independent)
    x2d = x_ref[...].reshape(TB * T, V)                               # already bf16
    h = _mlp(x2d, w0_ref, b0_ref, g0_ref, be0_ref)                    # (TB*T, H) f32

    # ---- layer_0_again ('point_level-4-3'): residual MLP(hidden -> hidden) ----
    h = h + _mlp(h.astype(bf16), w0a_ref, b0a_ref, g0a_ref, be0a_ref)

    # ---- hoisted GRU layer-0 input projection: one large-M matmul ----
    gi0 = jnp.dot(h.astype(bf16), wih0_ref[...],
                  preferred_element_type=f32) + bih0_ref[...]         # (TB*T, 3H) f32
    gi0 = gi0.reshape(TB, T, 3 * H).astype(bf16)
    # Re-order to TIME-major in the scratch so gi0_ref[t] is a contiguous load in the
    # recurrence.  T static sublane-selects + stores; overlaps the MXU of the matmul above.
    for t in range(T):
        gi0_ref[t] = gi0[:, t, :]

    # ---- 2-layer GRU, zero initial state; PyTorch gate order [r, z, n] ----
    def step(t, carry):
        h0, h1 = carry                                                # f32 (TB, H) each

        # -------- layer 0: gi hoisted (bf16 scratch), gh per step --------
        gi = gi0_ref[t]                                               # (TB, 3H) bf16
        gh = jnp.dot(h0.astype(bf16), whh0_ref[...],
                     preferred_element_type=f32) + bhh0_ref[...]
        r0 = sig((gi[:, :H] + gh[:, :H]).astype(gdt)).astype(f32)
        z0 = sig((gi[:, H:2 * H] + gh[:, H:2 * H]).astype(gdt)).astype(f32)
        n0 = jnp.tanh((gi[:, 2 * H:] + r0 * gh[:, 2 * H:]).astype(gdt)).astype(f32)
        h0 = (1.0 - z0) * n0 + z0 * h0

        # -------- layer 1: fused K=2H r/z projection + two K=H n-slab dots --------
        hcat = jnp.concatenate([h0, h1], axis=-1).astype(bf16)        # (TB, 2H)
        rz = jnp.dot(hcat, w1rz_ref[...],
                     preferred_element_type=f32) + b1rz_ref[...]      # (TB, 2H)
        gin = jnp.dot(h0.astype(bf16), wih1n_ref[...],
                      preferred_element_type=f32) + bih1n_ref[...]    # (TB, H)
        ghn = jnp.dot(h1.astype(bf16), whh1n_ref[...],
                      preferred_element_type=f32) + bhh1n_ref[...]    # (TB, H)
        r1 = sig(rz[:, :H].astype(gdt)).astype(f32)
        z1 = sig(rz[:, H:].astype(gdt)).astype(f32)
        n1 = jnp.tanh((gin + r1 * ghn).astype(gdt)).astype(f32)
        h1 = (1.0 - z1) * n1 + z1 * h1
        return (h0, h1)

    h0 = jnp.zeros((TB, H), f32)
    h1 = jnp.zeros((TB, H), f32)
    # Unrolled recurrence: lets the LLO scheduler overlap gate math / gi0 loads with the
    # MXU drain of neighbouring steps.  On v5e with very large TB, drop the unroll / strip-mine
    # the gate math if vst/spill slots bind.
    h0, h1 = jax.lax.fori_loop(0, T, step, (h0, h1), unroll=True)

    # forward() returns (hn[-1], None): final hidden of the last GRU layer.
    out_ref[...] = h1.astype(out_ref.dtype)


# ------------------------------- Wrapper ------------------------------------ #

def _tpu_generation():
    try:
        kind = jax.devices()[0].device_kind.lower()
    except Exception:
        return 0
    for g in (7, 6, 5, 4, 3, 2):
        if f"v{g}" in kind:
            return g
    return 0


def _pick_batch_tile(B, gen):
    """Default batch tile: 256 on v6e/v7x, 128 on v5e/unknown, clamped to a divisor of B."""
    pref = 256 if gen >= 6 else 128
    if B <= pref:
        return B
    for tb in range(pref, 7, -1):
        if B % tb == 0 and tb % 8 == 0:
            return tb
    return B   # fallback: single tile


def point_level_subgraph(x_btv, lengths, params, *, batch_tile=None, gates_bf16=None,
                         vmem_limit_bytes=None, single_buffer_weights=True):
    """Returns hn[-1] of shape (B, H), matching PointLevelSubGraph.forward()[0].

    batch_tile: rows of the batch processed per grid step.  Defaults to 256 (v6e/v7x) or
    128 (v5e) clamped to B; for real workloads keep grid = B // batch_tile >= 4 so the
    BlockSpec pipeline overlaps x DMA / output writeback, and on v7x keep it even (>= 8)
    so dimension_semantics=("parallel",) load-balances both TensorCores.
    """
    del lengths  # unused by the PyTorch forward as well
    B, T, V = x_btv.shape
    H = params["w0"].shape[1]

    gen = _tpu_generation()
    if gates_bf16 is None:
        gates_bf16 = gen >= 6                 # bf16 EUP/VPU only on v6e/v7x
    TB = _pick_batch_tile(B, gen) if batch_tile is None else batch_tile
    assert B % TB == 0, "batch must be divisible by batch_tile"
    assert TB % 8 == 0 or TB == B, "batch_tile must be a multiple of 8 (or the full batch)"

    bf16, f32 = jnp.bfloat16, jnp.float32
    x_in = x_btv.astype(bf16)                 # halve x HBM DMA; it is a bf16 MXU operand anyway

    # ---- pack GRU layer-1 weights: fused r/z (K=2H) + separate n slabs (K=H) ----
    H2 = 2 * H
    wih1, whh1 = params["wih1"], params["whh1"]
    bih1, bhh1 = params["bih1"].astype(f32), params["bhh1"].astype(f32)
    w1_rz = jnp.concatenate([wih1[:, :H2], whh1[:, :H2]], axis=0).astype(bf16)   # (2H, 2H)
    b1_rz = bih1[:, :H2] + bhh1[:, :H2]                                          # (1, 2H)
    wih1_n = wih1[:, H2:].astype(bf16)        # (H, H)
    whh1_n = whh1[:, H2:].astype(bf16)        # (H, H)
    bih1_n = bih1[:, H2:]
    bhh1_n = bhh1[:, H2:]

    param_vals = [
        params["w0"].astype(bf16), params["b0"], params["g0"], params["be0"],
        params["w0a"].astype(bf16), params["b0a"], params["g0a"], params["be0a"],
        params["wih0"].astype(bf16), params["bih0"], params["whh0"].astype(bf16), params["bhh0"],
        w1_rz, b1_rz, wih1_n, bih1_n, whh1_n, bhh1_n,
    ]
    w_bytes = sum(int(np.prod(p.shape)) * p.dtype.itemsize for p in param_vals)

    # Weights/biases: constant index_map -> resident across the grid; single-buffered to
    # save VMEM (matters most on v7x's 64 MiB).
    def full_spec(p):
        if single_buffer_weights:
            return pl.BlockSpec(p.shape, lambda b: (0,) * p.ndim,
                                pipeline_mode=pl.Buffered(1))
        return pl.BlockSpec(p.shape, lambda b: (0,) * p.ndim)

    # ---- explicit VMEM budget: x/out double-buffered, weights single, bf16 gi0 scratch,
    #      plus headroom for the fused-MLP / gi0 intermediates the compiler keeps live ----
    if vmem_limit_bytes is None:
        blk_x = TB * T * V * 2
        blk_out = TB * H * 4
        scratch = T * TB * 3 * H * 2
        work = TB * T * (3 * H + 2 * H) * 4 * 2          # rough in-flight intermediate headroom
        est = 2 * blk_x + 2 * blk_out + \
            (1 if single_buffer_weights else 2) * w_bytes + scratch + work + (4 << 20)
        vmem_limit_bytes = max(32 << 20, int(est))

    # ---- advisory cost estimate so XLA schedules neighbours around this call ----
    flops = 2 * B * T * (V * H + 13 * H * H)             # 2 MLPs + gi0 + per-step GRU matmuls
    transcendentals = 6 * B * T * H                      # r/z/n x 2 layers, one EUP op each
    bytes_accessed = B * T * V * 2 + w_bytes + B * H * 4
    cost = pl.CostEstimate(flops=int(flops), transcendentals=int(transcendentals),
                           bytes_accessed=int(bytes_accessed))

    kernel = functools.partial(point_level_subgraph_kernel, gates_bf16=gates_bf16)

    return pl.pallas_call(
        kernel,
        out_shape=jax.ShapeDtypeStruct((B, H), jnp.float32),
        grid_spec=pltpu.PrefetchScalarGridSpec(
            num_scalar_prefetch=0,
            grid=(B // TB,),
            in_specs=[pl.BlockSpec((TB, T, V), lambda b: (b, 0, 0))]
                     + [full_spec(p) for p in param_vals],
            out_specs=pl.BlockSpec((TB, H), lambda b: (b, 0)),
            scratch_shapes=[pltpu.VMEM((T, TB, 3 * H), jnp.bfloat16)],
        ),
        compiler_params=pltpu.CompilerParams(
            dimension_semantics=("parallel",),            # batch tiles are independent
            vmem_limit_bytes=int(vmem_limit_bytes)),
        cost_estimate=cost,
    )(x_in, *param_vals)


# ----------------------- deterministic parameter init ----------------------- #

def init_params(key, V, H):
    ks = jax.random.split(key, 12)

    def nrm(k, shape, scale=0.1):
        return (scale * jax.random.normal(k, shape)).astype(jnp.float32)

    def nrm_bf16(k, shape, scale=0.1):
        return nrm(k, shape, scale).astype(jnp.bfloat16)   # matmul operands stored bf16

    p = {}
    # layer_0: MLP(vector_size -> hidden)
    p["w0"] = nrm_bf16(ks[0], (V, H)); p["b0"] = nrm(ks[1], (1, H))
    p["g0"] = jnp.ones((1, H), jnp.float32); p["be0"] = jnp.zeros((1, H), jnp.float32)
    # layer_0_again: MLP(hidden -> hidden)
    p["w0a"] = nrm_bf16(ks[2], (H, H)); p["b0a"] = nrm(ks[3], (1, H))
    p["g0a"] = jnp.ones((1, H), jnp.float32); p["be0a"] = jnp.zeros((1, H), jnp.float32)
    # GRU layer 0 (input H -> hidden H), gate order [r, z, n] along columns
    p["wih0"] = nrm_bf16(ks[4], (H, 3 * H)); p["whh0"] = nrm_bf16(ks[5], (H, 3 * H))
    p["bih0"] = nrm(ks[6], (1, 3 * H)); p["bhh0"] = nrm(ks[7], (1, 3 * H))
    # GRU layer 1
    p["wih1"] = nrm_bf16(ks[8], (H, 3 * H)); p["whh1"] = nrm_bf16(ks[9], (H, 3 * H))
    p["bih1"] = nrm(ks[10], (1, 3 * H)); p["bhh1"] = nrm(ks[11], (1, 3 * H))
    return p


# ----------------------------- pure-JAX reference --------------------------- #

def reference(x, p):
    """f32-activation reference using the same bf16-quantised weights (unpacked layout)."""
    H = p["w0"].shape[1]
    f32 = lambda a: a.astype(jnp.float32)

    def mlp(x, w, b, g, be):
        y = x @ f32(w) + b
        u = y.mean(-1, keepdims=True)
        s = ((y - u) ** 2).mean(-1, keepdims=True)
        y = (y - u) / jnp.sqrt(s + EPS)
        return jnp.maximum(g * y + be, 0.0)

    h = mlp(x, p["w0"], p["b0"], p["g0"], p["be0"])
    h = h + mlp(h, p["w0a"], p["b0a"], p["g0a"], p["be0a"])

    def cell(xt, hp, wih, whh, bih, bhh):
        gi = xt @ f32(wih) + bih
        gh = hp @ f32(whh) + bhh
        r = jax.nn.sigmoid(gi[:, :H] + gh[:, :H])
        z = jax.nn.sigmoid(gi[:, H:2 * H] + gh[:, H:2 * H])
        n = jnp.tanh(gi[:, 2 * H:] + r * gh[:, 2 * H:])
        return (1.0 - z) * n + z * hp

    def step(carry, xt):
        h0, h1 = carry
        h0 = cell(xt, h0, p["wih0"], p["whh0"], p["bih0"], p["bhh0"])
        h1 = cell(h0, h1, p["wih1"], p["whh1"], p["bih1"], p["bhh1"])
        return (h0, h1), None

    B = x.shape[0]
    h0 = jnp.zeros((B, H), jnp.float32)
    h1 = jnp.zeros((B, H), jnp.float32)
    (h0, h1), _ = jax.lax.scan(step, (h0, h1), jnp.transpose(h, (1, 0, 2)))
    return h1


# ---------------------------------- main ------------------------------------ #

if __name__ == "__main__":
    # Small demo shapes (DenseTNT defaults: vector_size=32, hidden_size=128).
    # batch_tile=32 gives a grid of 4 batch tiles so the BlockSpec pipeline is exercised;
    # real workloads should leave batch_tile=None (-> 128/256) with much larger B.
    B, T, V, H = 128, 8, 32, 128
    TB = 32

    key = jax.random.PRNGKey(0)
    kx, kp = jax.random.split(key)
    x = jax.random.normal(kx, (B, T, V), dtype=jnp.float32)
    lengths = jnp.full((B,), T, dtype=jnp.int32)   # unused by forward(); kept for parity
    params = init_params(kp, V, H)

    out = point_level_subgraph(x, lengths, params, batch_tile=TB)
    out = jax.block_until_ready(out)

    ref = reference(x, params)
    # Tolerance covers bf16 activations / bf16 gi0 scratch / (v6e+) bf16 gate pre-activations
    # vs. the f32-activation reference (weights are bf16-quantised identically in both).
    np.testing.assert_allclose(np.asarray(out), np.asarray(ref), rtol=3e-2, atol=3e-2)
    print("KERNEL_OK")
</pallas_src>

<mosaic_0001>
module attributes {stable_mosaic.version = 11 : i64} {
  func.func @point_level_subgraph_kernel(%arg0: i32, %arg1: memref<32x8x32xbf16, #tpu.memory_space<vmem>>, %arg2: memref<32x128xbf16, #tpu.memory_space<vmem>>, %arg3: memref<1x128xf32, #tpu.memory_space<vmem>>, %arg4: memref<1x128xf32, #tpu.memory_space<vmem>>, %arg5: memref<1x128xf32, #tpu.memory_space<vmem>>, %arg6: memref<128x128xbf16, #tpu.memory_space<vmem>>, %arg7: memref<1x128xf32, #tpu.memory_space<vmem>>, %arg8: memref<1x128xf32, #tpu.memory_space<vmem>>, %arg9: memref<1x128xf32, #tpu.memory_space<vmem>>, %arg10: memref<128x384xbf16, #tpu.memory_space<vmem>>, %arg11: memref<1x384xf32, #tpu.memory_space<vmem>>, %arg12: memref<128x384xbf16, #tpu.memory_space<vmem>>, %arg13: memref<1x384xf32, #tpu.memory_space<vmem>>, %arg14: memref<256x256xbf16, #tpu.memory_space<vmem>>, %arg15: memref<1x256xf32, #tpu.memory_space<vmem>>, %arg16: memref<128x128xbf16, #tpu.memory_space<vmem>>, %arg17: memref<1x128xf32, #tpu.memory_space<vmem>>, %arg18: memref<128x128xbf16, #tpu.memory_space<vmem>>, %arg19: memref<1x128xf32, #tpu.memory_space<vmem>>, %arg20: memref<32x128xf32, #tpu.memory_space<vmem>>, %arg21: memref<8x32x384xbf16, #tpu.memory_space<vmem>>) attributes {dimension_semantics = [#tpu.dimension_semantics<parallel>], iteration_bounds = array<i64: 4>, scalar_prefetch = 0 : i64, scratch_operands = 1 : i64, tpu.core_type = #tpu.core_type<tc>, window_params = [{transform_indices = @transform_0, window_bounds = array<i64: 32, 8, 32>}, {pipeline_mode = #tpu.pipeline_mode<synchronous>, transform_indices = @transform_1, window_bounds = array<i64: 32, 128>}, {pipeline_mode = #tpu.pipeline_mode<synchronous>, transform_indices = @transform_2, window_bounds = array<i64: 1, 128>}, {pipeline_mode = #tpu.pipeline_mode<synchronous>, transform_indices = @transform_3, window_bounds = array<i64: 1, 128>}, {pipeline_mode = #tpu.pipeline_mode<synchronous>, transform_indices = @transform_4, window_bounds = array<i64: 1, 128>}, {pipeline_mode = #tpu.pipeline_mode<synchronous>, transform_indices = @transform_5, window_bounds = array<i64: 128, 128>}, {pipeline_mode = #tpu.pipeline_mode<synchronous>, transform_indices = @transform_6, window_bounds = array<i64: 1, 128>}, {pipeline_mode = #tpu.pipeline_mode<synchronous>, transform_indices = @transform_7, window_bounds = array<i64: 1, 128>}, {pipeline_mode = #tpu.pipeline_mode<synchronous>, transform_indices = @transform_8, window_bounds = array<i64: 1, 128>}, {pipeline_mode = #tpu.pipeline_mode<synchronous>, transform_indices = @transform_9, window_bounds = array<i64: 128, 384>}, {pipeline_mode = #tpu.pipeline_mode<synchronous>, transform_indices = @transform_10, window_bounds = array<i64: 1, 384>}, {pipeline_mode = #tpu.pipeline_mode<synchronous>, transform_indices = @transform_11, window_bounds = array<i64: 128, 384>}, {pipeline_mode = #tpu.pipeline_mode<synchronous>, transform_indices = @transform_12, window_bounds = array<i64: 1, 384>}, {pipeline_mode = #tpu.pipeline_mode<synchronous>, transform_indices = @transform_13, window_bounds = array<i64: 256, 256>}, {pipeline_mode = #tpu.pipeline_mode<synchronous>, transform_indices = @transform_14, window_bounds = array<i64: 1, 256>}, {pipeline_mode = #tpu.pipeline_mode<synchronous>, transform_indices = @transform_15, window_bounds = array<i64: 128, 128>}, {pipeline_mode = #tpu.pipeline_mode<synchronous>, transform_indices = @transform_16, window_bounds = array<i64: 1, 128>}, {pipeline_mode = #tpu.pipeline_mode<synchronous>, transform_indices = @transform_17, window_bounds = array<i64: 128, 128>}, {pipeline_mode = #tpu.pipeline_mode<synchronous>, transform_indices = @transform_18, window_bounds = array<i64: 1, 128>}, {transform_indices = @transform_19, window_bounds = array<i64: 32, 128>}]} {
    %c0 = arith.constant 0 : index
    %c0_0 = arith.constant 0 : index
    %c0_1 = arith.constant 0 : index
    %0 = vector.load %arg1[%c0, %c0_0, %c0_1] : memref<32x8x32xbf16, #tpu.memory_space<vmem>>, vector<32x8x32xbf16>
    %1 = vector.shape_cast %0 : vector<32x8x32xbf16> to vector<256x32xbf16>
    %c0_2 = arith.constant 0 : index
    %c0_3 = arith.constant 0 : index
    %2 = vector.load %arg2[%c0_2, %c0_3] : memref<32x128xbf16, #tpu.memory_space<vmem>>, vector<32x128xbf16>
    %cst = arith.constant dense<0.000000e+00> : vector<256x128xf32>
    %3 = tpu.matmul %1, %2, %cst {dimension_numbers = #tpu.dot_dimension_numbers<[1], [0], [0], [1], [0, 0, 1, 1], [], []>} : vector<256x32xbf16>, vector<32x128xbf16>, vector<256x128xf32> -> vector<256x128xf32>
    %c0_4 = arith.constant 0 : index
    %c0_5 = arith.constant 0 : index
    %4 = vector.load %arg3[%c0_4, %c0_5] : memref<1x128xf32, #tpu.memory_space<vmem>>, vector<1x128xf32>
    %5 = vector.broadcast %4 : vector<1x128xf32> to vector<256x128xf32>
    %6 = arith.addf %3, %5 : vector<256x128xf32>
    %cst_6 = arith.constant dense<0.000000e+00> : vector<256xf32>
    %7 = vector.multi_reduction <add>, %6, %cst_6 [1] : vector<256x128xf32> to vector<256xf32>
    %8 = vector.shape_cast %7 : vector<256xf32> to vector<256x1xf32>
    %cst_7 = arith.constant 1.280000e+02 : f32
    %9 = vector.broadcast %cst_7 : f32 to vector<256x1xf32>
    %10 = arith.divf %8, %9 : vector<256x1xf32>
    %11 = vector.broadcast %10 : vector<256x1xf32> to vector<256x128xf32>
    %12 = arith.subf %6, %11 : vector<256x128xf32>
    %13 = arith.mulf %12, %12 : vector<256x128xf32>
    %cst_8 = arith.constant dense<0.000000e+00> : vector<256xf32>
    %14 = vector.multi_reduction <add>, %13, %cst_8 [1] : vector<256x128xf32> to vector<256xf32>
    %15 = vector.shape_cast %14 : vector<256xf32> to vector<256x1xf32>
    %cst_9 = arith.constant 1.280000e+02 : f32
    %16 = vector.broadcast %cst_9 : f32 to vector<256x1xf32>
    %17 = arith.divf %15, %16 : vector<256x1xf32>
    %18 = vector.broadcast %10 : vector<256x1xf32> to vector<256x128xf32>
    %19 = arith.subf %6, %18 : vector<256x128xf32>
    %cst_10 = arith.constant 9.99999974E-6 : f32
    %20 = vector.broadcast %cst_10 : f32 to vector<256x1xf32>
    %21 = arith.addf %17, %20 : vector<256x1xf32>
    %22 = math.rsqrt %21 : vector<256x1xf32>
    %23 = vector.broadcast %22 : vector<256x1xf32> to vector<256x128xf32>
    %24 = arith.mulf %19, %23 : vector<256x128xf32>
    %c0_11 = arith.constant 0 : index
    %c0_12 = arith.constant 0 : index
    %25 = vector.load %arg4[%c0_11, %c0_12] : memref<1x128xf32, #tpu.memory_space<vmem>>, vector<1x128xf32>
    %26 = vector.broadcast %25 : vector<1x128xf32> to vector<256x128xf32>
    %27 = arith.mulf %26, %24 : vector<256x128xf32>
    %c0_13 = arith.constant 0 : index
    %c0_14 = arith.constant 0 : index
    %28 = vector.load %arg5[%c0_13, %c0_14] : memref<1x128xf32, #tpu.memory_space<vmem>>, vector<1x128xf32>
    %29 = vector.broadcast %28 : vector<1x128xf32> to vector<256x128xf32>
    %30 = arith.addf %27, %29 : vector<256x128xf32>
    %cst_15 = arith.constant 0.000000e+00 : f32
    %31 = vector.broadcast %cst_15 : f32 to vector<256x128xf32>
    %32 = arith.maximumf %30, %31 : vector<256x128xf32>
    %33 = arith.truncf %32 : vector<256x128xf32> to vector<256x128xbf16>
    %c0_16 = arith.constant 0 : index
    %c0_17 = arith.constant 0 : index
    %34 = vector.load %arg6[%c0_16, %c0_17] : memref<128x128xbf16, #tpu.memory_space<vmem>>, vector<128x128xbf16>
    %cst_18 = arith.constant dense<0.000000e+00> : vector<256x128xf32>
    %35 = tpu.matmul %33, %34, %cst_18 {dimension_numbers = #tpu.dot_dimension_numbers<[1], [0], [0], [1], [0, 0, 1, 1], [], []>} : vector<256x128xbf16>, vector<128x128xbf16>, vector<256x128xf32> -> vector<256x128xf32>
    %c0_19 = arith.constant 0 : index
    %c0_20 = arith.constant 0 : index
    %36 = vector.load %arg7[%c0_19, %c0_20] : memref<1x128xf32, #tpu.memory_space<vmem>>, vector<1x128xf32>
    %37 = vector.broadcast %36 : vector<1x128xf32> to vector<256x128xf32>
    %38 = arith.addf %35, %37 : vector<256x128xf32>
    %cst_21 = arith.constant dense<0.000000e+00> : vector<256xf32>
    %39 = vector.multi_reduction <add>, %38, %cst_21 [1] : vector<256x128xf32> to vector<256xf32>
    %40 = vector.shape_cast %39 : vector<256xf32> to vector<256x1xf32>
    %cst_22 = arith.constant 1.280000e+02 : f32
    %41 = vector.broadcast %cst_22 : f32 to vector<256x1xf32>
    %42 = arith.divf %40, %41 : vector<256x1xf32>
    %43 = vector.broadcast %42 : vector<256x1xf32> to vector<256x128xf32>
    %44 = arith.subf %38, %43 : vector<256x128xf32>
    %45 = arith.mulf %44, %44 : vector<256x128xf32>
    %cst_23 = arith.constant dense<0.000000e+00> : vector<256xf32>
    %46 = vector.multi_reduction <add>, %45, %cst_23 [1] : vector<256x128xf32> to vector<256xf32>
    %47 = vector.shape_cast %46 : vector<256xf32> to vector<256x1xf32>
    %cst_24 = arith.constant 1.280000e+02 : f32
    %48 = vector.broadcast %cst_24 : f32 to vector<256x1xf32>
    %49 = arith.divf %47, %48 : vector<256x1xf32>
    %50 = vector.broadcast %42 : vector<256x1xf32> to vector<256x128xf32>
    %51 = arith.subf %38, %50 : vector<256x128xf32>
    %cst_25 = arith.constant 9.99999974E-6 : f32
    %52 = vector.broadcast %cst_25 : f32 to vector<256x1xf32>
    %53 = arith.addf %49, %52 : vector<256x1xf32>
    %54 = math.rsqrt %53 : vector<256x1xf32>
    %55 = vector.broadcast %54 : vector<256x1xf32> to vector<256x128xf32>
    %56 = arith.mulf %51, %55 : vector<256x128xf32>
    %c0_26 = arith.constant 0 : index
    %c0_27 = arith.constant 0 : index
    %57 = vector.load %arg8[%c0_26, %c0_27] : memref<1x128xf32, #tpu.memory_space<vmem>>, vector<1x128xf32>
    %58 = vector.broadcast %57 : vector<1x128xf32> to vector<256x128xf32>
    %59 = arith.mulf %58, %56 : vector<256x128xf32>
    %c0_28 = arith.constant 0 : index
    %c0_29 = arith.constant 0 : index
    %60 = vector.load %arg9[%c0_28, %c0_29] : memref<1x128xf32, #tpu.memory_space<vmem>>, vector<1x128xf32>
    %61 = vector.broadcast %60 : vector<1x128xf32> to vector<256x128xf32>
    %62 = arith.addf %59, %61 : vector<256x128xf32>
    %cst_30 = arith.constant 0.000000e+00 : f32
    %63 = vector.broadcast %cst_30 : f32 to vector<256x128xf32>
    %64 = arith.maximumf %62, %63 : vector<256x128xf32>
    %65 = arith.addf %32, %64 : vector<256x128xf32>
    %66 = arith.truncf %65 : vector<256x128xf32> to vector<256x128xbf16>
    %c0_31 = arith.constant 0 : index
    %c0_32 = arith.constant 0 : index
    %67 = vector.load %arg10[%c0_31, %c0_32] : memref<128x384xbf16, #tpu.memory_space<vmem>>, vector<128x384xbf16>
    %cst_33 = arith.constant dense<0.000000e+00> : vector<256x384xf32>
    %68 = tpu.matmul %66, %67, %cst_33 {dimension_numbers = #tpu.dot_dimension_numbers<[1], [0], [0], [1], [0, 0, 1, 1], [], []>} : vector<256x128xbf16>, vector<128x384xbf16>, vector<256x384xf32> -> vector<256x384xf32>
    %c0_34 = arith.constant 0 : index
    %c0_35 = arith.constant 0 : index
    %69 = vector.load %arg11[%c0_34, %c0_35] : memref<1x384xf32, #tpu.memory_space<vmem>>, vector<1x384xf32>
    %70 = vector.broadcast %69 : vector<1x384xf32> to vector<256x384xf32>
    %71 = arith.addf %68, %70 : vector<256x384xf32>
    %72 = vector.shape_cast %71 : vector<256x384xf32> to vector<32x8x384xf32>
    %73 = arith.truncf %72 : vector<32x8x384xf32> to vector<32x8x384xbf16>
    %74 = vector.extract_strided_slice %73 {offsets = [0, 0, 0], sizes = [32, 1, 384], strides = [1, 1, 1]} : vector<32x8x384xbf16> to vector<32x1x384xbf16>
    %75 = vector.shape_cast %74 : vector<32x1x384xbf16> to vector<32x384xbf16>
    %c0_36 = arith.constant 0 : index
    %c0_37 = arith.constant 0 : index
    %c0_38 = arith.constant 0 : index
    %76 = vector.load %arg21[%c0_36, %c0_37, %c0_38] : memref<8x32x384xbf16, #tpu.memory_space<vmem>>, vector<1x32x384xbf16>
    %77 = vector.shape_cast %76 : vector<1x32x384xbf16> to vector<32x384xbf16>
    %78 = vector.shape_cast %75 : vector<32x384xbf16> to vector<1x32x384xbf16>
    tpu.vector_store %arg21[%c0_36, %c0_37, %c0_38], %78 {strides = array<i32>} : memref<8x32x384xbf16, #tpu.memory_space<vmem>>, vector<1x32x384xbf16>,
    %79 = vector.extract_strided_slice %73 {offsets = [0, 1, 0], sizes = [32, 1, 384], strides = [1, 1, 1]} : vector<32x8x384xbf16> to vector<32x1x384xbf16>
    %80 = vector.shape_cast %79 : vector<32x1x384xbf16> to vector<32x384xbf16>
    %c1 = arith.constant 1 : index
    %c0_39 = arith.constant 0 : index
    %c0_40 = arith.constant 0 : index
    %81 = vector.load %arg21[%c1, %c0_39, %c0_40] : memref<8x32x384xbf16, #tpu.memory_space<vmem>>, vector<1x32x384xbf16>
    %82 = vector.shape_cast %81 : vector<1x32x384xbf16> to vector<32x384xbf16>
    %83 = vector.shape_cast %80 : vector<32x384xbf16> to vector<1x32x384xbf16>
    tpu.vector_store %arg21[%c1, %c0_39, %c0_40], %83 {strides = array<i32>} : memref<8x32x384xbf16, #tpu.memory_space<vmem>>, vector<1x32x384xbf16>,
    %84 = vector.extract_strided_slice %73 {offsets = [0, 2, 0], sizes = [32, 1, 384], strides = [1, 1, 1]} : vector<32x8x384xbf16> to vector<32x1x384xbf16>
    %85 = vector.shape_cast %84 : vector<32x1x384xbf16> to vector<32x384xbf16>
    %c2 = arith.constant 2 : index
    %c0_41 = arith.constant 0 : index
    %c0_42 = arith.constant 0 : index
    %86 = vector.load %arg21[%c2, %c0_41, %c0_42] : memref<8x32x384xbf16, #tpu.memory_space<vmem>>, vector<1x32x384xbf16>
    %87 = vector.shape_cast %86 : vector<1x32x384xbf16> to vector<32x384xbf16>
    %88 = vector.shape_cast %85 : vector<32x384xbf16> to vector<1x32x384xbf16>
    tpu.vector_store %arg21[%c2, %c0_41, %c0_42], %88 {strides = array<i32>} : memref<8x32x384xbf16, #tpu.memory_space<vmem>>, vector<1x32x384xbf16>,
    %89 = vector.extract_strided_slice %73 {offsets = [0, 3, 0], sizes = [32, 1, 384], strides = [1, 1, 1]} : vector<32x8x384xbf16> to vector<32x1x384xbf16>
    %90 = vector.shape_cast %89 : vector<32x1x384xbf16> to vector<32x384xbf16>
    %c3 = arith.constant 3 : index
    %c0_43 = arith.constant 0 : index
    %c0_44 = arith.constant 0 : index
    %91 = vector.load %arg21[%c3, %c0_43, %c0_44] : memref<8x32x384xbf16, #tpu.memory_space<vmem>>, vector<1x32x384xbf16>
    %92 = vector.shape_cast %91 : vector<1x32x384xbf16> to vector<32x384xbf16>
    %93 = vector.shape_cast %90 : vector<32x384xbf16> to vector<1x32x384xbf16>
    tpu.vector_store %arg21[%c3, %c0_43, %c0_44], %93 {strides = array<i32>} : memref<8x32x384xbf16, #tpu.memory_space<vmem>>, vector<1x32x384xbf16>,
    %94 = vector.extract_strided_slice %73 {offsets = [0, 4, 0], sizes = [32, 1, 384], strides = [1, 1, 1]} : vector<32x8x384xbf16> to vector<32x1x384xbf16>
    %95 = vector.shape_cast %94 : vector<32x1x384xbf16> to vector<32x384xbf16>
    %c4 = arith.constant 4 : index
    %c0_45 = arith.constant 0 : index
    %c0_46 = arith.constant 0 : index
    %96 = vector.load %arg21[%c4, %c0_45, %c0_46] : memref<8x32x384xbf16, #tpu.memory_space<vmem>>, vector<1x32x384xbf16>
    %97 = vector.shape_cast %96 : vector<1x32x384xbf16> to vector<32x384xbf16>
    %98 = vector.shape_cast %95 : vector<32x384xbf16> to vector<1x32x384xbf16>
    tpu.vector_store %arg21[%c4, %c0_45, %c0_46], %98 {strides = array<i32>} : memref<8x32x384xbf16, #tpu.memory_space<vmem>>, vector<1x32x384xbf16>,
    %99 = vector.extract_strided_slice %73 {offsets = [0, 5, 0], sizes = [32, 1, 384], strides = [1, 1, 1]} : vector<32x8x384xbf16> to vector<32x1x384xbf16>
    %100 = vector.shape_cast %99 : vector<32x1x384xbf16> to vector<32x384xbf16>
    %c5 = arith.constant 5 : index
    %c0_47 = arith.constant 0 : index
    %c0_48 = arith.constant 0 : index
    %101 = vector.load %arg21[%c5, %c0_47, %c0_48] : memref<8x32x384xbf16, #tpu.memory_space<vmem>>, vector<1x32x384xbf16>
    %102 = vector.shape_cast %101 : vector<1x32x384xbf16> to vector<32x384xbf16>
    %103 = vector.shape_cast %100 : vector<32x384xbf16> to vector<1x32x384xbf16>
    tpu.vector_store %arg21[%c5, %c0_47, %c0_48], %103 {strides = array<i32>} : memref<8x32x384xbf16, #tpu.memory_space<vmem>>, vector<1x32x384xbf16>,
    %104 = vector.extract_strided_slice %73 {offsets = [0, 6, 0], sizes = [32, 1, 384], strides = [1, 1, 1]} : vector<32x8x384xbf16> to vector<32x1x384xbf16>
    %105 = vector.shape_cast %104 : vector<32x1x384xbf16> to vector<32x384xbf16>
    %c6 = arith.constant 6 : index
    %c0_49 = arith.constant 0 : index
    %c0_50 = arith.constant 0 : index
    %106 = vector.load %arg21[%c6, %c0_49, %c0_50] : memref<8x32x384xbf16, #tpu.memory_space<vmem>>, vector<1x32x384xbf16>
    %107 = vector.shape_cast %106 : vector<1x32x384xbf16> to vector<32x384xbf16>
    %108 = vector.shape_cast %105 : vector<32x384xbf16> to vector<1x32x384xbf16>
    tpu.vector_store %arg21[%c6, %c0_49, %c0_50], %108 {strides = array<i32>} : memref<8x32x384xbf16, #tpu.memory_space<vmem>>, vector<1x32x384xbf16>,
    %109 = vector.extract_strided_slice %73 {offsets = [0, 7, 0], sizes = [32, 1, 384], strides = [1, 1, 1]} : vector<32x8x384xbf16> to vector<32x1x384xbf16>
    %110 = vector.shape_cast %109 : vector<32x1x384xbf16> to vector<32x384xbf16>
    %c7 = arith.constant 7 : index
    %c0_51 = arith.constant 0 : index
    %c0_52 = arith.constant 0 : index
    %111 = vector.load %arg21[%c7, %c0_51, %c0_52] : memref<8x32x384xbf16, #tpu.memory_space<vmem>>, vector<1x32x384xbf16>
    %112 = vector.shape_cast %111 : vector<1x32x384xbf16> to vector<32x384xbf16>
    %113 = vector.shape_cast %110 : vector<32x384xbf16> to vector<1x32x384xbf16>
    tpu.vector_store %arg21[%c7, %c0_51, %c0_52], %113 {strides = array<i32>} : memref<8x32x384xbf16, #tpu.memory_space<vmem>>, vector<1x32x384xbf16>,
    %cst_53 = arith.constant 0.000000e+00 : f32
    %114 = vector.broadcast %cst_53 : f32 to vector<32x128xf32>
    %cst_54 = arith.constant 0.000000e+00 : f32
    %115 = vector.broadcast %cst_54 : f32 to vector<32x128xf32>
    %c0_i32 = arith.constant 0 : i32
    %116 = arith.index_cast %c0_i32 : i32 to index
    %c0_55 = arith.constant 0 : index
    %c0_56 = arith.constant 0 : index
    %117 = vector.load %arg21[%116, %c0_55, %c0_56] : memref<8x32x384xbf16, #tpu.memory_space<vmem>>, vector<1x32x384xbf16>
    %118 = vector.shape_cast %117 : vector<1x32x384xbf16> to vector<32x384xbf16>
    %119 = arith.truncf %114 : vector<32x128xf32> to vector<32x128xbf16>
    %c0_57 = arith.constant 0 : index
    %c0_58 = arith.constant 0 : index
    %120 = vector.load %arg12[%c0_57, %c0_58] : memref<128x384xbf16, #tpu.memory_space<vmem>>, vector<128x384xbf16>
    %cst_59 = arith.constant dense<0.000000e+00> : vector<32x384xf32>
    %121 = tpu.matmul %119, %120, %cst_59 {dimension_numbers = #tpu.dot_dimension_numbers<[1], [0], [0], [1], [0, 0, 1, 1], [], []>} : vector<32x128xbf16>, vector<128x384xbf16>, vector<32x384xf32> -> vector<32x384xf32>
    %c0_60 = arith.constant 0 : index
    %c0_61 = arith.constant 0 : index
    %122 = vector.load %arg13[%c0_60, %c0_61] : memref<1x384xf32, #tpu.memory_space<vmem>>, vector<1x384xf32>
    %123 = vector.broadcast %122 : vector<1x384xf32> to vector<32x384xf32>
    %124 = arith.addf %121, %123 : vector<32x384xf32>
    %125 = vector.extract_strided_slice %118 {offsets = [0, 0], sizes = [32, 128], strides = [1, 1]} : vector<32x384xbf16> to vector<32x128xbf16>
    %126 = vector.extract_strided_slice %124 {offsets = [0, 0], sizes = [32, 128], strides = [1, 1]} : vector<32x384xf32> to vector<32x128xf32>
    %127 = arith.extf %125 : vector<32x128xbf16> to vector<32x128xf32>
    %128 = arith.addf %127, %126 : vector<32x128xf32>
    %cst_62 = arith.constant 5.000000e-01 : f32
    %129 = vector.broadcast %cst_62 : f32 to vector<32x128xf32>
    %130 = arith.mulf %129, %128 : vector<32x128xf32>
    %131 = math.tanh %130 : vector<32x128xf32>
    %cst_63 = arith.constant 1.000000e+00 : f32
    %132 = vector.broadcast %cst_63 : f32 to vector<32x128xf32>
    %133 = arith.addf %131, %132 : vector<32x128xf32>
    %cst_64 = arith.constant 5.000000e-01 : f32
    %134 = vector.broadcast %cst_64 : f32 to vector<32x128xf32>
    %135 = arith.mulf %134, %133 : vector<32x128xf32>
    %136 = vector.extract_strided_slice %118 {offsets = [0, 128], sizes = [32, 128], strides = [1, 1]} : vector<32x384xbf16> to vector<32x128xbf16>
    %137 = vector.extract_strided_slice %124 {offsets = [0, 128], sizes = [32, 128], strides = [1, 1]} : vector<32x384xf32> to vector<32x128xf32>
    %138 = arith.extf %136 : vector<32x128xbf16> to vector<32x128xf32>
    %139 = arith.addf %138, %137 : vector<32x128xf32>
    %cst_65 = arith.constant 5.000000e-01 : f32
    %140 = vector.broadcast %cst_65 : f32 to vector<32x128xf32>
    %141 = arith.mulf %140, %139 : vector<32x128xf32>
    %142 = math.tanh %141 : vector<32x128xf32>
    %cst_66 = arith.constant 1.000000e+00 : f32
    %143 = vector.broadcast %cst_66 : f32 to vector<32x128xf32>
    %144 = arith.addf %142, %143 : vector<32x128xf32>
    %cst_67 = arith.constant 5.000000e-01 : f32
    %145 = vector.broadcast %cst_67 : f32 to vector<32x128xf32>
    %146 = arith.mulf %145, %144 : vector<32x128xf32>
    %147 = vector.extract_strided_slice %118 {offsets = [0, 256], sizes = [32, 128], strides = [1, 1]} : vector<32x384xbf16> to vector<32x128xbf16>
    %148 = vector.extract_strided_slice %124 {offsets = [0, 256], sizes = [32, 128], strides = [1, 1]} : vector<32x384xf32> to vector<32x128xf32>
    %149 = arith.mulf %135, %148 : vector<32x128xf32>
    %150 = arith.extf %147 : vector<32x128xbf16> to vector<32x128xf32>
    %151 = arith.addf %150, %149 : vector<32x128xf32>
    %152 = math.tanh %151 : vector<32x128xf32>
    %cst_68 = arith.constant 1.000000e+00 : f32
    %153 = vector.broadcast %cst_68 : f32 to vector<32x128xf32>
    %154 = arith.subf %153, %146 : vector<32x128xf32>
    %155 = arith.mulf %154, %152 : vector<32x128xf32>
    %156 = arith.mulf %146, %114 : vector<32x128xf32>
    %157 = arith.addf %155, %156 : vector<32x128xf32>
    %158 = tpu.concatenate %157, %115 in 1 : vector<32x128xf32>, vector<32x128xf32> -> vector<32x256xf32>
    %159 = arith.truncf %158 : vector<32x256xf32> to vector<32x256xbf16>
    %c0_69 = arith.constant 0 : index
    %c0_70 = arith.constant 0 : index
    %160 = vector.load %arg14[%c0_69, %c0_70] : memref<256x256xbf16, #tpu.memory_space<vmem>>, vector<256x256xbf16>
    %cst_71 = arith.constant dense<0.000000e+00> : vector<32x256xf32>
    %161 = tpu.matmul %159, %160, %cst_71 {dimension_numbers = #tpu.dot_dimension_numbers<[1], [0], [0], [1], [0, 0, 1, 1], [], []>} : vector<32x256xbf16>, vector<256x256xbf16>, vector<32x256xf32> -> vector<32x256xf32>
    %c0_72 = arith.constant 0 : index
    %c0_73 = arith.constant 0 : index
    %162 = vector.load %arg15[%c0_72, %c0_73] : memref<1x256xf32, #tpu.memory_space<vmem>>, vector<1x256xf32>
    %163 = vector.broadcast %162 : vector<1x256xf32> to vector<32x256xf32>
    %164 = arith.addf %161, %163 : vector<32x256xf32>
    %165 = arith.truncf %157 : vector<32x128xf32> to vector<32x128xbf16>
    %c0_74 = arith.constant 0 : index
    %c0_75 = arith.constant 0 : index
    %166 = vector.load %arg16[%c0_74, %c0_75] : memref<128x128xbf16, #tpu.memory_space<vmem>>, vector<128x128xbf16>
    %cst_76 = arith.constant dense<0.000000e+00> : vector<32x128xf32>
    %167 = tpu.matmul %165, %166, %cst_76 {dimension_numbers = #tpu.dot_dimension_numbers<[1], [0], [0], [1], [0, 0, 1, 1], [], []>} : vector<32x128xbf16>, vector<128x128xbf16>, vector<32x128xf32> -> vector<32x128xf32>
    %c0_77 = arith.constant 0 : index
    %c0_78 = arith.constant 0 : index
    %168 = vector.load %arg17[%c0_77, %c0_78] : memref<1x128xf32, #tpu.memory_space<vmem>>, vector<1x128xf32>
    %169 = vector.broadcast %168 : vector<1x128xf32> to vector<32x128xf32>
    %170 = arith.addf %167, %169 : vector<32x128xf32>
    %171 = arith.truncf %115 : vector<32x128xf32> to vector<32x128xbf16>
    %c0_79 = arith.constant 0 : index
    %c0_80 = arith.constant 0 : index
    %172 = vector.load %arg18[%c0_79, %c0_80] : memref<128x128xbf16, #tpu.memory_space<vmem>>, vector<128x128xbf16>
    %cst_81 = arith.constant dense<0.000000e+00> : vector<32x128xf32>
    %173 = tpu.matmul %171, %172, %cst_81 {dimension_numbers = #tpu.dot_dimension_numbers<[1], [0], [0], [1], [0, 0, 1, 1], [], []>} : vector<32x128xbf16>, vector<128x128xbf16>, vector<32x128xf32> -> vector<32x128xf32>
    %c0_82 = arith.constant 0 : index
    %c0_83 = arith.constant 0 : index
    %174 = vector.load %arg19[%c0_82, %c0_83] : memref<1x128xf32, #tpu.memory_space<vmem>>, vector<1x128xf32>
    %175 = vector.broadcast %174 : vector<1x128xf32> to vector<32x128xf32>
    %176 = arith.addf %173, %175 : vector<32x128xf32>
    %177 = vector.extract_strided_slice %164 {offsets = [0, 0], sizes = [32, 128], strides = [1, 1]} : vector<32x256xf32> to vector<32x128xf32>
    %cst_84 = arith.constant 5.000000e-01 : f32
    %178 = vector.broadcast %cst_84 : f32 to vector<32x128xf32>
    %179 = arith.mulf %178, %177 : vector<32x128xf32>
    %180 = math.tanh %179 : vector<32x128xf32>
    %cst_85 = arith.constant 1.000000e+00 : f32
    %181 = vector.broadcast %cst_85 : f32 to vector<32x128xf32>
    %182 = arith.addf %180, %181 : vector<32x128xf32>
    %cst_86 = arith.constant 5.000000e-01 : f32
    %183 = vector.broadcast %cst_86 : f32 to vector<32x128xf32>
    %184 = arith.mulf %183, %182 : vector<32x128xf32>
    %185 = vector.extract_strided_slice %164 {offsets = [0, 128], sizes = [32, 128], strides = [1, 1]} : vector<32x256xf32> to vector<32x128xf32>
    %cst_87 = arith.constant 5.000000e-01 : f32
    %186 = vector.broadcast %cst_87 : f32 to vector<32x128xf32>
    %187 = arith.mulf %186, %185 : vector<32x128xf32>
    %188 = math.tanh %187 : vector<32x128xf32>
    %cst_88 = arith.constant 1.000000e+00 : f32
    %189 = vector.broadcast %cst_88 : f32 to vector<32x128xf32>
    %190 = arith.addf %188, %189 : vector<32x128xf32>
    %cst_89 = arith.constant 5.000000e-01 : f32
    %191 = vector.broadcast %cst_89 : f32 to vector<32x128xf32>
    %192 = arith.mulf %191, %190 : vector<32x128xf32>
    %193 = arith.mulf %184, %176 : vector<32x128xf32>
    %194 = arith.addf %170, %193 : vector<32x128xf32>
    %195 = math.tanh %194 : vector<32x128xf32>
    %cst_90 = arith.constant 1.000000e+00 : f32
    %196 = vector.broadcast %cst_90 : f32 to vector<32x128xf32>
    %197 = arith.subf %196, %192 : vector<32x128xf32>
    %198 = arith.mulf %197, %195 : vector<32x128xf32>
    %199 = arith.mulf %192, %115 : vector<32x128xf32>
    %200 = arith.addf %198, %199 : vector<32x128xf32>
    %c1_i32 = arith.constant 1 : i32
    %201 = arith.index_cast %c1_i32 : i32 to index
    %c0_91 = arith.constant 0 : index
    %c0_92 = arith.constant 0 : index
    %202 = vector.load %arg21[%201, %c0_91, %c0_92] : memref<8x32x384xbf16, #tpu.memory_space<vmem>>, vector<1x32x384xbf16>
    %203 = vector.shape_cast %202 : vector<1x32x384xbf16> to vector<32x384xbf16>
    %204 = arith.truncf %157 : vector<32x128xf32> to vector<32x128xbf16>
    %c0_93 = arith.constant 0 : index
    %c0_94 = arith.constant 0 : index
    %205 = vector.load %arg12[%c0_93, %c0_94] : memref<128x384xbf16, #tpu.memory_space<vmem>>, vector<128x384xbf16>
    %cst_95 = arith.constant dense<0.000000e+00> : vector<32x384xf32>
    %206 = tpu.matmul %204, %205, %cst_95 {dimension_numbers = #tpu.dot_dimension_numbers<[1], [0], [0], [1], [0, 0, 1, 1], [], []>} : vector<32x128xbf16>, vector<128x384xbf16>, vector<32x384xf32> -> vector<32x384xf32>
    %c0_96 = arith.constant 0 : index
    %c0_97 = arith.constant 0 : index
    %207 = vector.load %arg13[%c0_96, %c0_97] : memref<1x384xf32, #tpu.memory_space<vmem>>, vector<1x384xf32>
    %208 = vector.broadcast %207 : vector<1x384xf32> to vector<32x384xf32>
    %209 = arith.addf %206, %208 : vector<32x384xf32>
    %210 = vector.extract_strided_slice %203 {offsets = [0, 0], sizes = [32, 128], strides = [1, 1]} : vector<32x384xbf16> to vector<32x128xbf16>
    %211 = vector.extract_strided_slice %209 {offsets = [0, 0], sizes = [32, 128], strides = [1, 1]} : vector<32x384xf32> to vector<32x128xf32>
    %212 = arith.extf %210 : vector<32x128xbf16> to vector<32x128xf32>
    %213 = arith.addf %212, %211 : vector<32x128xf32>
    %cst_98 = arith.constant 5.000000e-01 : f32
    %214 = vector.broadcast %cst_98 : f32 to vector<32x128xf32>
    %215 = arith.mulf %214, %213 : vector<32x128xf32>
    %216 = math.tanh %215 : vector<32x128xf32>
    %cst_99 = arith.constant 1.000000e+00 : f32
    %217 = vector.broadcast %cst_99 : f32 to vector<32x128xf32>
    %218 = arith.addf %216, %217 : vector<32x128xf32>
    %cst_100 = arith.constant 5.000000e-01 : f32
    %219 = vector.broadcast %cst_100 : f32 to vector<32x128xf32>
    %220 = arith.mulf %219, %218 : vector<32x128xf32>
    %221 = vector.extract_strided_slice %203 {offsets = [0, 128], sizes = [32, 128], strides = [1, 1]} : vector<32x384xbf16> to vector<32x128xbf16>
    %222 = vector.extract_strided_slice %209 {offsets = [0, 128], sizes = [32, 128], strides = [1, 1]} : vector<32x384xf32> to vector<32x128xf32>
    %223 = arith.extf %221 : vector<32x128xbf16> to vector<32x128xf32>
    %224 = arith.addf %223, %222 : vector<32x128xf32>
    %cst_101 = arith.constant 5.000000e-01 : f32
    %225 = vector.broadcast %cst_101 : f32 to vector<32x128xf32>
    %226 = arith.mulf %225, %224 : vector<32x128xf32>
    %227 = math.tanh %226 : vector<32x128xf32>
    %cst_102 = arith.constant 1.000000e+00 : f32
    %228 = vector.broadcast %cst_102 : f32 to vector<32x128xf32>
    %229 = arith.addf %227, %228 : vector<32x128xf32>
    %cst_103 = arith.constant 5.000000e-01 : f32
    %230 = vector.broadcast %cst_103 : f32 to vector<32x128xf32>
    %231 = arith.mulf %230, %229 : vector<32x128xf32>
    %232 = vector.extract_strided_slice %203 {offsets = [0, 256], sizes = [32, 128], strides = [1, 1]} : vector<32x384xbf16> to vector<32x128xbf16>
    %233 = vector.extract_strided_slice %209 {offsets = [0, 256], sizes = [32, 128], strides = [1, 1]} : vector<32x384xf32> to vector<32x128xf32>
    %234 = arith.mulf %220, %233 : vector<32x128xf32>
    %235 = arith.extf %232 : vector<32x128xbf16> to vector<32x128xf32>
    %236 = arith.addf %235, %234 : vector<32x128xf32>
    %237 = math.tanh %236 : vector<32x128xf32>
    %cst_104 = arith.constant 1.000000e+00 : f32
    %238 = vector.broadcast %cst_104 : f32 to vector<32x128xf32>
    %239 = arith.subf %238, %231 : vector<32x128xf32>
    %240 = arith.mulf %239, %237 : vector<32x128xf32>
    %241 = arith.mulf %231, %157 : vector<32x128xf32>
    %242 = arith.addf %240, %241 : vector<32x128xf32>
    %243 = tpu.concatenate %242, %200 in 1 : vector<32x128xf32>, vector<32x128xf32> -> vector<32x256xf32>
    %244 = arith.truncf %243 : vector<32x256xf32> to vector<32x256xbf16>
    %c0_105 = arith.constant 0 : index
    %c0_106 = arith.constant 0 : index
    %245 = vector.load %arg14[%c0_105, %c0_106] : memref<256x256xbf16, #tpu.memory_space<vmem>>, vector<256x256xbf16>
    %cst_107 = arith.constant dense<0.000000e+00> : vector<32x256xf32>
    %246 = tpu.matmul %244, %245, %cst_107 {dimension_numbers = #tpu.dot_dimension_numbers<[1], [0], [0], [1], [0, 0, 1, 1], [], []>} : vector<32x256xbf16>, vector<256x256xbf16>, vector<32x256xf32> -> vector<32x256xf32>
    %c0_108 = arith.constant 0 : index
    %c0_109 = arith.constant 0 : index
    %247 = vector.load %arg15[%c0_108, %c0_109] : memref<1x256xf32, #tpu.memory_space<vmem>>, vector<1x256xf32>
    %248 = vector.broadcast %247 : vector<1x256xf32> to vector<32x256xf32>
    %249 = arith.addf %246, %248 : vector<32x256xf32>
    %250 = arith.truncf %242 : vector<32x128xf32> to vector<32x128xbf16>
    %c0_110 = arith.constant 0 : index
    %c0_111 = arith.constant 0 : index
    %251 = vector.load %arg16[%c0_110, %c0_111] : memref<128x128xbf16, #tpu.memory_space<vmem>>, vector<128x128xbf16>
    %cst_112 = arith.constant dense<0.000000e+00> : vector<32x128xf32>
    %252 = tpu.matmul %250, %251, %cst_112 {dimension_numbers = #tpu.dot_dimension_numbers<[1], [0], [0], [1], [0, 0, 1, 1], [], []>} : vector<32x128xbf16>, vector<128x128xbf16>, vector<32x128xf32> -> vector<32x128xf32>
    %c0_113 = arith.constant 0 : index
    %c0_114 = arith.constant 0 : index
    %253 = vector.load %arg17[%c0_113, %c0_114] : memref<1x128xf32, #tpu.memory_space<vmem>>, vector<1x128xf32>
    %254 = vector.broadcast %253 : vector<1x128xf32> to vector<32x128xf32>
    %255 = arith.addf %252, %254 : vector<32x128xf32>
    %256 = arith.truncf %200 : vector<32x128xf32> to vector<32x128xbf16>
    %c0_115 = arith.constant 0 : index
    %c0_116 = arith.constant 0 : index
    %257 = vector.load %arg18[%c0_115, %c0_116] : memref<128x128xbf16, #tpu.memory_space<vmem>>, vector<128x128xbf16>
    %cst_117 = arith.constant dense<0.000000e+00> : vector<32x128xf32>
    %258 = tpu.matmul %256, %257, %cst_117 {dimension_numbers = #tpu.dot_dimension_numbers<[1], [0], [0], [1], [0, 0, 1, 1], [], []>} : vector<32x128xbf16>, vector<128x128xbf16>, vector<32x128xf32> -> vector<32x128xf32>
    %c0_118 = arith.constant 0 : index
    %c0_119 = arith.constant 0 : index
    %259 = vector.load %arg19[%c0_118, %c0_119] : memref<1x128xf32, #tpu.memory_space<vmem>>, vector<1x128xf32>
    %260 = vector.broadcast %259 : vector<1x128xf32> to vector<32x128xf32>
    %261 = arith.addf %258, %260 : vector<32x128xf32>
    %262 = vector.extract_strided_slice %249 {offsets = [0, 0], sizes = [32, 128], strides = [1, 1]} : vector<32x256xf32> to vector<32x128xf32>
    %cst_120 = arith.constant 5.000000e-01 : f32
    %263 = vector.broadcast %cst_120 : f32 to vector<32x128xf32>
    %264 = arith.mulf %263, %262 : vector<32x128xf32>
    %265 = math.tanh %264 : vector<32x128xf32>
    %cst_121 = arith.constant 1.000000e+00 : f32
    %266 = vector.broadcast %cst_121 : f32 to vector<32x128xf32>
    %267 = arith.addf %265, %266 : vector<32x128xf32>
    %cst_122 = arith.constant 5.000000e-01 : f32
    %268 = vector.broadcast %cst_122 : f32 to vector<32x128xf32>
    %269 = arith.mulf %268, %267 : vector<32x128xf32>
    %270 = vector.extract_strided_slice %249 {offsets = [0, 128], sizes = [32, 128], strides = [1, 1]} : vector<32x256xf32> to vector<32x128xf32>
    %cst_123 = arith.constant 5.000000e-01 : f32
    %271 = vector.broadcast %cst_123 : f32 to vector<32x128xf32>
    %272 = arith.mulf %271, %270 : vector<32x128xf32>
    %273 = math.tanh %272 : vector<32x128xf32>
    %cst_124 = arith.constant 1.000000e+00 : f32
    %274 = vector.broadcast %cst_124 : f32 to vector<32x128xf32>
    %275 = arith.addf %273, %274 : vector<32x128xf32>
    %cst_125 = arith.constant 5.000000e-01 : f32
    %276 = vector.broadcast %cst_125 : f32 to vector<32x128xf32>
    %277 = arith.mulf %276, %275 : vector<32x128xf32>
    %278 = arith.mulf %269, %261 : vector<32x128xf32>
    %279 = arith.addf %255, %278 : vector<32x128xf32>
    %280 = math.tanh %279 : vector<32x128xf32>
    %cst_126 = arith.constant 1.000000e+00 : f32
    %281 = vector.broadcast %cst_126 : f32 to vector<32x128xf32>
    %282 = arith.subf %281, %277 : vector<32x128xf32>
    %283 = arith.mulf %282, %280 : vector<32x128xf32>
    %284 = arith.mulf %277, %200 : vector<32x128xf32>
    %285 = arith.addf %283, %284 : vector<32x128xf32>
    %c2_i32 = arith.constant 2 : i32
    %286 = arith.index_cast %c2_i32 : i32 to index
    %c0_127 = arith.constant 0 : index
    %c0_128 = arith.constant 0 : index
    %287 = vector.load %arg21[%286, %c0_127, %c0_128] : memref<8x32x384xbf16, #tpu.memory_space<vmem>>, vector<1x32x384xbf16>
    %288 = vector.shape_cast %287 : vector<1x32x384xbf16> to vector<32x384xbf16>
    %289 = arith.truncf %242 : vector<32x128xf32> to vector<32x128xbf16>
    %c0_129 = arith.constant 0 : index
    %c0_130 = arith.constant 0 : index
    %290 = vector.load %arg12[%c0_129, %c0_130] : memref<128x384xbf16, #tpu.memory_space<vmem>>, vector<128x384xbf16>
    %cst_131 = arith.constant dense<0.000000e+00> : vector<32x384xf32>
    %291 = tpu.matmul %289, %290, %cst_131 {dimension_numbers = #tpu.dot_dimension_numbers<[1], [0], [0], [1], [0, 0, 1, 1], [], []>} : vector<32x128xbf16>, vector<128x384xbf16>, vector<32x384xf32> -> vector<32x384xf32>
    %c0_132 = arith.constant 0 : index
    %c0_133 = arith.constant 0 : index
    %292 = vector.load %arg13[%c0_132, %c0_133] : memref<1x384xf32, #tpu.memory_space<vmem>>, vector<1x384xf32>
    %293 = vector.broadcast %292 : vector<1x384xf32> to vector<32x384xf32>
    %294 = arith.addf %291, %293 : vector<32x384xf32>
    %295 = vector.extract_strided_slice %288 {offsets = [0, 0], sizes = [32, 128], strides = [1, 1]} : vector<32x384xbf16> to vector<32x128xbf16>
    %296 = vector.extract_strided_slice %294 {offsets = [0, 0], sizes = [32, 128], strides = [1, 1]} : vector<32x384xf32> to vector<32x128xf32>
    %297 = arith.extf %295 : vector<32x128xbf16> to vector<32x128xf32>
    %298 = arith.addf %297, %296 : vector<32x128xf32>
    %cst_134 = arith.constant 5.000000e-01 : f32
    %299 = vector.broadcast %cst_134 : f32 to vector<32x128xf32>
    %300 = arith.mulf %299, %298 : vector<32x128xf32>
    %301 = math.tanh %300 : vector<32x128xf32>
    %cst_135 = arith.constant 1.000000e+00 : f32
    %302 = vector.broadcast %cst_135 : f32 to vector<32x128xf32>
    %303 = arith.addf %301, %302 : vector<32x128xf32>
    %cst_136 = arith.constant 5.000000e-01 : f32
    %304 = vector.broadcast %cst_136 : f32 to vector<32x128xf32>
    %305 = arith.mulf %304, %303 : vector<32x128xf32>
    %306 = vector.extract_strided_slice %288 {offsets = [0, 128], sizes = [32, 128], strides = [1, 1]} : vector<32x384xbf16> to vector<32x128xbf16>
    %307 = vector.extract_strided_slice %294 {offsets = [0, 128], sizes = [32, 128], strides = [1, 1]} : vector<32x384xf32> to vector<32x128xf32>
    %308 = arith.extf %306 : vector<32x128xbf16> to vector<32x128xf32>
    %309 = arith.addf %308, %307 : vector<32x128xf32>
    %cst_137 = arith.constant 5.000000e-01 : f32
    %310 = vector.broadcast %cst_137 : f32 to vector<32x128xf32>
    %311 = arith.mulf %310, %309 : vector<32x128xf32>
    %312 = math.tanh %311 : vector<32x128xf32>
    %cst_138 = arith.constant 1.000000e+00 : f32
    %313 = vector.broadcast %cst_138 : f32 to vector<32x128xf32>
    %314 = arith.addf %312, %313 : vector<32x128xf32>
    %cst_139 = arith.constant 5.000000e-01 : f32
    %315 = vector.broadcast %cst_139 : f32 to vector<32x128xf32>
    %316 = arith.mulf %315, %314 : vector<32x128xf32>
    %317 = vector.extract_strided_slice %288 {offsets = [0, 256], sizes = [32, 128], strides = [1, 1]} : vector<32x384xbf16> to vector<32x128xbf16>
    %318 = vector.extract_strided_slice %294 {offsets = [0, 256], sizes = [32, 128], strides = [1, 1]} : vector<32x384xf32> to vector<32x128xf32>
    %319 = arith.mulf %305, %318 : vector<32x128xf32>
    %320 = arith.extf %317 : vector<32x128xbf16> to vector<32x128xf32>
    %321 = arith.addf %320, %319 : vector<32x128xf32>
    %322 = math.tanh %321 : vector<32x128xf32>
    %cst_140 = arith.constant 1.000000e+00 : f32
    %323 = vector.broadcast %cst_140 : f32 to vector<32x128xf32>
    %324 = arith.subf %323, %316 : vector<32x128xf32>
    %325 = arith.mulf %324, %322 : vector<32x128xf32>
    %326 = arith.mulf %316, %242 : vector<32x128xf32>
    %327 = arith.addf %325, %326 : vector<32x128xf32>
    %328 = tpu.concatenate %327, %285 in 1 : vector<32x128xf32>, vector<32x128xf32> -> vector<32x256xf32>
    %329 = arith.truncf %328 : vector<32x256xf32> to vector<32x256xbf16>
    %c0_141 = arith.constant 0 : index
    %c0_142 = arith.constant 0 : index
    %330 = vector.load %arg14[%c0_141, %c0_142] : memref<256x256xbf16, #tpu.memory_space<vmem>>, vector<256x256xbf16>
    %cst_143 = arith.constant dense<0.000000e+00> : vector<32x256xf32>
    %331 = tpu.matmul %329, %330, %cst_143 {dimension_numbers = #tpu.dot_dimension_numbers<[1], [0], [0], [1], [0, 0, 1, 1], [], []>} : vector<32x256xbf16>, vector<256x256xbf16>, vector<32x256xf32> -> vector<32x256xf32>
    %c0_144 = arith.constant 0 : index
    %c0_145 = arith.constant 0 : index
    %332 = vector.load %arg15[%c0_144, %c0_145] : memref<1x256xf32, #tpu.memory_space<vmem>>, vector<1x256xf32>
    %333 = vector.broadcast %332 : vector<1x256xf32> to vector<32x256xf32>
    %334 = arith.addf %331, %333 : vector<32x256xf32>
    %335 = arith.truncf %327 : vector<32x128xf32> to vector<32x128xbf16>
    %c0_146 = arith.constant 0 : index
    %c0_147 = arith.constant 0 : index
    %336 = vector.load %arg16[%c0_146, %c0_147] : memref<128x128xbf16, #tpu.memory_space<vmem>>, vector<128x128xbf16>
    %cst_148 = arith.constant dense<0.000000e+00> : vector<32x128xf32>
    %337 = tpu.matmul %335, %336, %cst_148 {dimension_numbers = #tpu.dot_dimension_numbers<[1], [0], [0], [1], [0, 0, 1, 1], [], []>} : vector<32x128xbf16>, vector<128x128xbf16>, vector<32x128xf32> -> vector<32x128xf32>
    %c0_149 = arith.constant 0 : index
    %c0_150 = arith.constant 0 : index
    %338 = vector.load %arg17[%c0_149, %c0_150] : memref<1x128xf32, #tpu.memory_space<vmem>>, vector<1x128xf32>
    %339 = vector.broadcast %338 : vector<1x128xf32> to vector<32x128xf32>
    %340 = arith.addf %337, %339 : vector<32x128xf32>
    %341 = arith.truncf %285 : vector<32x128xf32> to vector<32x128xbf16>
    %c0_151 = arith.constant 0 : index
    %c0_152 = arith.constant 0 : index
    %342 = vector.load %arg18[%c0_151, %c0_152] : memref<128x128xbf16, #tpu.memory_space<vmem>>, vector<128x128xbf16>
    %cst_153 = arith.constant dense<0.000000e+00> : vector<32x128xf32>
    %343 = tpu.matmul %341, %342, %cst_153 {dimension_numbers = #tpu.dot_dimension_numbers<[1], [0], [0], [1], [0, 0, 1, 1], [], []>} : vector<32x128xbf16>, vector<128x128xbf16>, vector<32x128xf32> -> vector<32x128xf32>
    %c0_154 = arith.constant 0 : index
    %c0_155 = arith.constant 0 : index
    %344 = vector.load %arg19[%c0_154, %c0_155] : memref<1x128xf32, #tpu.memory_space<vmem>>, vector<1x128xf32>
    %345 = vector.broadcast %344 : vector<1x128xf32> to vector<32x128xf32>
    %346 = arith.addf %343, %345 : vector<32x128xf32>
    %347 = vector.extract_strided_slice %334 {offsets = [0, 0], sizes = [32, 128], strides = [1, 1]} : vector<32x256xf32> to vector<32x128xf32>
    %cst_156 = arith.constant 5.000000e-01 : f32
    %348 = vector.broadcast %cst_156 : f32 to vector<32x128xf32>
    %349 = arith.mulf %348, %347 : vector<32x128xf32>
    %350 = math.tanh %349 : vector<32x128xf32>
    %cst_157 = arith.constant 1.000000e+00 : f32
    %351 = vector.broadcast %cst_157 : f32 to vector<32x128xf32>
    %352 = arith.addf %350, %351 : vector<32x128xf32>
    %cst_158 = arith.constant 5.000000e-01 : f32
    %353 = vector.broadcast %cst_158 : f32 to vector<32x128xf32>
    %354 = arith.mulf %353, %352 : vector<32x128xf32>
    %355 = vector.extract_strided_slice %334 {offsets = [0, 128], sizes = [32, 128], strides = [1, 1]} : vector<32x256xf32> to vector<32x128xf32>
    %cst_159 = arith.constant 5.000000e-01 : f32
    %356 = vector.broadcast %cst_159 : f32 to vector<32x128xf32>
    %357 = arith.mulf %356, %355 : vector<32x128xf32>
    %358 = math.tanh %357 : vector<32x128xf32>
    %cst_160 = arith.constant 1.000000e+00 : f32
    %359 = vector.broadcast %cst_160 : f32 to vector<32x128xf32>
    %360 = arith.addf %358, %359 : vector<32x128xf32>
    %cst_161 = arith.constant 5.000000e-01 : f32
    %361 = vector.broadcast %cst_161 : f32 to vector<32x128xf32>
    %362 = arith.mulf %361, %360 : vector<32x128xf32>
    %363 = arith.mulf %354, %346 : vector<32x128xf32>
    %364 = arith.addf %340, %363 : vector<32x128xf32>
    %365 = math.tanh %364 : vector<32x128xf32>
    %cst_162 = arith.constant 1.000000e+00 : f32
    %366 = vector.broadcast %cst_162 : f32 to vector<32x128xf32>
    %367 = arith.subf %366, %362 : vector<32x128xf32>
    %368 = arith.mulf %367, %365 : vector<32x128xf32>
    %369 = arith.mulf %362, %285 : vector<32x128xf32>
    %370 = arith.addf %368, %369 : vector<32x128xf32>
    %c3_i32 = arith.constant 3 : i32
    %371 = arith.index_cast %c3_i32 : i32 to index
    %c0_163 = arith.constant 0 : index
    %c0_164 = arith.constant 0 : index
    %372 = vector.load %arg21[%371, %c0_163, %c0_164] : memref<8x32x384xbf16, #tpu.memory_space<vmem>>, vector<1x32x384xbf16>
    %373 = vector.shape_cast %372 : vector<1x32x384xbf16> to vector<32x384xbf16>
    %374 = arith.truncf %327 : vector<32x128xf32> to vector<32x128xbf16>
    %c0_165 = arith.constant 0 : index
    %c0_166 = arith.constant 0 : index
    %375 = vector.load %arg12[%c0_165, %c0_166] : memref<128x384xbf16, #tpu.memory_space<vmem>>, vector<128x384xbf16>
    %cst_167 = arith.constant dense<0.000000e+00> : vector<32x384xf32>
    %376 = tpu.matmul %374, %375, %cst_167 {dimension_numbers = #tpu.dot_dimension_numbers<[1], [0], [0], [1], [0, 0, 1, 1], [], []>} : vector<32x128xbf16>, vector<128x384xbf16>, vector<32x384xf32> -> vector<32x384xf32>
    %c0_168 = arith.constant 0 : index
    %c0_169 = arith.constant 0 : index
    %377 = vector.load %arg13[%c0_168, %c0_169] : memref<1x384xf32, #tpu.memory_space<vmem>>, vector<1x384xf32>
    %378 = vector.broadcast %377 : vector<1x384xf32> to vector<32x384xf32>
    %379 = arith.addf %376, %378 : vector<32x384xf32>
    %380 = vector.extract_strided_slice %373 {offsets = [0, 0], sizes = [32, 128], strides = [1, 1]} : vector<32x384xbf16> to vector<32x128xbf16>
    %381 = vector.extract_strided_slice %379 {offsets = [0, 0], sizes = [32, 128], strides = [1, 1]} : vector<32x384xf32> to vector<32x128xf32>
    %382 = arith.extf %380 : vector<32x128xbf16> to vector<32x128xf32>
    %383 = arith.addf %382, %381 : vector<32x128xf32>
    %cst_170 = arith.constant 5.000000e-01 : f32
    %384 = vector.broadcast %cst_170 : f32 to vector<32x128xf32>
    %385 = arith.mulf %384, %383 : vector<32x128xf32>
    %386 = math.tanh %385 : vector<32x128xf32>
    %cst_171 = arith.constant 1.000000e+00 : f32
    %387 = vector.broadcast %cst_171 : f32 to vector<32x128xf32>
    %388 = arith.addf %386, %387 : vector<32x128xf32>
    %cst_172 = arith.constant 5.000000e-01 : f32
    %389 = vector.broadcast %cst_172 : f32 to vector<32x128xf32>
    %390 = arith.mulf %389, %388 : vector<32x128xf32>
    %391 = vector.extract_strided_slice %373 {offsets = [0, 128], sizes = [32, 128], strides = [1, 1]} : vector<32x384xbf16> to vector<32x128xbf16>
    %392 = vector.extract_strided_slice %379 {offsets = [0, 128], sizes = [32, 128], strides = [1, 1]} : vector<32x384xf32> to vector<32x128xf32>
    %393 = arith.extf %391 : vector<32x128xbf16> to vector<32x128xf32>
    %394 = arith.addf %393, %392 : vector<32x128xf32>
    %cst_173 = arith.constant 5.000000e-01 : f32
    %395 = vector.broadcast %cst_173 : f32 to vector<32x128xf32>
    %396 = arith.mulf %395, %394 : vector<32x128xf32>
    %397 = math.tanh %396 : vector<32x128xf32>
    %cst_174 = arith.constant 1.000000e+00 : f32
    %398 = vector.broadcast %cst_174 : f32 to vector<32x128xf32>
    %399 = arith.addf %397, %398 : vector<32x128xf32>
    %cst_175 = arith.constant 5.000000e-01 : f32
    %400 = vector.broadcast %cst_175 : f32 to vector<32x128xf32>
    %401 = arith.mulf %400, %399 : vector<32x128xf32>
    %402 = vector.extract_strided_slice %373 {offsets = [0, 256], sizes = [32, 128], strides = [1, 1]} : vector<32x384xbf16> to vector<32x128xbf16>
    %403 = vector.extract_strided_slice %379 {offsets = [0, 256], sizes = [32, 128], strides = [1, 1]} : vector<32x384xf32> to vector<32x128xf32>
    %404 = arith.mulf %390, %403 : vector<32x128xf32>
    %405 = arith.extf %402 : vector<32x128xbf16> to vector<32x128xf32>
    %406 = arith.addf %405, %404 : vector<32x128xf32>
    %407 = math.tanh %406 : vector<32x128xf32>
    %cst_176 = arith.constant 1.000000e+00 : f32
    %408 = vector.broadcast %cst_176 : f32 to vector<32x128xf32>
    %409 = arith.subf %408, %401 : vector<32x128xf32>
    %410 = arith.mulf %409, %407 : vector<32x128xf32>
    %411 = arith.mulf %401, %327 : vector<32x128xf32>
    %412 = arith.addf %410, %411 : vector<32x128xf32>
    %413 = tpu.concatenate %412, %370 in 1 : vector<32x128xf32>, vector<32x128xf32> -> vector<32x256xf32>
    %414 = arith.truncf %413 : vector<32x256xf32> to vector<32x256xbf16>
    %c0_177 = arith.constant 0 : index
    %c0_178 = arith.constant 0 : index
    %415 = vector.load %arg14[%c0_177, %c0_178] : memref<256x256xbf16, #tpu.memory_space<vmem>>, vector<256x256xbf16>
    %cst_179 = arith.constant dense<0.000000e+00> : vector<32x256xf32>
    %416 = tpu.matmul %414, %415, %cst_179 {dimension_numbers = #tpu.dot_dimension_numbers<[1], [0], [0], [1], [0, 0, 1, 1], [], []>} : vector<32x256xbf16>, vector<256x256xbf16>, vector<32x256xf32> -> vector<32x256xf32>
    %c0_180 = arith.constant 0 : index
    %c0_181 = arith.constant 0 : index
    %417 = vector.load %arg15[%c0_180, %c0_181] : memref<1x256xf32, #tpu.memory_space<vmem>>, vector<1x256xf32>
    %418 = vector.broadcast %417 : vector<1x256xf32> to vector<32x256xf32>
    %419 = arith.addf %416, %418 : vector<32x256xf32>
    %420 = arith.truncf %412 : vector<32x128xf32> to vector<32x128xbf16>
    %c0_182 = arith.constant 0 : index
    %c0_183 = arith.constant 0 : index
    %421 = vector.load %arg16[%c0_182, %c0_183] : memref<128x128xbf16, #tpu.memory_space<vmem>>, vector<128x128xbf16>
    %cst_184 = arith.constant dense<0.000000e+00> : vector<32x128xf32>
    %422 = tpu.matmul %420, %421, %cst_184 {dimension_numbers = #tpu.dot_dimension_numbers<[1], [0], [0], [1], [0, 0, 1, 1], [], []>} : vector<32x128xbf16>, vector<128x128xbf16>, vector<32x128xf32> -> vector<32x128xf32>
    %c0_185 = arith.constant 0 : index
    %c0_186 = arith.constant 0 : index
    %423 = vector.load %arg17[%c0_185, %c0_186] : memref<1x128xf32, #tpu.memory_space<vmem>>, vector<1x128xf32>
    %424 = vector.broadcast %423 : vector<1x128xf32> to vector<32x128xf32>
    %425 = arith.addf %422, %424 : vector<32x128xf32>
    %426 = arith.truncf %370 : vector<32x128xf32> to vector<32x128xbf16>
    %c0_187 = arith.constant 0 : index
    %c0_188 = arith.constant 0 : index
    %427 = vector.load %arg18[%c0_187, %c0_188] : memref<128x128xbf16, #tpu.memory_space<vmem>>, vector<128x128xbf16>
    %cst_189 = arith.constant dense<0.000000e+00> : vector<32x128xf32>
    %428 = tpu.matmul %426, %427, %cst_189 {dimension_numbers = #tpu.dot_dimension_numbers<[1], [0], [0], [1], [0, 0, 1, 1], [], []>} : vector<32x128xbf16>, vector<128x128xbf16>, vector<32x128xf32> -> vector<32x128xf32>
    %c0_190 = arith.constant 0 : index
    %c0_191 = arith.constant 0 : index
    %429 = vector.load %arg19[%c0_190, %c0_191] : memref<1x128xf32, #tpu.memory_space<vmem>>, vector<1x128xf32>
    %430 = vector.broadcast %429 : vector<1x128xf32> to vector<32x128xf32>
    %431 = arith.addf %428, %430 : vector<32x128xf32>
    %432 = vector.extract_strided_slice %419 {offsets = [0, 0], sizes = [32, 128], strides = [1, 1]} : vector<32x256xf32> to vector<32x128xf32>
    %cst_192 = arith.constant 5.000000e-01 : f32
    %433 = vector.broadcast %cst_192 : f32 to vector<32x128xf32>
    %434 = arith.mulf %433, %432 : vector<32x128xf32>
    %435 = math.tanh %434 : vector<32x128xf32>
    %cst_193 = arith.constant 1.000000e+00 : f32
    %436 = vector.broadcast %cst_193 : f32 to vector<32x128xf32>
    %437 = arith.addf %435, %436 : vector<32x128xf32>
    %cst_194 = arith.constant 5.000000e-01 : f32
    %438 = vector.broadcast %cst_194 : f32 to vector<32x128xf32>
    %439 = arith.mulf %438, %437 : vector<32x128xf32>
    %440 = vector.extract_strided_slice %419 {offsets = [0, 128], sizes = [32, 128], strides = [1, 1]} : vector<32x256xf32> to vector<32x128xf32>
    %cst_195 = arith.constant 5.000000e-01 : f32
    %441 = vector.broadcast %cst_195 : f32 to vector<32x128xf32>
    %442 = arith.mulf %441, %440 : vector<32x128xf32>
    %443 = math.tanh %442 : vector<32x128xf32>
    %cst_196 = arith.constant 1.000000e+00 : f32
    %444 = vector.broadcast %cst_196 : f32 to vector<32x128xf32>
    %445 = arith.addf %443, %444 : vector<32x128xf32>
    %cst_197 = arith.constant 5.000000e-01 : f32
    %446 = vector.broadcast %cst_197 : f32 to vector<32x128xf32>
    %447 = arith.mulf %446, %445 : vector<32x128xf32>
    %448 = arith.mulf %439, %431 : vector<32x128xf32>
    %449 = arith.addf %425, %448 : vector<32x128xf32>
    %450 = math.tanh %449 : vector<32x128xf32>
    %cst_198 = arith.constant 1.000000e+00 : f32
    %451 = vector.broadcast %cst_198 : f32 to vector<32x128xf32>
    %452 = arith.subf %451, %447 : vector<32x128xf32>
    %453 = arith.mulf %452, %450 : vector<32x128xf32>
    %454 = arith.mulf %447, %370 : vector<32x128xf32>
    %455 = arith.addf %453, %454 : vector<32x128xf32>
    %c4_i32 = arith.constant 4 : i32
    %456 = arith.index_cast %c4_i32 : i32 to index
    %c0_199 = arith.constant 0 : index
    %c0_200 = arith.constant 0 : index
    %457 = vector.load %arg21[%456, %c0_199, %c0_200] : memref<8x32x384xbf16, #tpu.memory_space<vmem>>, vector<1x32x384xbf16>
    %458 = vector.shape_cast %457 : vector<1x32x384xbf16> to vector<32x384xbf16>
    %459 = arith.truncf %412 : vector<32x128xf32> to vector<32x128xbf16>
    %c0_201 = arith.constant 0 : index
    %c0_202 = arith.constant 0 : index
    %460 = vector.load %arg12[%c0_201, %c0_202] : memref<128x384xbf16, #tpu.memory_space<vmem>>, vector<128x384xbf16>
    %cst_203 = arith.constant dense<0.000000e+00> : vector<32x384xf32>
    %461 = tpu.matmul %459, %460, %cst_203 {dimension_numbers = #tpu.dot_dimension_numbers<[1], [0], [0], [1], [0, 0, 1, 1], [], []>} : vector<32x128xbf16>, vector<128x384xbf16>, vector<32x384xf32> -> vector<32x384xf32>
    %c0_204 = arith.constant 0 : index
    %c0_205 = arith.constant 0 : index
    %462 = vector.load %arg13[%c0_204, %c0_205] : memref<1x384xf32, #tpu.memory_space<vmem>>, vector<1x384xf32>
    %463 = vector.broadcast %462 : vector<1x384xf32> to vector<32x384xf32>
    %464 = arith.addf %461, %463 : vector<32x384xf32>
    %465 = vector.extract_strided_slice %458 {offsets = [0, 0], sizes = [32, 128], strides = [1, 1]} : vector<32x384xbf16> to vector<32x128xbf16>
    %466 = vector.extract_strided_slice %464 {offsets = [0, 0], sizes = [32, 128], strides = [1, 1]} : vector<32x384xf32> to vector<32x128xf32>
    %467 = arith.extf %465 : vector<32x128xbf16> to vector<32x128xf32>
    %468 = arith.addf %467, %466 : vector<32x128xf32>
    %cst_206 = arith.constant 5.000000e-01 : f32
    %469 = vector.broadcast %cst_206 : f32 to vector<32x128xf32>
    %470 = arith.mulf %469, %468 : vector<32x128xf32>
    %471 = math.tanh %470 : vector<32x128xf32>
    %cst_207 = arith.constant 1.000000e+00 : f32
    %472 = vector.broadcast %cst_207 : f32 to vector<32x128xf32>
    %473 = arith.addf %471, %472 : vector<32x128xf32>
    %cst_208 = arith.constant 5.000000e-01 : f32
    %474 = vector.broadcast %cst_208 : f32 to vector<32x128xf32>
    %475 = arith.mulf %474, %473 : vector<32x128xf32>
    %476 = vector.extract_strided_slice %458 {offsets = [0, 128], sizes = [32, 128], strides = [1, 1]} : vector<32x384xbf16> to vector<32x128xbf16>
    %477 = vector.extract_strided_slice %464 {offsets = [0, 128], sizes = [32, 128], strides = [1, 1]} : vector<32x384xf32> to vector<32x128xf32>
    %478 = arith.extf %476 : vector<32x128xbf16> to vector<32x128xf32>
    %479 = arith.addf %478, %477 : vector<32x128xf32>
    %cst_209 = arith.constant 5.000000e-01 : f32
    %480 = vector.broadcast %cst_209 : f32 to vector<32x128xf32>
    %481 = arith.mulf %480, %479 : vector<32x128xf32>
    %482 = math.tanh %481 : vector<32x128xf32>
    %cst_210 = arith.constant 1.000000e+00 : f32
    %483 = vector.broadcast %cst_210 : f32 to vector<32x128xf32>
    %484 = arith.addf %482, %483 : vector<32x128xf32>
    %cst_211 = arith.constant 5.000000e-01 : f32
    %485 = vector.broadcast %cst_211 : f32 to vector<32x128xf32>
    %486 = arith.mulf %485, %484 : vector<32x128xf32>
    %487 = vector.extract_strided_slice %458 {offsets = [0, 256], sizes = [32, 128], strides = [1, 1]} : vector<32x384xbf16> to vector<32x128xbf16>
    %488 = vector.extract_strided_slice %464 {offsets = [0, 256], sizes = [32, 128], strides = [1, 1]} : vector<32x384xf32> to vector<32x128xf32>
    %489 = arith.mulf %475, %488 : vector<32x128xf32>
    %490 = arith.extf %487 : vector<32x128xbf16> to vector<32x128xf32>
    %491 = arith.addf %490, %489 : vector<32x128xf32>
    %492 = math.tanh %491 : vector<32x128xf32>
    %cst_212 = arith.constant 1.000000e+00 : f32
    %493 = vector.broadcast %cst_212 : f32 to vector<32x128xf32>
    %494 = arith.subf %493, %486 : vector<32x128xf32>
    %495 = arith.mulf %494, %492 : vector<32x128xf32>
    %496 = arith.mulf %486, %412 : vector<32x128xf32>
    %497 = arith.addf %495, %496 : vector<32x128xf32>
    %498 = tpu.concatenate %497, %455 in 1 : vector<32x128xf32>, vector<32x128xf32> -> vector<32x256xf32>
    %499 = arith.truncf %498 : vector<32x256xf32> to vector<32x256xbf16>
    %c0_213 = arith.constant 0 : index
    %c0_214 = arith.constant 0 : index
    %500 = vector.load %arg14[%c0_213, %c0_214] : memref<256x256xbf16, #tpu.memory_space<vmem>>, vector<256x256xbf16>
    %cst_215 = arith.constant dense<0.000000e+00> : vector<32x256xf32>
    %501 = tpu.matmul %499, %500, %cst_215 {dimension_numbers = #tpu.dot_dimension_numbers<[1], [0], [0], [1], [0, 0, 1, 1], [], []>} : vector<32x256xbf16>, vector<256x256xbf16>, vector<32x256xf32> -> vector<32x256xf32>
    %c0_216 = arith.constant 0 : index
    %c0_217 = arith.constant 0 : index
    %502 = vector.load %arg15[%c0_216, %c0_217] : memref<1x256xf32, #tpu.memory_space<vmem>>, vector<1x256xf32>
    %503 = vector.broadcast %502 : vector<1x256xf32> to vector<32x256xf32>
    %504 = arith.addf %501, %503 : vector<32x256xf32>
    %505 = arith.truncf %497 : vector<32x128xf32> to vector<32x128xbf16>
    %c0_218 = arith.constant 0 : index
    %c0_219 = arith.constant 0 : index
    %506 = vector.load %arg16[%c0_218, %c0_219] : memref<128x128xbf16, #tpu.memory_space<vmem>>, vector<128x128xbf16>
    %cst_220 = arith.constant dense<0.000000e+00> : vector<32x128xf32>
    %507 = tpu.matmul %505, %506, %cst_220 {dimension_numbers = #tpu.dot_dimension_numbers<[1], [0], [0], [1], [0, 0, 1, 1], [], []>} : vector<32x128xbf16>, vector<128x128xbf16>, vector<32x128xf32> -> vector<32x128xf32>
    %c0_221 = arith.constant 0 : index
    %c0_222 = arith.constant 0 : index
    %508 = vector.load %arg17[%c0_221, %c0_222] : memref<1x128xf32, #tpu.memory_space<vmem>>, vector<1x128xf32>
    %509 = vector.broadcast %508 : vector<1x128xf32> to vector<32x128xf32>
    %510 = arith.addf %507, %509 : vector<32x128xf32>
    %511 = arith.truncf %455 : vector<32x128xf32> to vector<32x128xbf16>
    %c0_223 = arith.constant 0 : index
    %c0_224 = arith.constant 0 : index
    %512 = vector.load %arg18[%c0_223, %c0_224] : memref<128x128xbf16, #tpu.memory_space<vmem>>, vector<128x128xbf16>
    %cst_225 = arith.constant dense<0.000000e+00> : vector<32x128xf32>
    %513 = tpu.matmul %511, %512, %cst_225 {dimension_numbers = #tpu.dot_dimension_numbers<[1], [0], [0], [1], [0, 0, 1, 1], [], []>} : vector<32x128xbf16>, vector<128x128xbf16>, vector<32x128xf32> -> vector<32x128xf32>
    %c0_226 = arith.constant 0 : index
    %c0_227 = arith.constant 0 : index
    %514 = vector.load %arg19[%c0_226, %c0_227] : memref<1x128xf32, #tpu.memory_space<vmem>>, vector<1x128xf32>
    %515 = vector.broadcast %514 : vector<1x128xf32> to vector<32x128xf32>
    %516 = arith.addf %513, %515 : vector<32x128xf32>
    %517 = vector.extract_strided_slice %504 {offsets = [0, 0], sizes = [32, 128], strides = [1, 1]} : vector<32x256xf32> to vector<32x128xf32>
    %cst_228 = arith.constant 5.000000e-01 : f32
    %518 = vector.broadcast %cst_228 : f32 to vector<32x128xf32>
    %519 = arith.mulf %518, %517 : vector<32x128xf32>
    %520 = math.tanh %519 : vector<32x128xf32>
    %cst_229 = arith.constant 1.000000e+00 : f32
    %521 = vector.broadcast %cst_229 : f32 to vector<32x128xf32>
    %522 = arith.addf %520, %521 : vector<32x128xf32>
    %cst_230 = arith.constant 5.000000e-01 : f32
    %523 = vector.broadcast %cst_230 : f32 to vector<32x128xf32>
    %524 = arith.mulf %523, %522 : vector<32x128xf32>
    %525 = vector.extract_strided_slice %504 {offsets = [0, 128], sizes = [32, 128], strides = [1, 1]} : vector<32x256xf32> to vector<32x128xf32>
    %cst_231 = arith.constant 5.000000e-01 : f32
    %526 = vector.broadcast %cst_231 : f32 to vector<32x128xf32>
    %527 = arith.mulf %526, %525 : vector<32x128xf32>
    %528 = math.tanh %527 : vector<32x128xf32>
    %cst_232 = arith.constant 1.000000e+00 : f32
    %529 = vector.broadcast %cst_232 : f32 to vector<32x128xf32>
    %530 = arith.addf %528, %529 : vector<32x128xf32>
    %cst_233 = arith.constant 5.000000e-01 : f32
    %531 = vector.broadcast %cst_233 : f32 to vector<32x128xf32>
    %532 = arith.mulf %531, %530 : vector<32x128xf32>
    %533 = arith.mulf %524, %516 : vector<32x128xf32>
    %534 = arith.addf %510, %533 : vector<32x128xf32>
    %535 = math.tanh %534 : vector<32x128xf32>
    %cst_234 = arith.constant 1.000000e+00 : f32
    %536 = vector.broadcast %cst_234 : f32 to vector<32x128xf32>
    %537 = arith.subf %536, %532 : vector<32x128xf32>
    %538 = arith.mulf %537, %535 : vector<32x128xf32>
    %539 = arith.mulf %532, %455 : vector<32x128xf32>
    %540 = arith.addf %538, %539 : vector<32x128xf32>
    %c5_i32 = arith.constant 5 : i32
    %541 = arith.index_cast %c5_i32 : i32 to index
    %c0_235 = arith.constant 0 : index
    %c0_236 = arith.constant 0 : index
    %542 = vector.load %arg21[%541, %c0_235, %c0_236] : memref<8x32x384xbf16, #tpu.memory_space<vmem>>, vector<1x32x384xbf16>
    %543 = vector.shape_cast %542 : vector<1x32x384xbf16> to vector<32x384xbf16>
    %544 = arith.truncf %497 : vector<32x128xf32> to vector<32x128xbf16>
    %c0_237 = arith.constant 0 : index
    %c0_238 = arith.constant 0 : index
    %545 = vector.load %arg12[%c0_237, %c0_238] : memref<128x384xbf16, #tpu.memory_space<vmem>>, vector<128x384xbf16>
    %cst_239 = arith.constant dense<0.000000e+00> : vector<32x384xf32>
    %546 = tpu.matmul %544, %545, %cst_239 {dimension_numbers = #tpu.dot_dimension_numbers<[1], [0], [0], [1], [0, 0, 1, 1], [], []>} : vector<32x128xbf16>, vector<128x384xbf16>, vector<32x384xf32> -> vector<32x384xf32>
    %c0_240 = arith.constant 0 : index
    %c0_241 = arith.constant 0 : index
    %547 = vector.load %arg13[%c0_240, %c0_241] : memref<1x384xf32, #tpu.memory_space<vmem>>, vector<1x384xf32>
    %548 = vector.broadcast %547 : vector<1x384xf32> to vector<32x384xf32>
    %549 = arith.addf %546, %548 : vector<32x384xf32>
    %550 = vector.extract_strided_slice %543 {offsets = [0, 0], sizes = [32, 128], strides = [1, 1]} : vector<32x384xbf16> to vector<32x128xbf16>
    %551 = vector.extract_strided_slice %549 {offsets = [0, 0], sizes = [32, 128], strides = [1, 1]} : vector<32x384xf32> to vector<32x128xf32>
    %552 = arith.extf %550 : vector<32x128xbf16> to vector<32x128xf32>
    %553 = arith.addf %552, %551 : vector<32x128xf32>
    %cst_242 = arith.constant 5.000000e-01 : f32
    %554 = vector.broadcast %cst_242 : f32 to vector<32x128xf32>
    %555 = arith.mulf %554, %553 : vector<32x128xf32>
    %556 = math.tanh %555 : vector<32x128xf32>
    %cst_243 = arith.constant 1.000000e+00 : f32
    %557 = vector.broadcast %cst_243 : f32 to vector<32x128xf32>
    %558 = arith.addf %556, %557 : vector<32x128xf32>
    %cst_244 = arith.constant 5.000000e-01 : f32
    %559 = vector.broadcast %cst_244 : f32 to vector<32x128xf32>
    %560 = arith.mulf %559, %558 : vector<32x128xf32>
    %561 = vector.extract_strided_slice %543 {offsets = [0, 128], sizes = [32, 128], strides = [1, 1]} : vector<32x384xbf16> to vector<32x128xbf16>
    %562 = vector.extract_strided_slice %549 {offsets = [0, 128], sizes = [32, 128], strides = [1, 1]} : vector<32x384xf32> to vector<32x128xf32>
    %563 = arith.extf %561 : vector<32x128xbf16> to vector<32x128xf32>
    %564 = arith.addf %563, %562 : vector<32x128xf32>
    %cst_245 = arith.constant 5.000000e-01 : f32
    %565 = vector.broadcast %cst_245 : f32 to vector<32x128xf32>
    %566 = arith.mulf %565, %564 : vector<32x128xf32>
    %567 = math.tanh %566 : vector<32x128xf32>
    %cst_246 = arith.constant 1.000000e+00 : f32
    %568 = vector.broadcast %cst_246 : f32 to vector<32x128xf32>
    %569 = arith.addf %567, %568 : vector<32x128xf32>
    %cst_247 = arith.constant 5.000000e-01 : f32
    %570 = vector.broadcast %cst_247 : f32 to vector<32x128xf32>
    %571 = arith.mulf %570, %569 : vector<32x128xf32>
    %572 = vector.extract_strided_slice %543 {offsets = [0, 256], sizes = [32, 128], strides = [1, 1]} : vector<32x384xbf16> to vector<32x128xbf16>
    %573 = vector.extract_strided_slice %549 {offsets = [0, 256], sizes = [32, 128], strides = [1, 1]} : vector<32x384xf32> to vector<32x128xf32>
    %574 = arith.mulf %560, %573 : vector<32x128xf32>
    %575 = arith.extf %572 : vector<32x128xbf16> to vector<32x128xf32>
    %576 = arith.addf %575, %574 : vector<32x128xf32>
    %577 = math.tanh %576 : vector<32x128xf32>
    %cst_248 = arith.constant 1.000000e+00 : f32
    %578 = vector.broadcast %cst_248 : f32 to vector<32x128xf32>
    %579 = arith.subf %578, %571 : vector<32x128xf32>
    %580 = arith.mulf %579, %577 : vector<32x128xf32>
    %581 = arith.mulf %571, %497 : vector<32x128xf32>
    %582 = arith.addf %580, %581 : vector<32x128xf32>
    %583 = tpu.concatenate %582, %540 in 1 : vector<32x128xf32>, vector<32x128xf32> -> vector<32x256xf32>
    %584 = arith.truncf %583 : vector<32x256xf32> to vector<32x256xbf16>
    %c0_249 = arith.constant 0 : index
    %c0_250 = arith.constant 0 : index
    %585 = vector.load %arg14[%c0_249, %c0_250] : memref<256x256xbf16, #tpu.memory_space<vmem>>, vector<256x256xbf16>
    %cst_251 = arith.constant dense<0.000000e+00> : vector<32x256xf32>
    %586 = tpu.matmul %584, %585, %cst_251 {dimension_numbers = #tpu.dot_dimension_numbers<[1], [0], [0], [1], [0, 0, 1, 1], [], []>} : vector<32x256xbf16>, vector<256x256xbf16>, vector<32x256xf32> -> vector<32x256xf32>
    %c0_252 = arith.constant 0 : index
    %c0_253 = arith.constant 0 : index
    %587 = vector.load %arg15[%c0_252, %c0_253] : memref<1x256xf32, #tpu.memory_space<vmem>>, vector<1x256xf32>
    %588 = vector.broadcast %587 : vector<1x256xf32> to vector<32x256xf32>
    %589 = arith.addf %586, %588 : vector<32x256xf32>
    %590 = arith.truncf %582 : vector<32x128xf32> to vector<32x128xbf16>
    %c0_254 = arith.constant 0 : index
    %c0_255 = arith.constant 0 : index
    %591 = vector.load %arg16[%c0_254, %c0_255] : memref<128x128xbf16, #tpu.memory_space<vmem>>, vector<128x128xbf16>
    %cst_256 = arith.constant dense<0.000000e+00> : vector<32x128xf32>
    %592 = tpu.matmul %590, %591, %cst_256 {dimension_numbers = #tpu.dot_dimension_numbers<[1], [0], [0], [1], [0, 0, 1, 1], [], []>} : vector<32x128xbf16>, vector<128x128xbf16>, vector<32x128xf32> -> vector<32x128xf32>
    %c0_257 = arith.constant 0 : index
    %c0_258 = arith.constant 0 : index
    %593 = vector.load %arg17[%c0_257, %c0_258] : memref<1x128xf32, #tpu.memory_space<vmem>>, vector<1x128xf32>
    %594 = vector.broadcast %593 : vector<1x128xf32> to vector<32x128xf32>
    %595 = arith.addf %592, %594 : vector<32x128xf32>
    %596 = arith.truncf %540 : vector<32x128xf32> to vector<32x128xbf16>
    %c0_259 = arith.constant 0 : index
    %c0_260 = arith.constant 0 : index
    %597 = vector.load %arg18[%c0_259, %c0_260] : memref<128x128xbf16, #tpu.memory_space<vmem>>, vector<128x128xbf16>
    %cst_261 = arith.constant dense<0.000000e+00> : vector<32x128xf32>
    %598 = tpu.matmul %596, %597, %cst_261 {dimension_numbers = #tpu.dot_dimension_numbers<[1], [0], [0], [1], [0, 0, 1, 1], [], []>} : vector<32x128xbf16>, vector<128x128xbf16>, vector<32x128xf32> -> vector<32x128xf32>
    %c0_262 = arith.constant 0 : index
    %c0_263 = arith.constant 0 : index
    %599 = vector.load %arg19[%c0_262, %c0_263] : memref<1x128xf32, #tpu.memory_space<vmem>>, vector<1x128xf32>
    %600 = vector.broadcast %599 : vector<1x128xf32> to vector<32x128xf32>
    %601 = arith.addf %598, %600 : vector<32x128xf32>
    %602 = vector.extract_strided_slice %589 {offsets = [0, 0], sizes = [32, 128], strides = [1, 1]} : vector<32x256xf32> to vector<32x128xf32>
    %cst_264 = arith.constant 5.000000e-01 : f32
    %603 = vector.broadcast %cst_264 : f32 to vector<32x128xf32>
    %604 = arith.mulf %603, %602 : vector<32x128xf32>
    %605 = math.tanh %604 : vector<32x128xf32>
    %cst_265 = arith.constant 1.000000e+00 : f32
    %606 = vector.broadcast %cst_265 : f32 to vector<32x128xf32>
    %607 = arith.addf %605, %606 : vector<32x128xf32>
    %cst_266 = arith.constant 5.000000e-01 : f32
    %608 = vector.broadcast %cst_266 : f32 to vector<32x128xf32>
    %609 = arith.mulf %608, %607 : vector<32x128xf32>
    %610 = vector.extract_strided_slice %589 {offsets = [0, 128], sizes = [32, 128], strides = [1, 1]} : vector<32x256xf32> to vector<32x128xf32>
    %cst_267 = arith.constant 5.000000e-01 : f32
    %611 = vector.broadcast %cst_267 : f32 to vector<32x128xf32>
    %612 = arith.mulf %611, %610 : vector<32x128xf32>
    %613 = math.tanh %612 : vector<32x128xf32>
    %cst_268 = arith.constant 1.000000e+00 : f32
    %614 = vector.broadcast %cst_268 : f32 to vector<32x128xf32>
    %615 = arith.addf %613, %614 : vector<32x128xf32>
    %cst_269 = arith.constant 5.000000e-01 : f32
    %616 = vector.broadcast %cst_269 : f32 to vector<32x128xf32>
    %617 = arith.mulf %616, %615 : vector<32x128xf32>
    %618 = arith.mulf %609, %601 : vector<32x128xf32>
    %619 = arith.addf %595, %618 : vector<32x128xf32>
    %620 = math.tanh %619 : vector<32x128xf32>
    %cst_270 = arith.constant 1.000000e+00 : f32
    %621 = vector.broadcast %cst_270 : f32 to vector<32x128xf32>
    %622 = arith.subf %621, %617 : vector<32x128xf32>
    %623 = arith.mulf %622, %620 : vector<32x128xf32>
    %624 = arith.mulf %617, %540 : vector<32x128xf32>
    %625 = arith.addf %623, %624 : vector<32x128xf32>
    %c6_i32 = arith.constant 6 : i32
    %626 = arith.index_cast %c6_i32 : i32 to index
    %c0_271 = arith.constant 0 : index
    %c0_272 = arith.constant 0 : index
    %627 = vector.load %arg21[%626, %c0_271, %c0_272] : memref<8x32x384xbf16, #tpu.memory_space<vmem>>, vector<1x32x384xbf16>
    %628 = vector.shape_cast %627 : vector<1x32x384xbf16> to vector<32x384xbf16>
    %629 = arith.truncf %582 : vector<32x128xf32> to vector<32x128xbf16>
    %c0_273 = arith.constant 0 : index
    %c0_274 = arith.constant 0 : index
    %630 = vector.load %arg12[%c0_273, %c0_274] : memref<128x384xbf16, #tpu.memory_space<vmem>>, vector<128x384xbf16>
    %cst_275 = arith.constant dense<0.000000e+00> : vector<32x384xf32>
    %631 = tpu.matmul %629, %630, %cst_275 {dimension_numbers = #tpu.dot_dimension_numbers<[1], [0], [0], [1], [0, 0, 1, 1], [], []>} : vector<32x128xbf16>, vector<128x384xbf16>, vector<32x384xf32> -> vector<32x384xf32>
    %c0_276 = arith.constant 0 : index
    %c0_277 = arith.constant 0 : index
    %632 = vector.load %arg13[%c0_276, %c0_277] : memref<1x384xf32, #tpu.memory_space<vmem>>, vector<1x384xf32>
    %633 = vector.broadcast %632 : vector<1x384xf32> to vector<32x384xf32>
    %634 = arith.addf %631, %633 : vector<32x384xf32>
    %635 = vector.extract_strided_slice %628 {offsets = [0, 0], sizes = [32, 128], strides = [1, 1]} : vector<32x384xbf16> to vector<32x128xbf16>
    %636 = vector.extract_strided_slice %634 {offsets = [0, 0], sizes = [32, 128], strides = [1, 1]} : vector<32x384xf32> to vector<32x128xf32>
    %637 = arith.extf %635 : vector<32x128xbf16> to vector<32x128xf32>
    %638 = arith.addf %637, %636 : vector<32x128xf32>
    %cst_278 = arith.constant 5.000000e-01 : f32
    %639 = vector.broadcast %cst_278 : f32 to vector<32x128xf32>
    %640 = arith.mulf %639, %638 : vector<32x128xf32>
    %641 = math.tanh %640 : vector<32x128xf32>
    %cst_279 = arith.constant 1.000000e+00 : f32
    %642 = vector.broadcast %cst_279 : f32 to vector<32x128xf32>
    %643 = arith.addf %641, %642 : vector<32x128xf32>
    %cst_280 = arith.constant 5.000000e-01 : f32
    %644 = vector.broadcast %cst_280 : f32 to vector<32x128xf32>
    %645 = arith.mulf %644, %643 : vector<32x128xf32>
    %646 = vector.extract_strided_slice %628 {offsets = [0, 128], sizes = [32, 128], strides = [1, 1]} : vector<32x384xbf16> to vector<32x128xbf16>
    %647 = vector.extract_strided_slice %634 {offsets = [0, 128], sizes = [32, 128], strides = [1, 1]} : vector<32x384xf32> to vector<32x128xf32>
    %648 = arith.extf %646 : vector<32x128xbf16> to vector<32x128xf32>
    %649 = arith.addf %648, %647 : vector<32x128xf32>
    %cst_281 = arith.constant 5.000000e-01 : f32
    %650 = vector.broadcast %cst_281 : f32 to vector<32x128xf32>
    %651 = arith.mulf %650, %649 : vector<32x128xf32>
    %652 = math.tanh %651 : vector<32x128xf32>
    %cst_282 = arith.constant 1.000000e+00 : f32
    %653 = vector.broadcast %cst_282 : f32 to vector<32x128xf32>
    %654 = arith.addf %652, %653 : vector<32x128xf32>
    %cst_283 = arith.constant 5.000000e-01 : f32
    %655 = vector.broadcast %cst_283 : f32 to vector<32x128xf32>
    %656 = arith.mulf %655, %654 : vector<32x128xf32>
    %657 = vector.extract_strided_slice %628 {offsets = [0, 256], sizes = [32, 128], strides = [1, 1]} : vector<32x384xbf16> to vector<32x128xbf16>
    %658 = vector.extract_strided_slice %634 {offsets = [0, 256], sizes = [32, 128], strides = [1, 1]} : vector<32x384xf32> to vector<32x128xf32>
    %659 = arith.mulf %645, %658 : vector<32x128xf32>
    %660 = arith.extf %657 : vector<32x128xbf16> to vector<32x128xf32>
    %661 = arith.addf %660, %659 : vector<32x128xf32>
    %662 = math.tanh %661 : vector<32x128xf32>
    %cst_284 = arith.constant 1.000000e+00 : f32
    %663 = vector.broadcast %cst_284 : f32 to vector<32x128xf32>
    %664 = arith.subf %663, %656 : vector<32x128xf32>
    %665 = arith.mulf %664, %662 : vector<32x128xf32>
    %666 = arith.mulf %656, %582 : vector<32x128xf32>
    %667 = arith.addf %665, %666 : vector<32x128xf32>
    %668 = tpu.concatenate %667, %625 in 1 : vector<32x128xf32>, vector<32x128xf32> -> vector<32x256xf32>
    %669 = arith.truncf %668 : vector<32x256xf32> to vector<32x256xbf16>
    %c0_285 = arith.constant 0 : index
    %c0_286 = arith.constant 0 : index
    %670 = vector.load %arg14[%c0_285, %c0_286] : memref<256x256xbf16, #tpu.memory_space<vmem>>, vector<256x256xbf16>
    %cst_287 = arith.constant dense<0.000000e+00> : vector<32x256xf32>
    %671 = tpu.matmul %669, %670, %cst_287 {dimension_numbers = #tpu.dot_dimension_numbers<[1], [0], [0], [1], [0, 0, 1, 1], [], []>} : vector<32x256xbf16>, vector<256x256xbf16>, vector<32x256xf32> -> vector<32x256xf32>
    %c0_288 = arith.constant 0 : index
    %c0_289 = arith.constant 0 : index
    %672 = vector.load %arg15[%c0_288, %c0_289] : memref<1x256xf32, #tpu.memory_space<vmem>>, vector<1x256xf32>
    %673 = vector.broadcast %672 : vector<1x256xf32> to vector<32x256xf32>
    %674 = arith.addf %671, %673 : vector<32x256xf32>
    %675 = arith.truncf %667 : vector<32x128xf32> to vector<32x128xbf16>
    %c0_290 = arith.constant 0 : index
    %c0_291 = arith.constant 0 : index
    %676 = vector.load %arg16[%c0_290, %c0_291] : memref<128x128xbf16, #tpu.memory_space<vmem>>, vector<128x128xbf16>
    %cst_292 = arith.constant dense<0.000000e+00> : vector<32x128xf32>
    %677 = tpu.matmul %675, %676, %cst_292 {dimension_numbers = #tpu.dot_dimension_numbers<[1], [0], [0], [1], [0, 0, 1, 1], [], []>} : vector<32x128xbf16>, vector<128x128xbf16>, vector<32x128xf32> -> vector<32x128xf32>
    %c0_293 = arith.constant 0 : index
    %c0_294 = arith.constant 0 : index
    %678 = vector.load %arg17[%c0_293, %c0_294] : memref<1x128xf32, #tpu.memory_space<vmem>>, vector<1x128xf32>
    %679 = vector.broadcast %678 : vector<1x128xf32> to vector<32x128xf32>
    %680 = arith.addf %677, %679 : vector<32x128xf32>
    %681 = arith.truncf %625 : vector<32x128xf32> to vector<32x128xbf16>
    %c0_295 = arith.constant 0 : index
    %c0_296 = arith.constant 0 : index
    %682 = vector.load %arg18[%c0_295, %c0_296] : memref<128x128xbf16, #tpu.memory_space<vmem>>, vector<128x128xbf16>
    %cst_297 = arith.constant dense<0.000000e+00> : vector<32x128xf32>
    %683 = tpu.matmul %681, %682, %cst_297 {dimension_numbers = #tpu.dot_dimension_numbers<[1], [0], [0], [1], [0, 0, 1, 1], [], []>} : vector<32x128xbf16>, vector<128x128xbf16>, vector<32x128xf32> -> vector<32x128xf32>
    %c0_298 = arith.constant 0 : index
    %c0_299 = arith.constant 0 : index
    %684 = vector.load %arg19[%c0_298, %c0_299] : memref<1x128xf32, #tpu.memory_space<vmem>>, vector<1x128xf32>
    %685 = vector.broadcast %684 : vector<1x128xf32> to vector<32x128xf32>
    %686 = arith.addf %683, %685 : vector<32x128xf32>
    %687 = vector.extract_strided_slice %674 {offsets = [0, 0], sizes = [32, 128], strides = [1, 1]} : vector<32x256xf32> to vector<32x128xf32>
    %cst_300 = arith.constant 5.000000e-01 : f32
    %688 = vector.broadcast %cst_300 : f32 to vector<32x128xf32>
    %689 = arith.mulf %688, %687 : vector<32x128xf32>
    %690 = math.tanh %689 : vector<32x128xf32>
    %cst_301 = arith.constant 1.000000e+00 : f32
    %691 = vector.broadcast %cst_301 : f32 to vector<32x128xf32>
    %692 = arith.addf %690, %691 : vector<32x128xf32>
    %cst_302 = arith.constant 5.000000e-01 : f32
    %693 = vector.broadcast %cst_302 : f32 to vector<32x128xf32>
    %694 = arith.mulf %693, %692 : vector<32x128xf32>
    %695 = vector.extract_strided_slice %674 {offsets = [0, 128], sizes = [32, 128], strides = [1, 1]} : vector<32x256xf32> to vector<32x128xf32>
    %cst_303 = arith.constant 5.000000e-01 : f32
    %696 = vector.broadcast %cst_303 : f32 to vector<32x128xf32>
    %697 = arith.mulf %696, %695 : vector<32x128xf32>
    %698 = math.tanh %697 : vector<32x128xf32>
    %cst_304 = arith.constant 1.000000e+00 : f32
    %699 = vector.broadcast %cst_304 : f32 to vector<32x128xf32>
    %700 = arith.addf %698, %699 : vector<32x128xf32>
    %cst_305 = arith.constant 5.000000e-01 : f32
    %701 = vector.broadcast %cst_305 : f32 to vector<32x128xf32>
    %702 = arith.mulf %701, %700 : vector<32x128xf32>
    %703 = arith.mulf %694, %686 : vector<32x128xf32>
    %704 = arith.addf %680, %703 : vector<32x128xf32>
    %705 = math.tanh %704 : vector<32x128xf32>
    %cst_306 = arith.constant 1.000000e+00 : f32
    %706 = vector.broadcast %cst_306 : f32 to vector<32x128xf32>
    %707 = arith.subf %706, %702 : vector<32x128xf32>
    %708 = arith.mulf %707, %705 : vector<32x128xf32>
    %709 = arith.mulf %702, %625 : vector<32x128xf32>
    %710 = arith.addf %708, %709 : vector<32x128xf32>
    %c7_i32 = arith.constant 7 : i32
    %711 = arith.index_cast %c7_i32 : i32 to index
    %c0_307 = arith.constant 0 : index
    %c0_308 = arith.constant 0 : index
    %712 = vector.load %arg21[%711, %c0_307, %c0_308] : memref<8x32x384xbf16, #tpu.memory_space<vmem>>, vector<1x32x384xbf16>
    %713 = vector.shape_cast %712 : vector<1x32x384xbf16> to vector<32x384xbf16>
    %714 = arith.truncf %667 : vector<32x128xf32> to vector<32x128xbf16>
    %c0_309 = arith.constant 0 : index
    %c0_310 = arith.constant 0 : index
    %715 = vector.load %arg12[%c0_309, %c0_310] : memref<128x384xbf16, #tpu.memory_space<vmem>>, vector<128x384xbf16>
    %cst_311 = arith.constant dense<0.000000e+00> : vector<32x384xf32>
    %716 = tpu.matmul %714, %715, %cst_311 {dimension_numbers = #tpu.dot_dimension_numbers<[1], [0], [0], [1], [0, 0, 1, 1], [], []>} : vector<32x128xbf16>, vector<128x384xbf16>, vector<32x384xf32> -> vector<32x384xf32>
    %c0_312 = arith.constant 0 : index
    %c0_313 = arith.constant 0 : index
    %717 = vector.load %arg13[%c0_312, %c0_313] : memref<1x384xf32, #tpu.memory_space<vmem>>, vector<1x384xf32>
    %718 = vector.broadcast %717 : vector<1x384xf32> to vector<32x384xf32>
    %719 = arith.addf %716, %718 : vector<32x384xf32>
    %720 = vector.extract_strided_slice %713 {offsets = [0, 0], sizes = [32, 128], strides = [1, 1]} : vector<32x384xbf16> to vector<32x128xbf16>
    %721 = vector.extract_strided_slice %719 {offsets = [0, 0], sizes = [32, 128], strides = [1, 1]} : vector<32x384xf32> to vector<32x128xf32>
    %722 = arith.extf %720 : vector<32x128xbf16> to vector<32x128xf32>
    %723 = arith.addf %722, %721 : vector<32x128xf32>
    %cst_314 = arith.constant 5.000000e-01 : f32
    %724 = vector.broadcast %cst_314 : f32 to vector<32x128xf32>
    %725 = arith.mulf %724, %723 : vector<32x128xf32>
    %726 = math.tanh %725 : vector<32x128xf32>
    %cst_315 = arith.constant 1.000000e+00 : f32
    %727 = vector.broadcast %cst_315 : f32 to vector<32x128xf32>
    %728 = arith.addf %726, %727 : vector<32x128xf32>
    %cst_316 = arith.constant 5.000000e-01 : f32
    %729 = vector.broadcast %cst_316 : f32 to vector<32x128xf32>
    %730 = arith.mulf %729, %728 : vector<32x128xf32>
    %731 = vector.extract_strided_slice %713 {offsets = [0, 128], sizes = [32, 128], strides = [1, 1]} : vector<32x384xbf16> to vector<32x128xbf16>
    %732 = vector.extract_strided_slice %719 {offsets = [0, 128], sizes = [32, 128], strides = [1, 1]} : vector<32x384xf32> to vector<32x128xf32>
    %733 = arith.extf %731 : vector<32x128xbf16> to vector<32x128xf32>
    %734 = arith.addf %733, %732 : vector<32x128xf32>
    %cst_317 = arith.constant 5.000000e-01 : f32
    %735 = vector.broadcast %cst_317 : f32 to vector<32x128xf32>
    %736 = arith.mulf %735, %734 : vector<32x128xf32>
    %737 = math.tanh %736 : vector<32x128xf32>
    %cst_318 = arith.constant 1.000000e+00 : f32
    %738 = vector.broadcast %cst_318 : f32 to vector<32x128xf32>
    %739 = arith.addf %737, %738 : vector<32x128xf32>
    %cst_319 = arith.constant 5.000000e-01 : f32
    %740 = vector.broadcast %cst_319 : f32 to vector<32x128xf32>
    %741 = arith.mulf %740, %739 : vector<32x128xf32>
    %742 = vector.extract_strided_slice %713 {offsets = [0, 256], sizes = [32, 128], strides = [1, 1]} : vector<32x384xbf16> to vector<32x128xbf16>
    %743 = vector.extract_strided_slice %719 {offsets = [0, 256], sizes = [32, 128], strides = [1, 1]} : vector<32x384xf32> to vector<32x128xf32>
    %744 = arith.mulf %730, %743 : vector<32x128xf32>
    %745 = arith.extf %742 : vector<32x128xbf16> to vector<32x128xf32>
    %746 = arith.addf %745, %744 : vector<32x128xf32>
    %747 = math.tanh %746 : vector<32x128xf32>
    %cst_320 = arith.constant 1.000000e+00 : f32
    %748 = vector.broadcast %cst_320 : f32 to vector<32x128xf32>
    %749 = arith.subf %748, %741 : vector<32x128xf32>
    %750 = arith.mulf %749, %747 : vector<32x128xf32>
    %751 = arith.mulf %741, %667 : vector<32x128xf32>
    %752 = arith.addf %750, %751 : vector<32x128xf32>
    %753 = tpu.concatenate %752, %710 in 1 : vector<32x128xf32>, vector<32x128xf32> -> vector<32x256xf32>
    %754 = arith.truncf %753 : vector<32x256xf32> to vector<32x256xbf16>
    %c0_321 = arith.constant 0 : index
    %c0_322 = arith.constant 0 : index
    %755 = vector.load %arg14[%c0_321, %c0_322] : memref<256x256xbf16, #tpu.memory_space<vmem>>, vector<256x256xbf16>
    %cst_323 = arith.constant dense<0.000000e+00> : vector<32x256xf32>
    %756 = tpu.matmul %754, %755, %cst_323 {dimension_numbers = #tpu.dot_dimension_numbers<[1], [0], [0], [1], [0, 0, 1, 1], [], []>} : vector<32x256xbf16>, vector<256x256xbf16>, vector<32x256xf32> -> vector<32x256xf32>
    %c0_324 = arith.constant 0 : index
    %c0_325 = arith.constant 0 : index
    %757 = vector.load %arg15[%c0_324, %c0_325] : memref<1x256xf32, #tpu.memory_space<vmem>>, vector<1x256xf32>
    %758 = vector.broadcast %757 : vector<1x256xf32> to vector<32x256xf32>
    %759 = arith.addf %756, %758 : vector<32x256xf32>
    %760 = arith.truncf %752 : vector<32x128xf32> to vector<32x128xbf16>
    %c0_326 = arith.constant 0 : index
    %c0_327 = arith.constant 0 : index
    %761 = vector.load %arg16[%c0_326, %c0_327] : memref<128x128xbf16, #tpu.memory_space<vmem>>, vector<128x128xbf16>
    %cst_328 = arith.constant dense<0.000000e+00> : vector<32x128xf32>
    %762 = tpu.matmul %760, %761, %cst_328 {dimension_numbers = #tpu.dot_dimension_numbers<[1], [0], [0], [1], [0, 0, 1, 1], [], []>} : vector<32x128xbf16>, vector<128x128xbf16>, vector<32x128xf32> -> vector<32x128xf32>
    %c0_329 = arith.constant 0 : index
    %c0_330 = arith.constant 0 : index
    %763 = vector.load %arg17[%c0_329, %c0_330] : memref<1x128xf32, #tpu.memory_space<vmem>>, vector<1x128xf32>
    %764 = vector.broadcast %763 : vector<1x128xf32> to vector<32x128xf32>
    %765 = arith.addf %762, %764 : vector<32x128xf32>
    %766 = arith.truncf %710 : vector<32x128xf32> to vector<32x128xbf16>
    %c0_331 = arith.constant 0 : index
    %c0_332 = arith.constant 0 : index
    %767 = vector.load %arg18[%c0_331, %c0_332] : memref<128x128xbf16, #tpu.memory_space<vmem>>, vector<128x128xbf16>
    %cst_333 = arith.constant dense<0.000000e+00> : vector<32x128xf32>
    %768 = tpu.matmul %766, %767, %cst_333 {dimension_numbers = #tpu.dot_dimension_numbers<[1], [0], [0], [1], [0, 0, 1, 1], [], []>} : vector<32x128xbf16>, vector<128x128xbf16>, vector<32x128xf32> -> vector<32x128xf32>
    %c0_334 = arith.constant 0 : index
    %c0_335 = arith.constant 0 : index
    %769 = vector.load %arg19[%c0_334, %c0_335] : memref<1x128xf32, #tpu.memory_space<vmem>>, vector<1x128xf32>
    %770 = vector.broadcast %769 : vector<1x128xf32> to vector<32x128xf32>
    %771 = arith.addf %768, %770 : vector<32x128xf32>
    %772 = vector.extract_strided_slice %759 {offsets = [0, 0], sizes = [32, 128], strides = [1, 1]} : vector<32x256xf32> to vector<32x128xf32>
    %cst_336 = arith.constant 5.000000e-01 : f32
    %773 = vector.broadcast %cst_336 : f32 to vector<32x128xf32>
    %774 = arith.mulf %773, %772 : vector<32x128xf32>
    %775 = math.tanh %774 : vector<32x128xf32>
    %cst_337 = arith.constant 1.000000e+00 : f32
    %776 = vector.broadcast %cst_337 : f32 to vector<32x128xf32>
    %777 = arith.addf %775, %776 : vector<32x128xf32>
    %cst_338 = arith.constant 5.000000e-01 : f32
    %778 = vector.broadcast %cst_338 : f32 to vector<32x128xf32>
    %779 = arith.mulf %778, %777 : vector<32x128xf32>
    %780 = vector.extract_strided_slice %759 {offsets = [0, 128], sizes = [32, 128], strides = [1, 1]} : vector<32x256xf32> to vector<32x128xf32>
    %cst_339 = arith.constant 5.000000e-01 : f32
    %781 = vector.broadcast %cst_339 : f32 to vector<32x128xf32>
    %782 = arith.mulf %781, %780 : vector<32x128xf32>
    %783 = math.tanh %782 : vector<32x128xf32>
    %cst_340 = arith.constant 1.000000e+00 : f32
    %784 = vector.broadcast %cst_340 : f32 to vector<32x128xf32>
    %785 = arith.addf %783, %784 : vector<32x128xf32>
    %cst_341 = arith.constant 5.000000e-01 : f32
    %786 = vector.broadcast %cst_341 : f32 to vector<32x128xf32>
    %787 = arith.mulf %786, %785 : vector<32x128xf32>
    %788 = arith.mulf %779, %771 : vector<32x128xf32>
    %789 = arith.addf %765, %788 : vector<32x128xf32>
    %790 = math.tanh %789 : vector<32x128xf32>
    %cst_342 = arith.constant 1.000000e+00 : f32
    %791 = vector.broadcast %cst_342 : f32 to vector<32x128xf32>
    %792 = arith.subf %791, %787 : vector<32x128xf32>
    %793 = arith.mulf %792, %790 : vector<32x128xf32>
    %794 = arith.mulf %787, %710 : vector<32x128xf32>
    %795 = arith.addf %793, %794 : vector<32x128xf32>
    %c8_i32 = arith.constant 8 : i32
    %c0_343 = arith.constant 0 : index
    %c0_344 = arith.constant 0 : index
    %796 = vector.load %arg20[%c0_343, %c0_344] : memref<32x128xf32, #tpu.memory_space<vmem>>, vector<32x128xf32>
    tpu.vector_store %arg20[%c0_343, %c0_344], %795 {strides = array<i32>} : memref<32x128xf32, #tpu.memory_space<vmem>>, vector<32x128xf32>,
    return
  }
  func.func @transform_0(%arg0: i32) -> (i32, i32, i32) {
    %c0_i32 = arith.constant 0 : i32
    %c0_i32_0 = arith.constant 0 : i32
    %c0_i32_1 = arith.constant 0 : i32
    return %arg0, %c0_i32, %c0_i32_0 : i32, i32, i32
  }
  func.func @transform_1(%arg0: i32) -> (i32, i32) {
    %c0_i32 = arith.constant 0 : i32
    %c0_i32_0 = arith.constant 0 : i32
    %c0_i32_1 = arith.constant 0 : i32
    return %c0_i32, %c0_i32_0 : i32, i32
  }
  func.func @transform_2(%arg0: i32) -> (i32, i32) {
    %c0_i32 = arith.constant 0 : i32
    %c0_i32_0 = arith.constant 0 : i32
    %c0_i32_1 = arith.constant 0 : i32
    return %c0_i32, %c0_i32_0 : i32, i32
  }
  func.func @transform_3(%arg0: i32) -> (i32, i32) {
    %c0_i32 = arith.constant 0 : i32
    %c0_i32_0 = arith.constant 0 : i32
    %c0_i32_1 = arith.constant 0 : i32
    return %c0_i32, %c0_i32_0 : i32, i32
  }
  func.func @transform_4(%arg0: i32) -> (i32, i32) {
    %c0_i32 = arith.constant 0 : i32
    %c0_i32_0 = arith.constant 0 : i32
    %c0_i32_1 = arith.constant 0 : i32
    return %c0_i32, %c0_i32_0 : i32, i32
  }
  func.func @transform_5(%arg0: i32) -> (i32, i32) {
    %c0_i32 = arith.constant 0 : i32
    %c0_i32_0 = arith.constant 0 : i32
    %c0_i32_1 = arith.constant 0 : i32
    return %c0_i32, %c0_i32_0 : i32, i32
  }
  func.func @transform_6(%arg0: i32) -> (i32, i32) {
    %c0_i32 = arith.constant 0 : i32
    %c0_i32_0 = arith.constant 0 : i32
    %c0_i32_1 = arith.constant 0 : i32
    return %c0_i32, %c0_i32_0 : i32, i32
  }
  func.func @transform_7(%arg0: i32) -> (i32, i32) {
    %c0_i32 = arith.constant 0 : i32
    %c0_i32_0 = arith.constant 0 : i32
    %c0_i32_1 = arith.constant 0 : i32
    return %c0_i32, %c0_i32_0 : i32, i32
  }
  func.func @transform_8(%arg0: i32) -> (i32, i32) {
    %c0_i32 = arith.constant 0 : i32
    %c0_i32_0 = arith.constant 0 : i32
    %c0_i32_1 = arith.constant 0 : i32
    return %c0_i32, %c0_i32_0 : i32, i32
  }
  func.func @transform_9(%arg0: i32) -> (i32, i32) {
    %c0_i32 = arith.constant 0 : i32
    %c0_i32_0 = arith.constant 0 : i32
    %c0_i32_1 = arith.constant 0 : i32
    return %c0_i32, %c0_i32_0 : i32, i32
  }
  func.func @transform_10(%arg0: i32) -> (i32, i32) {
    %c0_i32 = arith.constant 0 : i32
    %c0_i32_0 = arith.constant 0 : i32
    %c0_i32_1 = arith.constant 0 : i32
    return %c0_i32, %c0_i32_0 : i32, i32
  }
  func.func @transform_11(%arg0: i32) -> (i32, i32) {
    %c0_i32 = arith.constant 0 : i32
    %c0_i32_0 = arith.constant 0 : i32
    %c0_i32_1 = arith.constant 0 : i32
    return %c0_i32, %c0_i32_0 : i32, i32
  }
  func.func @transform_12(%arg0: i32) -> (i32, i32) {
    %c0_i32 = arith.constant 0 : i32
    %c0_i32_0 = arith.constant 0 : i32
    %c0_i32_1 = arith.constant 0 : i32
    return %c0_i32, %c0_i32_0 : i32, i32
  }
  func.func @transform_13(%arg0: i32) -> (i32, i32) {
    %c0_i32 = arith.constant 0 : i32
    %c0_i32_0 = arith.constant 0 : i32
    %c0_i32_1 = arith.constant 0 : i32
    return %c0_i32, %c0_i32_0 : i32, i32
  }
  func.func @transform_14(%arg0: i32) -> (i32, i32) {
    %c0_i32 = arith.constant 0 : i32
    %c0_i32_0 = arith.constant 0 : i32
    %c0_i32_1 = arith.constant 0 : i32
    return %c0_i32, %c0_i32_0 : i32, i32
  }
  func.func @transform_15(%arg0: i32) -> (i32, i32) {
    %c0_i32 = arith.constant 0 : i32
    %c0_i32_0 = arith.constant 0 : i32
    %c0_i32_1 = arith.constant 0 : i32
    return %c0_i32, %c0_i32_0 : i32, i32
  }
  func.func @transform_16(%arg0: i32) -> (i32, i32) {
    %c0_i32 = arith.constant 0 : i32
    %c0_i32_0 = arith.constant 0 : i32
    %c0_i32_1 = arith.constant 0 : i32
    return %c0_i32, %c0_i32_0 : i32, i32
  }
  func.func @transform_17(%arg0: i32) -> (i32, i32) {
    %c0_i32 = arith.constant 0 : i32
    %c0_i32_0 = arith.constant 0 : i32
    %c0_i32_1 = arith.constant 0 : i32
    return %c0_i32, %c0_i32_0 : i32, i32
  }
  func.func @transform_18(%arg0: i32) -> (i32, i32) {
    %c0_i32 = arith.constant 0 : i32
    %c0_i32_0 = arith.constant 0 : i32
    %c0_i32_1 = arith.constant 0 : i32
    return %c0_i32, %c0_i32_0 : i32, i32
  }
  func.func @transform_19(%arg0: i32) -> (i32, i32) {
    %c0_i32 = arith.constant 0 : i32
    %c0_i32_0 = arith.constant 0 : i32
    return %arg0, %c0_i32 : i32, i32
  }
}

</mosaic_0001>

<llo_original>
// kernel: tpu_custom_call.1
$region0: #{tpu_custom_call.1}
  #allocation0 [shape = 'u32[]', space=smem, size = 0x4, offset = 0x4, fixed_abs, tag = 'smem constant byte address 0x4 - core index']
  #allocation1 [shape = 'u32[144,128]{1,0:T(1,128)}', space=vmem, size = 0x12000, scoped, tag = 'internal scratch']
  #allocation2 [shape = 'bf16[8,32,384]{2,1,0:T(16,128)(2,1)}', space=vmem, size = 0x30000, scoped, tag = 'scratch operand']
  %s0 = inlined_call_operand.vmem [shape: bf16[128,8,32], index: 0, kind: input, shape index: {}]
  %s1 = inlined_call_operand.hbm [shape: bf16[32,128], index: 1, kind: input, shape index: {}]
  %s2 = inlined_call_operand.vmem [shape: f32[1,128], index: 2, kind: input, shape index: {}]
  %s3 = inlined_call_operand.hbm [shape: f32[1,128], index: 3, kind: input, shape index: {}]
  %s4 = inlined_call_operand.vmem [shape: f32[1,128], index: 4, kind: input, shape index: {}]
  %s5 = inlined_call_operand.hbm [shape: bf16[128,128], index: 5, kind: input, shape index: {}]
  %s6 = inlined_call_operand.vmem [shape: f32[1,128], index: 6, kind: input, shape index: {}]
  %s7 = inlined_call_operand.vmem [shape: f32[1,128], index: 7, kind: input, shape index: {}]
  %s8 = inlined_call_operand.vmem [shape: f32[1,128], index: 8, kind: input, shape index: {}]
  %s9 = inlined_call_operand.vmem [shape: bf16[128,384], index: 9, kind: input, shape index: {}]
  %s10 = inlined_call_operand.vmem [shape: f32[1,384], index: 10, kind: input, shape index: {}]
  %s11 = inlined_call_operand.vmem [shape: bf16[128,384], index: 11, kind: input, shape index: {}]
  %s12 = inlined_call_operand.vmem [shape: f32[1,384], index: 12, kind: input, shape index: {}]
  %s13 = inlined_call_operand.vmem [shape: bf16[256,256], index: 13, kind: input, shape index: {}]
  %s14 = inlined_call_operand.vmem [shape: f32[1,256], index: 14, kind: input, shape index: {}]
  %s15 = inlined_call_operand.hbm [shape: bf16[128,128], index: 15, kind: input, shape index: {}]
  %s16 = inlined_call_operand.vmem [shape: f32[1,128], index: 16, kind: input, shape index: {}]
  %s17 = inlined_call_operand.hbm [shape: bf16[128,128], index: 17, kind: input, shape index: {}]
  %s18 = inlined_call_operand.vmem [shape: f32[1,128], index: 18, kind: input, shape index: {}]
  %s19 = inlined_call_operand.hbm [shape: f32[128,128], index: 19, kind: output, shape index: {}]
  %s20 = sld [smem:[#allocation0]]
  $region129: #{tpu_custom_call.1} parent=0
    _
  %s22 = ssub.s32 1, %s20
  %s23 = scalar_select 0, %s22, %s20
  $region1: #{tpu_custom_call.1} parent=0
    #allocation3 [shape = 'u8[8192]{0}', space=vmem, size = 0x2000, scoped, tag = 'input window, operand 1, single buffered']
    #allocation4 [shape = 's32[2]{0}', space=sflag, size = 0x8, scoped, tag = 'scoped memory for tpu_custom_call.1']
    #allocation5 [shape = 's32[2]{0}', space=sflag, size = 0x8, scoped, tag = 'scoped memory for tpu_custom_call.1']
    #allocation6 [shape = 'u8[512]{0}', space=vmem, size = 0x400, scoped, tag = 'input window, operand 3, single buffered']
    #allocation7 [shape = 's32[1]{0}', space=sflag, size = 0x4, scoped, tag = 'scoped memory for tpu_custom_call.1']
    #allocation8 [shape = 'u8[32768]{0}', space=vmem, size = 0x8000, scoped, tag = 'input window, operand 5, single buffered']
    #allocation9 [shape = 'u8[32768]{0}', space=vmem, size = 0x8000, scoped, tag = 'input window, operand 15, single buffered']
    #allocation10 [shape = 's32[1]{0}', space=sflag, size = 0x4, scoped, tag = 'scoped memory for tpu_custom_call.1']
    #allocation11 [shape = 'u8[32768]{0}', space=vmem, size = 0x8000, scoped, tag = 'input window, operand 17, single buffered']
    #allocation12 [shape = 'u8[32768]{0}', space=vmem, size = 0x8000, scoped, tag = 'output window, operand 0']
    %24 = vsyncpa [#allocation4], 0
    %25 = vsyncpa [#allocation7], 0
    %26 = vsyncpa [#allocation10], 0
    %27 = vsyncpa [#allocation5], 0
    %s28 = scalar_lea.sflag [#allocation5], 1
    %29 = vsyncpa %s28, 0
    loop: start=0, step=1, limit=6
    $region2: #{tpu_custom_call.1} parent=1 // loop_pre_header
      _
    $region3: #{tpu_custom_call.1} parent=1 // loop_header
      %s31 = sphi 0, %s35
      %p32 = scmp.ge.s32.totalorder %s31, 6
      %s41 = sphi 0, %s43
      %s44 = sphi 0, %s41
      %s45 = sphi 0, %s44
      %s61 = sphi 0, %s45
      %s65 = sphi 0, %s65
      %s67 = sphi 0, %s65
      %s68 = sphi 0, %s67
      %s82 = sphi 0, %s68
      %s86 = sphi 0, %s86
      %s88 = sphi 0, %s86
      %s89 = sphi 0, %s88
      %s103 = sphi 0, %s89
      %s107 = sphi 0, %s107
      %s109 = sphi 0, %s107
      %s110 = sphi 0, %s109
      %s124 = sphi 0, %s110
      %s128 = sphi 0, %s128
      %s130 = sphi 0, %s128
      %s131 = sphi 0, %s130
      %s145 = sphi 0, %s131
      %s149 = sphi 0, %s149
      %s151 = sphi 0, %s149
      %s152 = sphi 0, %s151
      %s166 = sphi 0, %s152
      %s170 = sphi 0, %s170
      %s172 = sphi 0, %s170
      %s173 = sphi 0, %s172
      %s187 = sphi 0, %s173
      %s191 = sphi 0, %s191
      %s193 = sphi 0, %s191
      %s194 = sphi 0, %s193
      %s208 = sphi 0, %s194
      %s212 = sphi 0, %s212
      %s214 = sphi 0, %s212
      %s215 = sphi 0, %s214
      %s229 = sphi 0, %s215
      %s233 = sphi 0, %s233
      %s235 = sphi 0, %s233
      %s236 = sphi 0, %s235
      %s250 = sphi 0, %s236
      %s254 = sphi 0, %s254
      %s256 = sphi 0, %s254
      %s257 = sphi 0, %s256
      %s271 = sphi 0, %s257
      %s275 = sphi 0, %s275
      %s277 = sphi 0, %s275
      %s278 = sphi 0, %s277
      %s292 = sphi 0, %s278
      %s296 = sphi 0, %s296
      %s298 = sphi 0, %s296
      %s299 = sphi 0, %s298
      %s313 = sphi 0, %s299
      %s317 = sphi 0, %s317
      %s319 = sphi 0, %s317
      %s320 = sphi 0, %s319
      %s334 = sphi 0, %s320
      %s338 = sphi 0, %s338
      %s340 = sphi 0, %s338
      %s341 = sphi 0, %s340
      %s355 = sphi 0, %s341
      %s359 = sphi 0, %s359
      %s361 = sphi 0, %s359
      %s362 = sphi 0, %s361
      %s376 = sphi 0, %s362
      %s380 = sphi 0, %s380
      %s382 = sphi 0, %s380
      %s383 = sphi 0, %s382
      %s397 = sphi 0, %s383
      %s401 = sphi 0, %s401
      %s403 = sphi 0, %s401
      %s404 = sphi 0, %s403
      %s418 = sphi 0, %s404
      %s422 = sphi 0, %s422
      %s424 = sphi 0, %s422
      %s425 = sphi 0, %s424
      %s439 = sphi 0, %s425
      %s445 = sphi 0, %s447
      %s448 = sphi 0, %s445
      %s449 = sphi 0, %s448
      %s465 = sphi 0, %s449
    $region4: #{tpu_custom_call.1} parent=1 // loop_header_branch
      %34 = sbr.rel (%p32) target = $region8
    $region5: #{tpu_custom_call.1} parent=1 // loop_body
      %s36 = ssub.s32 %s31, 1
      %s37 = ssub.s32 %s31, 2
      %s38 = sadd.s32 %s31, 1
      %s39 = ssub.s32 %s31, %s38
      %p40 = scmp.eq.s32.totalorder %s39, 0
      %s42 = sadd.s32 %s41, 1
      %s43 = scalar_select %p40, %s41, %s42
      %p46 = pneg %p40
      %p47 = scmp.eq.s32.totalorder %s31, 3
      %p48 = por %p46, %p47
      %p49 = scmp.ne.s32.totalorder %s41, %s44
      %p50 = scmp.eq.s32.totalorder %s31, 0
      %p51 = por %p49, %p50
      %p52 = scmp.ne.s32.totalorder %s41, %s44
      %p53 = scmp.eq.s32.totalorder %s36, 3
      %p54 = por %p52, %p53
      %p55 = scmp.ne.s32.totalorder %s44, %s45
      %p56 = scmp.eq.s32.totalorder %s36, 0
      %p57 = por %p55, %p56
      %p58 = scmp.ne.s32.totalorder %s44, %s45
      %p59 = scmp.eq.s32.totalorder %s37, 3
      %p60 = por %p58, %p59
      %p62 = scmp.ne.s32.totalorder %s45, %s61
      %p63 = scmp.eq.s32.totalorder %s37, 0
      %p64 = por %p62, %p63
      %s66 = sadd.s32 %s65, 1
      %p69 = scmp.eq.s32.totalorder %s31, 3
      %p70 = scmp.ne.s32.totalorder %s65, %s67
      %p71 = scmp.eq.s32.totalorder %s31, 0
      %p72 = por %p70, %p71
      %p73 = scmp.ne.s32.totalorder %s65, %s67
      %p74 = scmp.eq.s32.totalorder %s36, 3
      %p75 = por %p73, %p74
      %p76 = scmp.ne.s32.totalorder %s67, %s68
      %p77 = scmp.eq.s32.totalorder %s36, 0
      %p78 = por %p76, %p77
      %p79 = scmp.ne.s32.totalorder %s67, %s68
      %p80 = scmp.eq.s32.totalorder %s37, 3
      %p81 = por %p79, %p80
      %p83 = scmp.ne.s32.totalorder %s68, %s82
      %p84 = scmp.eq.s32.totalorder %s37, 0
      %p85 = por %p83, %p84
      %s87 = sadd.s32 %s86, 1
      %p90 = scmp.eq.s32.totalorder %s31, 3
      %p91 = scmp.ne.s32.totalorder %s86, %s88
      %p92 = scmp.eq.s32.totalorder %s31, 0
      %p93 = por %p91, %p92
      %p94 = scmp.ne.s32.totalorder %s86, %s88
      %p95 = scmp.eq.s32.totalorder %s36, 3
      %p96 = por %p94, %p95
      %p97 = scmp.ne.s32.totalorder %s88, %s89
      %p98 = scmp.eq.s32.totalorder %s36, 0
      %p99 = por %p97, %p98
      %p100 = scmp.ne.s32.totalorder %s88, %s89
      %p101 = scmp.eq.s32.totalorder %s37, 3
      %p102 = por %p100, %p101
      %p104 = scmp.ne.s32.totalorder %s89, %s103
      %p105 = scmp.eq.s32.totalorder %s37, 0
      %p106 = por %p104, %p105
      %s108 = sadd.s32 %s107, 1
      %p111 = scmp.eq.s32.totalorder %s31, 3
      %p112 = scmp.ne.s32.totalorder %s107, %s109
      %p113 = scmp.eq.s32.totalorder %s31, 0
      %p114 = por %p112, %p113
      %p115 = scmp.ne.s32.totalorder %s107, %s109
      %p116 = scmp.eq.s32.totalorder %s36, 3
      %p117 = por %p115, %p116
      %p118 = scmp.ne.s32.totalorder %s109, %s110
      %p119 = scmp.eq.s32.totalorder %s36, 0
      %p120 = por %p118, %p119
      %p121 = scmp.ne.s32.totalorder %s109, %s110
      %p122 = scmp.eq.s32.totalorder %s37, 3
      %p123 = por %p121, %p122
      %p125 = scmp.ne.s32.totalorder %s110, %s124
      %p126 = scmp.eq.s32.totalorder %s37, 0
      %p127 = por %p125, %p126
      %s129 = sadd.s32 %s128, 1
      %p132 = scmp.eq.s32.totalorder %s31, 3
      %p133 = scmp.ne.s32.totalorder %s128, %s130
      %p134 = scmp.eq.s32.totalorder %s31, 0
      %p135 = por %p133, %p134
      %p136 = scmp.ne.s32.totalorder %s128, %s130
      %p137 = scmp.eq.s32.totalorder %s36, 3
      %p138 = por %p136, %p137
      %p139 = scmp.ne.s32.totalorder %s130, %s131
      %p140 = scmp.eq.s32.totalorder %s36, 0
      %p141 = por %p139, %p140
      %p142 = scmp.ne.s32.totalorder %s130, %s131
      %p143 = scmp.eq.s32.totalorder %s37, 3
      %p144 = por %p142, %p143
      %p146 = scmp.ne.s32.totalorder %s131, %s145
      %p147 = scmp.eq.s32.totalorder %s37, 0
      %p148 = por %p146, %p147
      %s150 = sadd.s32 %s149, 1
      %p153 = scmp.eq.s32.totalorder %s31, 3
      %p154 = scmp.ne.s32.totalorder %s149, %s151
      %p155 = scmp.eq.s32.totalorder %s31, 0
      %p156 = por %p154, %p155
      %p157 = scmp.ne.s32.totalorder %s149, %s151
      %p158 = scmp.eq.s32.totalorder %s36, 3
      %p159 = por %p157, %p158
      %p160 = scmp.ne.s32.totalorder %s151, %s152
      %p161 = scmp.eq.s32.totalorder %s36, 0
      %p162 = por %p160, %p161
      %p163 = scmp.ne.s32.totalorder %s151, %s152
      %p164 = scmp.eq.s32.totalorder %s37, 3
      %p165 = por %p163, %p164
      %p167 = scmp.ne.s32.totalorder %s152, %s166
      %p168 = scmp.eq.s32.totalorder %s37, 0
      %p169 = por %p167, %p168
      %s171 = sadd.s32 %s170, 1
      %p174 = scmp.eq.s32.totalorder %s31, 3
      %p175 = scmp.ne.s32.totalorder %s170, %s172
      %p176 = scmp.eq.s32.totalorder %s31, 0
      %p177 = por %p175, %p176
      %p178 = scmp.ne.s32.totalorder %s170, %s172
      %p179 = scmp.eq.s32.totalorder %s36, 3
      %p180 = por %p178, %p179
      %p181 = scmp.ne.s32.totalorder %s172, %s173
      %p182 = scmp.eq.s32.totalorder %s36, 0
      %p183 = por %p181, %p182
      %p184 = scmp.ne.s32.totalorder %s172, %s173
      %p185 = scmp.eq.s32.totalorder %s37, 3
      %p186 = por %p184, %p185
      %p188 = scmp.ne.s32.totalorder %s173, %s187
      %p189 = scmp.eq.s32.totalorder %s37, 0
      %p190 = por %p188, %p189
      %s192 = sadd.s32 %s191, 1
      %p195 = scmp.eq.s32.totalorder %s31, 3
      %p196 = scmp.ne.s32.totalorder %s191, %s193
      %p197 = scmp.eq.s32.totalorder %s31, 0
      %p198 = por %p196, %p197
      %p199 = scmp.ne.s32.totalorder %s191, %s193
      %p200 = scmp.eq.s32.totalorder %s36, 3
      %p201 = por %p199, %p200
      %p202 = scmp.ne.s32.totalorder %s193, %s194
      %p203 = scmp.eq.s32.totalorder %s36, 0
      %p204 = por %p202, %p203
      %p205 = scmp.ne.s32.totalorder %s193, %s194
      %p206 = scmp.eq.s32.totalorder %s37, 3
      %p207 = por %p205, %p206
      %p209 = scmp.ne.s32.totalorder %s194, %s208
      %p210 = scmp.eq.s32.totalorder %s37, 0
      %p211 = por %p209, %p210
      %s213 = sadd.s32 %s212, 1
      %p216 = scmp.eq.s32.totalorder %s31, 3
      %p217 = scmp.ne.s32.totalorder %s212, %s214
      %p218 = scmp.eq.s32.totalorder %s31, 0
      %p219 = por %p217, %p218
      %p220 = scmp.ne.s32.totalorder %s212, %s214
      %p221 = scmp.eq.s32.totalorder %s36, 3
      %p222 = por %p220, %p221
      %p223 = scmp.ne.s32.totalorder %s214, %s215
      %p224 = scmp.eq.s32.totalorder %s36, 0
      %p225 = por %p223, %p224
      %p226 = scmp.ne.s32.totalorder %s214, %s215
      %p227 = scmp.eq.s32.totalorder %s37, 3
      %p228 = por %p226, %p227
      %p230 = scmp.ne.s32.totalorder %s215, %s229
      %p231 = scmp.eq.s32.totalorder %s37, 0
      %p232 = por %p230, %p231
      %s234 = sadd.s32 %s233, 1
      %p237 = scmp.eq.s32.totalorder %s31, 3
      %p238 = scmp.ne.s32.totalorder %s233, %s235
      %p239 = scmp.eq.s32.totalorder %s31, 0
      %p240 = por %p238, %p239
      %p241 = scmp.ne.s32.totalorder %s233, %s235
      %p242 = scmp.eq.s32.totalorder %s36, 3
      %p243 = por %p241, %p242
      %p244 = scmp.ne.s32.totalorder %s235, %s236
      %p245 = scmp.eq.s32.totalorder %s36, 0
      %p246 = por %p244, %p245
      %p247 = scmp.ne.s32.totalorder %s235, %s236
      %p248 = scmp.eq.s32.totalorder %s37, 3
      %p249 = por %p247, %p248
      %p251 = scmp.ne.s32.totalorder %s236, %s250
      %p252 = scmp.eq.s32.totalorder %s37, 0
      %p253 = por %p251, %p252
      %s255 = sadd.s32 %s254, 1
      %p258 = scmp.eq.s32.totalorder %s31, 3
      %p259 = scmp.ne.s32.totalorder %s254, %s256
      %p260 = scmp.eq.s32.totalorder %s31, 0
      %p261 = por %p259, %p260
      %p262 = scmp.ne.s32.totalorder %s254, %s256
      %p263 = scmp.eq.s32.totalorder %s36, 3
      %p264 = por %p262, %p263
      %p265 = scmp.ne.s32.totalorder %s256, %s257
      %p266 = scmp.eq.s32.totalorder %s36, 0
      %p267 = por %p265, %p266
      %p268 = scmp.ne.s32.totalorder %s256, %s257
      %p269 = scmp.eq.s32.totalorder %s37, 3
      %p270 = por %p268, %p269
      %p272 = scmp.ne.s32.totalorder %s257, %s271
      %p273 = scmp.eq.s32.totalorder %s37, 0
      %p274 = por %p272, %p273
      %s276 = sadd.s32 %s275, 1
      %p279 = scmp.eq.s32.totalorder %s31, 3
      %p280 = scmp.ne.s32.totalorder %s275, %s277
      %p281 = scmp.eq.s32.totalorder %s31, 0
      %p282 = por %p280, %p281
      %p283 = scmp.ne.s32.totalorder %s275, %s277
      %p284 = scmp.eq.s32.totalorder %s36, 3
      %p285 = por %p283, %p284
      %p286 = scmp.ne.s32.totalorder %s277, %s278
      %p287 = scmp.eq.s32.totalorder %s36, 0
      %p288 = por %p286, %p287
      %p289 = scmp.ne.s32.totalorder %s277, %s278
      %p290 = scmp.eq.s32.totalorder %s37, 3
      %p291 = por %p289, %p290
      %p293 = scmp.ne.s32.totalorder %s278, %s292
      %p294 = scmp.eq.s32.totalorder %s37, 0
      %p295 = por %p293, %p294
      %s297 = sadd.s32 %s296, 1
      %p300 = scmp.eq.s32.totalorder %s31, 3
      %p301 = scmp.ne.s32.totalorder %s296, %s298
      %p302 = scmp.eq.s32.totalorder %s31, 0
      %p303 = por %p301, %p302
      %p304 = scmp.ne.s32.totalorder %s296, %s298
      %p305 = scmp.eq.s32.totalorder %s36, 3
      %p306 = por %p304, %p305
      %p307 = scmp.ne.s32.totalorder %s298, %s299
      %p308 = scmp.eq.s32.totalorder %s36, 0
      %p309 = por %p307, %p308
      %p310 = scmp.ne.s32.totalorder %s298, %s299
      %p311 = scmp.eq.s32.totalorder %s37, 3
      %p312 = por %p310, %p311
      %p314 = scmp.ne.s32.totalorder %s299, %s313
      %p315 = scmp.eq.s32.totalorder %s37, 0
      %p316 = por %p314, %p315
      %s318 = sadd.s32 %s317, 1
      %p321 = scmp.eq.s32.totalorder %s31, 3
      %p322 = scmp.ne.s32.totalorder %s317, %s319
      %p323 = scmp.eq.s32.totalorder %s31, 0
      %p324 = por %p322, %p323
      %p325 = scmp.ne.s32.totalorder %s317, %s319
      %p326 = scmp.eq.s32.totalorder %s36, 3
      %p327 = por %p325, %p326
      %p328 = scmp.ne.s32.totalorder %s319, %s320
      %p329 = scmp.eq.s32.totalorder %s36, 0
      %p330 = por %p328, %p329
      %p331 = scmp.ne.s32.totalorder %s319, %s320
      %p332 = scmp.eq.s32.totalorder %s37, 3
      %p333 = por %p331, %p332
      %p335 = scmp.ne.s32.totalorder %s320, %s334
      %p336 = scmp.eq.s32.totalorder %s37, 0
      %p337 = por %p335, %p336
      %s339 = sadd.s32 %s338, 1
      %p342 = scmp.eq.s32.totalorder %s31, 3
      %p343 = scmp.ne.s32.totalorder %s338, %s340
      %p344 = scmp.eq.s32.totalorder %s31, 0
      %p345 = por %p343, %p344
      %p346 = scmp.ne.s32.totalorder %s338, %s340
      %p347 = scmp.eq.s32.totalorder %s36, 3
      %p348 = por %p346, %p347
      %p349 = scmp.ne.s32.totalorder %s340, %s341
      %p350 = scmp.eq.s32.totalorder %s36, 0
      %p351 = por %p349, %p350
      %p352 = scmp.ne.s32.totalorder %s340, %s341
      %p353 = scmp.eq.s32.totalorder %s37, 3
      %p354 = por %p352, %p353
      %p356 = scmp.ne.s32.totalorder %s341, %s355
      %p357 = scmp.eq.s32.totalorder %s37, 0
      %p358 = por %p356, %p357
      %s360 = sadd.s32 %s359, 1
      %p363 = scmp.eq.s32.totalorder %s31, 3
      %p364 = scmp.ne.s32.totalorder %s359, %s361
      %p365 = scmp.eq.s32.totalorder %s31, 0
      %p366 = por %p364, %p365
      %p367 = scmp.ne.s32.totalorder %s359, %s361
      %p368 = scmp.eq.s32.totalorder %s36, 3
      %p369 = por %p367, %p368
      %p370 = scmp.ne.s32.totalorder %s361, %s362
      %p371 = scmp.eq.s32.totalorder %s36, 0
      %p372 = por %p370, %p371
      %p373 = scmp.ne.s32.totalorder %s361, %s362
      %p374 = scmp.eq.s32.totalorder %s37, 3
      %p375 = por %p373, %p374
      %p377 = scmp.ne.s32.totalorder %s362, %s376
      %p378 = scmp.eq.s32.totalorder %s37, 0
      %p379 = por %p377, %p378
      %s381 = sadd.s32 %s380, 1
      %p384 = scmp.eq.s32.totalorder %s31, 3
      %p385 = scmp.ne.s32.totalorder %s380, %s382
      %p386 = scmp.eq.s32.totalorder %s31, 0
      %p387 = por %p385, %p386
      %p388 = scmp.ne.s32.totalorder %s380, %s382
      %p389 = scmp.eq.s32.totalorder %s36, 3
      %p390 = por %p388, %p389
      %p391 = scmp.ne.s32.totalorder %s382, %s383
      %p392 = scmp.eq.s32.totalorder %s36, 0
      %p393 = por %p391, %p392
      %p394 = scmp.ne.s32.totalorder %s382, %s383
      %p395 = scmp.eq.s32.totalorder %s37, 3
      %p396 = por %p394, %p395
      %p398 = scmp.ne.s32.totalorder %s383, %s397
      %p399 = scmp.eq.s32.totalorder %s37, 0
      %p400 = por %p398, %p399
      %s402 = sadd.s32 %s401, 1
      %p405 = scmp.eq.s32.totalorder %s31, 3
      %p406 = scmp.ne.s32.totalorder %s401, %s403
      %p407 = scmp.eq.s32.totalorder %s31, 0
      %p408 = por %p406, %p407
      %p409 = scmp.ne.s32.totalorder %s401, %s403
      %p410 = scmp.eq.s32.totalorder %s36, 3
      %p411 = por %p409, %p410
      %p412 = scmp.ne.s32.totalorder %s403, %s404
      %p413 = scmp.eq.s32.totalorder %s36, 0
      %p414 = por %p412, %p413
      %p415 = scmp.ne.s32.totalorder %s403, %s404
      %p416 = scmp.eq.s32.totalorder %s37, 3
      %p417 = por %p415, %p416
      %p419 = scmp.ne.s32.totalorder %s404, %s418
      %p420 = scmp.eq.s32.totalorder %s37, 0
      %p421 = por %p419, %p420
      %s423 = sadd.s32 %s422, 1
      %p426 = scmp.eq.s32.totalorder %s31, 3
      %p427 = scmp.ne.s32.totalorder %s422, %s424
      %p428 = scmp.eq.s32.totalorder %s31, 0
      %p429 = por %p427, %p428
      %p430 = scmp.ne.s32.totalorder %s422, %s424
      %p431 = scmp.eq.s32.totalorder %s36, 3
      %p432 = por %p430, %p431
      %p433 = scmp.ne.s32.totalorder %s424, %s425
      %p434 = scmp.eq.s32.totalorder %s36, 0
      %p435 = por %p433, %p434
      %p436 = scmp.ne.s32.totalorder %s424, %s425
      %p437 = scmp.eq.s32.totalorder %s37, 3
      %p438 = por %p436, %p437
      %p440 = scmp.ne.s32.totalorder %s425, %s439
      %p441 = scmp.eq.s32.totalorder %s37, 0
      %p442 = por %p440, %p441
      %s443 = ssub.s32 %s31, %s38
      %p444 = scmp.eq.s32.totalorder %s443, 0
      %s446 = sadd.s32 %s445, 1
      %s447 = scalar_select %p444, %s445, %s446
      %p450 = pneg %p444
      %p451 = scmp.eq.s32.totalorder %s31, 3
      %p452 = por %p450, %p451
      %p453 = scmp.ne.s32.totalorder %s445, %s448
      %p454 = scmp.eq.s32.totalorder %s31, 0
      %p455 = por %p453, %p454
      %p456 = scmp.ne.s32.totalorder %s445, %s448
      %p457 = scmp.eq.s32.totalorder %s36, 3
      %p458 = por %p456, %p457
      %p459 = scmp.ne.s32.totalorder %s448, %s449
      %p460 = scmp.eq.s32.totalorder %s36, 0
      %p461 = por %p459, %p460
      %p462 = scmp.ne.s32.totalorder %s448, %s449
      %p463 = scmp.eq.s32.totalorder %s37, 3
      %p464 = por %p462, %p463
      %p466 = scmp.ne.s32.totalorder %s449, %s465
      %p467 = scmp.eq.s32.totalorder %s37, 0
      %p468 = por %p466, %p467
      %p469 = scmp.le.s32.totalorder 1, %s31
      %p470 = scmp.lt.s32.totalorder %s31, 5
      %p471 = pnand %p469, %p470
      %p472 = pneg %p471
      // Predicated region
      $region9: #{tpu_custom_call.1} parent=5 // pred_check
        _
      $region10: #{tpu_custom_call.1} parent=5 // pred_check_branch
        %474 = sbr.rel (%p471) target = $region12
      $region11: #{tpu_custom_call.1} parent=5 // pred_region
        %s475 = ssub.s32 %s31, 1
        // Predicated region
        $region13: #{tpu_custom_call.1} parent=11 // pred_check
          %p476 = pneg %p78
        $region14: #{tpu_custom_call.1} parent=11 // pred_check_branch
          %478 = sbr.rel (%p476) target = $region16
        $region15: #{tpu_custom_call.1} parent=11 // pred_region
          %s480 = ssub.s32 256, 256
          %481 = vsyncadd [#allocation4], %s480
          %s482 = sshll.u32 [#allocation3], 4
          %s483 = int_to_ptr.vmem [resolvable:$true] %s482
          %488 = dma.hbm_to_vmem [thread:$0]  %s1, 256, %s483, [#allocation4], 64, 64, 4
        $region16: #{tpu_custom_call.1} parent=11 // pred_fallthru
          _
        // Predicated region
        $region17: #{tpu_custom_call.1} parent=11 // pred_check
          %p489 = pneg %p99
        $region18: #{tpu_custom_call.1} parent=11 // pred_check_branch
          %491 = sbr.rel (%p489) target = $region20
        $region19: #{tpu_custom_call.1} parent=11 // pred_region
          _
        $region20: #{tpu_custom_call.1} parent=11 // pred_fallthru
          _
        // Predicated region
        $region21: #{tpu_custom_call.1} parent=11 // pred_check
          %p492 = pneg %p120
        $region22: #{tpu_custom_call.1} parent=11 // pred_check_branch
          %494 = sbr.rel (%p492) target = $region24
        $region23: #{tpu_custom_call.1} parent=11 // pred_region
          %s496 = ssub.s32 16, 16
          %497 = vsyncadd [#allocation7], %s496
          %s499 = sshll.u32 [#allocation6], 4
          %s500 = int_to_ptr.vmem [resolvable:$true] %s499
          %502 = dma.hbm_to_vmem [thread:$0]  %s3, 16, %s500, [#allocation7]
        $region24: #{tpu_custom_call.1} parent=11 // pred_fallthru
          _
        // Predicated region
        $region25: #{tpu_custom_call.1} parent=11 // pred_check
          %p503 = pneg %p141
        $region26: #{tpu_custom_call.1} parent=11 // pred_check_branch
          %505 = sbr.rel (%p503) target = $region28
        $region27: #{tpu_custom_call.1} parent=11 // pred_region
          _
        $region28: #{tpu_custom_call.1} parent=11 // pred_fallthru
          _
        // Predicated region
        $region29: #{tpu_custom_call.1} parent=11 // pred_check
          %p506 = pneg %p162
        $region30: #{tpu_custom_call.1} parent=11 // pred_check_branch
          %508 = sbr.rel (%p506) target = $region32
        $region31: #{tpu_custom_call.1} parent=11 // pred_region
          %s510 = ssub.s32 1024, 1024
          %511 = vsyncadd [#allocation7], %s510
          %s512 = sshll.u32 [#allocation8], 4
          %s513 = int_to_ptr.vmem [resolvable:$true] %s512
          %518 = dma.hbm_to_vmem [thread:$0]  %s5, 1024, %s513, [#allocation7], 64, 64, 4
        $region32: #{tpu_custom_call.1} parent=11 // pred_fallthru
          _
        // Predicated region
        $region33: #{tpu_custom_call.1} parent=11 // pred_check
          %p519 = pneg %p183
        $region34: #{tpu_custom_call.1} parent=11 // pred_check_branch
          %521 = sbr.rel (%p519) target = $region36
        $region35: #{tpu_custom_call.1} parent=11 // pred_region
          _
        $region36: #{tpu_custom_call.1} parent=11 // pred_fallthru
          _
        // Predicated region
        $region37: #{tpu_custom_call.1} parent=11 // pred_check
          %p522 = pneg %p204
        $region38: #{tpu_custom_call.1} parent=11 // pred_check_branch
          %524 = sbr.rel (%p522) target = $region40
        $region39: #{tpu_custom_call.1} parent=11 // pred_region
          _
        $region40: #{tpu_custom_call.1} parent=11 // pred_fallthru
          _
        // Predicated region
        $region41: #{tpu_custom_call.1} parent=11 // pred_check
          %p525 = pneg %p225
        $region42: #{tpu_custom_call.1} parent=11 // pred_check_branch
          %527 = sbr.rel (%p525) target = $region44
        $region43: #{tpu_custom_call.1} parent=11 // pred_region
          _
        $region44: #{tpu_custom_call.1} parent=11 // pred_fallthru
          _
        // Predicated region
        $region45: #{tpu_custom_call.1} parent=11 // pred_check
          %p528 = pneg %p246
        $region46: #{tpu_custom_call.1} parent=11 // pred_check_branch
          %530 = sbr.rel (%p528) target = $region48
        $region47: #{tpu_custom_call.1} parent=11 // pred_region
          _
        $region48: #{tpu_custom_call.1} parent=11 // pred_fallthru
          _
        // Predicated region
        $region49: #{tpu_custom_call.1} parent=11 // pred_check
          %p531 = pneg %p267
        $region50: #{tpu_custom_call.1} parent=11 // pred_check_branch
          %533 = sbr.rel (%p531) target = $region52
        $region51: #{tpu_custom_call.1} parent=11 // pred_region
          _
        $region52: #{tpu_custom_call.1} parent=11 // pred_fallthru
          _
        // Predicated region
        $region53: #{tpu_custom_call.1} parent=11 // pred_check
          %p534 = pneg %p288
        $region54: #{tpu_custom_call.1} parent=11 // pred_check_branch
          %536 = sbr.rel (%p534) target = $region56
        $region55: #{tpu_custom_call.1} parent=11 // pred_region
          _
        $region56: #{tpu_custom_call.1} parent=11 // pred_fallthru
          _
        // Predicated region
        $region57: #{tpu_custom_call.1} parent=11 // pred_check
          %p537 = pneg %p309
        $region58: #{tpu_custom_call.1} parent=11 // pred_check_branch
          %539 = sbr.rel (%p537) target = $region60
        $region59: #{tpu_custom_call.1} parent=11 // pred_region
          _
        $region60: #{tpu_custom_call.1} parent=11 // pred_fallthru
          _
        // Predicated region
        $region61: #{tpu_custom_call.1} parent=11 // pred_check
          %p540 = pneg %p330
        $region62: #{tpu_custom_call.1} parent=11 // pred_check_branch
          %542 = sbr.rel (%p540) target = $region64
        $region63: #{tpu_custom_call.1} parent=11 // pred_region
          _
        $region64: #{tpu_custom_call.1} parent=11 // pred_fallthru
          _
        // Predicated region
        $region65: #{tpu_custom_call.1} parent=11 // pred_check
          %p543 = pneg %p351
        $region66: #{tpu_custom_call.1} parent=11 // pred_check_branch
          %545 = sbr.rel (%p543) target = $region68
        $region67: #{tpu_custom_call.1} parent=11 // pred_region
          _
        $region68: #{tpu_custom_call.1} parent=11 // pred_fallthru
          _
        // Predicated region
        $region69: #{tpu_custom_call.1} parent=11 // pred_check
          %p546 = pneg %p372
        $region70: #{tpu_custom_call.1} parent=11 // pred_check_branch
          %548 = sbr.rel (%p546) target = $region72
        $region71: #{tpu_custom_call.1} parent=11 // pred_region
          %s550 = ssub.s32 1024, 1024
          %551 = vsyncadd [#allocation10], %s550
          %s552 = sshll.u32 [#allocation9], 4
          %s553 = int_to_ptr.vmem [resolvable:$true] %s552
          %558 = dma.hbm_to_vmem [thread:$0]  %s15, 1024, %s553, [#allocation10], 64, 64, 4
        $region72: #{tpu_custom_call.1} parent=11 // pred_fallthru
          _
        // Predicated region
        $region73: #{tpu_custom_call.1} parent=11 // pred_check
          %p559 = pneg %p393
        $region74: #{tpu_custom_call.1} parent=11 // pred_check_branch
          %561 = sbr.rel (%p559) target = $region76
        $region75: #{tpu_custom_call.1} parent=11 // pred_region
          _
        $region76: #{tpu_custom_call.1} parent=11 // pred_fallthru
          _
        // Predicated region
        $region77: #{tpu_custom_call.1} parent=11 // pred_check
          %p562 = pneg %p414
        $region78: #{tpu_custom_call.1} parent=11 // pred_check_branch
          %564 = sbr.rel (%p562) target = $region80
        $region79: #{tpu_custom_call.1} parent=11 // pred_region
          %s566 = ssub.s32 1024, 1024
          %567 = vsyncadd [#allocation10], %s566
          %s568 = sshll.u32 [#allocation11], 4
          %s569 = int_to_ptr.vmem [resolvable:$true] %s568
          %574 = dma.hbm_to_vmem [thread:$0]  %s17, 1024, %s569, [#allocation10], 64, 64, 4
        $region80: #{tpu_custom_call.1} parent=11 // pred_fallthru
          _
        // Predicated region
        $region81: #{tpu_custom_call.1} parent=11 // pred_check
          %p575 = pneg %p435
        $region82: #{tpu_custom_call.1} parent=11 // pred_check_branch
          %577 = sbr.rel (%p575) target = $region84
        $region83: #{tpu_custom_call.1} parent=11 // pred_region
          _
        $region84: #{tpu_custom_call.1} parent=11 // pred_fallthru
          _
      $region12: #{tpu_custom_call.1} parent=5 // pred_fallthru
        _
      %p578 = scmp.lt.s32.totalorder %s31, 4
      // Predicated region
      $region85: #{tpu_custom_call.1} parent=5 // pred_check
        %p579 = pneg %p578
      $region86: #{tpu_custom_call.1} parent=5 // pred_check_branch
        %581 = sbr.rel (%p579) target = $region88
      $region87: #{tpu_custom_call.1} parent=5 // pred_region
        // Predicated region
        $region89: #{tpu_custom_call.1} parent=87 // pred_check
          %p582 = pneg %p51
        $region90: #{tpu_custom_call.1} parent=87 // pred_check_branch
          %584 = sbr.rel (%p582) target = $region92
        $region91: #{tpu_custom_call.1} parent=87 // pred_region
          %s585 = smul.u32 32, %s31
          %p586 = scmp.lt.s32.totalorder %s585, 127
          %s587 = scalar_select %p586, %s585, 127
          %s588 = smul.addr %s587, 4
          %s589 = scalar_lea.vmem %s0, %s588
          %s590 = smul.u32 32, %s31
        $region92: #{tpu_custom_call.1} parent=87 // pred_fallthru
          _
      $region88: #{tpu_custom_call.1} parent=5 // pred_fallthru
        _
      %p591 = scmp.le.s32.totalorder 1, %s31
      %p592 = scmp.lt.s32.totalorder %s31, 5
      %p593 = pnand %p591, %p592
      %p594 = pneg %p593
      // Predicated region
      $region93: #{tpu_custom_call.1} parent=5 // pred_check
        _
      $region94: #{tpu_custom_call.1} parent=5 // pred_check_branch
        %596 = sbr.rel (%p593) target = $region96
      $region95: #{tpu_custom_call.1} parent=5 // pred_region
        %s597 = ssub.s32 %s31, 1
        // Predicated region
        $region97: #{tpu_custom_call.1} parent=95 // pred_check
          %p598 = pneg %p78
        $region98: #{tpu_custom_call.1} parent=95 // pred_check_branch
          %600 = sbr.rel (%p598) target = $region100
        $region99: #{tpu_custom_call.1} parent=95 // pred_region
          %601 = dma.done [#allocation4], 256
        $region100: #{tpu_custom_call.1} parent=95 // pred_fallthru
          _
        // Predicated region
        $region101: #{tpu_custom_call.1} parent=95 // pred_check
          %p602 = pneg %p120
        $region102: #{tpu_custom_call.1} parent=95 // pred_check_branch
          %604 = sbr.rel (%p602) target = $region104
        $region103: #{tpu_custom_call.1} parent=95 // pred_region
          %605 = dma.done [#allocation7], 16
        $region104: #{tpu_custom_call.1} parent=95 // pred_fallthru
          _
        // Predicated region
        $region105: #{tpu_custom_call.1} parent=95 // pred_check
          %p606 = pneg %p162
        $region106: #{tpu_custom_call.1} parent=95 // pred_check_branch
          %608 = sbr.rel (%p606) target = $region108
        $region107: #{tpu_custom_call.1} parent=95 // pred_region
          %609 = dma.done [#allocation7], 1024
        $region108: #{tpu_custom_call.1} parent=95 // pred_fallthru
          _
        // Predicated region
        $region109: #{tpu_custom_call.1} parent=95 // pred_check
          %p610 = pneg %p372
        $region110: #{tpu_custom_call.1} parent=95 // pred_check_branch
          %612 = sbr.rel (%p610) target = $region112
        $region111: #{tpu_custom_call.1} parent=95 // pred_region
          %613 = dma.done [#allocation10], 1024
        $region112: #{tpu_custom_call.1} parent=95 // pred_fallthru
          _
        // Predicated region
        $region113: #{tpu_custom_call.1} parent=95 // pred_check
          %p614 = pneg %p414
        $region114: #{tpu_custom_call.1} parent=95 // pred_check_branch
          %616 = sbr.rel (%p614) target = $region116
        $region115: #{tpu_custom_call.1} parent=95 // pred_region
          %617 = dma.done [#allocation10], 1024
        $region116: #{tpu_custom_call.1} parent=95 // pred_fallthru
          _
        %s618 = smul.u32 32, %s36
        %p619 = scmp.lt.s32.totalorder %s618, 127
        %s620 = scalar_select %p619, %s618, 127
        %s621 = smul.addr %s620, 4
        %s622 = scalar_lea.vmem %s0, %s621
        %p623 = pneg %p57
        %p624 = pneg %p54
        %p625 = pneg %p78
        %p626 = pneg %p75
        %p627 = pneg %p99
        %p628 = pneg %p96
        %p629 = pneg %p120
        %p630 = pneg %p117
        %p631 = pneg %p141
        %p632 = pneg %p138
        %p633 = pneg %p162
        %p634 = pneg %p159
        %p635 = pneg %p183
        %p636 = pneg %p180
        %p637 = pneg %p204
        %p638 = pneg %p201
        %p639 = pneg %p225
        %p640 = pneg %p222
        %p641 = pneg %p246
        %p642 = pneg %p243
        %p643 = pneg %p267
        %p644 = pneg %p264
        %p645 = pneg %p288
        %p646 = pneg %p285
        %p647 = pneg %p309
        %p648 = pneg %p306
        %p649 = pneg %p330
        %p650 = pneg %p327
        %p651 = pneg %p351
        %p652 = pneg %p348
        %p653 = pneg %p372
        %p654 = pneg %p369
        %p655 = pneg %p393
        %p656 = pneg %p390
        %p657 = pneg %p414
        %p658 = pneg %p411
        %p659 = pneg %p435
        %p660 = pneg %p432
        %p661 = pneg %p461
        %p662 = pneg %p458
        %s663 = sand.u32 %s448, 1
        %s664 = scalar_lea.sflag [#allocation5], %s663
        %s665 = sand.u32 %s448, 1
        %s666 = smul.addr %s665, 32
        %s667 = scalar_lea.vmem [#allocation12], %s666
        %s668 = smul.u32 32, %s36
        %p669 = scmp.lt.s32.totalorder %s668, 127
        %s670 = scalar_select %p669, %s668, 127
        %s671 = smul.addr %s670, 4
        %s672 = scalar_lea.vmem %s0, %s671
        %s673 = smul.u32 32, %s36
        %s674 = smul.u32 4, %s36
        %v676 = vld [vmem:[%s672] sm:$0xf]
        %v677 = vld [vmem:[%s672 + $0x4] sm:$0xf]
        %v678 = vld [vmem:[%s672 + $0x8] sm:$0xf]
        %v679 = vld [vmem:[%s672 + $0xc] sm:$0xf]
        %v680 = vld [vmem:[%s672 + $0x10] sm:$0xf]
        %v681 = vld [vmem:[%s672 + $0x14] sm:$0xf]
        %v682 = vld [vmem:[%s672 + $0x18] sm:$0xf]
        %v683 = vld [vmem:[%s672 + $0x1c] sm:$0xf]
        %v684 = vld [vmem:[%s672 + $0x20] sm:$0xf]
        %v685 = vld [vmem:[%s672 + $0x24] sm:$0xf]
        %v686 = vld [vmem:[%s672 + $0x28] sm:$0xf]
        %v687 = vld [vmem:[%s672 + $0x2c] sm:$0xf]
        %v688 = vld [vmem:[%s672 + $0x30] sm:$0xf]
        %v689 = vld [vmem:[%s672 + $0x34] sm:$0xf]
        %v690 = vld [vmem:[%s672 + $0x38] sm:$0xf]
        %v691 = vld [vmem:[%s672 + $0x3c] sm:$0xf]
        %v692 = vld [vmem:[%s672 + $0x40] sm:$0xf]
        %v693 = vld [vmem:[%s672 + $0x44] sm:$0xf]
        %v694 = vld [vmem:[%s672 + $0x48] sm:$0xf]
        %v695 = vld [vmem:[%s672 + $0x4c] sm:$0xf]
        %v696 = vld [vmem:[%s672 + $0x50] sm:$0xf]
        %v697 = vld [vmem:[%s672 + $0x54] sm:$0xf]
        %v698 = vld [vmem:[%s672 + $0x58] sm:$0xf]
        %v699 = vld [vmem:[%s672 + $0x5c] sm:$0xf]
        %v700 = vld [vmem:[%s672 + $0x60] sm:$0xf]
        %v701 = vld [vmem:[%s672 + $0x64] sm:$0xf]
        %v702 = vld [vmem:[%s672 + $0x68] sm:$0xf]
        %v703 = vld [vmem:[%s672 + $0x6c] sm:$0xf]
        %v704 = vld [vmem:[%s672 + $0x70] sm:$0xf]
        %v705 = vld [vmem:[%s672 + $0x74] sm:$0xf]
        %v706 = vld [vmem:[%s672 + $0x78] sm:$0xf]
        %v707 = vld [vmem:[%s672 + $0x7c] sm:$0xf]
        %v708 = vld [vmem:[#allocation3] sm:$0xf]
        %v709 = vld [vmem:[#allocation3 + $0x4] sm:$0xf]
        %v710 = vld [vmem:[#allocation3 + $0x8] sm:$0xf]
        %v711 = vld [vmem:[#allocation3 + $0xc] sm:$0xf]
        %v712 = vld [vmem:[%s2] sm:$0x1]
        %v714 = vlaneseq
        %v715 = vshrl.u32 %v714, 7
        %v716 = vsub.s32 0, %v715
        %v717 = vrot.slane %v712, %v716
        %v751 = vunpack.c.l.b16 %v676
        %v752 = vunpack.c.l.b16 %v677
        %v753 = vunpack.c.l.b16 %v678
        %v754 = vunpack.c.l.b16 %v679
        %v755 = vunpack.c.l.b16 %v680
        %v756 = vunpack.c.l.b16 %v681
        %v757 = vunpack.c.l.b16 %v682
        %v758 = vunpack.c.l.b16 %v683
        %v759 = vunpack.c.l.b16 %v684
        %v760 = vunpack.c.l.b16 %v685
        %v761 = vunpack.c.l.b16 %v686
        %v762 = vunpack.c.l.b16 %v687
        %v763 = vunpack.c.l.b16 %v688
        %v764 = vunpack.c.l.b16 %v689
        %v765 = vunpack.c.l.b16 %v690
        %v766 = vunpack.c.l.b16 %v691
        %v767 = vunpack.c.l.b16 %v692
        %v768 = vunpack.c.l.b16 %v693
        %v769 = vunpack.c.l.b16 %v694
        %v770 = vunpack.c.l.b16 %v695
        %v771 = vunpack.c.l.b16 %v696
        %v772 = vunpack.c.l.b16 %v697
        %v773 = vunpack.c.l.b16 %v698
        %v774 = vunpack.c.l.b16 %v699
        %v775 = vunpack.c.l.b16 %v700
        %v776 = vunpack.c.l.b16 %v701
        %v777 = vunpack.c.l.b16 %v702
        %v778 = vunpack.c.l.b16 %v703
        %v779 = vunpack.c.l.b16 %v704
        %v780 = vunpack.c.l.b16 %v705
        %v781 = vunpack.c.l.b16 %v706
        %v782 = vunpack.c.l.b16 %v707
        %v783 = vpack.c.b16 %v752, %v751
        %v784 = vpack.c.b16 %v754, %v753
        %v785 = vpack.c.b16 %v756, %v755
        %v786 = vpack.c.b16 %v758, %v757
        %v787 = vpack.c.b16 %v760, %v759
        %v788 = vpack.c.b16 %v762, %v761
        %v789 = vpack.c.b16 %v764, %v763
        %v790 = vpack.c.b16 %v766, %v765
        %v791 = vpack.c.b16 %v768, %v767
        %v792 = vpack.c.b16 %v770, %v769
        %v793 = vpack.c.b16 %v772, %v771
        %v794 = vpack.c.b16 %v774, %v773
        %v795 = vpack.c.b16 %v776, %v775
        %v796 = vpack.c.b16 %v778, %v777
        %v797 = vpack.c.b16 %v780, %v779
        %v798 = vpack.c.b16 %v782, %v781
        %v803 = vunpack.c.l.b16 %v708
        %v804 = vunpack.c.l.b16 %v709
        %v805 = vunpack.c.l.b16 %v710
        %v806 = vunpack.c.l.b16 %v711
        %v807 = vpack.c.b16 %v804, %v803
        %v808 = vpack.c.b16 %v806, %v805
        %vm811 = vcmask 261120
        %v813 = vsel %vm811, %v783, 0
        %v816 = vsel %vm811, %v784, 0
        %v819 = vsel %vm811, %v785, 0
        %v822 = vsel %vm811, %v786, 0
        %v825 = vsel %vm811, %v787, 0
        %v828 = vsel %vm811, %v788, 0
        %v831 = vsel %vm811, %v789, 0
        %v834 = vsel %vm811, %v790, 0
        %v837 = vsel %vm811, %v791, 0
        %v840 = vsel %vm811, %v792, 0
        %v843 = vsel %vm811, %v793, 0
        %v846 = vsel %vm811, %v794, 0
        %v849 = vsel %vm811, %v795, 0
        %v852 = vsel %vm811, %v796, 0
        %v855 = vsel %vm811, %v797, 0
        %v858 = vsel %vm811, %v798, 0
        %860 = vmatprep.subr.bf16.mxu0 0
        %861 = vmatpush1.bf16.msra.mxu0 %v807
        %862 = vmatprep.subr.bf16.mxu0 0
        %863 = vmatpush1.bf16.msra.mxu0 %v808
        %864 = vmatprep.subr.bf16.mxu0 0
        %865 = vmatpush1.bf16.msra.mxu0 0
        %866 = vmatprep.subr.bf16.mxu0 0
        %867 = vmatpush1.bf16.msra.mxu0 0
        %868 = vmatprep.subr.bf16.mxu0 0
        %869 = vmatpush1.bf16.msra.mxu0 0
        %870 = vmatprep.subr.bf16.mxu0 0
        %871 = vmatpush1.bf16.msra.mxu0 0
        %872 = vmatprep.subr.bf16.mxu0 0
        %873 = vmatpush1.bf16.msra.mxu0 0
        %874 = vmatprep.subr.bf16.mxu0 0
        %875 = vmatpush1.bf16.msra.mxu0 0
        %876 = vmatprep.subr.bf16.mxu0 0
        %877 = vmatpush1.bf16.msra.mxu0 0
        %878 = vmatprep.subr.bf16.mxu0 0
        %879 = vmatpush1.bf16.msra.mxu0 0
        %880 = vmatprep.subr.bf16.mxu0 0
        %881 = vmatpush1.bf16.msra.mxu0 0
        %882 = vmatprep.subr.bf16.mxu0 0
        %883 = vmatpush1.bf16.msra.mxu0 0
        %884 = vmatprep.subr.bf16.mxu0 0
        %885 = vmatpush1.bf16.msra.mxu0 0
        %886 = vmatprep.subr.bf16.mxu0 0
        %887 = vmatpush1.bf16.msra.mxu0 0
        %888 = vmatprep.subr.bf16.mxu0 0
        %889 = vmatpush1.bf16.msra.mxu0 0
        %890 = vmatprep.subr.bf16.mxu0 0
        %891 = vmatpush1.bf16.msra.mxu0 0
        %892 = vmatprep.mubr.bf16.mxu0 0
        %893 = vmatmul.mubr.bf16.gmra.mrb[0].mxu0 %v813
        %v894 = vpop.f32.mrb[0].mxu0
        %v895 = vadd.f32 %v717, %v894
        %v896 = vpop.f32.mrb[0].mxu0
        %v897 = vpop.f32.mrb[0].mxu0
        %v898 = vadd.f32 %v717, %v897
        %v899 = vpop.f32.mrb[0].mxu0
        %900 = vmatprep.mubr.bf16.mxu0 0
        %901 = vmatmul.mubr.bf16.gmra.mrb[0].mxu0 %v816
        %v902 = vpop.f32.mrb[0].mxu0
        %v903 = vadd.f32 %v717, %v902
        %v904 = vpop.f32.mrb[0].mxu0
        %v905 = vpop.f32.mrb[0].mxu0
        %v906 = vadd.f32 %v717, %v905
        %v907 = vpop.f32.mrb[0].mxu0
        %908 = vmatprep.mubr.bf16.mxu0 0
        %909 = vmatmul.mubr.bf16.gmra.mrb[0].mxu0 %v819
        %v910 = vpop.f32.mrb[0].mxu0
        %v911 = vadd.f32 %v717, %v910
        %v912 = vpop.f32.mrb[0].mxu0
        %v913 = vpop.f32.mrb[0].mxu0
        %v914 = vadd.f32 %v717, %v913
        %v915 = vpop.f32.mrb[0].mxu0
        %916 = vmatprep.mubr.bf16.mxu0 0
        %917 = vmatmul.mubr.bf16.gmra.mrb[0].mxu0 %v822
        %v918 = vpop.f32.mrb[0].mxu0
        %v919 = vadd.f32 %v717, %v918
        %v920 = vpop.f32.mrb[0].mxu0
        %v921 = vpop.f32.mrb[0].mxu0
        %v922 = vadd.f32 %v717, %v921
        %v923 = vpop.f32.mrb[0].mxu0
        %924 = vmatprep.mubr.bf16.mxu0 0
        %925 = vmatmul.mubr.bf16.gmra.mrb[0].mxu0 %v825
        %v926 = vpop.f32.mrb[0].mxu0
        %v927 = vadd.f32 %v717, %v926
        %v928 = vpop.f32.mrb[0].mxu0
        %v929 = vpop.f32.mrb[0].mxu0
        %v930 = vadd.f32 %v717, %v929
        %v931 = vpop.f32.mrb[0].mxu0
        %932 = vmatprep.mubr.bf16.mxu0 0
        %933 = vmatmul.mubr.bf16.gmra.mrb[0].mxu0 %v828
        %v934 = vpop.f32.mrb[0].mxu0
        %v935 = vadd.f32 %v717, %v934
        %v936 = vpop.f32.mrb[0].mxu0
        %v937 = vpop.f32.mrb[0].mxu0
        %v938 = vadd.f32 %v717, %v937
        %v939 = vpop.f32.mrb[0].mxu0
        %940 = vmatprep.mubr.bf16.mxu0 0
        %941 = vmatmul.mubr.bf16.gmra.mrb[0].mxu0 %v831
        %v942 = vpop.f32.mrb[0].mxu0
        %v943 = vadd.f32 %v717, %v942
        %v944 = vpop.f32.mrb[0].mxu0
        %v945 = vpop.f32.mrb[0].mxu0
        %v946 = vadd.f32 %v717, %v945
        %v947 = vpop.f32.mrb[0].mxu0
        %948 = vmatprep.mubr.bf16.mxu0 0
        %949 = vmatmul.mubr.bf16.gmra.mrb[0].mxu0 %v834
        %v950 = vpop.f32.mrb[0].mxu0
        %v951 = vadd.f32 %v717, %v950
        %v952 = vpop.f32.mrb[0].mxu0
        %v953 = vpop.f32.mrb[0].mxu0
        %v954 = vadd.f32 %v717, %v953
        %v955 = vpop.f32.mrb[0].mxu0
        %956 = vmatprep.mubr.bf16.mxu0 0
        %957 = vmatmul.mubr.bf16.gmra.mrb[0].mxu0 %v837
        %v958 = vpop.f32.mrb[0].mxu0
        %v959 = vadd.f32 %v717, %v958
        %v960 = vpop.f32.mrb[0].mxu0
        %v961 = vpop.f32.mrb[0].mxu0
        %v962 = vadd.f32 %v717, %v961
        %v963 = vpop.f32.mrb[0].mxu0
        %964 = vmatprep.mubr.bf16.mxu0 0
        %965 = vmatmul.mubr.bf16.gmra.mrb[0].mxu0 %v840
        %v966 = vpop.f32.mrb[0].mxu0
        %v967 = vadd.f32 %v717, %v966
        %v968 = vpop.f32.mrb[0].mxu0
        %v969 = vpop.f32.mrb[0].mxu0
        %v970 = vadd.f32 %v717, %v969
        %v971 = vpop.f32.mrb[0].mxu0
        %972 = vmatprep.mubr.bf16.mxu0 0
        %973 = vmatmul.mubr.bf16.gmra.mrb[0].mxu0 %v843
        %v974 = vpop.f32.mrb[0].mxu0
        %v975 = vadd.f32 %v717, %v974
        %v976 = vpop.f32.mrb[0].mxu0
        %v977 = vpop.f32.mrb[0].mxu0
        %v978 = vadd.f32 %v717, %v977
        %v979 = vpop.f32.mrb[0].mxu0
        %980 = vmatprep.mubr.bf16.mxu0 0
        %981 = vmatmul.mubr.bf16.gmra.mrb[0].mxu0 %v846
        %v982 = vpop.f32.mrb[0].mxu0
        %v983 = vadd.f32 %v717, %v982
        %v984 = vpop.f32.mrb[0].mxu0
        %v985 = vpop.f32.mrb[0].mxu0
        %v986 = vadd.f32 %v717, %v985
        %v987 = vpop.f32.mrb[0].mxu0
        %988 = vmatprep.mubr.bf16.mxu0 0
        %989 = vmatmul.mubr.bf16.gmra.mrb[0].mxu0 %v849
        %v990 = vpop.f32.mrb[0].mxu0
        %v991 = vadd.f32 %v717, %v990
        %v992 = vpop.f32.mrb[0].mxu0
        %v993 = vpop.f32.mrb[0].mxu0
        %v994 = vadd.f32 %v717, %v993
        %v995 = vpop.f32.mrb[0].mxu0
        %996 = vmatprep.mubr.bf16.mxu0 0
        %997 = vmatmul.mubr.bf16.gmra.mrb[0].mxu0 %v852
        %v998 = vpop.f32.mrb[0].mxu0
        %v999 = vadd.f32 %v717, %v998
        %v1000 = vpop.f32.mrb[0].mxu0
        %v1001 = vpop.f32.mrb[0].mxu0
        %v1002 = vadd.f32 %v717, %v1001
        %v1003 = vpop.f32.mrb[0].mxu0
        %1004 = vmatprep.mubr.bf16.mxu0 0
        %1005 = vmatmul.mubr.bf16.gmra.mrb[0].mxu0 %v855
        %v1006 = vpop.f32.mrb[0].mxu0
        %v1007 = vadd.f32 %v717, %v1006
        %v1008 = vpop.f32.mrb[0].mxu0
        %v1009 = vpop.f32.mrb[0].mxu0
        %v1010 = vadd.f32 %v717, %v1009
        %v1011 = vpop.f32.mrb[0].mxu0
        %1012 = vmatprep.mubr.bf16.mxu0 0
        %1013 = vmatmul.mubr.bf16.gmra.mrb[0].mxu0 %v858
        %v1014 = vpop.f32.mrb[0].mxu0
        %v1015 = vadd.f32 %v717, %v1014
        %v1016 = vpop.f32.mrb[0].mxu0
        %v1017 = vpop.f32.mrb[0].mxu0
        %v1018 = vadd.f32 %v717, %v1017
        %v1019 = vpop.f32.mrb[0].mxu0
        %1020 = vdwg.mxu0
        %1021 = vadd.xlane.f32.xlu0 %v895
        %v1022 = vpop.xlane.xlu0 %1021
        %1023 = vadd.xlane.f32.xlu0 %v898
        %v1024 = vpop.xlane.xlu0 %1023
        %1025 = vadd.xlane.f32.xlu0 %v903
        %v1026 = vpop.xlane.xlu0 %1025
        %1027 = vadd.xlane.f32.xlu0 %v906
        %v1028 = vpop.xlane.xlu0 %1027
        %1029 = vadd.xlane.f32.xlu0 %v911
        %v1030 = vpop.xlane.xlu0 %1029
        %1031 = vadd.xlane.f32.xlu0 %v914
        %v1032 = vpop.xlane.xlu0 %1031
        %1033 = vadd.xlane.f32.xlu0 %v919
        %v1034 = vpop.xlane.xlu0 %1033
        %1035 = vadd.xlane.f32.xlu0 %v922
        %v1036 = vpop.xlane.xlu0 %1035
        %1037 = vadd.xlane.f32.xlu0 %v927
        %v1038 = vpop.xlane.xlu0 %1037
        %1039 = vadd.xlane.f32.xlu0 %v930
        %v1040 = vpop.xlane.xlu0 %1039
        %1041 = vadd.xlane.f32.xlu0 %v935
        %v1042 = vpop.xlane.xlu0 %1041
        %1043 = vadd.xlane.f32.xlu0 %v938
        %v1044 = vpop.xlane.xlu0 %1043
        %1045 = vadd.xlane.f32.xlu0 %v943
        %v1046 = vpop.xlane.xlu0 %1045
        %1047 = vadd.xlane.f32.xlu0 %v946
        %v1048 = vpop.xlane.xlu0 %1047
        %1049 = vadd.xlane.f32.xlu0 %v951
        %v1050 = vpop.xlane.xlu0 %1049
        %1051 = vadd.xlane.f32.xlu0 %v954
        %v1052 = vpop.xlane.xlu0 %1051
        %1053 = vadd.xlane.f32.xlu0 %v959
        %v1054 = vpop.xlane.xlu0 %1053
        %1055 = vadd.xlane.f32.xlu0 %v962
        %v1056 = vpop.xlane.xlu0 %1055
        %1057 = vadd.xlane.f32.xlu0 %v967
        %v1058 = vpop.xlane.xlu0 %1057
        %1059 = vadd.xlane.f32.xlu0 %v970
        %v1060 = vpop.xlane.xlu0 %1059
        %1061 = vadd.xlane.f32.xlu0 %v975
        %v1062 = vpop.xlane.xlu0 %1061
        %1063 = vadd.xlane.f32.xlu0 %v978
        %v1064 = vpop.xlane.xlu0 %1063
        %1065 = vadd.xlane.f32.xlu0 %v983
        %v1066 = vpop.xlane.xlu0 %1065
        %1067 = vadd.xlane.f32.xlu0 %v986
        %v1068 = vpop.xlane.xlu0 %1067
        %1069 = vadd.xlane.f32.xlu0 %v991
        %v1070 = vpop.xlane.xlu0 %1069
        %1071 = vadd.xlane.f32.xlu0 %v994
        %v1072 = vpop.xlane.xlu0 %1071
        %1073 = vadd.xlane.f32.xlu0 %v999
        %v1074 = vpop.xlane.xlu0 %1073
        %1075 = vadd.xlane.f32.xlu0 %v1002
        %v1076 = vpop.xlane.xlu0 %1075
        %1077 = vadd.xlane.f32.xlu0 %v1007
        %v1078 = vpop.xlane.xlu0 %1077
        %1079 = vadd.xlane.f32.xlu0 %v1010
        %v1080 = vpop.xlane.xlu0 %1079
        %1081 = vadd.xlane.f32.xlu0 %v1015
        %v1082 = vpop.xlane.xlu0 %1081
        %1083 = vadd.xlane.f32.xlu0 %v1018
        %v1084 = vpop.xlane.xlu0 %1083
        %v1085 = vrcp.pop 128.0
        %v1086 = vmul.f32 %v1022, %v1085
        %v1087 = vmul.f32 %v1024, %v1085
        %v1088 = vmul.f32 %v1026, %v1085
        %v1089 = vmul.f32 %v1028, %v1085
        %v1090 = vmul.f32 %v1030, %v1085
        %v1091 = vmul.f32 %v1032, %v1085
        %v1092 = vmul.f32 %v1034, %v1085
        %v1093 = vmul.f32 %v1036, %v1085
        %v1094 = vmul.f32 %v1038, %v1085
        %v1095 = vmul.f32 %v1040, %v1085
        %v1096 = vmul.f32 %v1042, %v1085
        %v1097 = vmul.f32 %v1044, %v1085
        %v1098 = vmul.f32 %v1046, %v1085
        %v1099 = vmul.f32 %v1048, %v1085
        %v1100 = vmul.f32 %v1050, %v1085
        %v1101 = vmul.f32 %v1052, %v1085
        %v1102 = vmul.f32 %v1054, %v1085
        %v1103 = vmul.f32 %v1056, %v1085
        %v1104 = vmul.f32 %v1058, %v1085
        %v1105 = vmul.f32 %v1060, %v1085
        %v1106 = vmul.f32 %v1062, %v1085
        %v1107 = vmul.f32 %v1064, %v1085
        %v1108 = vmul.f32 %v1066, %v1085
        %v1109 = vmul.f32 %v1068, %v1085
        %v1110 = vmul.f32 %v1070, %v1085
        %v1111 = vmul.f32 %v1072, %v1085
        %v1112 = vmul.f32 %v1074, %v1085
        %v1113 = vmul.f32 %v1076, %v1085
        %v1114 = vmul.f32 %v1078, %v1085
        %v1115 = vmul.f32 %v1080, %v1085
        %v1116 = vmul.f32 %v1082, %v1085
        %v1117 = vmul.f32 %v1084, %v1085
        %v1118 = vsub.f32 %v895, %v1086
        %v1119 = vsub.f32 %v898, %v1087
        %v1120 = vsub.f32 %v903, %v1088
        %v1121 = vsub.f32 %v906, %v1089
        %v1122 = vsub.f32 %v911, %v1090
        %v1123 = vsub.f32 %v914, %v1091
        %v1124 = vsub.f32 %v919, %v1092
        %v1125 = vsub.f32 %v922, %v1093
        %v1126 = vsub.f32 %v927, %v1094
        %v1127 = vsub.f32 %v930, %v1095
        %v1128 = vsub.f32 %v935, %v1096
        %v1129 = vsub.f32 %v938, %v1097
        %v1130 = vsub.f32 %v943, %v1098
        %v1131 = vsub.f32 %v946, %v1099
        %v1132 = vsub.f32 %v951, %v1100
        %v1133 = vsub.f32 %v954, %v1101
        %v1134 = vsub.f32 %v959, %v1102
        %v1135 = vsub.f32 %v962, %v1103
        %v1136 = vsub.f32 %v967, %v1104
        %v1137 = vsub.f32 %v970, %v1105
        %v1138 = vsub.f32 %v975, %v1106
        %v1139 = vsub.f32 %v978, %v1107
        %v1140 = vsub.f32 %v983, %v1108
        %v1141 = vsub.f32 %v986, %v1109
        %v1142 = vsub.f32 %v991, %v1110
        %v1143 = vsub.f32 %v994, %v1111
        %v1144 = vsub.f32 %v999, %v1112
        %v1145 = vsub.f32 %v1002, %v1113
        %v1146 = vsub.f32 %v1007, %v1114
        %v1147 = vsub.f32 %v1010, %v1115
        %v1148 = vsub.f32 %v1015, %v1116
        %v1149 = vsub.f32 %v1018, %v1117
        %v1150 = vmul.f32 %v1118, %v1118
        %v1151 = vmul.f32 %v1119, %v1119
        %v1152 = vmul.f32 %v1120, %v1120
        %v1153 = vmul.f32 %v1121, %v1121
        %v1154 = vmul.f32 %v1122, %v1122
        %v1155 = vmul.f32 %v1123, %v1123
        %v1156 = vmul.f32 %v1124, %v1124
        %v1157 = vmul.f32 %v1125, %v1125
        %v1158 = vmul.f32 %v1126, %v1126
        %v1159 = vmul.f32 %v1127, %v1127
        %v1160 = vmul.f32 %v1128, %v1128
        %v1161 = vmul.f32 %v1129, %v1129
        %v1162 = vmul.f32 %v1130, %v1130
        %v1163 = vmul.f32 %v1131, %v1131
        %v1164 = vmul.f32 %v1132, %v1132
        %v1165 = vmul.f32 %v1133, %v1133
        %v1166 = vmul.f32 %v1134, %v1134
        %v1167 = vmul.f32 %v1135, %v1135
        %v1168 = vmul.f32 %v1136, %v1136
        %v1169 = vmul.f32 %v1137, %v1137
        %v1170 = vmul.f32 %v1138, %v1138
        %v1171 = vmul.f32 %v1139, %v1139
        %v1172 = vmul.f32 %v1140, %v1140
        %v1173 = vmul.f32 %v1141, %v1141
        %v1174 = vmul.f32 %v1142, %v1142
        %v1175 = vmul.f32 %v1143, %v1143
        %v1176 = vmul.f32 %v1144, %v1144
        %v1177 = vmul.f32 %v1145, %v1145
        %v1178 = vmul.f32 %v1146, %v1146
        %v1179 = vmul.f32 %v1147, %v1147
        %v1180 = vmul.f32 %v1148, %v1148
        %v1181 = vmul.f32 %v1149, %v1149
        %1182 = vadd.xlane.f32.xlu0 %v1150
        %v1183 = vpop.xlane.xlu0 %1182
        %1184 = vadd.xlane.f32.xlu0 %v1151
        %v1185 = vpop.xlane.xlu0 %1184
        %1186 = vadd.xlane.f32.xlu0 %v1152
        %v1187 = vpop.xlane.xlu0 %1186
        %1188 = vadd.xlane.f32.xlu0 %v1153
        %v1189 = vpop.xlane.xlu0 %1188
        %1190 = vadd.xlane.f32.xlu0 %v1154
        %v1191 = vpop.xlane.xlu0 %1190
        %1192 = vadd.xlane.f32.xlu0 %v1155
        %v1193 = vpop.xlane.xlu0 %1192
        %1194 = vadd.xlane.f32.xlu0 %v1156
        %v1195 = vpop.xlane.xlu0 %1194
        %1196 = vadd.xlane.f32.xlu0 %v1157
        %v1197 = vpop.xlane.xlu0 %1196
        %1198 = vadd.xlane.f32.xlu0 %v1158
        %v1199 = vpop.xlane.xlu0 %1198
        %1200 = vadd.xlane.f32.xlu0 %v1159
        %v1201 = vpop.xlane.xlu0 %1200
        %1202 = vadd.xlane.f32.xlu0 %v1160
        %v1203 = vpop.xlane.xlu0 %1202
        %1204 = vadd.xlane.f32.xlu0 %v1161
        %v1205 = vpop.xlane.xlu0 %1204
        %1206 = vadd.xlane.f32.xlu0 %v1162
        %v1207 = vpop.xlane.xlu0 %1206
        %1208 = vadd.xlane.f32.xlu0 %v1163
        %v1209 = vpop.xlane.xlu0 %1208
        %1210 = vadd.xlane.f32.xlu0 %v1164
        %v1211 = vpop.xlane.xlu0 %1210
        %1212 = vadd.xlane.f32.xlu0 %v1165
        %v1213 = vpop.xlane.xlu0 %1212
        %1214 = vadd.xlane.f32.xlu0 %v1166
        %v1215 = vpop.xlane.xlu0 %1214
        %1216 = vadd.xlane.f32.xlu0 %v1167
        %v1217 = vpop.xlane.xlu0 %1216
        %1218 = vadd.xlane.f32.xlu0 %v1168
        %v1219 = vpop.xlane.xlu0 %1218
        %1220 = vadd.xlane.f32.xlu0 %v1169
        %v1221 = vpop.xlane.xlu0 %1220
        %1222 = vadd.xlane.f32.xlu0 %v1170
        %v1223 = vpop.xlane.xlu0 %1222
        %1224 = vadd.xlane.f32.xlu0 %v1171
        %v1225 = vpop.xlane.xlu0 %1224
        %1226 = vadd.xlane.f32.xlu0 %v1172
        %v1227 = vpop.xlane.xlu0 %1226
        %1228 = vadd.xlane.f32.xlu0 %v1173
        %v1229 = vpop.xlane.xlu0 %1228
        %1230 = vadd.xlane.f32.xlu0 %v1174
        %v1231 = vpop.xlane.xlu0 %1230
        %1232 = vadd.xlane.f32.xlu0 %v1175
        %v1233 = vpop.xlane.xlu0 %1232
        %1234 = vadd.xlane.f32.xlu0 %v1176
        %v1235 = vpop.xlane.xlu0 %1234
        %1236 = vadd.xlane.f32.xlu0 %v1177
        %v1237 = vpop.xlane.xlu0 %1236
        %1238 = vadd.xlane.f32.xlu0 %v1178
        %v1239 = vpop.xlane.xlu0 %1238
        %1240 = vadd.xlane.f32.xlu0 %v1179
        %v1241 = vpop.xlane.xlu0 %1240
        %1242 = vadd.xlane.f32.xlu0 %v1180
        %v1243 = vpop.xlane.xlu0 %1242
        %1244 = vadd.xlane.f32.xlu0 %v1181
        %v1245 = vpop.xlane.xlu0 %1244
        %v1246 = vmul.f32 %v1183, %v1085
        %v1247 = vmul.f32 %v1185, %v1085
        %v1248 = vmul.f32 %v1187, %v1085
        %v1249 = vmul.f32 %v1189, %v1085
        %v1250 = vmul.f32 %v1191, %v1085
        %v1251 = vmul.f32 %v1193, %v1085
        %v1252 = vmul.f32 %v1195, %v1085
        %v1253 = vmul.f32 %v1197, %v1085
        %v1254 = vmul.f32 %v1199, %v1085
        %v1255 = vmul.f32 %v1201, %v1085
        %v1256 = vmul.f32 %v1203, %v1085
        %v1257 = vmul.f32 %v1205, %v1085
        %v1258 = vmul.f32 %v1207, %v1085
        %v1259 = vmul.f32 %v1209, %v1085
        %v1260 = vmul.f32 %v1211, %v1085
        %v1261 = vmul.f32 %v1213, %v1085
        %v1262 = vmul.f32 %v1215, %v1085
        %v1263 = vmul.f32 %v1217, %v1085
        %v1264 = vmul.f32 %v1219, %v1085
        %v1265 = vmul.f32 %v1221, %v1085
        %v1266 = vmul.f32 %v1223, %v1085
        %v1267 = vmul.f32 %v1225, %v1085
        %v1268 = vmul.f32 %v1227, %v1085
        %v1269 = vmul.f32 %v1229, %v1085
        %v1270 = vmul.f32 %v1231, %v1085
        %v1271 = vmul.f32 %v1233, %v1085
        %v1272 = vmul.f32 %v1235, %v1085
        %v1273 = vmul.f32 %v1237, %v1085
        %v1274 = vmul.f32 %v1239, %v1085
        %v1275 = vmul.f32 %v1241, %v1085
        %v1276 = vmul.f32 %v1243, %v1085
        %v1277 = vmul.f32 %v1245, %v1085
        %v1278 = vadd.f32 %v1246, 1e-05
        %v1279 = vadd.f32 %v1247, 1e-05
        %v1280 = vadd.f32 %v1248, 1e-05
        %v1281 = vadd.f32 %v1249, 1e-05
        %v1282 = vadd.f32 %v1250, 1e-05
        %v1283 = vadd.f32 %v1251, 1e-05
        %v1284 = vadd.f32 %v1252, 1e-05
        %v1285 = vadd.f32 %v1253, 1e-05
        %v1286 = vadd.f32 %v1254, 1e-05
        %v1287 = vadd.f32 %v1255, 1e-05
        %v1288 = vadd.f32 %v1256, 1e-05
        %v1289 = vadd.f32 %v1257, 1e-05
        %v1290 = vadd.f32 %v1258, 1e-05
        %v1291 = vadd.f32 %v1259, 1e-05
        %v1292 = vadd.f32 %v1260, 1e-05
        %v1293 = vadd.f32 %v1261, 1e-05
        %v1294 = vadd.f32 %v1262, 1e-05
        %v1295 = vadd.f32 %v1263, 1e-05
        %v1296 = vadd.f32 %v1264, 1e-05
        %v1297 = vadd.f32 %v1265, 1e-05
        %v1298 = vadd.f32 %v1266, 1e-05
        %v1299 = vadd.f32 %v1267, 1e-05
        %v1300 = vadd.f32 %v1268, 1e-05
        %v1301 = vadd.f32 %v1269, 1e-05
        %v1302 = vadd.f32 %v1270, 1e-05
        %v1303 = vadd.f32 %v1271, 1e-05
        %v1304 = vadd.f32 %v1272, 1e-05
        %v1305 = vadd.f32 %v1273, 1e-05
        %v1306 = vadd.f32 %v1274, 1e-05
        %v1307 = vadd.f32 %v1275, 1e-05
        %v1308 = vadd.f32 %v1276, 1e-05
        %v1309 = vadd.f32 %v1277, 1e-05
        %v1310 = vrsqrt.pop %v1278
        %v1311 = vrsqrt.pop %v1279
        %v1312 = vrsqrt.pop %v1280
        %v1313 = vrsqrt.pop %v1281
        %v1314 = vrsqrt.pop %v1282
        %v1315 = vrsqrt.pop %v1283
        %v1316 = vrsqrt.pop %v1284
        %v1317 = vrsqrt.pop %v1285
        %v1318 = vrsqrt.pop %v1286
        %v1319 = vrsqrt.pop %v1287
        %v1320 = vrsqrt.pop %v1288
        %v1321 = vrsqrt.pop %v1289
        %v1322 = vrsqrt.pop %v1290
        %v1323 = vrsqrt.pop %v1291
        %v1324 = vrsqrt.pop %v1292
        %v1325 = vrsqrt.pop %v1293
        %v1326 = vrsqrt.pop %v1294
        %v1327 = vrsqrt.pop %v1295
        %v1328 = vrsqrt.pop %v1296
        %v1329 = vrsqrt.pop %v1297
        %v1330 = vrsqrt.pop %v1298
        %v1331 = vrsqrt.pop %v1299
        %v1332 = vrsqrt.pop %v1300
        %v1333 = vrsqrt.pop %v1301
        %v1334 = vrsqrt.pop %v1302
        %v1335 = vrsqrt.pop %v1303
        %v1336 = vrsqrt.pop %v1304
        %v1337 = vrsqrt.pop %v1305
        %v1338 = vrsqrt.pop %v1306
        %v1339 = vrsqrt.pop %v1307
        %v1340 = vrsqrt.pop %v1308
        %v1341 = vrsqrt.pop %v1309
        %v1342 = vmul.f32 %v1118, %v1310
        %v1343 = vmul.f32 %v1119, %v1311
        %v1344 = vmul.f32 %v1120, %v1312
        %v1345 = vmul.f32 %v1121, %v1313
        %v1346 = vmul.f32 %v1122, %v1314
        %v1347 = vmul.f32 %v1123, %v1315
        %v1348 = vmul.f32 %v1124, %v1316
        %v1349 = vmul.f32 %v1125, %v1317
        %v1350 = vmul.f32 %v1126, %v1318
        %v1351 = vmul.f32 %v1127, %v1319
        %v1352 = vmul.f32 %v1128, %v1320
        %v1353 = vmul.f32 %v1129, %v1321
        %v1354 = vmul.f32 %v1130, %v1322
        %v1355 = vmul.f32 %v1131, %v1323
        %v1356 = vmul.f32 %v1132, %v1324
        %v1357 = vmul.f32 %v1133, %v1325
        %v1358 = vmul.f32 %v1134, %v1326
        %v1359 = vmul.f32 %v1135, %v1327
        %v1360 = vmul.f32 %v1136, %v1328
        %v1361 = vmul.f32 %v1137, %v1329
        %v1362 = vmul.f32 %v1138, %v1330
        %v1363 = vmul.f32 %v1139, %v1331
        %v1364 = vmul.f32 %v1140, %v1332
        %v1365 = vmul.f32 %v1141, %v1333
        %v1366 = vmul.f32 %v1142, %v1334
        %v1367 = vmul.f32 %v1143, %v1335
        %v1368 = vmul.f32 %v1144, %v1336
        %v1369 = vmul.f32 %v1145, %v1337
        %v1370 = vmul.f32 %v1146, %v1338
        %v1371 = vmul.f32 %v1147, %v1339
        %v1372 = vmul.f32 %v1148, %v1340
        %v1373 = vmul.f32 %v1149, %v1341
        %v1374 = vld [vmem:[#allocation6] sm:$0x1]
        %v1376 = vlaneseq
        %v1377 = vshrl.u32 %v1376, 7
        %v1378 = vsub.s32 0, %v1377
        %v1379 = vrot.slane %v1374, %v1378
        %v1381 = vmul.f32 %v1379, %v1342
        %v1382 = vmul.f32 %v1379, %v1343
        %v1383 = vmul.f32 %v1379, %v1344
        %v1384 = vmul.f32 %v1379, %v1345
        %v1385 = vmul.f32 %v1379, %v1346
        %v1386 = vmul.f32 %v1379, %v1347
        %v1387 = vmul.f32 %v1379, %v1348
        %v1388 = vmul.f32 %v1379, %v1349
        %v1389 = vmul.f32 %v1379, %v1350
        %v1390 = vmul.f32 %v1379, %v1351
        %v1391 = vmul.f32 %v1379, %v1352
        %v1392 = vmul.f32 %v1379, %v1353
        %v1393 = vmul.f32 %v1379, %v1354
        %v1394 = vmul.f32 %v1379, %v1355
        %v1395 = vmul.f32 %v1379, %v1356
        %v1396 = vmul.f32 %v1379, %v1357
        %v1397 = vmul.f32 %v1379, %v1358
        %v1398 = vmul.f32 %v1379, %v1359
        %v1399 = vmul.f32 %v1379, %v1360
        %v1400 = vmul.f32 %v1379, %v1361
        %v1401 = vmul.f32 %v1379, %v1362
        %v1402 = vmul.f32 %v1379, %v1363
        %v1403 = vmul.f32 %v1379, %v1364
        %v1404 = vmul.f32 %v1379, %v1365
        %v1405 = vmul.f32 %v1379, %v1366
        %v1406 = vmul.f32 %v1379, %v1367
        %v1407 = vmul.f32 %v1379, %v1368
        %v1408 = vmul.f32 %v1379, %v1369
        %v1409 = vmul.f32 %v1379, %v1370
        %v1410 = vmul.f32 %v1379, %v1371
        %v1411 = vmul.f32 %v1379, %v1372
        %v1412 = vmul.f32 %v1379, %v1373
        %v1413 = vld [vmem:[%s4] sm:$0x1]
        %v1415 = vlaneseq
        %v1416 = vshrl.u32 %v1415, 7
        %v1417 = vsub.s32 0, %v1416
        %v1418 = vrot.slane %v1413, %v1417
        %v1420 = vadd.f32 %v1381, %v1418
        %v1421 = vadd.f32 %v1382, %v1418
        %v1422 = vadd.f32 %v1383, %v1418
        %v1423 = vadd.f32 %v1384, %v1418
        %v1424 = vadd.f32 %v1385, %v1418
        %v1425 = vadd.f32 %v1386, %v1418
        %v1426 = vadd.f32 %v1387, %v1418
        %v1427 = vadd.f32 %v1388, %v1418
        %v1428 = vadd.f32 %v1389, %v1418
        %v1429 = vadd.f32 %v1390, %v1418
        %v1430 = vadd.f32 %v1391, %v1418
        %v1431 = vadd.f32 %v1392, %v1418
        %v1432 = vadd.f32 %v1393, %v1418
        %v1433 = vadd.f32 %v1394, %v1418
        %v1434 = vadd.f32 %v1395, %v1418
        %v1435 = vadd.f32 %v1396, %v1418
        %v1436 = vadd.f32 %v1397, %v1418
        %v1437 = vadd.f32 %v1398, %v1418
        %v1438 = vadd.f32 %v1399, %v1418
        %v1439 = vadd.f32 %v1400, %v1418
        %v1440 = vadd.f32 %v1401, %v1418
        %v1441 = vadd.f32 %v1402, %v1418
        %v1442 = vadd.f32 %v1403, %v1418
        %v1443 = vadd.f32 %v1404, %v1418
        %v1444 = vadd.f32 %v1405, %v1418
        %v1445 = vadd.f32 %v1406, %v1418
        %v1446 = vadd.f32 %v1407, %v1418
        %v1447 = vadd.f32 %v1408, %v1418
        %v1448 = vadd.f32 %v1409, %v1418
        %v1449 = vadd.f32 %v1410, %v1418
        %v1450 = vadd.f32 %v1411, %v1418
        %v1451 = vadd.f32 %v1412, %v1418
        %v1452 = vmax.f32 %v1420, 0.0
        %v1453 = vmax.f32 %v1421, 0.0
        %v1454 = vmax.f32 %v1422, 0.0
        %v1455 = vmax.f32 %v1423, 0.0
        %v1456 = vmax.f32 %v1424, 0.0
        %v1457 = vmax.f32 %v1425, 0.0
        %v1458 = vmax.f32 %v1426, 0.0
        %v1459 = vmax.f32 %v1427, 0.0
        %v1460 = vmax.f32 %v1428, 0.0
        %v1461 = vmax.f32 %v1429, 0.0
        %v1462 = vmax.f32 %v1430, 0.0
        %v1463 = vmax.f32 %v1431, 0.0
        %v1464 = vmax.f32 %v1432, 0.0
        %v1465 = vmax.f32 %v1433, 0.0
        %v1466 = vmax.f32 %v1434, 0.0
        %v1467 = vmax.f32 %v1435, 0.0
        %v1468 = vmax.f32 %v1436, 0.0
        %v1469 = vmax.f32 %v1437, 0.0
        %v1470 = vmax.f32 %v1438, 0.0
        %v1471 = vmax.f32 %v1439, 0.0
        %v1472 = vmax.f32 %v1440, 0.0
        %v1473 = vmax.f32 %v1441, 0.0
        %v1474 = vmax.f32 %v1442, 0.0
        %v1475 = vmax.f32 %v1443, 0.0
        %v1476 = vmax.f32 %v1444, 0.0
        %v1477 = vmax.f32 %v1445, 0.0
        %v1478 = vmax.f32 %v1446, 0.0
        %v1479 = vmax.f32 %v1447, 0.0
        %v1480 = vmax.f32 %v1448, 0.0
        %v1481 = vmax.f32 %v1449, 0.0
        %v1482 = vmax.f32 %v1450, 0.0
        %v1483 = vmax.f32 %v1451, 0.0
        %v1484 = vpack.c.bf16 %v1453, %v1452
        %v1485 = vpack.c.bf16 %v1455, %v1454
        %v1486 = vpack.c.bf16 %v1457, %v1456
        %v1487 = vpack.c.bf16 %v1459, %v1458
        %v1488 = vpack.c.bf16 %v1461, %v1460
        %v1489 = vpack.c.bf16 %v1463, %v1462
        %v1490 = vpack.c.bf16 %v1465, %v1464
        %v1491 = vpack.c.bf16 %v1467, %v1466
        %v1492 = vpack.c.bf16 %v1469, %v1468
        %v1493 = vpack.c.bf16 %v1471, %v1470
        %v1494 = vpack.c.bf16 %v1473, %v1472
        %v1495 = vpack.c.bf16 %v1475, %v1474
        %v1496 = vpack.c.bf16 %v1477, %v1476
        %v1497 = vpack.c.bf16 %v1479, %v1478
        %v1498 = vpack.c.bf16 %v1481, %v1480
        %v1499 = vpack.c.bf16 %v1483, %v1482
        %v1500 = vld [vmem:[#allocation8] sm:$0xf]
        %v1501 = vld [vmem:[#allocation8 + $0x4] sm:$0xf]
        %v1502 = vld [vmem:[#allocation8 + $0x8] sm:$0xf]
        %v1503 = vld [vmem:[#allocation8 + $0xc] sm:$0xf]
        %v1504 = vld [vmem:[#allocation8 + $0x10] sm:$0xf]
        %v1505 = vld [vmem:[#allocation8 + $0x14] sm:$0xf]
        %v1506 = vld [vmem:[#allocation8 + $0x18] sm:$0xf]
        %v1507 = vld [vmem:[#allocation8 + $0x1c] sm:$0xf]
        %v1508 = vld [vmem:[#allocation8 + $0x20] sm:$0xf]
        %v1509 = vld [vmem:[#allocation8 + $0x24] sm:$0xf]
        %v1510 = vld [vmem:[#allocation8 + $0x28] sm:$0xf]
        %v1511 = vld [vmem:[#allocation8 + $0x2c] sm:$0xf]
        %v1512 = vld [vmem:[#allocation8 + $0x30] sm:$0xf]
        %v1513 = vld [vmem:[#allocation8 + $0x34] sm:$0xf]
        %v1514 = vld [vmem:[#allocation8 + $0x38] sm:$0xf]
        %v1515 = vld [vmem:[#allocation8 + $0x3c] sm:$0xf]
        %v1516 = vld [vmem:[%s6] sm:$0x1]
        %v1518 = vlaneseq
        %v1519 = vshrl.u32 %v1518, 7
        %v1520 = vsub.s32 0, %v1519
        %v1521 = vrot.slane %v1516, %v1520
        %v1539 = vunpack.c.l.b16 %v1500
        %v1540 = vunpack.c.l.b16 %v1501
        %v1541 = vunpack.c.l.b16 %v1502
        %v1542 = vunpack.c.l.b16 %v1503
        %v1543 = vunpack.c.l.b16 %v1504
        %v1544 = vunpack.c.l.b16 %v1505
        %v1545 = vunpack.c.l.b16 %v1506
        %v1546 = vunpack.c.l.b16 %v1507
        %v1547 = vunpack.c.l.b16 %v1508
        %v1548 = vunpack.c.l.b16 %v1509
        %v1549 = vunpack.c.l.b16 %v1510
        %v1550 = vunpack.c.l.b16 %v1511
        %v1551 = vunpack.c.l.b16 %v1512
        %v1552 = vunpack.c.l.b16 %v1513
        %v1553 = vunpack.c.l.b16 %v1514
        %v1554 = vunpack.c.l.b16 %v1515
        %v1555 = vpack.c.b16 %v1540, %v1539
        %v1556 = vpack.c.b16 %v1542, %v1541
        %v1557 = vpack.c.b16 %v1544, %v1543
        %v1558 = vpack.c.b16 %v1546, %v1545
        %v1559 = vpack.c.b16 %v1548, %v1547
        %v1560 = vpack.c.b16 %v1550, %v1549
        %v1561 = vpack.c.b16 %v1552, %v1551
        %v1562 = vpack.c.b16 %v1554, %v1553
        %1571 = vmatprep.subr.bf16.mxu0 0
        %1572 = vmatpush1.bf16.msra.mxu0 %v1555
        %1573 = vmatprep.subr.bf16.mxu0 0
        %1574 = vmatpush1.bf16.msra.mxu0 %v1556
        %1575 = vmatprep.subr.bf16.mxu0 0
        %1576 = vmatpush1.bf16.msra.mxu0 %v1557
        %1577 = vmatprep.subr.bf16.mxu0 0
        %1578 = vmatpush1.bf16.msra.mxu0 %v1558
        %1579 = vmatprep.subr.bf16.mxu0 0
        %1580 = vmatpush1.bf16.msra.mxu0 %v1559
        %1581 = vmatprep.subr.bf16.mxu0 0
        %1582 = vmatpush1.bf16.msra.mxu0 %v1560
        %1583 = vmatprep.subr.bf16.mxu0 0
        %1584 = vmatpush1.bf16.msra.mxu0 %v1561
        %1585 = vmatprep.subr.bf16.mxu0 0
        %1586 = vmatpush1.bf16.msra.mxu0 %v1562
        %1587 = vmatprep.subr.bf16.mxu0 0
        %1588 = vmatpush1.bf16.msra.mxu0 0
        %1589 = vmatprep.subr.bf16.mxu0 0
        %1590 = vmatpush1.bf16.msra.mxu0 0
        %1591 = vmatprep.subr.bf16.mxu0 0
        %1592 = vmatpush1.bf16.msra.mxu0 0
        %1593 = vmatprep.subr.bf16.mxu0 0
        %1594 = vmatpush1.bf16.msra.mxu0 0
        %1595 = vmatprep.subr.bf16.mxu0 0
        %1596 = vmatpush1.bf16.msra.mxu0 0
        %1597 = vmatprep.subr.bf16.mxu0 0
        %1598 = vmatpush1.bf16.msra.mxu0 0
        %1599 = vmatprep.subr.bf16.mxu0 0
        %1600 = vmatpush1.bf16.msra.mxu0 0
        %1601 = vmatprep.subr.bf16.mxu0 0
        %1602 = vmatpush1.bf16.msra.mxu0 0
        %1603 = vmatprep.mubr.bf16.mxu0 0
        %1604 = vmatmul.mubr.bf16.gmra.mrb[0].mxu0 %v1484
        %v1605 = vpop.f32.mrb[0].mxu0
        %v1606 = vadd.f32 %v1521, %v1605
        %v1607 = vpop.f32.mrb[0].mxu0
        %v1608 = vpop.f32.mrb[0].mxu0
        %v1609 = vadd.f32 %v1521, %v1608
        %v1610 = vpop.f32.mrb[0].mxu0
        %1611 = vmatprep.mubr.bf16.mxu0 0
        %1612 = vmatmul.mubr.bf16.gmra.mrb[0].mxu0 %v1485
        %v1613 = vpop.f32.mrb[0].mxu0
        %v1614 = vadd.f32 %v1521, %v1613
        %v1615 = vpop.f32.mrb[0].mxu0
        %v1616 = vpop.f32.mrb[0].mxu0
        %v1617 = vadd.f32 %v1521, %v1616
        %v1618 = vpop.f32.mrb[0].mxu0
        %1619 = vmatprep.mubr.bf16.mxu0 0
        %1620 = vmatmul.mubr.bf16.gmra.mrb[0].mxu0 %v1486
        %v1621 = vpop.f32.mrb[0].mxu0
        %v1622 = vadd.f32 %v1521, %v1621
        %v1623 = vpop.f32.mrb[0].mxu0
        %v1624 = vpop.f32.mrb[0].mxu0
        %v1625 = vadd.f32 %v1521, %v1624
        %v1626 = vpop.f32.mrb[0].mxu0
        %1627 = vmatprep.mubr.bf16.mxu0 0
        %1628 = vmatmul.mubr.bf16.gmra.mrb[0].mxu0 %v1487
        %v1629 = vpop.f32.mrb[0].mxu0
        %v1630 = vadd.f32 %v1521, %v1629
        %v1631 = vpop.f32.mrb[0].mxu0
        %v1632 = vpop.f32.mrb[0].mxu0
        %v1633 = vadd.f32 %v1521, %v1632
        %v1634 = vpop.f32.mrb[0].mxu0
        %1635 = vmatprep.mubr.bf16.mxu0 0
        %1636 = vmatmul.mubr.bf16.gmra.mrb[0].mxu0 %v1488
        %v1637 = vpop.f32.mrb[0].mxu0
        %v1638 = vadd.f32 %v1521, %v1637
        %v1639 = vpop.f32.mrb[0].mxu0
        %v1640 = vpop.f32.mrb[0].mxu0
        %v1641 = vadd.f32 %v1521, %v1640
        %v1642 = vpop.f32.mrb[0].mxu0
        %1643 = vmatprep.mubr.bf16.mxu0 0
        %1644 = vmatmul.mubr.bf16.gmra.mrb[0].mxu0 %v1489
        %v1645 = vpop.f32.mrb[0].mxu0
        %v1646 = vadd.f32 %v1521, %v1645
        %v1647 = vpop.f32.mrb[0].mxu0
        %v1648 = vpop.f32.mrb[0].mxu0
        %v1649 = vadd.f32 %v1521, %v1648
        %v1650 = vpop.f32.mrb[0].mxu0
        %1651 = vmatprep.mubr.bf16.mxu0 0
        %1652 = vmatmul.mubr.bf16.gmra.mrb[0].mxu0 %v1490
        %v1653 = vpop.f32.mrb[0].mxu0
        %v1654 = vadd.f32 %v1521, %v1653
        %v1655 = vpop.f32.mrb[0].mxu0
        %v1656 = vpop.f32.mrb[0].mxu0
        %v1657 = vadd.f32 %v1521, %v1656
        %v1658 = vpop.f32.mrb[0].mxu0
        %1659 = vmatprep.mubr.bf16.mxu0 0
        %1660 = vmatmul.mubr.bf16.gmra.mrb[0].mxu0 %v1491
        %v1661 = vpop.f32.mrb[0].mxu0
        %v1662 = vadd.f32 %v1521, %v1661
        %v1663 = vpop.f32.mrb[0].mxu0
        %v1664 = vpop.f32.mrb[0].mxu0
        %v1665 = vadd.f32 %v1521, %v1664
        %v1666 = vpop.f32.mrb[0].mxu0
        %1667 = vmatprep.mubr.bf16.mxu0 0
        %1668 = vmatmul.mubr.bf16.gmra.mrb[0].mxu0 %v1492
        %v1669 = vpop.f32.mrb[0].mxu0
        %v1670 = vadd.f32 %v1521, %v1669
        %v1671 = vpop.f32.mrb[0].mxu0
        %v1672 = vpop.f32.mrb[0].mxu0
        %v1673 = vadd.f32 %v1521, %v1672
        %v1674 = vpop.f32.mrb[0].mxu0
        %1675 = vmatprep.mubr.bf16.mxu0 0
        %1676 = vmatmul.mubr.bf16.gmra.mrb[0].mxu0 %v1493
        %v1677 = vpop.f32.mrb[0].mxu0
        %v1678 = vadd.f32 %v1521, %v1677
        %v1679 = vpop.f32.mrb[0].mxu0
        %v1680 = vpop.f32.mrb[0].mxu0
        %v1681 = vadd.f32 %v1521, %v1680
        %v1682 = vpop.f32.mrb[0].mxu0
        %1683 = vmatprep.mubr.bf16.mxu0 0
        %1684 = vmatmul.mubr.bf16.gmra.mrb[0].mxu0 %v1494
        %v1685 = vpop.f32.mrb[0].mxu0
        %v1686 = vadd.f32 %v1521, %v1685
        %v1687 = vpop.f32.mrb[0].mxu0
        %v1688 = vpop.f32.mrb[0].mxu0
        %v1689 = vadd.f32 %v1521, %v1688
        %v1690 = vpop.f32.mrb[0].mxu0
        %1691 = vmatprep.mubr.bf16.mxu0 0
        %1692 = vmatmul.mubr.bf16.gmra.mrb[0].mxu0 %v1495
        %v1693 = vpop.f32.mrb[0].mxu0
        %v1694 = vadd.f32 %v1521, %v1693
        %v1695 = vpop.f32.mrb[0].mxu0
        %v1696 = vpop.f32.mrb[0].mxu0
        %v1697 = vadd.f32 %v1521, %v1696
        %v1698 = vpop.f32.mrb[0].mxu0
        %1699 = vmatprep.mubr.bf16.mxu0 0
        %1700 = vmatmul.mubr.bf16.gmra.mrb[0].mxu0 %v1496
        %v1701 = vpop.f32.mrb[0].mxu0
        %v1702 = vadd.f32 %v1521, %v1701
        %v1703 = vpop.f32.mrb[0].mxu0
        %v1704 = vpop.f32.mrb[0].mxu0
        %v1705 = vadd.f32 %v1521, %v1704
        %v1706 = vpop.f32.mrb[0].mxu0
        %1707 = vmatprep.mubr.bf16.mxu0 0
        %1708 = vmatmul.mubr.bf16.gmra.mrb[0].mxu0 %v1497
        %v1709 = vpop.f32.mrb[0].mxu0
        %v1710 = vadd.f32 %v1521, %v1709
        %v1711 = vpop.f32.mrb[0].mxu0
        %v1712 = vpop.f32.mrb[0].mxu0
        %v1713 = vadd.f32 %v1521, %v1712
        %v1714 = vpop.f32.mrb[0].mxu0
        %1715 = vmatprep.mubr.bf16.mxu0 0
        %1716 = vmatmul.mubr.bf16.gmra.mrb[0].mxu0 %v1498
        %v1717 = vpop.f32.mrb[0].mxu0
        %v1718 = vadd.f32 %v1521, %v1717
        %v1719 = vpop.f32.mrb[0].mxu0
        %v1720 = vpop.f32.mrb[0].mxu0
        %v1721 = vadd.f32 %v1521, %v1720
        %v1722 = vpop.f32.mrb[0].mxu0
        %1723 = vmatprep.mubr.bf16.mxu0 0
        %1724 = vmatmul.mubr.bf16.gmra.mrb[0].mxu0 %v1499
        %v1725 = vpop.f32.mrb[0].mxu0
        %v1726 = vadd.f32 %v1521, %v1725
        %v1727 = vpop.f32.mrb[0].mxu0
        %v1728 = vpop.f32.mrb[0].mxu0
        %v1729 = vadd.f32 %v1521, %v1728
        %v1730 = vpop.f32.mrb[0].mxu0
        %1731 = vdwg.mxu0
        %1732 = vadd.xlane.f32.xlu0 %v1606
        %v1733 = vpop.xlane.xlu0 %1732
        %1734 = vadd.xlane.f32.xlu0 %v1609
        %v1735 = vpop.xlane.xlu0 %1734
        %1736 = vadd.xlane.f32.xlu0 %v1614
        %v1737 = vpop.xlane.xlu0 %1736
        %1738 = vadd.xlane.f32.xlu0 %v1617
        %v1739 = vpop.xlane.xlu0 %1738
        %1740 = vadd.xlane.f32.xlu0 %v1622
        %v1741 = vpop.xlane.xlu0 %1740
        %1742 = vadd.xlane.f32.xlu0 %v1625
        %v1743 = vpop.xlane.xlu0 %1742
        %1744 = vadd.xlane.f32.xlu0 %v1630
        %v1745 = vpop.xlane.xlu0 %1744
        %1746 = vadd.xlane.f32.xlu0 %v1633
        %v1747 = vpop.xlane.xlu0 %1746
        %1748 = vadd.xlane.f32.xlu0 %v1638
        %v1749 = vpop.xlane.xlu0 %1748
        %1750 = vadd.xlane.f32.xlu0 %v1641
        %v1751 = vpop.xlane.xlu0 %1750
        %1752 = vadd.xlane.f32.xlu0 %v1646
        %v1753 = vpop.xlane.xlu0 %1752
        %1754 = vadd.xlane.f32.xlu0 %v1649
        %v1755 = vpop.xlane.xlu0 %1754
        %1756 = vadd.xlane.f32.xlu0 %v1654
        %v1757 = vpop.xlane.xlu0 %1756
        %1758 = vadd.xlane.f32.xlu0 %v1657
        %v1759 = vpop.xlane.xlu0 %1758
        %1760 = vadd.xlane.f32.xlu0 %v1662
        %v1761 = vpop.xlane.xlu0 %1760
        %1762 = vadd.xlane.f32.xlu0 %v1665
        %v1763 = vpop.xlane.xlu0 %1762
        %1764 = vadd.xlane.f32.xlu0 %v1670
        %v1765 = vpop.xlane.xlu0 %1764
        %1766 = vadd.xlane.f32.xlu0 %v1673
        %v1767 = vpop.xlane.xlu0 %1766
        %1768 = vadd.xlane.f32.xlu0 %v1678
        %v1769 = vpop.xlane.xlu0 %1768
        %1770 = vadd.xlane.f32.xlu0 %v1681
        %v1771 = vpop.xlane.xlu0 %1770
        %1772 = vadd.xlane.f32.xlu0 %v1686
        %v1773 = vpop.xlane.xlu0 %1772
        %1774 = vadd.xlane.f32.xlu0 %v1689
        %v1775 = vpop.xlane.xlu0 %1774
        %1776 = vadd.xlane.f32.xlu0 %v1694
        %v1777 = vpop.xlane.xlu0 %1776
        %1778 = vadd.xlane.f32.xlu0 %v1697
        %v1779 = vpop.xlane.xlu0 %1778
        %1780 = vadd.xlane.f32.xlu0 %v1702
        %v1781 = vpop.xlane.xlu0 %1780
        %1782 = vadd.xlane.f32.xlu0 %v1705
        %v1783 = vpop.xlane.xlu0 %1782
        %1784 = vadd.xlane.f32.xlu0 %v1710
        %v1785 = vpop.xlane.xlu0 %1784
        %1786 = vadd.xlane.f32.xlu0 %v1713
        %v1787 = vpop.xlane.xlu0 %1786
        %1788 = vadd.xlane.f32.xlu0 %v1718
        %v1789 = vpop.xlane.xlu0 %1788
        %1790 = vadd.xlane.f32.xlu0 %v1721
        %v1791 = vpop.xlane.xlu0 %1790
        %1792 = vadd.xlane.f32.xlu0 %v1726
        %v1793 = vpop.xlane.xlu0 %1792
        %1794 = vadd.xlane.f32.xlu0 %v1729
        %v1795 = vpop.xlane.xlu0 %1794
        %v1796 = vmul.f32 %v1733, %v1085
        %v1797 = vmul.f32 %v1735, %v1085
        %v1798 = vmul.f32 %v1737, %v1085
        %v1799 = vmul.f32 %v1739, %v1085
        %v1800 = vmul.f32 %v1741, %v1085
        %v1801 = vmul.f32 %v1743, %v1085
        %v1802 = vmul.f32 %v1745, %v1085
        %v1803 = vmul.f32 %v1747, %v1085
        %v1804 = vmul.f32 %v1749, %v1085
        %v1805 = vmul.f32 %v1751, %v1085
        %v1806 = vmul.f32 %v1753, %v1085
        %v1807 = vmul.f32 %v1755, %v1085
        %v1808 = vmul.f32 %v1757, %v1085
        %v1809 = vmul.f32 %v1759, %v1085
        %v1810 = vmul.f32 %v1761, %v1085
        %v1811 = vmul.f32 %v1763, %v1085
        %v1812 = vmul.f32 %v1765, %v1085
        %v1813 = vmul.f32 %v1767, %v1085
        %v1814 = vmul.f32 %v1769, %v1085
        %v1815 = vmul.f32 %v1771, %v1085
        %v1816 = vmul.f32 %v1773, %v1085
        %v1817 = vmul.f32 %v1775, %v1085
        %v1818 = vmul.f32 %v1777, %v1085
        %v1819 = vmul.f32 %v1779, %v1085
        %v1820 = vmul.f32 %v1781, %v1085
        %v1821 = vmul.f32 %v1783, %v1085
        %v1822 = vmul.f32 %v1785, %v1085
        %v1823 = vmul.f32 %v1787, %v1085
        %v1824 = vmul.f32 %v1789, %v1085
        %v1825 = vmul.f32 %v1791, %v1085
        %v1826 = vmul.f32 %v1793, %v1085
        %v1827 = vmul.f32 %v1795, %v1085
        %v1828 = vsub.f32 %v1606, %v1796
        %v1829 = vsub.f32 %v1609, %v1797
        %v1830 = vsub.f32 %v1614, %v1798
        %v1831 = vsub.f32 %v1617, %v1799
        %v1832 = vsub.f32 %v1622, %v1800
        %v1833 = vsub.f32 %v1625, %v1801
        %v1834 = vsub.f32 %v1630, %v1802
        %v1835 = vsub.f32 %v1633, %v1803
        %v1836 = vsub.f32 %v1638, %v1804
        %v1837 = vsub.f32 %v1641, %v1805
        %v1838 = vsub.f32 %v1646, %v1806
        %v1839 = vsub.f32 %v1649, %v1807
        %v1840 = vsub.f32 %v1654, %v1808
        %v1841 = vsub.f32 %v1657, %v1809
        %v1842 = vsub.f32 %v1662, %v1810
        %v1843 = vsub.f32 %v1665, %v1811
        %v1844 = vsub.f32 %v1670, %v1812
        %v1845 = vsub.f32 %v1673, %v1813
        %v1846 = vsub.f32 %v1678, %v1814
        %v1847 = vsub.f32 %v1681, %v1815
        %v1848 = vsub.f32 %v1686, %v1816
        %v1849 = vsub.f32 %v1689, %v1817
        %v1850 = vsub.f32 %v1694, %v1818
        %v1851 = vsub.f32 %v1697, %v1819
        %v1852 = vsub.f32 %v1702, %v1820
        %v1853 = vsub.f32 %v1705, %v1821
        %v1854 = vsub.f32 %v1710, %v1822
        %v1855 = vsub.f32 %v1713, %v1823
        %v1856 = vsub.f32 %v1718, %v1824
        %v1857 = vsub.f32 %v1721, %v1825
        %v1858 = vsub.f32 %v1726, %v1826
        %v1859 = vsub.f32 %v1729, %v1827
        %v1860 = vmul.f32 %v1828, %v1828
        %v1861 = vmul.f32 %v1829, %v1829
        %v1862 = vmul.f32 %v1830, %v1830
        %v1863 = vmul.f32 %v1831, %v1831
        %v1864 = vmul.f32 %v1832, %v1832
        %v1865 = vmul.f32 %v1833, %v1833
        %v1866 = vmul.f32 %v1834, %v1834
        %v1867 = vmul.f32 %v1835, %v1835
        %v1868 = vmul.f32 %v1836, %v1836
        %v1869 = vmul.f32 %v1837, %v1837
        %v1870 = vmul.f32 %v1838, %v1838
        %v1871 = vmul.f32 %v1839, %v1839
        %v1872 = vmul.f32 %v1840, %v1840
        %v1873 = vmul.f32 %v1841, %v1841
        %v1874 = vmul.f32 %v1842, %v1842
        %v1875 = vmul.f32 %v1843, %v1843
        %v1876 = vmul.f32 %v1844, %v1844
        %v1877 = vmul.f32 %v1845, %v1845
        %v1878 = vmul.f32 %v1846, %v1846
        %v1879 = vmul.f32 %v1847, %v1847
        %v1880 = vmul.f32 %v1848, %v1848
        %v1881 = vmul.f32 %v1849, %v1849
        %v1882 = vmul.f32 %v1850, %v1850
        %v1883 = vmul.f32 %v1851, %v1851
        %v1884 = vmul.f32 %v1852, %v1852
        %v1885 = vmul.f32 %v1853, %v1853
        %v1886 = vmul.f32 %v1854, %v1854
        %v1887 = vmul.f32 %v1855, %v1855
        %v1888 = vmul.f32 %v1856, %v1856
        %v1889 = vmul.f32 %v1857, %v1857
        %v1890 = vmul.f32 %v1858, %v1858
        %v1891 = vmul.f32 %v1859, %v1859
        %1892 = vadd.xlane.f32.xlu0 %v1860
        %v1893 = vpop.xlane.xlu0 %1892
        %1894 = vadd.xlane.f32.xlu0 %v1861
        %v1895 = vpop.xlane.xlu0 %1894
        %1896 = vadd.xlane.f32.xlu0 %v1862
        %v1897 = vpop.xlane.xlu0 %1896
        %1898 = vadd.xlane.f32.xlu0 %v1863
        %v1899 = vpop.xlane.xlu0 %1898
        %1900 = vadd.xlane.f32.xlu0 %v1864
        %v1901 = vpop.xlane.xlu0 %1900
        %1902 = vadd.xlane.f32.xlu0 %v1865
        %v1903 = vpop.xlane.xlu0 %1902
        %1904 = vadd.xlane.f32.xlu0 %v1866
        %v1905 = vpop.xlane.xlu0 %1904
        %1906 = vadd.xlane.f32.xlu0 %v1867
        %v1907 = vpop.xlane.xlu0 %1906
        %1908 = vadd.xlane.f32.xlu0 %v1868
        %v1909 = vpop.xlane.xlu0 %1908
        %1910 = vadd.xlane.f32.xlu0 %v1869
        %v1911 = vpop.xlane.xlu0 %1910
        %1912 = vadd.xlane.f32.xlu0 %v1870
        %v1913 = vpop.xlane.xlu0 %1912
        %1914 = vadd.xlane.f32.xlu0 %v1871
        %v1915 = vpop.xlane.xlu0 %1914
        %1916 = vadd.xlane.f32.xlu0 %v1872
        %v1917 = vpop.xlane.xlu0 %1916
        %1918 = vadd.xlane.f32.xlu0 %v1873
        %v1919 = vpop.xlane.xlu0 %1918
        %1920 = vadd.xlane.f32.xlu0 %v1874
        %v1921 = vpop.xlane.xlu0 %1920
        %1922 = vadd.xlane.f32.xlu0 %v1875
        %v1923 = vpop.xlane.xlu0 %1922
        %1924 = vadd.xlane.f32.xlu0 %v1876
        %v1925 = vpop.xlane.xlu0 %1924
        %1926 = vadd.xlane.f32.xlu0 %v1877
        %v1927 = vpop.xlane.xlu0 %1926
        %1928 = vadd.xlane.f32.xlu0 %v1878
        %v1929 = vpop.xlane.xlu0 %1928
        %1930 = vadd.xlane.f32.xlu0 %v1879
        %v1931 = vpop.xlane.xlu0 %1930
        %1932 = vadd.xlane.f32.xlu0 %v1880
        %v1933 = vpop.xlane.xlu0 %1932
        %1934 = vadd.xlane.f32.xlu0 %v1881
        %v1935 = vpop.xlane.xlu0 %1934
        %1936 = vadd.xlane.f32.xlu0 %v1882
        %v1937 = vpop.xlane.xlu0 %1936
        %1938 = vadd.xlane.f32.xlu0 %v1883
        %v1939 = vpop.xlane.xlu0 %1938
        %1940 = vadd.xlane.f32.xlu0 %v1884
        %v1941 = vpop.xlane.xlu0 %1940
        %1942 = vadd.xlane.f32.xlu0 %v1885
        %v1943 = vpop.xlane.xlu0 %1942
        %1944 = vadd.xlane.f32.xlu0 %v1886
        %v1945 = vpop.xlane.xlu0 %1944
        %1946 = vadd.xlane.f32.xlu0 %v1887
        %v1947 = vpop.xlane.xlu0 %1946
        %1948 = vadd.xlane.f32.xlu0 %v1888
        %v1949 = vpop.xlane.xlu0 %1948
        %1950 = vadd.xlane.f32.xlu0 %v1889
        %v1951 = vpop.xlane.xlu0 %1950
        %1952 = vadd.xlane.f32.xlu0 %v1890
        %v1953 = vpop.xlane.xlu0 %1952
        %1954 = vadd.xlane.f32.xlu0 %v1891
        %v1955 = vpop.xlane.xlu0 %1954
        %v1956 = vmul.f32 %v1893, %v1085
        %v1957 = vmul.f32 %v1895, %v1085
        %v1958 = vmul.f32 %v1897, %v1085
        %v1959 = vmul.f32 %v1899, %v1085
        %v1960 = vmul.f32 %v1901, %v1085
        %v1961 = vmul.f32 %v1903, %v1085
        %v1962 = vmul.f32 %v1905, %v1085
        %v1963 = vmul.f32 %v1907, %v1085
        %v1964 = vmul.f32 %v1909, %v1085
        %v1965 = vmul.f32 %v1911, %v1085
        %v1966 = vmul.f32 %v1913, %v1085
        %v1967 = vmul.f32 %v1915, %v1085
        %v1968 = vmul.f32 %v1917, %v1085
        %v1969 = vmul.f32 %v1919, %v1085
        %v1970 = vmul.f32 %v1921, %v1085
        %v1971 = vmul.f32 %v1923, %v1085
        %v1972 = vmul.f32 %v1925, %v1085
        %v1973 = vmul.f32 %v1927, %v1085
        %v1974 = vmul.f32 %v1929, %v1085
        %v1975 = vmul.f32 %v1931, %v1085
        %v1976 = vmul.f32 %v1933, %v1085
        %v1977 = vmul.f32 %v1935, %v1085
        %v1978 = vmul.f32 %v1937, %v1085
        %v1979 = vmul.f32 %v1939, %v1085
        %v1980 = vmul.f32 %v1941, %v1085
        %v1981 = vmul.f32 %v1943, %v1085
        %v1982 = vmul.f32 %v1945, %v1085
        %v1983 = vmul.f32 %v1947, %v1085
        %v1984 = vmul.f32 %v1949, %v1085
        %v1985 = vmul.f32 %v1951, %v1085
        %v1986 = vmul.f32 %v1953, %v1085
        %v1987 = vmul.f32 %v1955, %v1085
        %v1988 = vadd.f32 %v1956, 1e-05
        %v1989 = vadd.f32 %v1957, 1e-05
        %v1990 = vadd.f32 %v1958, 1e-05
        %v1991 = vadd.f32 %v1959, 1e-05
        %v1992 = vadd.f32 %v1960, 1e-05
        %v1993 = vadd.f32 %v1961, 1e-05
        %v1994 = vadd.f32 %v1962, 1e-05
        %v1995 = vadd.f32 %v1963, 1e-05
        %v1996 = vadd.f32 %v1964, 1e-05
        %v1997 = vadd.f32 %v1965, 1e-05
        %v1998 = vadd.f32 %v1966, 1e-05
        %v1999 = vadd.f32 %v1967, 1e-05
        %v2000 = vadd.f32 %v1968, 1e-05
        %v2001 = vadd.f32 %v1969, 1e-05
        %v2002 = vadd.f32 %v1970, 1e-05
        %v2003 = vadd.f32 %v1971, 1e-05
        %v2004 = vadd.f32 %v1972, 1e-05
        %v2005 = vadd.f32 %v1973, 1e-05
        %v2006 = vadd.f32 %v1974, 1e-05
        %v2007 = vadd.f32 %v1975, 1e-05
        %v2008 = vadd.f32 %v1976, 1e-05
        %v2009 = vadd.f32 %v1977, 1e-05
        %v2010 = vadd.f32 %v1978, 1e-05
        %v2011 = vadd.f32 %v1979, 1e-05
        %v2012 = vadd.f32 %v1980, 1e-05
        %v2013 = vadd.f32 %v1981, 1e-05
        %v2014 = vadd.f32 %v1982, 1e-05
        %v2015 = vadd.f32 %v1983, 1e-05
        %v2016 = vadd.f32 %v1984, 1e-05
        %v2017 = vadd.f32 %v1985, 1e-05
        %v2018 = vadd.f32 %v1986, 1e-05
        %v2019 = vadd.f32 %v1987, 1e-05
        %v2020 = vrsqrt.pop %v1988
        %v2021 = vrsqrt.pop %v1989
        %v2022 = vrsqrt.pop %v1990
        %v2023 = vrsqrt.pop %v1991
        %v2024 = vrsqrt.pop %v1992
        %v2025 = vrsqrt.pop %v1993
        %v2026 = vrsqrt.pop %v1994
        %v2027 = vrsqrt.pop %v1995
        %v2028 = vrsqrt.pop %v1996
        %v2029 = vrsqrt.pop %v1997
        %v2030 = vrsqrt.pop %v1998
        %v2031 = vrsqrt.pop %v1999
        %v2032 = vrsqrt.pop %v2000
        %v2033 = vrsqrt.pop %v2001
        %v2034 = vrsqrt.pop %v2002
        %v2035 = vrsqrt.pop %v2003
        %v2036 = vrsqrt.pop %v2004
        %v2037 = vrsqrt.pop %v2005
        %v2038 = vrsqrt.pop %v2006
        %v2039 = vrsqrt.pop %v2007
        %v2040 = vrsqrt.pop %v2008
        %v2041 = vrsqrt.pop %v2009
        %v2042 = vrsqrt.pop %v2010
        %v2043 = vrsqrt.pop %v2011
        %v2044 = vrsqrt.pop %v2012
        %v2045 = vrsqrt.pop %v2013
        %v2046 = vrsqrt.pop %v2014
        %v2047 = vrsqrt.pop %v2015
        %v2048 = vrsqrt.pop %v2016
        %v2049 = vrsqrt.pop %v2017
        %v2050 = vrsqrt.pop %v2018
        %v2051 = vrsqrt.pop %v2019
        %v2052 = vmul.f32 %v1828, %v2020
        %v2053 = vmul.f32 %v1829, %v2021
        %v2054 = vmul.f32 %v1830, %v2022
        %v2055 = vmul.f32 %v1831, %v2023
        %v2056 = vmul.f32 %v1832, %v2024
        %v2057 = vmul.f32 %v1833, %v2025
        %v2058 = vmul.f32 %v1834, %v2026
        %v2059 = vmul.f32 %v1835, %v2027
        %v2060 = vmul.f32 %v1836, %v2028
        %v2061 = vmul.f32 %v1837, %v2029
        %v2062 = vmul.f32 %v1838, %v2030
        %v2063 = vmul.f32 %v1839, %v2031
        %v2064 = vmul.f32 %v1840, %v2032
        %v2065 = vmul.f32 %v1841, %v2033
        %v2066 = vmul.f32 %v1842, %v2034
        %v2067 = vmul.f32 %v1843, %v2035
        %v2068 = vmul.f32 %v1844, %v2036
        %v2069 = vmul.f32 %v1845, %v2037
        %v2070 = vmul.f32 %v1846, %v2038
        %v2071 = vmul.f32 %v1847, %v2039
        %v2072 = vmul.f32 %v1848, %v2040
        %v2073 = vmul.f32 %v1849, %v2041
        %v2074 = vmul.f32 %v1850, %v2042
        %v2075 = vmul.f32 %v1851, %v2043
        %v2076 = vmul.f32 %v1852, %v2044
        %v2077 = vmul.f32 %v1853, %v2045
        %v2078 = vmul.f32 %v1854, %v2046
        %v2079 = vmul.f32 %v1855, %v2047
        %v2080 = vmul.f32 %v1856, %v2048
        %v2081 = vmul.f32 %v1857, %v2049
        %v2082 = vmul.f32 %v1858, %v2050
        %v2083 = vmul.f32 %v1859, %v2051
        %v2084 = vld [vmem:[%s7] sm:$0x1]
        %v2086 = vlaneseq
        %v2087 = vshrl.u32 %v2086, 7
        %v2088 = vsub.s32 0, %v2087
        %v2089 = vrot.slane %v2084, %v2088
        %v2091 = vmul.f32 %v2089, %v2052
        %v2092 = vmul.f32 %v2089, %v2053
        %v2093 = vmul.f32 %v2089, %v2054
        %v2094 = vmul.f32 %v2089, %v2055
        %v2095 = vmul.f32 %v2089, %v2056
        %v2096 = vmul.f32 %v2089, %v2057
        %v2097 = vmul.f32 %v2089, %v2058
        %v2098 = vmul.f32 %v2089, %v2059
        %v2099 = vmul.f32 %v2089, %v2060
        %v2100 = vmul.f32 %v2089, %v2061
        %v2101 = vmul.f32 %v2089, %v2062
        %v2102 = vmul.f32 %v2089, %v2063
        %v2103 = vmul.f32 %v2089, %v2064
        %v2104 = vmul.f32 %v2089, %v2065
        %v2105 = vmul.f32 %v2089, %v2066
        %v2106 = vmul.f32 %v2089, %v2067
        %v2107 = vmul.f32 %v2089, %v2068
        %v2108 = vmul.f32 %v2089, %v2069
        %v2109 = vmul.f32 %v2089, %v2070
        %v2110 = vmul.f32 %v2089, %v2071
        %v2111 = vmul.f32 %v2089, %v2072
        %v2112 = vmul.f32 %v2089, %v2073
        %v2113 = vmul.f32 %v2089, %v2074
        %v2114 = vmul.f32 %v2089, %v2075
        %v2115 = vmul.f32 %v2089, %v2076
        %v2116 = vmul.f32 %v2089, %v2077
        %v2117 = vmul.f32 %v2089, %v2078
        %v2118 = vmul.f32 %v2089, %v2079
        %v2119 = vmul.f32 %v2089, %v2080
        %v2120 = vmul.f32 %v2089, %v2081
        %v2121 = vmul.f32 %v2089, %v2082
        %v2122 = vmul.f32 %v2089, %v2083
        %v2123 = vld [vmem:[%s8] sm:$0x1]
        %v2125 = vlaneseq
        %v2126 = vshrl.u32 %v2125, 7
        %v2127 = vsub.s32 0, %v2126
        %v2128 = vrot.slane %v2123, %v2127
        %v2130 = vadd.f32 %v2091, %v2128
        %v2131 = vadd.f32 %v2092, %v2128
        %v2132 = vadd.f32 %v2093, %v2128
        %v2133 = vadd.f32 %v2094, %v2128
        %v2134 = vadd.f32 %v2095, %v2128
        %v2135 = vadd.f32 %v2096, %v2128
        %v2136 = vadd.f32 %v2097, %v2128
        %v2137 = vadd.f32 %v2098, %v2128
        %v2138 = vadd.f32 %v2099, %v2128
        %v2139 = vadd.f32 %v2100, %v2128
        %v2140 = vadd.f32 %v2101, %v2128
        %v2141 = vadd.f32 %v2102, %v2128
        %v2142 = vadd.f32 %v2103, %v2128
        %v2143 = vadd.f32 %v2104, %v2128
        %v2144 = vadd.f32 %v2105, %v2128
        %v2145 = vadd.f32 %v2106, %v2128
        %v2146 = vadd.f32 %v2107, %v2128
        %v2147 = vadd.f32 %v2108, %v2128
        %v2148 = vadd.f32 %v2109, %v2128
        %v2149 = vadd.f32 %v2110, %v2128
        %v2150 = vadd.f32 %v2111, %v2128
        %v2151 = vadd.f32 %v2112, %v2128
        %v2152 = vadd.f32 %v2113, %v2128
        %v2153 = vadd.f32 %v2114, %v2128
        %v2154 = vadd.f32 %v2115, %v2128
        %v2155 = vadd.f32 %v2116, %v2128
        %v2156 = vadd.f32 %v2117, %v2128
        %v2157 = vadd.f32 %v2118, %v2128
        %v2158 = vadd.f32 %v2119, %v2128
        %v2159 = vadd.f32 %v2120, %v2128
        %v2160 = vadd.f32 %v2121, %v2128
        %v2161 = vadd.f32 %v2122, %v2128
        %v2162 = vmax.f32 %v2130, 0.0
        %v2163 = vmax.f32 %v2131, 0.0
        %v2164 = vmax.f32 %v2132, 0.0
        %v2165 = vmax.f32 %v2133, 0.0
        %v2166 = vmax.f32 %v2134, 0.0
        %v2167 = vmax.f32 %v2135, 0.0
        %v2168 = vmax.f32 %v2136, 0.0
        %v2169 = vmax.f32 %v2137, 0.0
        %v2170 = vmax.f32 %v2138, 0.0
        %v2171 = vmax.f32 %v2139, 0.0
        %v2172 = vmax.f32 %v2140, 0.0
        %v2173 = vmax.f32 %v2141, 0.0
        %v2174 = vmax.f32 %v2142, 0.0
        %v2175 = vmax.f32 %v2143, 0.0
        %v2176 = vmax.f32 %v2144, 0.0
        %v2177 = vmax.f32 %v2145, 0.0
        %v2178 = vmax.f32 %v2146, 0.0
        %v2179 = vmax.f32 %v2147, 0.0
        %v2180 = vmax.f32 %v2148, 0.0
        %v2181 = vmax.f32 %v2149, 0.0
        %v2182 = vmax.f32 %v2150, 0.0
        %v2183 = vmax.f32 %v2151, 0.0
        %v2184 = vmax.f32 %v2152, 0.0
        %v2185 = vmax.f32 %v2153, 0.0
        %v2186 = vmax.f32 %v2154, 0.0
        %v2187 = vmax.f32 %v2155, 0.0
        %v2188 = vmax.f32 %v2156, 0.0
        %v2189 = vmax.f32 %v2157, 0.0
        %v2190 = vmax.f32 %v2158, 0.0
        %v2191 = vmax.f32 %v2159, 0.0
        %v2192 = vmax.f32 %v2160, 0.0
        %v2193 = vmax.f32 %v2161, 0.0
        %v2194 = vadd.f32 %v1452, %v2162
        %v2195 = vadd.f32 %v1453, %v2163
        %v2196 = vadd.f32 %v1454, %v2164
        %v2197 = vadd.f32 %v1455, %v2165
        %v2198 = vadd.f32 %v1456, %v2166
        %v2199 = vadd.f32 %v1457, %v2167
        %v2200 = vadd.f32 %v1458, %v2168
        %v2201 = vadd.f32 %v1459, %v2169
        %v2202 = vadd.f32 %v1460, %v2170
        %v2203 = vadd.f32 %v1461, %v2171
        %v2204 = vadd.f32 %v1462, %v2172
        %v2205 = vadd.f32 %v1463, %v2173
        %v2206 = vadd.f32 %v1464, %v2174
        %v2207 = vadd.f32 %v1465, %v2175
        %v2208 = vadd.f32 %v1466, %v2176
        %v2209 = vadd.f32 %v1467, %v2177
        %v2210 = vadd.f32 %v1468, %v2178
        %v2211 = vadd.f32 %v1469, %v2179
        %v2212 = vadd.f32 %v1470, %v2180
        %v2213 = vadd.f32 %v1471, %v2181
        %v2214 = vadd.f32 %v1472, %v2182
        %v2215 = vadd.f32 %v1473, %v2183
        %v2216 = vadd.f32 %v1474, %v2184
        %v2217 = vadd.f32 %v1475, %v2185
        %v2218 = vadd.f32 %v1476, %v2186
        %v2219 = vadd.f32 %v1477, %v2187
        %v2220 = vadd.f32 %v1478, %v2188
        %v2221 = vadd.f32 %v1479, %v2189
        %v2222 = vadd.f32 %v1480, %v2190
        %v2223 = vadd.f32 %v1481, %v2191
        %v2224 = vadd.f32 %v1482, %v2192
        %v2225 = vadd.f32 %v1483, %v2193
        %v2226 = vpack.c.bf16 %v2195, %v2194
        %v2227 = vpack.c.bf16 %v2197, %v2196
        %v2228 = vpack.c.bf16 %v2199, %v2198
        %v2229 = vpack.c.bf16 %v2201, %v2200
        %v2230 = vpack.c.bf16 %v2203, %v2202
        %v2231 = vpack.c.bf16 %v2205, %v2204
        %v2232 = vpack.c.bf16 %v2207, %v2206
        %v2233 = vpack.c.bf16 %v2209, %v2208
        %v2234 = vpack.c.bf16 %v2211, %v2210
        %v2235 = vpack.c.bf16 %v2213, %v2212
        %v2236 = vpack.c.bf16 %v2215, %v2214
        %v2237 = vpack.c.bf16 %v2217, %v2216
        %v2238 = vpack.c.bf16 %v2219, %v2218
        %v2239 = vpack.c.bf16 %v2221, %v2220
        %v2240 = vpack.c.bf16 %v2223, %v2222
        %v2241 = vpack.c.bf16 %v2225, %v2224
        %v2242 = vld [vmem:[%s9] sm:$0xff]
        %v2243 = vld [vmem:[%s9 + $0x8] sm:$0xf]
        %v2244 = vld [vmem:[%s9 + $0xc] sm:$0xff]
        %v2245 = vld [vmem:[%s9 + $0x14] sm:$0xf]
        %v2246 = vld [vmem:[%s9 + $0x18] sm:$0xff]
        %v2247 = vld [vmem:[%s9 + $0x20] sm:$0xf]
        %v2248 = vld [vmem:[%s9 + $0x24] sm:$0xff]
        %v2249 = vld [vmem:[%s9 + $0x2c] sm:$0xf]
        %v2250 = vld [vmem:[%s9 + $0x30] sm:$0xff]
        %v2251 = vld [vmem:[%s9 + $0x38] sm:$0xf]
        %v2252 = vld [vmem:[%s9 + $0x3c] sm:$0xff]
        %v2253 = vld [vmem:[%s9 + $0x44] sm:$0xf]
        %v2254 = vld [vmem:[%s9 + $0x48] sm:$0xff]
        %v2255 = vld [vmem:[%s9 + $0x50] sm:$0xf]
        %v2256 = vld [vmem:[%s9 + $0x54] sm:$0xff]
        %v2257 = vld [vmem:[%s9 + $0x5c] sm:$0xf]
        %v2258 = vld [vmem:[%s9 + $0x60] sm:$0xff]
        %v2259 = vld [vmem:[%s9 + $0x68] sm:$0xf]
        %v2260 = vld [vmem:[%s9 + $0x6c] sm:$0xff]
        %v2261 = vld [vmem:[%s9 + $0x74] sm:$0xf]
        %v2262 = vld [vmem:[%s9 + $0x78] sm:$0xff]
        %v2263 = vld [vmem:[%s9 + $0x80] sm:$0xf]
        %v2264 = vld [vmem:[%s9 + $0x84] sm:$0xff]
        %v2265 = vld [vmem:[%s9 + $0x8c] sm:$0xf]
        %v2266 = vld [vmem:[%s9 + $0x90] sm:$0xff]
        %v2267 = vld [vmem:[%s9 + $0x98] sm:$0xf]
        %v2268 = vld [vmem:[%s9 + $0x9c] sm:$0xff]
        %v2269 = vld [vmem:[%s9 + $0xa4] sm:$0xf]
        %v2270 = vld [vmem:[%s9 + $0xa8] sm:$0xff]
        %v2271 = vld [vmem:[%s9 + $0xb0] sm:$0xf]
        %v2272 = vld [vmem:[%s9 + $0xb4] sm:$0xff]
        %v2273 = vld [vmem:[%s9 + $0xbc] sm:$0xf]
        %v2274 = vld [vmem:[%s10] sm:$0x7]
        %v2276 = vlaneseq
        %v2277 = vshrl.u32 %v2276, 7
        %v2278 = vsub.s32 0, %v2277
        %v2279 = vrot.slane %v2274, %v2278
        %v2280 = vlaneseq
        %v2281 = vshrl.u32 %v2280, 7
        %v2282 = vsub.s32 1, %v2281
        %v2283 = vrot.slane %v2274, %v2282
        %v2284 = vlaneseq
        %v2285 = vshrl.u32 %v2284, 7
        %v2286 = vsub.s32 2, %v2285
        %v2287 = vrot.slane %v2274, %v2286
        %v2323 = vunpack.c.l.b16 %v2242
        %v2324 = vunpack.c.h.b16 %v2242
        %v2325 = vunpack.c.l.b16 %v2243
        %v2326 = vunpack.c.l.b16 %v2244
        %v2327 = vunpack.c.h.b16 %v2244
        %v2328 = vunpack.c.l.b16 %v2245
        %v2329 = vunpack.c.l.b16 %v2246
        %v2330 = vunpack.c.h.b16 %v2246
        %v2331 = vunpack.c.l.b16 %v2247
        %v2332 = vunpack.c.l.b16 %v2248
        %v2333 = vunpack.c.h.b16 %v2248
        %v2334 = vunpack.c.l.b16 %v2249
        %v2335 = vunpack.c.l.b16 %v2250
        %v2336 = vunpack.c.h.b16 %v2250
        %v2337 = vunpack.c.l.b16 %v2251
        %v2338 = vunpack.c.l.b16 %v2252
        %v2339 = vunpack.c.h.b16 %v2252
        %v2340 = vunpack.c.l.b16 %v2253
        %v2341 = vunpack.c.l.b16 %v2254
        %v2342 = vunpack.c.h.b16 %v2254
        %v2343 = vunpack.c.l.b16 %v2255
        %v2344 = vunpack.c.l.b16 %v2256
        %v2345 = vunpack.c.h.b16 %v2256
        %v2346 = vunpack.c.l.b16 %v2257
        %v2347 = vunpack.c.l.b16 %v2258
        %v2348 = vunpack.c.h.b16 %v2258
        %v2349 = vunpack.c.l.b16 %v2259
        %v2350 = vunpack.c.l.b16 %v2260
        %v2351 = vunpack.c.h.b16 %v2260
        %v2352 = vunpack.c.l.b16 %v2261
        %v2353 = vunpack.c.l.b16 %v2262
        %v2354 = vunpack.c.h.b16 %v2262
        %v2355 = vunpack.c.l.b16 %v2263
        %v2356 = vunpack.c.l.b16 %v2264
        %v2357 = vunpack.c.h.b16 %v2264
        %v2358 = vunpack.c.l.b16 %v2265
        %v2359 = vunpack.c.l.b16 %v2266
        %v2360 = vunpack.c.h.b16 %v2266
        %v2361 = vunpack.c.l.b16 %v2267
        %v2362 = vunpack.c.l.b16 %v2268
        %v2363 = vunpack.c.h.b16 %v2268
        %v2364 = vunpack.c.l.b16 %v2269
        %v2365 = vunpack.c.l.b16 %v2270
        %v2366 = vunpack.c.h.b16 %v2270
        %v2367 = vunpack.c.l.b16 %v2271
        %v2368 = vunpack.c.l.b16 %v2272
        %v2369 = vunpack.c.h.b16 %v2272
        %v2370 = vunpack.c.l.b16 %v2273
        %v2371 = vpack.c.b16 %v2326, %v2323
        %v2372 = vpack.c.b16 %v2327, %v2324
        %v2373 = vpack.c.b16 %v2328, %v2325
        %v2374 = vpack.c.b16 %v2332, %v2329
        %v2375 = vpack.c.b16 %v2333, %v2330
        %v2376 = vpack.c.b16 %v2334, %v2331
        %v2377 = vpack.c.b16 %v2338, %v2335
        %v2378 = vpack.c.b16 %v2339, %v2336
        %v2379 = vpack.c.b16 %v2340, %v2337
        %v2380 = vpack.c.b16 %v2344, %v2341
        %v2381 = vpack.c.b16 %v2345, %v2342
        %v2382 = vpack.c.b16 %v2346, %v2343
        %v2383 = vpack.c.b16 %v2350, %v2347
        %v2384 = vpack.c.b16 %v2351, %v2348
        %v2385 = vpack.c.b16 %v2352, %v2349
        %v2386 = vpack.c.b16 %v2356, %v2353
        %v2387 = vpack.c.b16 %v2357, %v2354
        %v2388 = vpack.c.b16 %v2358, %v2355
        %v2389 = vpack.c.b16 %v2362, %v2359
        %v2390 = vpack.c.b16 %v2363, %v2360
        %v2391 = vpack.c.b16 %v2364, %v2361
        %v2392 = vpack.c.b16 %v2368, %v2365
        %v2393 = vpack.c.b16 %v2369, %v2366
        %v2394 = vpack.c.b16 %v2370, %v2367
        %2419 = vmatprep.subr.bf16.mxu0 %v2372
        %2420 = vmatpush1.bf16.msra.mxu0 %v2371
        %2421 = vmatprep.subr.bf16.mxu0 %v2375
        %2422 = vmatpush1.bf16.msra.mxu0 %v2374
        %2423 = vmatprep.subr.bf16.mxu0 %v2378
        %2424 = vmatpush1.bf16.msra.mxu0 %v2377
        %2425 = vmatprep.subr.bf16.mxu0 %v2381
        %2426 = vmatpush1.bf16.msra.mxu0 %v2380
        %2427 = vmatprep.subr.bf16.mxu0 %v2384
        %2428 = vmatpush1.bf16.msra.mxu0 %v2383
        %2429 = vmatprep.subr.bf16.mxu0 %v2387
        %2430 = vmatpush1.bf16.msra.mxu0 %v2386
        %2431 = vmatprep.subr.bf16.mxu0 %v2390
        %2432 = vmatpush1.bf16.msra.mxu0 %v2389
        %2433 = vmatprep.subr.bf16.mxu0 %v2393
        %2434 = vmatpush1.bf16.msra.mxu0 %v2392
        %2435 = vmatprep.subr.bf16.mxu0 0
        %2436 = vmatpush1.bf16.msra.mxu0 0
        %2437 = vmatprep.subr.bf16.mxu0 0
        %2438 = vmatpush1.bf16.msra.mxu0 0
        %2439 = vmatprep.subr.bf16.mxu0 0
        %2440 = vmatpush1.bf16.msra.mxu0 0
        %2441 = vmatprep.subr.bf16.mxu0 0
        %2442 = vmatpush1.bf16.msra.mxu0 0
        %2443 = vmatprep.subr.bf16.mxu0 0
        %2444 = vmatpush1.bf16.msra.mxu0 0
        %2445 = vmatprep.subr.bf16.mxu0 0
        %2446 = vmatpush1.bf16.msra.mxu0 0
        %2447 = vmatprep.subr.bf16.mxu0 0
        %2448 = vmatpush1.bf16.msra.mxu0 0
        %2449 = vmatprep.subr.bf16.mxu0 0
        %2450 = vmatpush1.bf16.msra.mxu0 0
        %2451 = vmatprep.mubr.bf16.mxu0 0
        %2452 = vmatmul.mubr.bf16.gmra.mrb[0].mxu0 %v2226
        %v2453 = vpop.f32.mrb[0].mxu0
        %v2454 = vadd.f32 %v2279, %v2453
        %v2455 = vpop.f32.mrb[0].mxu0
        %v2456 = vadd.f32 %v2283, %v2455
        %v2457 = vpop.f32.mrb[0].mxu0
        %v2458 = vadd.f32 %v2279, %v2457
        %v2459 = vpop.f32.mrb[0].mxu0
        %v2460 = vadd.f32 %v2283, %v2459
        %2461 = vmatprep.mubr.bf16.mxu0 0
        %2462 = vmatmul.mubr.bf16.gmra.mrb[0].mxu0 %v2227
        %v2463 = vpop.f32.mrb[0].mxu0
        %v2464 = vadd.f32 %v2279, %v2463
        %v2465 = vpop.f32.mrb[0].mxu0
        %v2466 = vadd.f32 %v2283, %v2465
        %v2467 = vpop.f32.mrb[0].mxu0
        %v2468 = vadd.f32 %v2279, %v2467
        %v2469 = vpop.f32.mrb[0].mxu0
        %v2470 = vadd.f32 %v2283, %v2469
        %2471 = vmatprep.mubr.bf16.mxu0 0
        %2472 = vmatmul.mubr.bf16.gmra.mrb[0].mxu0 %v2228
        %v2473 = vpop.f32.mrb[0].mxu0
        %v2474 = vadd.f32 %v2279, %v2473
        %v2475 = vpop.f32.mrb[0].mxu0
        %v2476 = vadd.f32 %v2283, %v2475
        %v2477 = vpop.f32.mrb[0].mxu0
        %v2478 = vadd.f32 %v2279, %v2477
        %v2479 = vpop.f32.mrb[0].mxu0
        %v2480 = vadd.f32 %v2283, %v2479
        %2481 = vmatprep.mubr.bf16.mxu0 0
        %2482 = vmatmul.mubr.bf16.gmra.mrb[0].mxu0 %v2229
        %v2483 = vpop.f32.mrb[0].mxu0
        %v2484 = vadd.f32 %v2279, %v2483
        %v2485 = vpop.f32.mrb[0].mxu0
        %v2486 = vadd.f32 %v2283, %v2485
        %v2487 = vpop.f32.mrb[0].mxu0
        %v2488 = vadd.f32 %v2279, %v2487
        %v2489 = vpop.f32.mrb[0].mxu0
        %v2490 = vadd.f32 %v2283, %v2489
        %2491 = vmatprep.mubr.bf16.mxu0 0
        %2492 = vmatmul.mubr.bf16.gmra.mrb[0].mxu0 %v2230
        %v2493 = vpop.f32.mrb[0].mxu0
        %v2494 = vadd.f32 %v2279, %v2493
        %v2495 = vpop.f32.mrb[0].mxu0
        %v2496 = vadd.f32 %v2283, %v2495
        %v2497 = vpop.f32.mrb[0].mxu0
        %v2498 = vadd.f32 %v2279, %v2497
        %v2499 = vpop.f32.mrb[0].mxu0
        %v2500 = vadd.f32 %v2283, %v2499
        %2501 = vmatprep.mubr.bf16.mxu0 0
        %2502 = vmatmul.mubr.bf16.gmra.mrb[0].mxu0 %v2231
        %v2503 = vpop.f32.mrb[0].mxu0
        %v2504 = vadd.f32 %v2279, %v2503
        %v2505 = vpop.f32.mrb[0].mxu0
        %v2506 = vadd.f32 %v2283, %v2505
        %v2507 = vpop.f32.mrb[0].mxu0
        %v2508 = vadd.f32 %v2279, %v2507
        %v2509 = vpop.f32.mrb[0].mxu0
        %v2510 = vadd.f32 %v2283, %v2509
        %2511 = vmatprep.mubr.bf16.mxu0 0
        %2512 = vmatmul.mubr.bf16.gmra.mrb[0].mxu0 %v2232
        %v2513 = vpop.f32.mrb[0].mxu0
        %v2514 = vadd.f32 %v2279, %v2513
        %v2515 = vpop.f32.mrb[0].mxu0
        %v2516 = vadd.f32 %v2283, %v2515
        %v2517 = vpop.f32.mrb[0].mxu0
        %v2518 = vadd.f32 %v2279, %v2517
        %v2519 = vpop.f32.mrb[0].mxu0
        %v2520 = vadd.f32 %v2283, %v2519
        %2521 = vmatprep.mubr.bf16.mxu0 0
        %2522 = vmatmul.mubr.bf16.gmra.mrb[0].mxu0 %v2233
        %v2523 = vpop.f32.mrb[0].mxu0
        %v2524 = vadd.f32 %v2279, %v2523
        %v2525 = vpop.f32.mrb[0].mxu0
        %v2526 = vadd.f32 %v2283, %v2525
        %v2527 = vpop.f32.mrb[0].mxu0
        %v2528 = vadd.f32 %v2279, %v2527
        %v2529 = vpop.f32.mrb[0].mxu0
        %v2530 = vadd.f32 %v2283, %v2529
        %2531 = vmatprep.mubr.bf16.mxu0 0
        %2532 = vmatmul.mubr.bf16.gmra.mrb[0].mxu0 %v2234
        %v2533 = vpop.f32.mrb[0].mxu0
        %v2534 = vadd.f32 %v2279, %v2533
        %v2535 = vpop.f32.mrb[0].mxu0
        %v2536 = vadd.f32 %v2283, %v2535
        %v2537 = vpop.f32.mrb[0].mxu0
        %v2538 = vadd.f32 %v2279, %v2537
        %v2539 = vpop.f32.mrb[0].mxu0
        %v2540 = vadd.f32 %v2283, %v2539
        %2541 = vmatprep.mubr.bf16.mxu0 0
        %2542 = vmatmul.mubr.bf16.gmra.mrb[0].mxu0 %v2235
        %v2543 = vpop.f32.mrb[0].mxu0
        %v2544 = vadd.f32 %v2279, %v2543
        %v2545 = vpop.f32.mrb[0].mxu0
        %v2546 = vadd.f32 %v2283, %v2545
        %v2547 = vpop.f32.mrb[0].mxu0
        %v2548 = vadd.f32 %v2279, %v2547
        %v2549 = vpop.f32.mrb[0].mxu0
        %v2550 = vadd.f32 %v2283, %v2549
        %2551 = vmatprep.mubr.bf16.mxu0 0
        %2552 = vmatmul.mubr.bf16.gmra.mrb[0].mxu0 %v2236
        %v2553 = vpop.f32.mrb[0].mxu0
        %v2554 = vadd.f32 %v2279, %v2553
        %v2555 = vpop.f32.mrb[0].mxu0
        %v2556 = vadd.f32 %v2283, %v2555
        %v2557 = vpop.f32.mrb[0].mxu0
        %v2558 = vadd.f32 %v2279, %v2557
        %v2559 = vpop.f32.mrb[0].mxu0
        %v2560 = vadd.f32 %v2283, %v2559
        %2561 = vmatprep.mubr.bf16.mxu0 0
        %2562 = vmatmul.mubr.bf16.gmra.mrb[0].mxu0 %v2237
        %v2563 = vpop.f32.mrb[0].mxu0
        %v2564 = vadd.f32 %v2279, %v2563
        %v2565 = vpop.f32.mrb[0].mxu0
        %v2566 = vadd.f32 %v2283, %v2565
        %v2567 = vpop.f32.mrb[0].mxu0
        %v2568 = vadd.f32 %v2279, %v2567
        %v2569 = vpop.f32.mrb[0].mxu0
        %v2570 = vadd.f32 %v2283, %v2569
        %2571 = vmatprep.mubr.bf16.mxu0 0
        %2572 = vmatmul.mubr.bf16.gmra.mrb[0].mxu0 %v2238
        %v2573 = vpop.f32.mrb[0].mxu0
        %v2574 = vadd.f32 %v2279, %v2573
        %v2575 = vpop.f32.mrb[0].mxu0
        %v2576 = vadd.f32 %v2283, %v2575
        %v2577 = vpop.f32.mrb[0].mxu0
        %v2578 = vadd.f32 %v2279, %v2577
        %v2579 = vpop.f32.mrb[0].mxu0
        %v2580 = vadd.f32 %v2283, %v2579
        %2581 = vmatprep.mubr.bf16.mxu0 0
        %2582 = vmatmul.mubr.bf16.gmra.mrb[0].mxu0 %v2239
        %v2583 = vpop.f32.mrb[0].mxu0
        %v2584 = vadd.f32 %v2279, %v2583
        %v2585 = vpop.f32.mrb[0].mxu0
        %v2586 = vadd.f32 %v2283, %v2585
        %v2587 = vpop.f32.mrb[0].mxu0
        %v2588 = vadd.f32 %v2279, %v2587
        %v2589 = vpop.f32.mrb[0].mxu0
        %v2590 = vadd.f32 %v2283, %v2589
        %2591 = vmatprep.mubr.bf16.mxu0 0
        %2592 = vmatmul.mubr.bf16.gmra.mrb[0].mxu0 %v2240
        %v2593 = vpop.f32.mrb[0].mxu0
        %v2594 = vadd.f32 %v2279, %v2593
        %v2595 = vpop.f32.mrb[0].mxu0
        %v2596 = vadd.f32 %v2283, %v2595
        %v2597 = vpop.f32.mrb[0].mxu0
        %v2598 = vadd.f32 %v2279, %v2597
        %v2599 = vpop.f32.mrb[0].mxu0
        %v2600 = vadd.f32 %v2283, %v2599
        %2601 = vmatprep.mubr.bf16.mxu0 0
        %2602 = vmatmul.mubr.bf16.gmra.mrb[0].mxu0 %v2241
        %v2603 = vpop.f32.mrb[0].mxu0
        %v2604 = vadd.f32 %v2279, %v2603
        %v2605 = vpop.f32.mrb[0].mxu0
        %v2606 = vadd.f32 %v2283, %v2605
        %v2607 = vpop.f32.mrb[0].mxu0
        %v2608 = vadd.f32 %v2279, %v2607
        %v2609 = vpop.f32.mrb[0].mxu0
        %v2610 = vadd.f32 %v2283, %v2609
        %2611 = vdwg.mxu0
        %2612 = vmatprep.subr.bf16.mxu0 0
        %2613 = vmatpush1.bf16.msra.mxu0 %v2373
        %2614 = vmatprep.subr.bf16.mxu0 0
        %2615 = vmatpush1.bf16.msra.mxu0 %v2376
        %2616 = vmatprep.subr.bf16.mxu0 0
        %2617 = vmatpush1.bf16.msra.mxu0 %v2379
        %2618 = vmatprep.subr.bf16.mxu0 0
        %2619 = vmatpush1.bf16.msra.mxu0 %v2382
        %2620 = vmatprep.subr.bf16.mxu0 0
        %2621 = vmatpush1.bf16.msra.mxu0 %v2385
        %2622 = vmatprep.subr.bf16.mxu0 0
        %2623 = vmatpush1.bf16.msra.mxu0 %v2388
        %2624 = vmatprep.subr.bf16.mxu0 0
        %2625 = vmatpush1.bf16.msra.mxu0 %v2391
        %2626 = vmatprep.subr.bf16.mxu0 0
        %2627 = vmatpush1.bf16.msra.mxu0 %v2394
        %2628 = vmatprep.subr.bf16.mxu0 0
        %2629 = vmatpush1.bf16.msra.mxu0 0
        %2630 = vmatprep.subr.bf16.mxu0 0
        %2631 = vmatpush1.bf16.msra.mxu0 0
        %2632 = vmatprep.subr.bf16.mxu0 0
        %2633 = vmatpush1.bf16.msra.mxu0 0
        %2634 = vmatprep.subr.bf16.mxu0 0
        %2635 = vmatpush1.bf16.msra.mxu0 0
        %2636 = vmatprep.subr.bf16.mxu0 0
        %2637 = vmatpush1.bf16.msra.mxu0 0
        %2638 = vmatprep.subr.bf16.mxu0 0
        %2639 = vmatpush1.bf16.msra.mxu0 0
        %2640 = vmatprep.subr.bf16.mxu0 0
        %2641 = vmatpush1.bf16.msra.mxu0 0
        %2642 = vmatprep.subr.bf16.mxu0 0
        %2643 = vmatpush1.bf16.msra.mxu0 0
        %2644 = vmatprep.mubr.bf16.mxu0 0
        %2645 = vmatmul.mubr.bf16.gmra.mrb[0].mxu0 %v2226
        %v2646 = vpop.f32.mrb[0].mxu0
        %v2647 = vadd.f32 %v2287, %v2646
        %v2648 = vpop.f32.mrb[0].mxu0
        %v2649 = vpop.f32.mrb[0].mxu0
        %v2650 = vadd.f32 %v2287, %v2649
        %v2651 = vpop.f32.mrb[0].mxu0
        %2652 = vmatprep.mubr.bf16.mxu0 0
        %2653 = vmatmul.mubr.bf16.gmra.mrb[0].mxu0 %v2227
        %v2654 = vpop.f32.mrb[0].mxu0
        %v2655 = vadd.f32 %v2287, %v2654
        %v2656 = vpop.f32.mrb[0].mxu0
        %v2657 = vpop.f32.mrb[0].mxu0
        %v2658 = vadd.f32 %v2287, %v2657
        %v2659 = vpop.f32.mrb[0].mxu0
        %2660 = vmatprep.mubr.bf16.mxu0 0
        %2661 = vmatmul.mubr.bf16.gmra.mrb[0].mxu0 %v2228
        %v2662 = vpop.f32.mrb[0].mxu0
        %v2663 = vadd.f32 %v2287, %v2662
        %v2664 = vpop.f32.mrb[0].mxu0
        %v2665 = vpop.f32.mrb[0].mxu0
        %v2666 = vadd.f32 %v2287, %v2665
        %v2667 = vpop.f32.mrb[0].mxu0
        %2668 = vmatprep.mubr.bf16.mxu0 0
        %2669 = vmatmul.mubr.bf16.gmra.mrb[0].mxu0 %v2229
        %v2670 = vpop.f32.mrb[0].mxu0
        %v2671 = vadd.f32 %v2287, %v2670
        %v2672 = vpop.f32.mrb[0].mxu0
        %v2673 = vpop.f32.mrb[0].mxu0
        %v2674 = vadd.f32 %v2287, %v2673
        %v2675 = vpop.f32.mrb[0].mxu0
        %2676 = vmatprep.mubr.bf16.mxu0 0
        %2677 = vmatmul.mubr.bf16.gmra.mrb[0].mxu0 %v2230
        %v2678 = vpop.f32.mrb[0].mxu0
        %v2679 = vadd.f32 %v2287, %v2678
        %v2680 = vpop.f32.mrb[0].mxu0
        %v2681 = vpop.f32.mrb[0].mxu0
        %v2682 = vadd.f32 %v2287, %v2681
        %v2683 = vpop.f32.mrb[0].mxu0
        %2684 = vmatprep.mubr.bf16.mxu0 0
        %2685 = vmatmul.mubr.bf16.gmra.mrb[0].mxu0 %v2231
        %v2686 = vpop.f32.mrb[0].mxu0
        %v2687 = vadd.f32 %v2287, %v2686
        %v2688 = vpop.f32.mrb[0].mxu0
        %v2689 = vpop.f32.mrb[0].mxu0
        %v2690 = vadd.f32 %v2287, %v2689
        %v2691 = vpop.f32.mrb[0].mxu0
        %2692 = vmatprep.mubr.bf16.mxu0 0
        %2693 = vmatmul.mubr.bf16.gmra.mrb[0].mxu0 %v2232
        %v2694 = vpop.f32.mrb[0].mxu0
        %v2695 = vadd.f32 %v2287, %v2694
        %v2696 = vpop.f32.mrb[0].mxu0
        %v2697 = vpop.f32.mrb[0].mxu0
        %v2698 = vadd.f32 %v2287, %v2697
        %v2699 = vpop.f32.mrb[0].mxu0
        %2700 = vmatprep.mubr.bf16.mxu0 0
        %2701 = vmatmul.mubr.bf16.gmra.mrb[0].mxu0 %v2233
        %v2702 = vpop.f32.mrb[0].mxu0
        %v2703 = vadd.f32 %v2287, %v2702
        %v2704 = vpop.f32.mrb[0].mxu0
        %v2705 = vpop.f32.mrb[0].mxu0
        %v2706 = vadd.f32 %v2287, %v2705
        %v2707 = vpop.f32.mrb[0].mxu0
        %2708 = vmatprep.mubr.bf16.mxu0 0
        %2709 = vmatmul.mubr.bf16.gmra.mrb[0].mxu0 %v2234
        %v2710 = vpop.f32.mrb[0].mxu0
        %v2711 = vadd.f32 %v2287, %v2710
        %v2712 = vpop.f32.mrb[0].mxu0
        %v2713 = vpop.f32.mrb[0].mxu0
        %v2714 = vadd.f32 %v2287, %v2713
        %v2715 = vpop.f32.mrb[0].mxu0
        %2716 = vmatprep.mubr.bf16.mxu0 0
        %2717 = vmatmul.mubr.bf16.gmra.mrb[0].mxu0 %v2235
        %v2718 = vpop.f32.mrb[0].mxu0
        %v2719 = vadd.f32 %v2287, %v2718
        %v2720 = vpop.f32.mrb[0].mxu0
        %v2721 = vpop.f32.mrb[0].mxu0
        %v2722 = vadd.f32 %v2287, %v2721
        %v2723 = vpop.f32.mrb[0].mxu0
        %2724 = vmatprep.mubr.bf16.mxu0 0
        %2725 = vmatmul.mubr.bf16.gmra.mrb[0].mxu0 %v2236
        %v2726 = vpop.f32.mrb[0].mxu0
        %v2727 = vadd.f32 %v2287, %v2726
        %v2728 = vpop.f32.mrb[0].mxu0
        %v2729 = vpop.f32.mrb[0].mxu0
        %v2730 = vadd.f32 %v2287, %v2729
        %v2731 = vpop.f32.mrb[0].mxu0
        %2732 = vmatprep.mubr.bf16.mxu0 0
        %2733 = vmatmul.mubr.bf16.gmra.mrb[0].mxu0 %v2237
        %v2734 = vpop.f32.mrb[0].mxu0
        %v2735 = vadd.f32 %v2287, %v2734
        %v2736 = vpop.f32.mrb[0].mxu0
        %v2737 = vpop.f32.mrb[0].mxu0
        %v2738 = vadd.f32 %v2287, %v2737
        %v2739 = vpop.f32.mrb[0].mxu0
        %2740 = vmatprep.mubr.bf16.mxu0 0
        %2741 = vmatmul.mubr.bf16.gmra.mrb[0].mxu0 %v2238
        %v2742 = vpop.f32.mrb[0].mxu0
        %v2743 = vadd.f32 %v2287, %v2742
        %v2744 = vpop.f32.mrb[0].mxu0
        %v2745 = vpop.f32.mrb[0].mxu0
        %v2746 = vadd.f32 %v2287, %v2745
        %v2747 = vpop.f32.mrb[0].mxu0
        %2748 = vmatprep.mubr.bf16.mxu0 0
        %2749 = vmatmul.mubr.bf16.gmra.mrb[0].mxu0 %v2239
        %v2750 = vpop.f32.mrb[0].mxu0
        %v2751 = vadd.f32 %v2287, %v2750
        %v2752 = vpop.f32.mrb[0].mxu0
        %v2753 = vpop.f32.mrb[0].mxu0
        %v2754 = vadd.f32 %v2287, %v2753
        %v2755 = vpop.f32.mrb[0].mxu0
        %2756 = vmatprep.mubr.bf16.mxu0 0
        %2757 = vmatmul.mubr.bf16.gmra.mrb[0].mxu0 %v2240
        %v2758 = vpop.f32.mrb[0].mxu0
        %v2759 = vadd.f32 %v2287, %v2758
        %v2760 = vpop.f32.mrb[0].mxu0
        %v2761 = vpop.f32.mrb[0].mxu0
        %v2762 = vadd.f32 %v2287, %v2761
        %v2763 = vpop.f32.mrb[0].mxu0
        %2764 = vmatprep.mubr.bf16.mxu0 0
        %2765 = vmatmul.mubr.bf16.gmra.mrb[0].mxu0 %v2241
        %v2766 = vpop.f32.mrb[0].mxu0
        %v2767 = vadd.f32 %v2287, %v2766
        %v2768 = vpop.f32.mrb[0].mxu0
        %v2769 = vpop.f32.mrb[0].mxu0
        %v2770 = vadd.f32 %v2287, %v2769
        %v2771 = vpop.f32.mrb[0].mxu0
        %2772 = vdwg.mxu0
        %v2773 = vpack.c.bf16 %v2454, %v2454
        %v2774 = vpack.c.bf16 %v2456, %v2456
        %v2775 = vpack.c.bf16 %v2647, %v2647
        %v2776 = vpack.c.bf16 %v2458, %v2458
        %v2777 = vpack.c.bf16 %v2460, %v2460
        %v2778 = vpack.c.bf16 %v2650, %v2650
        %v2779 = vpack.c.bf16 %v2464, %v2464
        %v2780 = vpack.c.bf16 %v2466, %v2466
        %v2781 = vpack.c.bf16 %v2655, %v2655
        %v2782 = vpack.c.bf16 %v2468, %v2468
        %v2783 = vpack.c.bf16 %v2470, %v2470
        %v2784 = vpack.c.bf16 %v2658, %v2658
        %v2785 = vpack.c.bf16 %v2474, %v2474
        %v2786 = vpack.c.bf16 %v2476, %v2476
        %v2787 = vpack.c.bf16 %v2663, %v2663
        %v2788 = vpack.c.bf16 %v2478, %v2478
        %v2789 = vpack.c.bf16 %v2480, %v2480
        %v2790 = vpack.c.bf16 %v2666, %v2666
        %v2791 = vpack.c.bf16 %v2484, %v2484
        %v2792 = vpack.c.bf16 %v2486, %v2486
        %v2793 = vpack.c.bf16 %v2671, %v2671
        %v2794 = vpack.c.bf16 %v2488, %v2488
        %v2795 = vpack.c.bf16 %v2490, %v2490
        %v2796 = vpack.c.bf16 %v2674, %v2674
        %v2797 = vpack.c.bf16 %v2494, %v2494
        %v2798 = vpack.c.bf16 %v2496, %v2496
        %v2799 = vpack.c.bf16 %v2679, %v2679
        %v2800 = vpack.c.bf16 %v2498, %v2498
        %v2801 = vpack.c.bf16 %v2500, %v2500
        %v2802 = vpack.c.bf16 %v2682, %v2682
        %v2803 = vpack.c.bf16 %v2504, %v2504
        %v2804 = vpack.c.bf16 %v2506, %v2506
        %v2805 = vpack.c.bf16 %v2687, %v2687
        %v2806 = vpack.c.bf16 %v2508, %v2508
        %v2807 = vpack.c.bf16 %v2510, %v2510
        %v2808 = vpack.c.bf16 %v2690, %v2690
        %v2809 = vpack.c.bf16 %v2514, %v2514
        %v2810 = vpack.c.bf16 %v2516, %v2516
        %v2811 = vpack.c.bf16 %v2695, %v2695
        %v2812 = vpack.c.bf16 %v2518, %v2518
        %v2813 = vpack.c.bf16 %v2520, %v2520
        %v2814 = vpack.c.bf16 %v2698, %v2698
        %v2815 = vpack.c.bf16 %v2524, %v2524
        %v2816 = vpack.c.bf16 %v2526, %v2526
        %v2817 = vpack.c.bf16 %v2703, %v2703
        %v2818 = vpack.c.bf16 %v2528, %v2528
        %v2819 = vpack.c.bf16 %v2530, %v2530
        %v2820 = vpack.c.bf16 %v2706, %v2706
        %v2821 = vpack.c.bf16 %v2534, %v2534
        %v2822 = vpack.c.bf16 %v2536, %v2536
        %v2823 = vpack.c.bf16 %v2711, %v2711
        %v2824 = vpack.c.bf16 %v2538, %v2538
        %v2825 = vpack.c.bf16 %v2540, %v2540
        %v2826 = vpack.c.bf16 %v2714, %v2714
        %v2827 = vpack.c.bf16 %v2544, %v2544
        %v2828 = vpack.c.bf16 %v2546, %v2546
        %v2829 = vpack.c.bf16 %v2719, %v2719
        %v2830 = vpack.c.bf16 %v2548, %v2548
        %v2831 = vpack.c.bf16 %v2550, %v2550
        %v2832 = vpack.c.bf16 %v2722, %v2722
        %v2833 = vpack.c.bf16 %v2554, %v2554
        %v2834 = vpack.c.bf16 %v2556, %v2556
        %v2835 = vpack.c.bf16 %v2727, %v2727
        %v2836 = vpack.c.bf16 %v2558, %v2558
        %v2837 = vpack.c.bf16 %v2560, %v2560
        %v2838 = vpack.c.bf16 %v2730, %v2730
        %v2839 = vpack.c.bf16 %v2564, %v2564
        %v2840 = vpack.c.bf16 %v2566, %v2566
        %v2841 = vpack.c.bf16 %v2735, %v2735
        %v2842 = vpack.c.bf16 %v2568, %v2568
        %v2843 = vpack.c.bf16 %v2570, %v2570
        %v2844 = vpack.c.bf16 %v2738, %v2738
        %v2845 = vpack.c.bf16 %v2574, %v2574
        %v2846 = vpack.c.bf16 %v2576, %v2576
        %v2847 = vpack.c.bf16 %v2743, %v2743
        %v2848 = vpack.c.bf16 %v2578, %v2578
        %v2849 = vpack.c.bf16 %v2580, %v2580
        %v2850 = vpack.c.bf16 %v2746, %v2746
        %v2851 = vpack.c.bf16 %v2584, %v2584
        %v2852 = vpack.c.bf16 %v2586, %v2586
        %v2853 = vpack.c.bf16 %v2751, %v2751
        %v2854 = vpack.c.bf16 %v2588, %v2588
        %v2855 = vpack.c.bf16 %v2590, %v2590
        %v2856 = vpack.c.bf16 %v2754, %v2754
        %v2857 = vpack.c.bf16 %v2594, %v2594
        %v2858 = vpack.c.bf16 %v2596, %v2596
        %v2859 = vpack.c.bf16 %v2759, %v2759
        %v2860 = vpack.c.bf16 %v2598, %v2598
        %v2861 = vpack.c.bf16 %v2600, %v2600
        %v2862 = vpack.c.bf16 %v2762, %v2762
        %v2863 = vpack.c.bf16 %v2604, %v2604
        %v2864 = vpack.c.bf16 %v2606, %v2606
        %v2865 = vpack.c.bf16 %v2767, %v2767
        %v2866 = vpack.c.bf16 %v2608, %v2608
        %v2867 = vpack.c.bf16 %v2610, %v2610
        %v2868 = vpack.c.bf16 %v2770, %v2770
        %v2965 = vunpack.c.l.b16 %v2773
        %v2966 = vunpack.c.l.b16 %v2774
        %v2967 = vunpack.c.l.b16 %v2775
        %v2968 = vunpack.c.l.b16 %v2776
        %v2969 = vunpack.c.l.b16 %v2777
        %v2970 = vunpack.c.l.b16 %v2778
        %v2971 = vunpack.c.l.b16 %v2779
        %v2972 = vunpack.c.l.b16 %v2780
        %v2973 = vunpack.c.l.b16 %v2781
        %v2974 = vunpack.c.l.b16 %v2782
        %v2975 = vunpack.c.l.b16 %v2783
        %v2976 = vunpack.c.l.b16 %v2784
        %v2977 = vunpack.c.l.b16 %v2785
        %v2978 = vunpack.c.l.b16 %v2786
        %v2979 = vunpack.c.l.b16 %v2787
        %v2980 = vunpack.c.l.b16 %v2788
        %v2981 = vunpack.c.l.b16 %v2789
        %v2982 = vunpack.c.l.b16 %v2790
        %v2983 = vunpack.c.l.b16 %v2791
        %v2984 = vunpack.c.l.b16 %v2792
        %v2985 = vunpack.c.l.b16 %v2793
        %v2986 = vunpack.c.l.b16 %v2794
        %v2987 = vunpack.c.l.b16 %v2795
        %v2988 = vunpack.c.l.b16 %v2796
        %v2989 = vunpack.c.l.b16 %v2797
        %v2990 = vunpack.c.l.b16 %v2798
        %v2991 = vunpack.c.l.b16 %v2799
        %v2992 = vunpack.c.l.b16 %v2800
        %v2993 = vunpack.c.l.b16 %v2801
        %v2994 = vunpack.c.l.b16 %v2802
        %v2995 = vunpack.c.l.b16 %v2803
        %v2996 = vunpack.c.l.b16 %v2804
        %v2997 = vunpack.c.l.b16 %v2805
        %v2998 = vunpack.c.l.b16 %v2806
        %v2999 = vunpack.c.l.b16 %v2807
        %v3000 = vunpack.c.l.b16 %v2808
        %v3001 = vunpack.c.l.b16 %v2809
        %v3002 = vunpack.c.l.b16 %v2810
        %v3003 = vunpack.c.l.b16 %v2811
        %v3004 = vunpack.c.l.b16 %v2812
        %v3005 = vunpack.c.l.b16 %v2813
        %v3006 = vunpack.c.l.b16 %v2814
        %v3007 = vunpack.c.l.b16 %v2815
        %v3008 = vunpack.c.l.b16 %v2816
        %v3009 = vunpack.c.l.b16 %v2817
        %v3010 = vunpack.c.l.b16 %v2818
        %v3011 = vunpack.c.l.b16 %v2819
        %v3012 = vunpack.c.l.b16 %v2820
        %v3013 = vunpack.c.l.b16 %v2821
        %v3014 = vunpack.c.l.b16 %v2822
        %v3015 = vunpack.c.l.b16 %v2823
        %v3016 = vunpack.c.l.b16 %v2824
        %v3017 = vunpack.c.l.b16 %v2825
        %v3018 = vunpack.c.l.b16 %v2826
        %v3019 = vunpack.c.l.b16 %v2827
        %v3020 = vunpack.c.l.b16 %v2828
        %v3021 = vunpack.c.l.b16 %v2829
        %v3022 = vunpack.c.l.b16 %v2830
        %v3023 = vunpack.c.l.b16 %v2831
        %v3024 = vunpack.c.l.b16 %v2832
        %v3025 = vunpack.c.l.b16 %v2833
        %v3026 = vunpack.c.l.b16 %v2834
        %v3027 = vunpack.c.l.b16 %v2835
        %v3028 = vunpack.c.l.b16 %v2836
        %v3029 = vunpack.c.l.b16 %v2837
        %v3030 = vunpack.c.l.b16 %v2838
        %v3031 = vunpack.c.l.b16 %v2839
        %v3032 = vunpack.c.l.b16 %v2840
        %v3033 = vunpack.c.l.b16 %v2841
        %v3034 = vunpack.c.l.b16 %v2842
        %v3035 = vunpack.c.l.b16 %v2843
        %v3036 = vunpack.c.l.b16 %v2844
        %v3037 = vunpack.c.l.b16 %v2845
        %v3038 = vunpack.c.l.b16 %v2846
        %v3039 = vunpack.c.l.b16 %v2847
        %v3040 = vunpack.c.l.b16 %v2848
        %v3041 = vunpack.c.l.b16 %v2849
        %v3042 = vunpack.c.l.b16 %v2850
        %v3043 = vunpack.c.l.b16 %v2851
        %v3044 = vunpack.c.l.b16 %v2852
        %v3045 = vunpack.c.l.b16 %v2853
        %v3046 = vunpack.c.l.b16 %v2854
        %v3047 = vunpack.c.l.b16 %v2855
        %v3048 = vunpack.c.l.b16 %v2856
        %v3049 = vunpack.c.l.b16 %v2857
        %v3050 = vunpack.c.l.b16 %v2858
        %v3051 = vunpack.c.l.b16 %v2859
        %v3052 = vunpack.c.l.b16 %v2860
        %v3053 = vunpack.c.l.b16 %v2861
        %v3054 = vunpack.c.l.b16 %v2862
        %v3055 = vunpack.c.l.b16 %v2863
        %v3056 = vunpack.c.l.b16 %v2864
        %v3057 = vunpack.c.l.b16 %v2865
        %v3058 = vunpack.c.l.b16 %v2866
        %v3059 = vunpack.c.l.b16 %v2867
        %v3060 = vunpack.c.l.b16 %v2868
        %v3061 = vrot.slane %v2968, 7
        %vm3062 = vcmask 1041409
        %v3063 = vsel %vm3062, %v3061, %v2965
        %v3064 = vrot.slane %v2971, 6
        %vm3065 = vcmask 1042434
        %v3066 = vsel %vm3065, %v3064, %v3063
        %v3067 = vrot.slane %v2974, 5
        %vm3068 = vcmask 1043459
        %v3069 = vsel %vm3068, %v3067, %v3066
        %v3070 = vrot.slane %v2977, 4
        %vm3071 = vcmask 1044484
        %v3072 = vsel %vm3071, %v3070, %v3069
        %v3073 = vrot.slane %v2980, 3
        %vm3074 = vcmask 1045509
        %v3075 = vsel %vm3074, %v3073, %v3072
        %v3076 = vrot.slane %v2983, 2
        %vm3077 = vcmask 1046534
        %v3078 = vsel %vm3077, %v3076, %v3075
        %v3079 = vrot.slane %v2986, 1
        %vm3080 = vcmask 1047559
        %v3081 = vsel %vm3080, %v3079, %v3078
        %v3082 = vrot.slane %v2969, 7
        %v3083 = vsel %vm3062, %v3082, %v2966
        %v3084 = vrot.slane %v2972, 6
        %v3085 = vsel %vm3065, %v3084, %v3083
        %v3086 = vrot.slane %v2975, 5
        %v3087 = vsel %vm3068, %v3086, %v3085
        %v3088 = vrot.slane %v2978, 4
        %v3089 = vsel %vm3071, %v3088, %v3087
        %v3090 = vrot.slane %v2981, 3
        %v3091 = vsel %vm3074, %v3090, %v3089
        %v3092 = vrot.slane %v2984, 2
        %v3093 = vsel %vm3077, %v3092, %v3091
        %v3094 = vrot.slane %v2987, 1
        %v3095 = vsel %vm3080, %v3094, %v3093
        %v3096 = vrot.slane %v2970, 7
        %v3097 = vsel %vm3062, %v3096, %v2967
        %v3098 = vrot.slane %v2973, 6
        %v3099 = vsel %vm3065, %v3098, %v3097
        %v3100 = vrot.slane %v2976, 5
        %v3101 = vsel %vm3068, %v3100, %v3099
        %v3102 = vrot.slane %v2979, 4
        %v3103 = vsel %vm3071, %v3102, %v3101
        %v3104 = vrot.slane %v2982, 3
        %v3105 = vsel %vm3074, %v3104, %v3103
        %v3106 = vrot.slane %v2985, 2
        %v3107 = vsel %vm3077, %v3106, %v3105
        %v3108 = vrot.slane %v2988, 1
        %v3109 = vsel %vm3080, %v3108, %v3107
        %v3110 = vrot.slane %v2992, 7
        %v3111 = vsel %vm3062, %v3110, %v2989
        %v3112 = vrot.slane %v2995, 6
        %v3113 = vsel %vm3065, %v3112, %v3111
        %v3114 = vrot.slane %v2998, 5
        %v3115 = vsel %vm3068, %v3114, %v3113
        %v3116 = vrot.slane %v3001, 4
        %v3117 = vsel %vm3071, %v3116, %v3115
        %v3118 = vrot.slane %v3004, 3
        %v3119 = vsel %vm3074, %v3118, %v3117
        %v3120 = vrot.slane %v3007, 2
        %v3121 = vsel %vm3077, %v3120, %v3119
        %v3122 = vrot.slane %v3010, 1
        %v3123 = vsel %vm3080, %v3122, %v3121
        %v3124 = vrot.slane %v2993, 7
        %v3125 = vsel %vm3062, %v3124, %v2990
        %v3126 = vrot.slane %v2996, 6
        %v3127 = vsel %vm3065, %v3126, %v3125
        %v3128 = vrot.slane %v2999, 5
        %v3129 = vsel %vm3068, %v3128, %v3127
        %v3130 = vrot.slane %v3002, 4
        %v3131 = vsel %vm3071, %v3130, %v3129
        %v3132 = vrot.slane %v3005, 3
        %v3133 = vsel %vm3074, %v3132, %v3131
        %v3134 = vrot.slane %v3008, 2
        %v3135 = vsel %vm3077, %v3134, %v3133
        %v3136 = vrot.slane %v3011, 1
        %v3137 = vsel %vm3080, %v3136, %v3135
        %v3138 = vrot.slane %v2994, 7
        %v3139 = vsel %vm3062, %v3138, %v2991
        %v3140 = vrot.slane %v2997, 6
        %v3141 = vsel %vm3065, %v3140, %v3139
        %v3142 = vrot.slane %v3000, 5
        %v3143 = vsel %vm3068, %v3142, %v3141
        %v3144 = vrot.slane %v3003, 4
        %v3145 = vsel %vm3071, %v3144, %v3143
        %v3146 = vrot.slane %v3006, 3
        %v3147 = vsel %vm3074, %v3146, %v3145
        %v3148 = vrot.slane %v3009, 2
        %v3149 = vsel %vm3077, %v3148, %v3147
        %v3150 = vrot.slane %v3012, 1
        %v3151 = vsel %vm3080, %v3150, %v3149
        %v3152 = vrot.slane %v3016, 7
        %v3153 = vsel %vm3062, %v3152, %v3013
        %v3154 = vrot.slane %v3019, 6
        %v3155 = vsel %vm3065, %v3154, %v3153
        %v3156 = vrot.slane %v3022, 5
        %v3157 = vsel %vm3068, %v3156, %v3155
        %v3158 = vrot.slane %v3025, 4
        %v3159 = vsel %vm3071, %v3158, %v3157
        %v3160 = vrot.slane %v3028, 3
        %v3161 = vsel %vm3074, %v3160, %v3159
        %v3162 = vrot.slane %v3031, 2
        %v3163 = vsel %vm3077, %v3162, %v3161
        %v3164 = vrot.slane %v3034, 1
        %v3165 = vsel %vm3080, %v3164, %v3163
        %v3166 = vrot.slane %v3017, 7
        %v3167 = vsel %vm3062, %v3166, %v3014
        %v3168 = vrot.slane %v3020, 6
        %v3169 = vsel %vm3065, %v3168, %v3167
        %v3170 = vrot.slane %v3023, 5
        %v3171 = vsel %vm3068, %v3170, %v3169
        %v3172 = vrot.slane %v3026, 4
        %v3173 = vsel %vm3071, %v3172, %v3171
        %v3174 = vrot.slane %v3029, 3
        %v3175 = vsel %vm3074, %v3174, %v3173
        %v3176 = vrot.slane %v3032, 2
        %v3177 = vsel %vm3077, %v3176, %v3175
        %v3178 = vrot.slane %v3035, 1
        %v3179 = vsel %vm3080, %v3178, %v3177
        %v3180 = vrot.slane %v3018, 7
        %v3181 = vsel %vm3062, %v3180, %v3015
        %v3182 = vrot.slane %v3021, 6
        %v3183 = vsel %vm3065, %v3182, %v3181
        %v3184 = vrot.slane %v3024, 5
        %v3185 = vsel %vm3068, %v3184, %v3183
        %v3186 = vrot.slane %v3027, 4
        %v3187 = vsel %vm3071, %v3186, %v3185
        %v3188 = vrot.slane %v3030, 3
        %v3189 = vsel %vm3074, %v3188, %v3187
        %v3190 = vrot.slane %v3033, 2
        %v3191 = vsel %vm3077, %v3190, %v3189
        %v3192 = vrot.slane %v3036, 1
        %v3193 = vsel %vm3080, %v3192, %v3191
        %v3194 = vrot.slane %v3040, 7
        %v3195 = vsel %vm3062, %v3194, %v3037
        %v3196 = vrot.slane %v3043, 6
        %v3197 = vsel %vm3065, %v3196, %v3195
        %v3198 = vrot.slane %v3046, 5
        %v3199 = vsel %vm3068, %v3198, %v3197
        %v3200 = vrot.slane %v3049, 4
        %v3201 = vsel %vm3071, %v3200, %v3199
        %v3202 = vrot.slane %v3052, 3
        %v3203 = vsel %vm3074, %v3202, %v3201
        %v3204 = vrot.slane %v3055, 2
        %v3205 = vsel %vm3077, %v3204, %v3203
        %v3206 = vrot.slane %v3058, 1
        %v3207 = vsel %vm3080, %v3206, %v3205
        %v3208 = vrot.slane %v3041, 7
        %v3209 = vsel %vm3062, %v3208, %v3038
        %v3210 = vrot.slane %v3044, 6
        %v3211 = vsel %vm3065, %v3210, %v3209
        %v3212 = vrot.slane %v3047, 5
        %v3213 = vsel %vm3068, %v3212, %v3211
        %v3214 = vrot.slane %v3050, 4
        %v3215 = vsel %vm3071, %v3214, %v3213
        %v3216 = vrot.slane %v3053, 3
        %v3217 = vsel %vm3074, %v3216, %v3215
        %v3218 = vrot.slane %v3056, 2
        %v3219 = vsel %vm3077, %v3218, %v3217
        %v3220 = vrot.slane %v3059, 1
        %v3221 = vsel %vm3080, %v3220, %v3219
        %v3222 = vrot.slane %v3042, 7
        %v3223 = vsel %vm3062, %v3222, %v3039
        %v3224 = vrot.slane %v3045, 6
        %v3225 = vsel %vm3065, %v3224, %v3223
        %v3226 = vrot.slane %v3048, 5
        %v3227 = vsel %vm3068, %v3226, %v3225
        %v3228 = vrot.slane %v3051, 4
        %v3229 = vsel %vm3071, %v3228, %v3227
        %v3230 = vrot.slane %v3054, 3
        %v3231 = vsel %vm3074, %v3230, %v3229
        %v3232 = vrot.slane %v3057, 2
        %v3233 = vsel %vm3077, %v3232, %v3231
        %v3234 = vrot.slane %v3060, 1
        %v3235 = vsel %vm3080, %v3234, %v3233
        %v3236 = vpack.c.b16 %v3123, %v3081
        %v3237 = vpack.c.b16 %v3137, %v3095
        %v3238 = vpack.c.b16 %v3151, %v3109
        %v3239 = vpack.c.b16 %v3207, %v3165
        %v3240 = vpack.c.b16 %v3221, %v3179
        %v3241 = vpack.c.b16 %v3235, %v3193
        %3248 = vst [vmem:[#allocation2] sm:$0xff] %v3236
        %3249 = vst [vmem:[#allocation2 + $0x8] sm:$0xff] %v3237
        %3250 = vst [vmem:[#allocation2 + $0x10] sm:$0xff] %v3238
        %3251 = vst [vmem:[#allocation2 + $0x18] sm:$0xff] %v3239
        %3252 = vst [vmem:[#allocation2 + $0x20] sm:$0xff] %v3240
        %3253 = vst [vmem:[#allocation2 + $0x28] sm:$0xff] %v3241
        %v3254 = vrot.slane %v2965, 1
        %v3255 = vsel %vm3062, %v2968, %v3254
        %v3256 = vrot.slane %v2971, 7
        %v3257 = vsel %vm3065, %v3256, %v3255
        %v3258 = vrot.slane %v2974, 6
        %v3259 = vsel %vm3068, %v3258, %v3257
        %v3260 = vrot.slane %v2977, 5
        %v3261 = vsel %vm3071, %v3260, %v3259
        %v3262 = vrot.slane %v2980, 4
        %v3263 = vsel %vm3074, %v3262, %v3261
        %v3264 = vrot.slane %v2983, 3
        %v3265 = vsel %vm3077, %v3264, %v3263
        %v3266 = vrot.slane %v2986, 2
        %v3267 = vsel %vm3080, %v3266, %v3265
        %v3268 = vrot.slane %v2966, 1
        %v3269 = vsel %vm3062, %v2969, %v3268
        %v3270 = vrot.slane %v2972, 7
        %v3271 = vsel %vm3065, %v3270, %v3269
        %v3272 = vrot.slane %v2975, 6
        %v3273 = vsel %vm3068, %v3272, %v3271
        %v3274 = vrot.slane %v2978, 5
        %v3275 = vsel %vm3071, %v3274, %v3273
        %v3276 = vrot.slane %v2981, 4
        %v3277 = vsel %vm3074, %v3276, %v3275
        %v3278 = vrot.slane %v2984, 3
        %v3279 = vsel %vm3077, %v3278, %v3277
        %v3280 = vrot.slane %v2987, 2
        %v3281 = vsel %vm3080, %v3280, %v3279
        %v3282 = vrot.slane %v2967, 1
        %v3283 = vsel %vm3062, %v2970, %v3282
        %v3284 = vrot.slane %v2973, 7
        %v3285 = vsel %vm3065, %v3284, %v3283
        %v3286 = vrot.slane %v2976, 6
        %v3287 = vsel %vm3068, %v3286, %v3285
        %v3288 = vrot.slane %v2979, 5
        %v3289 = vsel %vm3071, %v3288, %v3287
        %v3290 = vrot.slane %v2982, 4
        %v3291 = vsel %vm3074, %v3290, %v3289
        %v3292 = vrot.slane %v2985, 3
        %v3293 = vsel %vm3077, %v3292, %v3291
        %v3294 = vrot.slane %v2988, 2
        %v3295 = vsel %vm3080, %v3294, %v3293
        %v3296 = vrot.slane %v2989, 1
        %v3297 = vsel %vm3062, %v2992, %v3296
        %v3298 = vrot.slane %v2995, 7
        %v3299 = vsel %vm3065, %v3298, %v3297
        %v3300 = vrot.slane %v2998, 6
        %v3301 = vsel %vm3068, %v3300, %v3299
        %v3302 = vrot.slane %v3001, 5
        %v3303 = vsel %vm3071, %v3302, %v3301
        %v3304 = vrot.slane %v3004, 4
        %v3305 = vsel %vm3074, %v3304, %v3303
        %v3306 = vrot.slane %v3007, 3
        %v3307 = vsel %vm3077, %v3306, %v3305
        %v3308 = vrot.slane %v3010, 2
        %v3309 = vsel %vm3080, %v3308, %v3307
        %v3310 = vrot.slane %v2990, 1
        %v3311 = vsel %vm3062, %v2993, %v3310
        %v3312 = vrot.slane %v2996, 7
        %v3313 = vsel %vm3065, %v3312, %v3311
        %v3314 = vrot.slane %v2999, 6
        %v3315 = vsel %vm3068, %v3314, %v3313
        %v3316 = vrot.slane %v3002, 5
        %v3317 = vsel %vm3071, %v3316, %v3315
        %v3318 = vrot.slane %v3005, 4
        %v3319 = vsel %vm3074, %v3318, %v3317
        %v3320 = vrot.slane %v3008, 3
        %v3321 = vsel %vm3077, %v3320, %v3319
        %v3322 = vrot.slane %v3011, 2
        %v3323 = vsel %vm3080, %v3322, %v3321
        %v3324 = vrot.slane %v2991, 1
        %v3325 = vsel %vm3062, %v2994, %v3324
        %v3326 = vrot.slane %v2997, 7
        %v3327 = vsel %vm3065, %v3326, %v3325
        %v3328 = vrot.slane %v3000, 6
        %v3329 = vsel %vm3068, %v3328, %v3327
        %v3330 = vrot.slane %v3003, 5
        %v3331 = vsel %vm3071, %v3330, %v3329
        %v3332 = vrot.slane %v3006, 4
        %v3333 = vsel %vm3074, %v3332, %v3331
        %v3334 = vrot.slane %v3009, 3
        %v3335 = vsel %vm3077, %v3334, %v3333
        %v3336 = vrot.slane %v3012, 2
        %v3337 = vsel %vm3080, %v3336, %v3335
        %v3338 = vrot.slane %v3013, 1
        %v3339 = vsel %vm3062, %v3016, %v3338
        %v3340 = vrot.slane %v3019, 7
        %v3341 = vsel %vm3065, %v3340, %v3339
        %v3342 = vrot.slane %v3022, 6
        %v3343 = vsel %vm3068, %v3342, %v3341
        %v3344 = vrot.slane %v3025, 5
        %v3345 = vsel %vm3071, %v3344, %v3343
        %v3346 = vrot.slane %v3028, 4
        %v3347 = vsel %vm3074, %v3346, %v3345
        %v3348 = vrot.slane %v3031, 3
        %v3349 = vsel %vm3077, %v3348, %v3347
        %v3350 = vrot.slane %v3034, 2
        %v3351 = vsel %vm3080, %v3350, %v3349
        %v3352 = vrot.slane %v3014, 1
        %v3353 = vsel %vm3062, %v3017, %v3352
        %v3354 = vrot.slane %v3020, 7
        %v3355 = vsel %vm3065, %v3354, %v3353
        %v3356 = vrot.slane %v3023, 6
        %v3357 = vsel %vm3068, %v3356, %v3355
        %v3358 = vrot.slane %v3026, 5
        %v3359 = vsel %vm3071, %v3358, %v3357
        %v3360 = vrot.slane %v3029, 4
        %v3361 = vsel %vm3074, %v3360, %v3359
        %v3362 = vrot.slane %v3032, 3
        %v3363 = vsel %vm3077, %v3362, %v3361
        %v3364 = vrot.slane %v3035, 2
        %v3365 = vsel %vm3080, %v3364, %v3363
        %v3366 = vrot.slane %v3015, 1
        %v3367 = vsel %vm3062, %v3018, %v3366
        %v3368 = vrot.slane %v3021, 7
        %v3369 = vsel %vm3065, %v3368, %v3367
        %v3370 = vrot.slane %v3024, 6
        %v3371 = vsel %vm3068, %v3370, %v3369
        %v3372 = vrot.slane %v3027, 5
        %v3373 = vsel %vm3071, %v3372, %v3371
        %v3374 = vrot.slane %v3030, 4
        %v3375 = vsel %vm3074, %v3374, %v3373
        %v3376 = vrot.slane %v3033, 3
        %v3377 = vsel %vm3077, %v3376, %v3375
        %v3378 = vrot.slane %v3036, 2
        %v3379 = vsel %vm3080, %v3378, %v3377
        %v3380 = vrot.slane %v3037, 1
        %v3381 = vsel %vm3062, %v3040, %v3380
        %v3382 = vrot.slane %v3043, 7
        %v3383 = vsel %vm3065, %v3382, %v3381
        %v3384 = vrot.slane %v3046, 6
        %v3385 = vsel %vm3068, %v3384, %v3383
        %v3386 = vrot.slane %v3049, 5
        %v3387 = vsel %vm3071, %v3386, %v3385
        %v3388 = vrot.slane %v3052, 4
        %v3389 = vsel %vm3074, %v3388, %v3387
        %v3390 = vrot.slane %v3055, 3
        %v3391 = vsel %vm3077, %v3390, %v3389
        %v3392 = vrot.slane %v3058, 2
        %v3393 = vsel %vm3080, %v3392, %v3391
        %v3394 = vrot.slane %v3038, 1
        %v3395 = vsel %vm3062, %v3041, %v3394
        %v3396 = vrot.slane %v3044, 7
        %v3397 = vsel %vm3065, %v3396, %v3395
        %v3398 = vrot.slane %v3047, 6
        %v3399 = vsel %vm3068, %v3398, %v3397
        %v3400 = vrot.slane %v3050, 5
        %v3401 = vsel %vm3071, %v3400, %v3399
        %v3402 = vrot.slane %v3053, 4
        %v3403 = vsel %vm3074, %v3402, %v3401
        %v3404 = vrot.slane %v3056, 3
        %v3405 = vsel %vm3077, %v3404, %v3403
        %v3406 = vrot.slane %v3059, 2
        %v3407 = vsel %vm3080, %v3406, %v3405
        %v3408 = vrot.slane %v3039, 1
        %v3409 = vsel %vm3062, %v3042, %v3408
        %v3410 = vrot.slane %v3045, 7
        %v3411 = vsel %vm3065, %v3410, %v3409
        %v3412 = vrot.slane %v3048, 6
        %v3413 = vsel %vm3068, %v3412, %v3411
        %v3414 = vrot.slane %v3051, 5
        %v3415 = vsel %vm3071, %v3414, %v3413
        %v3416 = vrot.slane %v3054, 4
        %v3417 = vsel %vm3074, %v3416, %v3415
        %v3418 = vrot.slane %v3057, 3
        %v3419 = vsel %vm3077, %v3418, %v3417
        %v3420 = vrot.slane %v3060, 2
        %v3421 = vsel %vm3080, %v3420, %v3419
        %v3422 = vpack.c.b16 %v3309, %v3267
        %v3423 = vpack.c.b16 %v3323, %v3281
        %v3424 = vpack.c.b16 %v3337, %v3295
        %v3425 = vpack.c.b16 %v3393, %v3351
        %v3426 = vpack.c.b16 %v3407, %v3365
        %v3427 = vpack.c.b16 %v3421, %v3379
        %s3434 = scalar_lea.vmem [#allocation2], 48
        %3435 = vst [vmem:[%s3434] sm:$0xff] %v3422
        %3436 = vst [vmem:[%s3434 + $0x8] sm:$0xff] %v3423
        %3437 = vst [vmem:[%s3434 + $0x10] sm:$0xff] %v3424
        %3438 = vst [vmem:[%s3434 + $0x18] sm:$0xff] %v3425
        %3439 = vst [vmem:[%s3434 + $0x20] sm:$0xff] %v3426
        %3440 = vst [vmem:[%s3434 + $0x28] sm:$0xff] %v3427
        %v3441 = vrot.slane %v2965, 2
        %v3442 = vrot.slane %v2968, 1
        %v3443 = vsel %vm3062, %v3442, %v3441
        %v3444 = vsel %vm3065, %v2971, %v3443
        %v3445 = vrot.slane %v2974, 7
        %v3446 = vsel %vm3068, %v3445, %v3444
        %v3447 = vrot.slane %v2977, 6
        %v3448 = vsel %vm3071, %v3447, %v3446
        %v3449 = vrot.slane %v2980, 5
        %v3450 = vsel %vm3074, %v3449, %v3448
        %v3451 = vrot.slane %v2983, 4
        %v3452 = vsel %vm3077, %v3451, %v3450
        %v3453 = vrot.slane %v2986, 3
        %v3454 = vsel %vm3080, %v3453, %v3452
        %v3455 = vrot.slane %v2966, 2
        %v3456 = vrot.slane %v2969, 1
        %v3457 = vsel %vm3062, %v3456, %v3455
        %v3458 = vsel %vm3065, %v2972, %v3457
        %v3459 = vrot.slane %v2975, 7
        %v3460 = vsel %vm3068, %v3459, %v3458
        %v3461 = vrot.slane %v2978, 6
        %v3462 = vsel %vm3071, %v3461, %v3460
        %v3463 = vrot.slane %v2981, 5
        %v3464 = vsel %vm3074, %v3463, %v3462
        %v3465 = vrot.slane %v2984, 4
        %v3466 = vsel %vm3077, %v3465, %v3464
        %v3467 = vrot.slane %v2987, 3
        %v3468 = vsel %vm3080, %v3467, %v3466
        %v3469 = vrot.slane %v2967, 2
        %v3470 = vrot.slane %v2970, 1
        %v3471 = vsel %vm3062, %v3470, %v3469
        %v3472 = vsel %vm3065, %v2973, %v3471
        %v3473 = vrot.slane %v2976, 7
        %v3474 = vsel %vm3068, %v3473, %v3472
        %v3475 = vrot.slane %v2979, 6
        %v3476 = vsel %vm3071, %v3475, %v3474
        %v3477 = vrot.slane %v2982, 5
        %v3478 = vsel %vm3074, %v3477, %v3476
        %v3479 = vrot.slane %v2985, 4
        %v3480 = vsel %vm3077, %v3479, %v3478
        %v3481 = vrot.slane %v2988, 3
        %v3482 = vsel %vm3080, %v3481, %v3480
        %v3483 = vrot.slane %v2989, 2
        %v3484 = vrot.slane %v2992, 1
        %v3485 = vsel %vm3062, %v3484, %v3483
        %v3486 = vsel %vm3065, %v2995, %v3485
        %v3487 = vrot.slane %v2998, 7
        %v3488 = vsel %vm3068, %v3487, %v3486
        %v3489 = vrot.slane %v3001, 6
        %v3490 = vsel %vm3071, %v3489, %v3488
        %v3491 = vrot.slane %v3004, 5
        %v3492 = vsel %vm3074, %v3491, %v3490
        %v3493 = vrot.slane %v3007, 4
        %v3494 = vsel %vm3077, %v3493, %v3492
        %v3495 = vrot.slane %v3010, 3
        %v3496 = vsel %vm3080, %v3495, %v3494
        %v3497 = vrot.slane %v2990, 2
        %v3498 = vrot.slane %v2993, 1
        %v3499 = vsel %vm3062, %v3498, %v3497
        %v3500 = vsel %vm3065, %v2996, %v3499
        %v3501 = vrot.slane %v2999, 7
        %v3502 = vsel %vm3068, %v3501, %v3500
        %v3503 = vrot.slane %v3002, 6
        %v3504 = vsel %vm3071, %v3503, %v3502
        %v3505 = vrot.slane %v3005, 5
        %v3506 = vsel %vm3074, %v3505, %v3504
        %v3507 = vrot.slane %v3008, 4
        %v3508 = vsel %vm3077, %v3507, %v3506
        %v3509 = vrot.slane %v3011, 3
        %v3510 = vsel %vm3080, %v3509, %v3508
        %v3511 = vrot.slane %v2991, 2
        %v3512 = vrot.slane %v2994, 1
        %v3513 = vsel %vm3062, %v3512, %v3511
        %v3514 = vsel %vm3065, %v2997, %v3513
        %v3515 = vrot.slane %v3000, 7
        %v3516 = vsel %vm3068, %v3515, %v3514
        %v3517 = vrot.slane %v3003, 6
        %v3518 = vsel %vm3071, %v3517, %v3516
        %v3519 = vrot.slane %v3006, 5
        %v3520 = vsel %vm3074, %v3519, %v3518
        %v3521 = vrot.slane %v3009, 4
        %v3522 = vsel %vm3077, %v3521, %v3520
        %v3523 = vrot.slane %v3012, 3
        %v3524 = vsel %vm3080, %v3523, %v3522
        %v3525 = vrot.slane %v3013, 2
        %v3526 = vrot.slane %v3016, 1
        %v3527 = vsel %vm3062, %v3526, %v3525
        %v3528 = vsel %vm3065, %v3019, %v3527
        %v3529 = vrot.slane %v3022, 7
        %v3530 = vsel %vm3068, %v3529, %v3528
        %v3531 = vrot.slane %v3025, 6
        %v3532 = vsel %vm3071, %v3531, %v3530
        %v3533 = vrot.slane %v3028, 5
        %v3534 = vsel %vm3074, %v3533, %v3532
        %v3535 = vrot.slane %v3031, 4
        %v3536 = vsel %vm3077, %v3535, %v3534
        %v3537 = vrot.slane %v3034, 3
        %v3538 = vsel %vm3080, %v3537, %v3536
        %v3539 = vrot.slane %v3014, 2
        %v3540 = vrot.slane %v3017, 1
        %v3541 = vsel %vm3062, %v3540, %v3539
        %v3542 = vsel %vm3065, %v3020, %v3541
        %v3543 = vrot.slane %v3023, 7
        %v3544 = vsel %vm3068, %v3543, %v3542
        %v3545 = vrot.slane %v3026, 6
        %v3546 = vsel %vm3071, %v3545, %v3544
        %v3547 = vrot.slane %v3029, 5
        %v3548 = vsel %vm3074, %v3547, %v3546
        %v3549 = vrot.slane %v3032, 4
        %v3550 = vsel %vm3077, %v3549, %v3548
        %v3551 = vrot.slane %v3035, 3
        %v3552 = vsel %vm3080, %v3551, %v3550
        %v3553 = vrot.slane %v3015, 2
        %v3554 = vrot.slane %v3018, 1
        %v3555 = vsel %vm3062, %v3554, %v3553
        %v3556 = vsel %vm3065, %v3021, %v3555
        %v3557 = vrot.slane %v3024, 7
        %v3558 = vsel %vm3068, %v3557, %v3556
        %v3559 = vrot.slane %v3027, 6
        %v3560 = vsel %vm3071, %v3559, %v3558
        %v3561 = vrot.slane %v3030, 5
        %v3562 = vsel %vm3074, %v3561, %v3560
        %v3563 = vrot.slane %v3033, 4
        %v3564 = vsel %vm3077, %v3563, %v3562
        %v3565 = vrot.slane %v3036, 3
        %v3566 = vsel %vm3080, %v3565, %v3564
        %v3567 = vrot.slane %v3037, 2
        %v3568 = vrot.slane %v3040, 1
        %v3569 = vsel %vm3062, %v3568, %v3567
        %v3570 = vsel %vm3065, %v3043, %v3569
        %v3571 = vrot.slane %v3046, 7
        %v3572 = vsel %vm3068, %v3571, %v3570
        %v3573 = vrot.slane %v3049, 6
        %v3574 = vsel %vm3071, %v3573, %v3572
        %v3575 = vrot.slane %v3052, 5
        %v3576 = vsel %vm3074, %v3575, %v3574
        %v3577 = vrot.slane %v3055, 4
        %v3578 = vsel %vm3077, %v3577, %v3576
        %v3579 = vrot.slane %v3058, 3
        %v3580 = vsel %vm3080, %v3579, %v3578
        %v3581 = vrot.slane %v3038, 2
        %v3582 = vrot.slane %v3041, 1
        %v3583 = vsel %vm3062, %v3582, %v3581
        %v3584 = vsel %vm3065, %v3044, %v3583
        %v3585 = vrot.slane %v3047, 7
        %v3586 = vsel %vm3068, %v3585, %v3584
        %v3587 = vrot.slane %v3050, 6
        %v3588 = vsel %vm3071, %v3587, %v3586
        %v3589 = vrot.slane %v3053, 5
        %v3590 = vsel %vm3074, %v3589, %v3588
        %v3591 = vrot.slane %v3056, 4
        %v3592 = vsel %vm3077, %v3591, %v3590
        %v3593 = vrot.slane %v3059, 3
        %v3594 = vsel %vm3080, %v3593, %v3592
        %v3595 = vrot.slane %v3039, 2
        %v3596 = vrot.slane %v3042, 1
        %v3597 = vsel %vm3062, %v3596, %v3595
        %v3598 = vsel %vm3065, %v3045, %v3597
        %v3599 = vrot.slane %v3048, 7
        %v3600 = vsel %vm3068, %v3599, %v3598
        %v3601 = vrot.slane %v3051, 6
        %v3602 = vsel %vm3071, %v3601, %v3600
        %v3603 = vrot.slane %v3054, 5
        %v3604 = vsel %vm3074, %v3603, %v3602
        %v3605 = vrot.slane %v3057, 4
        %v3606 = vsel %vm3077, %v3605, %v3604
        %v3607 = vrot.slane %v3060, 3
        %v3608 = vsel %vm3080, %v3607, %v3606
        %v3609 = vpack.c.b16 %v3496, %v3454
        %v3610 = vpack.c.b16 %v3510, %v3468
        %v3611 = vpack.c.b16 %v3524, %v3482
        %v3612 = vpack.c.b16 %v3580, %v3538
        %v3613 = vpack.c.b16 %v3594, %v3552
        %v3614 = vpack.c.b16 %v3608, %v3566
        %s3621 = scalar_lea.vmem [#allocation2], 96
        %3622 = vst [vmem:[%s3621] sm:$0xff] %v3609
        %3623 = vst [vmem:[%s3621 + $0x8] sm:$0xff] %v3610
        %3624 = vst [vmem:[%s3621 + $0x10] sm:$0xff] %v3611
        %3625 = vst [vmem:[%s3621 + $0x18] sm:$0xff] %v3612
        %3626 = vst [vmem:[%s3621 + $0x20] sm:$0xff] %v3613
        %3627 = vst [vmem:[%s3621 + $0x28] sm:$0xff] %v3614
        %v3628 = vrot.slane %v2965, 3
        %v3629 = vrot.slane %v2968, 2
        %v3630 = vsel %vm3062, %v3629, %v3628
        %v3631 = vrot.slane %v2971, 1
        %v3632 = vsel %vm3065, %v3631, %v3630
        %v3633 = vsel %vm3068, %v2974, %v3632
        %v3634 = vrot.slane %v2977, 7
        %v3635 = vsel %vm3071, %v3634, %v3633
        %v3636 = vrot.slane %v2980, 6
        %v3637 = vsel %vm3074, %v3636, %v3635
        %v3638 = vrot.slane %v2983, 5
        %v3639 = vsel %vm3077, %v3638, %v3637
        %v3640 = vrot.slane %v2986, 4
        %v3641 = vsel %vm3080, %v3640, %v3639
        %v3642 = vrot.slane %v2966, 3
        %v3643 = vrot.slane %v2969, 2
        %v3644 = vsel %vm3062, %v3643, %v3642
        %v3645 = vrot.slane %v2972, 1
        %v3646 = vsel %vm3065, %v3645, %v3644
        %v3647 = vsel %vm3068, %v2975, %v3646
        %v3648 = vrot.slane %v2978, 7
        %v3649 = vsel %vm3071, %v3648, %v3647
        %v3650 = vrot.slane %v2981, 6
        %v3651 = vsel %vm3074, %v3650, %v3649
        %v3652 = vrot.slane %v2984, 5
        %v3653 = vsel %vm3077, %v3652, %v3651
        %v3654 = vrot.slane %v2987, 4
        %v3655 = vsel %vm3080, %v3654, %v3653
        %v3656 = vrot.slane %v2967, 3
        %v3657 = vrot.slane %v2970, 2
        %v3658 = vsel %vm3062, %v3657, %v3656
        %v3659 = vrot.slane %v2973, 1
        %v3660 = vsel %vm3065, %v3659, %v3658
        %v3661 = vsel %vm3068, %v2976, %v3660
        %v3662 = vrot.slane %v2979, 7
        %v3663 = vsel %vm3071, %v3662, %v3661
        %v3664 = vrot.slane %v2982, 6
        %v3665 = vsel %vm3074, %v3664, %v3663
        %v3666 = vrot.slane %v2985, 5
        %v3667 = vsel %vm3077, %v3666, %v3665
        %v3668 = vrot.slane %v2988, 4
        %v3669 = vsel %vm3080, %v3668, %v3667
        %v3670 = vrot.slane %v2989, 3
        %v3671 = vrot.slane %v2992, 2
        %v3672 = vsel %vm3062, %v3671, %v3670
        %v3673 = vrot.slane %v2995, 1
        %v3674 = vsel %vm3065, %v3673, %v3672
        %v3675 = vsel %vm3068, %v2998, %v3674
        %v3676 = vrot.slane %v3001, 7
        %v3677 = vsel %vm3071, %v3676, %v3675
        %v3678 = vrot.slane %v3004, 6
        %v3679 = vsel %vm3074, %v3678, %v3677
        %v3680 = vrot.slane %v3007, 5
        %v3681 = vsel %vm3077, %v3680, %v3679
        %v3682 = vrot.slane %v3010, 4
        %v3683 = vsel %vm3080, %v3682, %v3681
        %v3684 = vrot.slane %v2990, 3
        %v3685 = vrot.slane %v2993, 2
        %v3686 = vsel %vm3062, %v3685, %v3684
        %v3687 = vrot.slane %v2996, 1
        %v3688 = vsel %vm3065, %v3687, %v3686
        %v3689 = vsel %vm3068, %v2999, %v3688
        %v3690 = vrot.slane %v3002, 7
        %v3691 = vsel %vm3071, %v3690, %v3689
        %v3692 = vrot.slane %v3005, 6
        %v3693 = vsel %vm3074, %v3692, %v3691
        %v3694 = vrot.slane %v3008, 5
        %v3695 = vsel %vm3077, %v3694, %v3693
        %v3696 = vrot.slane %v3011, 4
        %v3697 = vsel %vm3080, %v3696, %v3695
        %v3698 = vrot.slane %v2991, 3
        %v3699 = vrot.slane %v2994, 2
        %v3700 = vsel %vm3062, %v3699, %v3698
        %v3701 = vrot.slane %v2997, 1
        %v3702 = vsel %vm3065, %v3701, %v3700
        %v3703 = vsel %vm3068, %v3000, %v3702
        %v3704 = vrot.slane %v3003, 7
        %v3705 = vsel %vm3071, %v3704, %v3703
        %v3706 = vrot.slane %v3006, 6
        %v3707 = vsel %vm3074, %v3706, %v3705
        %v3708 = vrot.slane %v3009, 5
        %v3709 = vsel %vm3077, %v3708, %v3707
        %v3710 = vrot.slane %v3012, 4
        %v3711 = vsel %vm3080, %v3710, %v3709
        %v3712 = vrot.slane %v3013, 3
        %v3713 = vrot.slane %v3016, 2
        %v3714 = vsel %vm3062, %v3713, %v3712
        %v3715 = vrot.slane %v3019, 1
        %v3716 = vsel %vm3065, %v3715, %v3714
        %v3717 = vsel %vm3068, %v3022, %v3716
        %v3718 = vrot.slane %v3025, 7
        %v3719 = vsel %vm3071, %v3718, %v3717
        %v3720 = vrot.slane %v3028, 6
        %v3721 = vsel %vm3074, %v3720, %v3719
        %v3722 = vrot.slane %v3031, 5
        %v3723 = vsel %vm3077, %v3722, %v3721
        %v3724 = vrot.slane %v3034, 4
        %v3725 = vsel %vm3080, %v3724, %v3723
        %v3726 = vrot.slane %v3014, 3
        %v3727 = vrot.slane %v3017, 2
        %v3728 = vsel %vm3062, %v3727, %v3726
        %v3729 = vrot.slane %v3020, 1
        %v3730 = vsel %vm3065, %v3729, %v3728
        %v3731 = vsel %vm3068, %v3023, %v3730
        %v3732 = vrot.slane %v3026, 7
        %v3733 = vsel %vm3071, %v3732, %v3731
        %v3734 = vrot.slane %v3029, 6
        %v3735 = vsel %vm3074, %v3734, %v3733
        %v3736 = vrot.slane %v3032, 5
        %v3737 = vsel %vm3077, %v3736, %v3735
        %v3738 = vrot.slane %v3035, 4
        %v3739 = vsel %vm3080, %v3738, %v3737
        %v3740 = vrot.slane %v3015, 3
        %v3741 = vrot.slane %v3018, 2
        %v3742 = vsel %vm3062, %v3741, %v3740
        %v3743 = vrot.slane %v3021, 1
        %v3744 = vsel %vm3065, %v3743, %v3742
        %v3745 = vsel %vm3068, %v3024, %v3744
        %v3746 = vrot.slane %v3027, 7
        %v3747 = vsel %vm3071, %v3746, %v3745
        %v3748 = vrot.slane %v3030, 6
        %v3749 = vsel %vm3074, %v3748, %v3747
        %v3750 = vrot.slane %v3033, 5
        %v3751 = vsel %vm3077, %v3750, %v3749
        %v3752 = vrot.slane %v3036, 4
        %v3753 = vsel %vm3080, %v3752, %v3751
        %v3754 = vrot.slane %v3037, 3
        %v3755 = vrot.slane %v3040, 2
        %v3756 = vsel %vm3062, %v3755, %v3754
        %v3757 = vrot.slane %v3043, 1
        %v3758 = vsel %vm3065, %v3757, %v3756
        %v3759 = vsel %vm3068, %v3046, %v3758
        %v3760 = vrot.slane %v3049, 7
        %v3761 = vsel %vm3071, %v3760, %v3759
        %v3762 = vrot.slane %v3052, 6
        %v3763 = vsel %vm3074, %v3762, %v3761
        %v3764 = vrot.slane %v3055, 5
        %v3765 = vsel %vm3077, %v3764, %v3763
        %v3766 = vrot.slane %v3058, 4
        %v3767 = vsel %vm3080, %v3766, %v3765
        %v3768 = vrot.slane %v3038, 3
        %v3769 = vrot.slane %v3041, 2
        %v3770 = vsel %vm3062, %v3769, %v3768
        %v3771 = vrot.slane %v3044, 1
        %v3772 = vsel %vm3065, %v3771, %v3770
        %v3773 = vsel %vm3068, %v3047, %v3772
        %v3774 = vrot.slane %v3050, 7
        %v3775 = vsel %vm3071, %v3774, %v3773
        %v3776 = vrot.slane %v3053, 6
        %v3777 = vsel %vm3074, %v3776, %v3775
        %v3778 = vrot.slane %v3056, 5
        %v3779 = vsel %vm3077, %v3778, %v3777
        %v3780 = vrot.slane %v3059, 4
        %v3781 = vsel %vm3080, %v3780, %v3779
        %v3782 = vrot.slane %v3039, 3
        %v3783 = vrot.slane %v3042, 2
        %v3784 = vsel %vm3062, %v3783, %v3782
        %v3785 = vrot.slane %v3045, 1
        %v3786 = vsel %vm3065, %v3785, %v3784
        %v3787 = vsel %vm3068, %v3048, %v3786
        %v3788 = vrot.slane %v3051, 7
        %v3789 = vsel %vm3071, %v3788, %v3787
        %v3790 = vrot.slane %v3054, 6
        %v3791 = vsel %vm3074, %v3790, %v3789
        %v3792 = vrot.slane %v3057, 5
        %v3793 = vsel %vm3077, %v3792, %v3791
        %v3794 = vrot.slane %v3060, 4
        %v3795 = vsel %vm3080, %v3794, %v3793
        %v3796 = vpack.c.b16 %v3683, %v3641
        %v3797 = vpack.c.b16 %v3697, %v3655
        %v3798 = vpack.c.b16 %v3711, %v3669
        %v3799 = vpack.c.b16 %v3767, %v3725
        %v3800 = vpack.c.b16 %v3781, %v3739
        %v3801 = vpack.c.b16 %v3795, %v3753
        %s3808 = scalar_lea.vmem [#allocation2], 144
        %3809 = vst [vmem:[%s3808] sm:$0xff] %v3796
        %3810 = vst [vmem:[%s3808 + $0x8] sm:$0xff] %v3797
        %3811 = vst [vmem:[%s3808 + $0x10] sm:$0xff] %v3798
        %3812 = vst [vmem:[%s3808 + $0x18] sm:$0xff] %v3799
        %3813 = vst [vmem:[%s3808 + $0x20] sm:$0xff] %v3800
        %3814 = vst [vmem:[%s3808 + $0x28] sm:$0xff] %v3801
        %v3815 = vrot.slane %v2965, 4
        %v3816 = vrot.slane %v2968, 3
        %v3817 = vsel %vm3062, %v3816, %v3815
        %v3818 = vrot.slane %v2971, 2
        %v3819 = vsel %vm3065, %v3818, %v3817
        %v3820 = vrot.slane %v2974, 1
        %v3821 = vsel %vm3068, %v3820, %v3819
        %v3822 = vsel %vm3071, %v2977, %v3821
        %v3823 = vrot.slane %v2980, 7
        %v3824 = vsel %vm3074, %v3823, %v3822
        %v3825 = vrot.slane %v2983, 6
        %v3826 = vsel %vm3077, %v3825, %v3824
        %v3827 = vrot.slane %v2986, 5
        %v3828 = vsel %vm3080, %v3827, %v3826
        %v3829 = vrot.slane %v2966, 4
        %v3830 = vrot.slane %v2969, 3
        %v3831 = vsel %vm3062, %v3830, %v3829
        %v3832 = vrot.slane %v2972, 2
        %v3833 = vsel %vm3065, %v3832, %v3831
        %v3834 = vrot.slane %v2975, 1
        %v3835 = vsel %vm3068, %v3834, %v3833
        %v3836 = vsel %vm3071, %v2978, %v3835
        %v3837 = vrot.slane %v2981, 7
        %v3838 = vsel %vm3074, %v3837, %v3836
        %v3839 = vrot.slane %v2984, 6
        %v3840 = vsel %vm3077, %v3839, %v3838
        %v3841 = vrot.slane %v2987, 5
        %v3842 = vsel %vm3080, %v3841, %v3840
        %v3843 = vrot.slane %v2967, 4
        %v3844 = vrot.slane %v2970, 3
        %v3845 = vsel %vm3062, %v3844, %v3843
        %v3846 = vrot.slane %v2973, 2
        %v3847 = vsel %vm3065, %v3846, %v3845
        %v3848 = vrot.slane %v2976, 1
        %v3849 = vsel %vm3068, %v3848, %v3847
        %v3850 = vsel %vm3071, %v2979, %v3849
        %v3851 = vrot.slane %v2982, 7
        %v3852 = vsel %vm3074, %v3851, %v3850
        %v3853 = vrot.slane %v2985, 6
        %v3854 = vsel %vm3077, %v3853, %v3852
        %v3855 = vrot.slane %v2988, 5
        %v3856 = vsel %vm3080, %v3855, %v3854
        %v3857 = vrot.slane %v2989, 4
        %v3858 = vrot.slane %v2992, 3
        %v3859 = vsel %vm3062, %v3858, %v3857
        %v3860 = vrot.slane %v2995, 2
        %v3861 = vsel %vm3065, %v3860, %v3859
        %v3862 = vrot.slane %v2998, 1
        %v3863 = vsel %vm3068, %v3862, %v3861
        %v3864 = vsel %vm3071, %v3001, %v3863
        %v3865 = vrot.slane %v3004, 7
        %v3866 = vsel %vm3074, %v3865, %v3864
        %v3867 = vrot.slane %v3007, 6
        %v3868 = vsel %vm3077, %v3867, %v3866
        %v3869 = vrot.slane %v3010, 5
        %v3870 = vsel %vm3080, %v3869, %v3868
        %v3871 = vrot.slane %v2990, 4
        %v3872 = vrot.slane %v2993, 3
        %v3873 = vsel %vm3062, %v3872, %v3871
        %v3874 = vrot.slane %v2996, 2
        %v3875 = vsel %vm3065, %v3874, %v3873
        %v3876 = vrot.slane %v2999, 1
        %v3877 = vsel %vm3068, %v3876, %v3875
        %v3878 = vsel %vm3071, %v3002, %v3877
        %v3879 = vrot.slane %v3005, 7
        %v3880 = vsel %vm3074, %v3879, %v3878
        %v3881 = vrot.slane %v3008, 6
        %v3882 = vsel %vm3077, %v3881, %v3880
        %v3883 = vrot.slane %v3011, 5
        %v3884 = vsel %vm3080, %v3883, %v3882
        %v3885 = vrot.slane %v2991, 4
        %v3886 = vrot.slane %v2994, 3
        %v3887 = vsel %vm3062, %v3886, %v3885
        %v3888 = vrot.slane %v2997, 2
        %v3889 = vsel %vm3065, %v3888, %v3887
        %v3890 = vrot.slane %v3000, 1
        %v3891 = vsel %vm3068, %v3890, %v3889
        %v3892 = vsel %vm3071, %v3003, %v3891
        %v3893 = vrot.slane %v3006, 7
        %v3894 = vsel %vm3074, %v3893, %v3892
        %v3895 = vrot.slane %v3009, 6
        %v3896 = vsel %vm3077, %v3895, %v3894
        %v3897 = vrot.slane %v3012, 5
        %v3898 = vsel %vm3080, %v3897, %v3896
        %v3899 = vrot.slane %v3013, 4
        %v3900 = vrot.slane %v3016, 3
        %v3901 = vsel %vm3062, %v3900, %v3899
        %v3902 = vrot.slane %v3019, 2
        %v3903 = vsel %vm3065, %v3902, %v3901
        %v3904 = vrot.slane %v3022, 1
        %v3905 = vsel %vm3068, %v3904, %v3903
        %v3906 = vsel %vm3071, %v3025, %v3905
        %v3907 = vrot.slane %v3028, 7
        %v3908 = vsel %vm3074, %v3907, %v3906
        %v3909 = vrot.slane %v3031, 6
        %v3910 = vsel %vm3077, %v3909, %v3908
        %v3911 = vrot.slane %v3034, 5
        %v3912 = vsel %vm3080, %v3911, %v3910
        %v3913 = vrot.slane %v3014, 4
        %v3914 = vrot.slane %v3017, 3
        %v3915 = vsel %vm3062, %v3914, %v3913
        %v3916 = vrot.slane %v3020, 2
        %v3917 = vsel %vm3065, %v3916, %v3915
        %v3918 = vrot.slane %v3023, 1
        %v3919 = vsel %vm3068, %v3918, %v3917
        %v3920 = vsel %vm3071, %v3026, %v3919
        %v3921 = vrot.slane %v3029, 7
        %v3922 = vsel %vm3074, %v3921, %v3920
        %v3923 = vrot.slane %v3032, 6
        %v3924 = vsel %vm3077, %v3923, %v3922
        %v3925 = vrot.slane %v3035, 5
        %v3926 = vsel %vm3080, %v3925, %v3924
        %v3927 = vrot.slane %v3015, 4
        %v3928 = vrot.slane %v3018, 3
        %v3929 = vsel %vm3062, %v3928, %v3927
        %v3930 = vrot.slane %v3021, 2
        %v3931 = vsel %vm3065, %v3930, %v3929
        %v3932 = vrot.slane %v3024, 1
        %v3933 = vsel %vm3068, %v3932, %v3931
        %v3934 = vsel %vm3071, %v3027, %v3933
        %v3935 = vrot.slane %v3030, 7
        %v3936 = vsel %vm3074, %v3935, %v3934
        %v3937 = vrot.slane %v3033, 6
        %v3938 = vsel %vm3077, %v3937, %v3936
        %v3939 = vrot.slane %v3036, 5
        %v3940 = vsel %vm3080, %v3939, %v3938
        %v3941 = vrot.slane %v3037, 4
        %v3942 = vrot.slane %v3040, 3
        %v3943 = vsel %vm3062, %v3942, %v3941
        %v3944 = vrot.slane %v3043, 2
        %v3945 = vsel %vm3065, %v3944, %v3943
        %v3946 = vrot.slane %v3046, 1
        %v3947 = vsel %vm3068, %v3946, %v3945
        %v3948 = vsel %vm3071, %v3049, %v3947
        %v3949 = vrot.slane %v3052, 7
        %v3950 = vsel %vm3074, %v3949, %v3948
        %v3951 = vrot.slane %v3055, 6
        %v3952 = vsel %vm3077, %v3951, %v3950
        %v3953 = vrot.slane %v3058, 5
        %v3954 = vsel %vm3080, %v3953, %v3952
        %v3955 = vrot.slane %v3038, 4
        %v3956 = vrot.slane %v3041, 3
        %v3957 = vsel %vm3062, %v3956, %v3955
        %v3958 = vrot.slane %v3044, 2
        %v3959 = vsel %vm3065, %v3958, %v3957
        %v3960 = vrot.slane %v3047, 1
        %v3961 = vsel %vm3068, %v3960, %v3959
        %v3962 = vsel %vm3071, %v3050, %v3961
        %v3963 = vrot.slane %v3053, 7
        %v3964 = vsel %vm3074, %v3963, %v3962
        %v3965 = vrot.slane %v3056, 6
        %v3966 = vsel %vm3077, %v3965, %v3964
        %v3967 = vrot.slane %v3059, 5
        %v3968 = vsel %vm3080, %v3967, %v3966
        %v3969 = vrot.slane %v3039, 4
        %v3970 = vrot.slane %v3042, 3
        %v3971 = vsel %vm3062, %v3970, %v3969
        %v3972 = vrot.slane %v3045, 2
        %v3973 = vsel %vm3065, %v3972, %v3971
        %v3974 = vrot.slane %v3048, 1
        %v3975 = vsel %vm3068, %v3974, %v3973
        %v3976 = vsel %vm3071, %v3051, %v3975
        %v3977 = vrot.slane %v3054, 7
        %v3978 = vsel %vm3074, %v3977, %v3976
        %v3979 = vrot.slane %v3057, 6
        %v3980 = vsel %vm3077, %v3979, %v3978
        %v3981 = vrot.slane %v3060, 5
        %v3982 = vsel %vm3080, %v3981, %v3980
        %v3983 = vpack.c.b16 %v3870, %v3828
        %v3984 = vpack.c.b16 %v3884, %v3842
        %v3985 = vpack.c.b16 %v3898, %v3856
        %v3986 = vpack.c.b16 %v3954, %v3912
        %v3987 = vpack.c.b16 %v3968, %v3926
        %v3988 = vpack.c.b16 %v3982, %v3940
        %s3995 = scalar_lea.vmem [#allocation2], 192
        %3996 = vst [vmem:[%s3995] sm:$0xff] %v3983
        %3997 = vst [vmem:[%s3995 + $0x8] sm:$0xff] %v3984
        %3998 = vst [vmem:[%s3995 + $0x10] sm:$0xff] %v3985
        %3999 = vst [vmem:[%s3995 + $0x18] sm:$0xff] %v3986
        %4000 = vst [vmem:[%s3995 + $0x20] sm:$0xff] %v3987
        %4001 = vst [vmem:[%s3995 + $0x28] sm:$0xff] %v3988
        %v4002 = vrot.slane %v2965, 5
        %v4003 = vrot.slane %v2968, 4
        %v4004 = vsel %vm3062, %v4003, %v4002
        %v4005 = vrot.slane %v2971, 3
        %v4006 = vsel %vm3065, %v4005, %v4004
        %v4007 = vrot.slane %v2974, 2
        %v4008 = vsel %vm3068, %v4007, %v4006
        %v4009 = vrot.slane %v2977, 1
        %v4010 = vsel %vm3071, %v4009, %v4008
        %v4011 = vsel %vm3074, %v2980, %v4010
        %v4012 = vrot.slane %v2983, 7
        %v4013 = vsel %vm3077, %v4012, %v4011
        %v4014 = vrot.slane %v2986, 6
        %v4015 = vsel %vm3080, %v4014, %v4013
        %v4016 = vrot.slane %v2966, 5
        %v4017 = vrot.slane %v2969, 4
        %v4018 = vsel %vm3062, %v4017, %v4016
        %v4019 = vrot.slane %v2972, 3
        %v4020 = vsel %vm3065, %v4019, %v4018
        %v4021 = vrot.slane %v2975, 2
        %v4022 = vsel %vm3068, %v4021, %v4020
        %v4023 = vrot.slane %v2978, 1
        %v4024 = vsel %vm3071, %v4023, %v4022
        %v4025 = vsel %vm3074, %v2981, %v4024
        %v4026 = vrot.slane %v2984, 7
        %v4027 = vsel %vm3077, %v4026, %v4025
        %v4028 = vrot.slane %v2987, 6
        %v4029 = vsel %vm3080, %v4028, %v4027
        %v4030 = vrot.slane %v2967, 5
        %v4031 = vrot.slane %v2970, 4
        %v4032 = vsel %vm3062, %v4031, %v4030
        %v4033 = vrot.slane %v2973, 3
        %v4034 = vsel %vm3065, %v4033, %v4032
        %v4035 = vrot.slane %v2976, 2
        %v4036 = vsel %vm3068, %v4035, %v4034
        %v4037 = vrot.slane %v2979, 1
        %v4038 = vsel %vm3071, %v4037, %v4036
        %v4039 = vsel %vm3074, %v2982, %v4038
        %v4040 = vrot.slane %v2985, 7
        %v4041 = vsel %vm3077, %v4040, %v4039
        %v4042 = vrot.slane %v2988, 6
        %v4043 = vsel %vm3080, %v4042, %v4041
        %v4044 = vrot.slane %v2989, 5
        %v4045 = vrot.slane %v2992, 4
        %v4046 = vsel %vm3062, %v4045, %v4044
        %v4047 = vrot.slane %v2995, 3
        %v4048 = vsel %vm3065, %v4047, %v4046
        %v4049 = vrot.slane %v2998, 2
        %v4050 = vsel %vm3068, %v4049, %v4048
        %v4051 = vrot.slane %v3001, 1
        %v4052 = vsel %vm3071, %v4051, %v4050
        %v4053 = vsel %vm3074, %v3004, %v4052
        %v4054 = vrot.slane %v3007, 7
        %v4055 = vsel %vm3077, %v4054, %v4053
        %v4056 = vrot.slane %v3010, 6
        %v4057 = vsel %vm3080, %v4056, %v4055
        %v4058 = vrot.slane %v2990, 5
        %v4059 = vrot.slane %v2993, 4
        %v4060 = vsel %vm3062, %v4059, %v4058
        %v4061 = vrot.slane %v2996, 3
        %v4062 = vsel %vm3065, %v4061, %v4060
        %v4063 = vrot.slane %v2999, 2
        %v4064 = vsel %vm3068, %v4063, %v4062
        %v4065 = vrot.slane %v3002, 1
        %v4066 = vsel %vm3071, %v4065, %v4064
        %v4067 = vsel %vm3074, %v3005, %v4066
        %v4068 = vrot.slane %v3008, 7
        %v4069 = vsel %vm3077, %v4068, %v4067
        %v4070 = vrot.slane %v3011, 6
        %v4071 = vsel %vm3080, %v4070, %v4069
        %v4072 = vrot.slane %v2991, 5
        %v4073 = vrot.slane %v2994, 4
        %v4074 = vsel %vm3062, %v4073, %v4072
        %v4075 = vrot.slane %v2997, 3
        %v4076 = vsel %vm3065, %v4075, %v4074
        %v4077 = vrot.slane %v3000, 2
        %v4078 = vsel %vm3068, %v4077, %v4076
        %v4079 = vrot.slane %v3003, 1
        %v4080 = vsel %vm3071, %v4079, %v4078
        %v4081 = vsel %vm3074, %v3006, %v4080
        %v4082 = vrot.slane %v3009, 7
        %v4083 = vsel %vm3077, %v4082, %v4081
        %v4084 = vrot.slane %v3012, 6
        %v4085 = vsel %vm3080, %v4084, %v4083
        %v4086 = vrot.slane %v3013, 5
        %v4087 = vrot.slane %v3016, 4
        %v4088 = vsel %vm3062, %v4087, %v4086
        %v4089 = vrot.slane %v3019, 3
        %v4090 = vsel %vm3065, %v4089, %v4088
        %v4091 = vrot.slane %v3022, 2
        %v4092 = vsel %vm3068, %v4091, %v4090
        %v4093 = vrot.slane %v3025, 1
        %v4094 = vsel %vm3071, %v4093, %v4092
        %v4095 = vsel %vm3074, %v3028, %v4094
        %v4096 = vrot.slane %v3031, 7
        %v4097 = vsel %vm3077, %v4096, %v4095
        %v4098 = vrot.slane %v3034, 6
        %v4099 = vsel %vm3080, %v4098, %v4097
        %v4100 = vrot.slane %v3014, 5
        %v4101 = vrot.slane %v3017, 4
        %v4102 = vsel %vm3062, %v4101, %v4100
        %v4103 = vrot.slane %v3020, 3
        %v4104 = vsel %vm3065, %v4103, %v4102
        %v4105 = vrot.slane %v3023, 2
        %v4106 = vsel %vm3068, %v4105, %v4104
        %v4107 = vrot.slane %v3026, 1
        %v4108 = vsel %vm3071, %v4107, %v4106
        %v4109 = vsel %vm3074, %v3029, %v4108
        %v4110 = vrot.slane %v3032, 7
        %v4111 = vsel %vm3077, %v4110, %v4109
        %v4112 = vrot.slane %v3035, 6
        %v4113 = vsel %vm3080, %v4112, %v4111
        %v4114 = vrot.slane %v3015, 5
        %v4115 = vrot.slane %v3018, 4
        %v4116 = vsel %vm3062, %v4115, %v4114
        %v4117 = vrot.slane %v3021, 3
        %v4118 = vsel %vm3065, %v4117, %v4116
        %v4119 = vrot.slane %v3024, 2
        %v4120 = vsel %vm3068, %v4119, %v4118
        %v4121 = vrot.slane %v3027, 1
        %v4122 = vsel %vm3071, %v4121, %v4120
        %v4123 = vsel %vm3074, %v3030, %v4122
        %v4124 = vrot.slane %v3033, 7
        %v4125 = vsel %vm3077, %v4124, %v4123
        %v4126 = vrot.slane %v3036, 6
        %v4127 = vsel %vm3080, %v4126, %v4125
        %v4128 = vrot.slane %v3037, 5
        %v4129 = vrot.slane %v3040, 4
        %v4130 = vsel %vm3062, %v4129, %v4128
        %v4131 = vrot.slane %v3043, 3
        %v4132 = vsel %vm3065, %v4131, %v4130
        %v4133 = vrot.slane %v3046, 2
        %v4134 = vsel %vm3068, %v4133, %v4132
        %v4135 = vrot.slane %v3049, 1
        %v4136 = vsel %vm3071, %v4135, %v4134
        %v4137 = vsel %vm3074, %v3052, %v4136
        %v4138 = vrot.slane %v3055, 7
        %v4139 = vsel %vm3077, %v4138, %v4137
        %v4140 = vrot.slane %v3058, 6
        %v4141 = vsel %vm3080, %v4140, %v4139
        %v4142 = vrot.slane %v3038, 5
        %v4143 = vrot.slane %v3041, 4
        %v4144 = vsel %vm3062, %v4143, %v4142
        %v4145 = vrot.slane %v3044, 3
        %v4146 = vsel %vm3065, %v4145, %v4144
        %v4147 = vrot.slane %v3047, 2
        %v4148 = vsel %vm3068, %v4147, %v4146
        %v4149 = vrot.slane %v3050, 1
        %v4150 = vsel %vm3071, %v4149, %v4148
        %v4151 = vsel %vm3074, %v3053, %v4150
        %v4152 = vrot.slane %v3056, 7
        %v4153 = vsel %vm3077, %v4152, %v4151
        %v4154 = vrot.slane %v3059, 6
        %v4155 = vsel %vm3080, %v4154, %v4153
        %v4156 = vrot.slane %v3039, 5
        %v4157 = vrot.slane %v3042, 4
        %v4158 = vsel %vm3062, %v4157, %v4156
        %v4159 = vrot.slane %v3045, 3
        %v4160 = vsel %vm3065, %v4159, %v4158
        %v4161 = vrot.slane %v3048, 2
        %v4162 = vsel %vm3068, %v4161, %v4160
        %v4163 = vrot.slane %v3051, 1
        %v4164 = vsel %vm3071, %v4163, %v4162
        %v4165 = vsel %vm3074, %v3054, %v4164
        %v4166 = vrot.slane %v3057, 7
        %v4167 = vsel %vm3077, %v4166, %v4165
        %v4168 = vrot.slane %v3060, 6
        %v4169 = vsel %vm3080, %v4168, %v4167
        %v4170 = vpack.c.b16 %v4057, %v4015
        %v4171 = vpack.c.b16 %v4071, %v4029
        %v4172 = vpack.c.b16 %v4085, %v4043
        %v4173 = vpack.c.b16 %v4141, %v4099
        %v4174 = vpack.c.b16 %v4155, %v4113
        %v4175 = vpack.c.b16 %v4169, %v4127
        %s4182 = scalar_lea.vmem [#allocation2], 240
        %4183 = vst [vmem:[%s4182] sm:$0xff] %v4170
        %4184 = vst [vmem:[%s4182 + $0x8] sm:$0xff] %v4171
        %4185 = vst [vmem:[%s4182 + $0x10] sm:$0xff] %v4172
        %4186 = vst [vmem:[%s4182 + $0x18] sm:$0xff] %v4173
        %4187 = vst [vmem:[%s4182 + $0x20] sm:$0xff] %v4174
        %4188 = vst [vmem:[%s4182 + $0x28] sm:$0xff] %v4175
        %v4189 = vrot.slane %v2965, 6
        %v4190 = vrot.slane %v2968, 5
        %v4191 = vsel %vm3062, %v4190, %v4189
        %v4192 = vrot.slane %v2971, 4
        %v4193 = vsel %vm3065, %v4192, %v4191
        %v4194 = vrot.slane %v2974, 3
        %v4195 = vsel %vm3068, %v4194, %v4193
        %v4196 = vrot.slane %v2977, 2
        %v4197 = vsel %vm3071, %v4196, %v4195
        %v4198 = vrot.slane %v2980, 1
        %v4199 = vsel %vm3074, %v4198, %v4197
        %v4200 = vsel %vm3077, %v2983, %v4199
        %v4201 = vrot.slane %v2986, 7
        %v4202 = vsel %vm3080, %v4201, %v4200
        %v4203 = vrot.slane %v2966, 6
        %v4204 = vrot.slane %v2969, 5
        %v4205 = vsel %vm3062, %v4204, %v4203
        %v4206 = vrot.slane %v2972, 4
        %v4207 = vsel %vm3065, %v4206, %v4205
        %v4208 = vrot.slane %v2975, 3
        %v4209 = vsel %vm3068, %v4208, %v4207
        %v4210 = vrot.slane %v2978, 2
        %v4211 = vsel %vm3071, %v4210, %v4209
        %v4212 = vrot.slane %v2981, 1
        %v4213 = vsel %vm3074, %v4212, %v4211
        %v4214 = vsel %vm3077, %v2984, %v4213
        %v4215 = vrot.slane %v2987, 7
        %v4216 = vsel %vm3080, %v4215, %v4214
        %v4217 = vrot.slane %v2967, 6
        %v4218 = vrot.slane %v2970, 5
        %v4219 = vsel %vm3062, %v4218, %v4217
        %v4220 = vrot.slane %v2973, 4
        %v4221 = vsel %vm3065, %v4220, %v4219
        %v4222 = vrot.slane %v2976, 3
        %v4223 = vsel %vm3068, %v4222, %v4221
        %v4224 = vrot.slane %v2979, 2
        %v4225 = vsel %vm3071, %v4224, %v4223
        %v4226 = vrot.slane %v2982, 1
        %v4227 = vsel %vm3074, %v4226, %v4225
        %v4228 = vsel %vm3077, %v2985, %v4227
        %v4229 = vrot.slane %v2988, 7
        %v4230 = vsel %vm3080, %v4229, %v4228
        %v4231 = vrot.slane %v2989, 6
        %v4232 = vrot.slane %v2992, 5
        %v4233 = vsel %vm3062, %v4232, %v4231
        %v4234 = vrot.slane %v2995, 4
        %v4235 = vsel %vm3065, %v4234, %v4233
        %v4236 = vrot.slane %v2998, 3
        %v4237 = vsel %vm3068, %v4236, %v4235
        %v4238 = vrot.slane %v3001, 2
        %v4239 = vsel %vm3071, %v4238, %v4237
        %v4240 = vrot.slane %v3004, 1
        %v4241 = vsel %vm3074, %v4240, %v4239
        %v4242 = vsel %vm3077, %v3007, %v4241
        %v4243 = vrot.slane %v3010, 7
        %v4244 = vsel %vm3080, %v4243, %v4242
        %v4245 = vrot.slane %v2990, 6
        %v4246 = vrot.slane %v2993, 5
        %v4247 = vsel %vm3062, %v4246, %v4245
        %v4248 = vrot.slane %v2996, 4
        %v4249 = vsel %vm3065, %v4248, %v4247
        %v4250 = vrot.slane %v2999, 3
        %v4251 = vsel %vm3068, %v4250, %v4249
        %v4252 = vrot.slane %v3002, 2
        %v4253 = vsel %vm3071, %v4252, %v4251
        %v4254 = vrot.slane %v3005, 1
        %v4255 = vsel %vm3074, %v4254, %v4253
        %v4256 = vsel %vm3077, %v3008, %v4255
        %v4257 = vrot.slane %v3011, 7
        %v4258 = vsel %vm3080, %v4257, %v4256
        %v4259 = vrot.slane %v2991, 6
        %v4260 = vrot.slane %v2994, 5
        %v4261 = vsel %vm3062, %v4260, %v4259
        %v4262 = vrot.slane %v2997, 4
        %v4263 = vsel %vm3065, %v4262, %v4261
        %v4264 = vrot.slane %v3000, 3
        %v4265 = vsel %vm3068, %v4264, %v4263
        %v4266 = vrot.slane %v3003, 2
        %v4267 = vsel %vm3071, %v4266, %v4265
        %v4268 = vrot.slane %v3006, 1
        %v4269 = vsel %vm3074, %v4268, %v4267
        %v4270 = vsel %vm3077, %v3009, %v4269
        %v4271 = vrot.slane %v3012, 7
        %v4272 = vsel %vm3080, %v4271, %v4270
        %v4273 = vrot.slane %v3013, 6
        %v4274 = vrot.slane %v3016, 5
        %v4275 = vsel %vm3062, %v4274, %v4273
        %v4276 = vrot.slane %v3019, 4
        %v4277 = vsel %vm3065, %v4276, %v4275
        %v4278 = vrot.slane %v3022, 3
        %v4279 = vsel %vm3068, %v4278, %v4277
        %v4280 = vrot.slane %v3025, 2
        %v4281 = vsel %vm3071, %v4280, %v4279
        %v4282 = vrot.slane %v3028, 1
        %v4283 = vsel %vm3074, %v4282, %v4281
        %v4284 = vsel %vm3077, %v3031, %v4283
        %v4285 = vrot.slane %v3034, 7
        %v4286 = vsel %vm3080, %v4285, %v4284
        %v4287 = vrot.slane %v3014, 6
        %v4288 = vrot.slane %v3017, 5
        %v4289 = vsel %vm3062, %v4288, %v4287
        %v4290 = vrot.slane %v3020, 4
        %v4291 = vsel %vm3065, %v4290, %v4289
        %v4292 = vrot.slane %v3023, 3
        %v4293 = vsel %vm3068, %v4292, %v4291
        %v4294 = vrot.slane %v3026, 2
        %v4295 = vsel %vm3071, %v4294, %v4293
        %v4296 = vrot.slane %v3029, 1
        %v4297 = vsel %vm3074, %v4296, %v4295
        %v4298 = vsel %vm3077, %v3032, %v4297
        %v4299 = vrot.slane %v3035, 7
        %v4300 = vsel %vm3080, %v4299, %v4298
        %v4301 = vrot.slane %v3015, 6
        %v4302 = vrot.slane %v3018, 5
        %v4303 = vsel %vm3062, %v4302, %v4301
        %v4304 = vrot.slane %v3021, 4
        %v4305 = vsel %vm3065, %v4304, %v4303
        %v4306 = vrot.slane %v3024, 3
        %v4307 = vsel %vm3068, %v4306, %v4305
        %v4308 = vrot.slane %v3027, 2
        %v4309 = vsel %vm3071, %v4308, %v4307
        %v4310 = vrot.slane %v3030, 1
        %v4311 = vsel %vm3074, %v4310, %v4309
        %v4312 = vsel %vm3077, %v3033, %v4311
        %v4313 = vrot.slane %v3036, 7
        %v4314 = vsel %vm3080, %v4313, %v4312
        %v4315 = vrot.slane %v3037, 6
        %v4316 = vrot.slane %v3040, 5
        %v4317 = vsel %vm3062, %v4316, %v4315
        %v4318 = vrot.slane %v3043, 4
        %v4319 = vsel %vm3065, %v4318, %v4317
        %v4320 = vrot.slane %v3046, 3
        %v4321 = vsel %vm3068, %v4320, %v4319
        %v4322 = vrot.slane %v3049, 2
        %v4323 = vsel %vm3071, %v4322, %v4321
        %v4324 = vrot.slane %v3052, 1
        %v4325 = vsel %vm3074, %v4324, %v4323
        %v4326 = vsel %vm3077, %v3055, %v4325
        %v4327 = vrot.slane %v3058, 7
        %v4328 = vsel %vm3080, %v4327, %v4326
        %v4329 = vrot.slane %v3038, 6
        %v4330 = vrot.slane %v3041, 5
        %v4331 = vsel %vm3062, %v4330, %v4329
        %v4332 = vrot.slane %v3044, 4
        %v4333 = vsel %vm3065, %v4332, %v4331
        %v4334 = vrot.slane %v3047, 3
        %v4335 = vsel %vm3068, %v4334, %v4333
        %v4336 = vrot.slane %v3050, 2
        %v4337 = vsel %vm3071, %v4336, %v4335
        %v4338 = vrot.slane %v3053, 1
        %v4339 = vsel %vm3074, %v4338, %v4337
        %v4340 = vsel %vm3077, %v3056, %v4339
        %v4341 = vrot.slane %v3059, 7
        %v4342 = vsel %vm3080, %v4341, %v4340
        %v4343 = vrot.slane %v3039, 6
        %v4344 = vrot.slane %v3042, 5
        %v4345 = vsel %vm3062, %v4344, %v4343
        %v4346 = vrot.slane %v3045, 4
        %v4347 = vsel %vm3065, %v4346, %v4345
        %v4348 = vrot.slane %v3048, 3
        %v4349 = vsel %vm3068, %v4348, %v4347
        %v4350 = vrot.slane %v3051, 2
        %v4351 = vsel %vm3071, %v4350, %v4349
        %v4352 = vrot.slane %v3054, 1
        %v4353 = vsel %vm3074, %v4352, %v4351
        %v4354 = vsel %vm3077, %v3057, %v4353
        %v4355 = vrot.slane %v3060, 7
        %v4356 = vsel %vm3080, %v4355, %v4354
        %v4357 = vpack.c.b16 %v4244, %v4202
        %v4358 = vpack.c.b16 %v4258, %v4216
        %v4359 = vpack.c.b16 %v4272, %v4230
        %v4360 = vpack.c.b16 %v4328, %v4286
        %v4361 = vpack.c.b16 %v4342, %v4300
        %v4362 = vpack.c.b16 %v4356, %v4314
        %s4369 = scalar_lea.vmem [#allocation2], 288
        %4370 = vst [vmem:[%s4369] sm:$0xff] %v4357
        %4371 = vst [vmem:[%s4369 + $0x8] sm:$0xff] %v4358
        %4372 = vst [vmem:[%s4369 + $0x10] sm:$0xff] %v4359
        %4373 = vst [vmem:[%s4369 + $0x18] sm:$0xff] %v4360
        %4374 = vst [vmem:[%s4369 + $0x20] sm:$0xff] %v4361
        %4375 = vst [vmem:[%s4369 + $0x28] sm:$0xff] %v4362
        %v4376 = vrot.slane %v2965, 7
        %v4377 = vrot.slane %v2968, 6
        %v4378 = vsel %vm3062, %v4377, %v4376
        %v4379 = vrot.slane %v2971, 5
        %v4380 = vsel %vm3065, %v4379, %v4378
        %v4381 = vrot.slane %v2974, 4
        %v4382 = vsel %vm3068, %v4381, %v4380
        %v4383 = vrot.slane %v2977, 3
        %v4384 = vsel %vm3071, %v4383, %v4382
        %v4385 = vrot.slane %v2980, 2
        %v4386 = vsel %vm3074, %v4385, %v4384
        %v4387 = vrot.slane %v2983, 1
        %v4388 = vsel %vm3077, %v4387, %v4386
        %v4389 = vsel %vm3080, %v2986, %v4388
        %v4390 = vrot.slane %v2966, 7
        %v4391 = vrot.slane %v2969, 6
        %v4392 = vsel %vm3062, %v4391, %v4390
        %v4393 = vrot.slane %v2972, 5
        %v4394 = vsel %vm3065, %v4393, %v4392
        %v4395 = vrot.slane %v2975, 4
        %v4396 = vsel %vm3068, %v4395, %v4394
        %v4397 = vrot.slane %v2978, 3
        %v4398 = vsel %vm3071, %v4397, %v4396
        %v4399 = vrot.slane %v2981, 2
        %v4400 = vsel %vm3074, %v4399, %v4398
        %v4401 = vrot.slane %v2984, 1
        %v4402 = vsel %vm3077, %v4401, %v4400
        %v4403 = vsel %vm3080, %v2987, %v4402
        %v4404 = vrot.slane %v2967, 7
        %v4405 = vrot.slane %v2970, 6
        %v4406 = vsel %vm3062, %v4405, %v4404
        %v4407 = vrot.slane %v2973, 5
        %v4408 = vsel %vm3065, %v4407, %v4406
        %v4409 = vrot.slane %v2976, 4
        %v4410 = vsel %vm3068, %v4409, %v4408
        %v4411 = vrot.slane %v2979, 3
        %v4412 = vsel %vm3071, %v4411, %v4410
        %v4413 = vrot.slane %v2982, 2
        %v4414 = vsel %vm3074, %v4413, %v4412
        %v4415 = vrot.slane %v2985, 1
        %v4416 = vsel %vm3077, %v4415, %v4414
        %v4417 = vsel %vm3080, %v2988, %v4416
        %v4418 = vrot.slane %v2989, 7
        %v4419 = vrot.slane %v2992, 6
        %v4420 = vsel %vm3062, %v4419, %v4418
        %v4421 = vrot.slane %v2995, 5
        %v4422 = vsel %vm3065, %v4421, %v4420
        %v4423 = vrot.slane %v2998, 4
        %v4424 = vsel %vm3068, %v4423, %v4422
        %v4425 = vrot.slane %v3001, 3
        %v4426 = vsel %vm3071, %v4425, %v4424
        %v4427 = vrot.slane %v3004, 2
        %v4428 = vsel %vm3074, %v4427, %v4426
        %v4429 = vrot.slane %v3007, 1
        %v4430 = vsel %vm3077, %v4429, %v4428
        %v4431 = vsel %vm3080, %v3010, %v4430
        %v4432 = vrot.slane %v2990, 7
        %v4433 = vrot.slane %v2993, 6
        %v4434 = vsel %vm3062, %v4433, %v4432
        %v4435 = vrot.slane %v2996, 5
        %v4436 = vsel %vm3065, %v4435, %v4434
        %v4437 = vrot.slane %v2999, 4
        %v4438 = vsel %vm3068, %v4437, %v4436
        %v4439 = vrot.slane %v3002, 3
        %v4440 = vsel %vm3071, %v4439, %v4438
        %v4441 = vrot.slane %v3005, 2
        %v4442 = vsel %vm3074, %v4441, %v4440
        %v4443 = vrot.slane %v3008, 1
        %v4444 = vsel %vm3077, %v4443, %v4442
        %v4445 = vsel %vm3080, %v3011, %v4444
        %v4446 = vrot.slane %v2991, 7
        %v4447 = vrot.slane %v2994, 6
        %v4448 = vsel %vm3062, %v4447, %v4446
        %v4449 = vrot.slane %v2997, 5
        %v4450 = vsel %vm3065, %v4449, %v4448
        %v4451 = vrot.slane %v3000, 4
        %v4452 = vsel %vm3068, %v4451, %v4450
        %v4453 = vrot.slane %v3003, 3
        %v4454 = vsel %vm3071, %v4453, %v4452
        %v4455 = vrot.slane %v3006, 2
        %v4456 = vsel %vm3074, %v4455, %v4454
        %v4457 = vrot.slane %v3009, 1
        %v4458 = vsel %vm3077, %v4457, %v4456
        %v4459 = vsel %vm3080, %v3012, %v4458
        %v4460 = vrot.slane %v3013, 7
        %v4461 = vrot.slane %v3016, 6
        %v4462 = vsel %vm3062, %v4461, %v4460
        %v4463 = vrot.slane %v3019, 5
        %v4464 = vsel %vm3065, %v4463, %v4462
        %v4465 = vrot.slane %v3022, 4
        %v4466 = vsel %vm3068, %v4465, %v4464
        %v4467 = vrot.slane %v3025, 3
        %v4468 = vsel %vm3071, %v4467, %v4466
        %v4469 = vrot.slane %v3028, 2
        %v4470 = vsel %vm3074, %v4469, %v4468
        %v4471 = vrot.slane %v3031, 1
        %v4472 = vsel %vm3077, %v4471, %v4470
        %v4473 = vsel %vm3080, %v3034, %v4472
        %v4474 = vrot.slane %v3014, 7
        %v4475 = vrot.slane %v3017, 6
        %v4476 = vsel %vm3062, %v4475, %v4474
        %v4477 = vrot.slane %v3020, 5
        %v4478 = vsel %vm3065, %v4477, %v4476
        %v4479 = vrot.slane %v3023, 4
        %v4480 = vsel %vm3068, %v4479, %v4478
        %v4481 = vrot.slane %v3026, 3
        %v4482 = vsel %vm3071, %v4481, %v4480
        %v4483 = vrot.slane %v3029, 2
        %v4484 = vsel %vm3074, %v4483, %v4482
        %v4485 = vrot.slane %v3032, 1
        %v4486 = vsel %vm3077, %v4485, %v4484
        %v4487 = vsel %vm3080, %v3035, %v4486
        %v4488 = vrot.slane %v3015, 7
        %v4489 = vrot.slane %v3018, 6
        %v4490 = vsel %vm3062, %v4489, %v4488
        %v4491 = vrot.slane %v3021, 5
        %v4492 = vsel %vm3065, %v4491, %v4490
        %v4493 = vrot.slane %v3024, 4
        %v4494 = vsel %vm3068, %v4493, %v4492
        %v4495 = vrot.slane %v3027, 3
        %v4496 = vsel %vm3071, %v4495, %v4494
        %v4497 = vrot.slane %v3030, 2
        %v4498 = vsel %vm3074, %v4497, %v4496
        %v4499 = vrot.slane %v3033, 1
        %v4500 = vsel %vm3077, %v4499, %v4498
        %v4501 = vsel %vm3080, %v3036, %v4500
        %v4502 = vrot.slane %v3037, 7
        %v4503 = vrot.slane %v3040, 6
        %v4504 = vsel %vm3062, %v4503, %v4502
        %v4505 = vrot.slane %v3043, 5
        %v4506 = vsel %vm3065, %v4505, %v4504
        %v4507 = vrot.slane %v3046, 4
        %v4508 = vsel %vm3068, %v4507, %v4506
        %v4509 = vrot.slane %v3049, 3
        %v4510 = vsel %vm3071, %v4509, %v4508
        %v4511 = vrot.slane %v3052, 2
        %v4512 = vsel %vm3074, %v4511, %v4510
        %v4513 = vrot.slane %v3055, 1
        %v4514 = vsel %vm3077, %v4513, %v4512
        %v4515 = vsel %vm3080, %v3058, %v4514
        %v4516 = vrot.slane %v3038, 7
        %v4517 = vrot.slane %v3041, 6
        %v4518 = vsel %vm3062, %v4517, %v4516
        %v4519 = vrot.slane %v3044, 5
        %v4520 = vsel %vm3065, %v4519, %v4518
        %v4521 = vrot.slane %v3047, 4
        %v4522 = vsel %vm3068, %v4521, %v4520
        %v4523 = vrot.slane %v3050, 3
        %v4524 = vsel %vm3071, %v4523, %v4522
        %v4525 = vrot.slane %v3053, 2
        %v4526 = vsel %vm3074, %v4525, %v4524
        %v4527 = vrot.slane %v3056, 1
        %v4528 = vsel %vm3077, %v4527, %v4526
        %v4529 = vsel %vm3080, %v3059, %v4528
        %v4530 = vrot.slane %v3039, 7
        %v4531 = vrot.slane %v3042, 6
        %v4532 = vsel %vm3062, %v4531, %v4530
        %v4533 = vrot.slane %v3045, 5
        %v4534 = vsel %vm3065, %v4533, %v4532
        %v4535 = vrot.slane %v3048, 4
        %v4536 = vsel %vm3068, %v4535, %v4534
        %v4537 = vrot.slane %v3051, 3
        %v4538 = vsel %vm3071, %v4537, %v4536
        %v4539 = vrot.slane %v3054, 2
        %v4540 = vsel %vm3074, %v4539, %v4538
        %v4541 = vrot.slane %v3057, 1
        %v4542 = vsel %vm3077, %v4541, %v4540
        %v4543 = vsel %vm3080, %v3060, %v4542
        %v4544 = vpack.c.b16 %v4431, %v4389
        %v4545 = vpack.c.b16 %v4445, %v4403
        %v4546 = vpack.c.b16 %v4459, %v4417
        %v4547 = vpack.c.b16 %v4515, %v4473
        %v4548 = vpack.c.b16 %v4529, %v4487
        %v4549 = vpack.c.b16 %v4543, %v4501
        %s4556 = scalar_lea.vmem [#allocation2], 336
        %4557 = vst [vmem:[%s4556] sm:$0xff] %v4544
        %4558 = vst [vmem:[%s4556 + $0x8] sm:$0xff] %v4545
        %4559 = vst [vmem:[%s4556 + $0x10] sm:$0xff] %v4546
        %4560 = vst [vmem:[%s4556 + $0x18] sm:$0xff] %v4547
        %4561 = vst [vmem:[%s4556 + $0x20] sm:$0xff] %v4548
        %4562 = vst [vmem:[%s4556 + $0x28] sm:$0xff] %v4549
        %v4563 = vld [vmem:[#allocation2] sm:$0xff]
        %v4564 = vld [vmem:[#allocation2 + $0x8] sm:$0xff]
        %v4565 = vld [vmem:[#allocation2 + $0x10] sm:$0xff]
        %v4566 = vld [vmem:[#allocation2 + $0x18] sm:$0xff]
        %v4567 = vld [vmem:[#allocation2 + $0x20] sm:$0xff]
        %v4568 = vld [vmem:[#allocation2 + $0x28] sm:$0xff]
        %v4569 = vld [vmem:[%s11] sm:$0xff]
        %v4570 = vld [vmem:[%s11 + $0x8] sm:$0xf]
        %v4571 = vld [vmem:[%s11 + $0xc] sm:$0xff]
        %v4572 = vld [vmem:[%s11 + $0x14] sm:$0xf]
        %v4573 = vld [vmem:[%s11 + $0x18] sm:$0xff]
        %v4574 = vld [vmem:[%s11 + $0x20] sm:$0xf]
        %v4575 = vld [vmem:[%s11 + $0x24] sm:$0xff]
        %v4576 = vld [vmem:[%s11 + $0x2c] sm:$0xf]
        %v4577 = vld [vmem:[%s11 + $0x30] sm:$0xff]
        %v4578 = vld [vmem:[%s11 + $0x38] sm:$0xf]
        %v4579 = vld [vmem:[%s11 + $0x3c] sm:$0xff]
        %v4580 = vld [vmem:[%s11 + $0x44] sm:$0xf]
        %v4581 = vld [vmem:[%s11 + $0x48] sm:$0xff]
        %v4582 = vld [vmem:[%s11 + $0x50] sm:$0xf]
        %v4583 = vld [vmem:[%s11 + $0x54] sm:$0xff]
        %v4584 = vld [vmem:[%s11 + $0x5c] sm:$0xf]
        %v4585 = vld [vmem:[%s11 + $0x60] sm:$0xff]
        %v4586 = vld [vmem:[%s11 + $0x68] sm:$0xf]
        %v4587 = vld [vmem:[%s11 + $0x6c] sm:$0xff]
        %v4588 = vld [vmem:[%s11 + $0x74] sm:$0xf]
        %v4589 = vld [vmem:[%s11 + $0x78] sm:$0xff]
        %v4590 = vld [vmem:[%s11 + $0x80] sm:$0xf]
        %v4591 = vld [vmem:[%s11 + $0x84] sm:$0xff]
        %v4592 = vld [vmem:[%s11 + $0x8c] sm:$0xf]
        %v4593 = vld [vmem:[%s11 + $0x90] sm:$0xff]
        %v4594 = vld [vmem:[%s11 + $0x98] sm:$0xf]
        %v4595 = vld [vmem:[%s11 + $0x9c] sm:$0xff]
        %v4596 = vld [vmem:[%s11 + $0xa4] sm:$0xf]
        %v4597 = vld [vmem:[%s11 + $0xa8] sm:$0xff]
        %v4598 = vld [vmem:[%s11 + $0xb0] sm:$0xf]
        %v4599 = vld [vmem:[%s11 + $0xb4] sm:$0xff]
        %v4600 = vld [vmem:[%s11 + $0xbc] sm:$0xf]
        %v4601 = vld [vmem:[%s12] sm:$0x7]
        %v4603 = vlaneseq
        %v4604 = vshrl.u32 %v4603, 7
        %v4605 = vsub.s32 0, %v4604
        %v4606 = vrot.slane %v4601, %v4605
        %v4607 = vlaneseq
        %v4608 = vshrl.u32 %v4607, 7
        %v4609 = vsub.s32 1, %v4608
        %v4610 = vrot.slane %v4601, %v4609
        %v4611 = vlaneseq
        %v4612 = vshrl.u32 %v4611, 7
        %v4613 = vsub.s32 2, %v4612
        %v4614 = vrot.slane %v4601, %v4613
        %v4650 = vunpack.c.l.b16 %v4569
        %v4651 = vunpack.c.h.b16 %v4569
        %v4652 = vunpack.c.l.b16 %v4570
        %v4653 = vunpack.c.l.b16 %v4571
        %v4654 = vunpack.c.h.b16 %v4571
        %v4655 = vunpack.c.l.b16 %v4572
        %v4656 = vunpack.c.l.b16 %v4573
        %v4657 = vunpack.c.h.b16 %v4573
        %v4658 = vunpack.c.l.b16 %v4574
        %v4659 = vunpack.c.l.b16 %v4575
        %v4660 = vunpack.c.h.b16 %v4575
        %v4661 = vunpack.c.l.b16 %v4576
        %v4662 = vunpack.c.l.b16 %v4577
        %v4663 = vunpack.c.h.b16 %v4577
        %v4664 = vunpack.c.l.b16 %v4578
        %v4665 = vunpack.c.l.b16 %v4579
        %v4666 = vunpack.c.h.b16 %v4579
        %v4667 = vunpack.c.l.b16 %v4580
        %v4668 = vunpack.c.l.b16 %v4581
        %v4669 = vunpack.c.h.b16 %v4581
        %v4670 = vunpack.c.l.b16 %v4582
        %v4671 = vunpack.c.l.b16 %v4583
        %v4672 = vunpack.c.h.b16 %v4583
        %v4673 = vunpack.c.l.b16 %v4584
        %v4674 = vunpack.c.l.b16 %v4585
        %v4675 = vunpack.c.h.b16 %v4585
        %v4676 = vunpack.c.l.b16 %v4586
        %v4677 = vunpack.c.l.b16 %v4587
        %v4678 = vunpack.c.h.b16 %v4587
        %v4679 = vunpack.c.l.b16 %v4588
        %v4680 = vunpack.c.l.b16 %v4589
        %v4681 = vunpack.c.h.b16 %v4589
        %v4682 = vunpack.c.l.b16 %v4590
        %v4683 = vunpack.c.l.b16 %v4591
        %v4684 = vunpack.c.h.b16 %v4591
        %v4685 = vunpack.c.l.b16 %v4592
        %v4686 = vunpack.c.l.b16 %v4593
        %v4687 = vunpack.c.h.b16 %v4593
        %v4688 = vunpack.c.l.b16 %v4594
        %v4689 = vunpack.c.l.b16 %v4595
        %v4690 = vunpack.c.h.b16 %v4595
        %v4691 = vunpack.c.l.b16 %v4596
        %v4692 = vunpack.c.l.b16 %v4597
        %v4693 = vunpack.c.h.b16 %v4597
        %v4694 = vunpack.c.l.b16 %v4598
        %v4695 = vunpack.c.l.b16 %v4599
        %v4696 = vunpack.c.h.b16 %v4599
        %v4697 = vunpack.c.l.b16 %v4600
        %v4698 = vpack.c.b16 %v4653, %v4650
        %v4699 = vpack.c.b16 %v4654, %v4651
        %v4700 = vpack.c.b16 %v4655, %v4652
        %v4701 = vpack.c.b16 %v4659, %v4656
        %v4702 = vpack.c.b16 %v4660, %v4657
        %v4703 = vpack.c.b16 %v4661, %v4658
        %v4704 = vpack.c.b16 %v4665, %v4662
        %v4705 = vpack.c.b16 %v4666, %v4663
        %v4706 = vpack.c.b16 %v4667, %v4664
        %v4707 = vpack.c.b16 %v4671, %v4668
        %v4708 = vpack.c.b16 %v4672, %v4669
        %v4709 = vpack.c.b16 %v4673, %v4670
        %v4710 = vpack.c.b16 %v4677, %v4674
        %v4711 = vpack.c.b16 %v4678, %v4675
        %v4712 = vpack.c.b16 %v4679, %v4676
        %v4713 = vpack.c.b16 %v4683, %v4680
        %v4714 = vpack.c.b16 %v4684, %v4681
        %v4715 = vpack.c.b16 %v4685, %v4682
        %v4716 = vpack.c.b16 %v4689, %v4686
        %v4717 = vpack.c.b16 %v4690, %v4687
        %v4718 = vpack.c.b16 %v4691, %v4688
        %v4719 = vpack.c.b16 %v4695, %v4692
        %v4720 = vpack.c.b16 %v4696, %v4693
        %v4721 = vpack.c.b16 %v4697, %v4694
        %4746 = vmatprep.subr.bf16.mxu0 %v4699
        %4747 = vmatpush1.bf16.msra.mxu0 %v4698
        %4748 = vmatprep.subr.bf16.mxu0 %v4702
        %4749 = vmatpush1.bf16.msra.mxu0 %v4701
        %4750 = vmatprep.subr.bf16.mxu0 %v4705
        %4751 = vmatpush1.bf16.msra.mxu0 %v4704
        %4752 = vmatprep.subr.bf16.mxu0 %v4708
        %4753 = vmatpush1.bf16.msra.mxu0 %v4707
        %4754 = vmatprep.subr.bf16.mxu0 %v4711
        %4755 = vmatpush1.bf16.msra.mxu0 %v4710
        %4756 = vmatprep.subr.bf16.mxu0 %v4714
        %4757 = vmatpush1.bf16.msra.mxu0 %v4713
        %4758 = vmatprep.subr.bf16.mxu0 %v4717
        %4759 = vmatpush1.bf16.msra.mxu0 %v4716
        %4760 = vmatprep.subr.bf16.mxu0 %v4720
        %4761 = vmatpush1.bf16.msra.mxu0 %v4719
        %4762 = vmatprep.subr.bf16.mxu0 0
        %4763 = vmatpush1.bf16.msra.mxu0 0
        %4764 = vmatprep.subr.bf16.mxu0 0
        %4765 = vmatpush1.bf16.msra.mxu0 0
        %4766 = vmatprep.subr.bf16.mxu0 0
        %4767 = vmatpush1.bf16.msra.mxu0 0
        %4768 = vmatprep.subr.bf16.mxu0 0
        %4769 = vmatpush1.bf16.msra.mxu0 0
        %4770 = vmatprep.subr.bf16.mxu0 0
        %4771 = vmatpush1.bf16.msra.mxu0 0
        %4772 = vmatprep.subr.bf16.mxu0 0
        %4773 = vmatpush1.bf16.msra.mxu0 0
        %4774 = vmatprep.subr.bf16.mxu0 0
        %4775 = vmatpush1.bf16.msra.mxu0 0
        %4776 = vmatprep.subr.bf16.mxu0 0
        %4777 = vmatpush1.bf16.msra.mxu0 0
        %4778 = vmatprep.mubr.bf16.mxu0 0
        %4779 = vmatmul.mubr.bf16.gmra.mrb[0].mxu0 0
        %v4780 = vpop.f32.mrb[0].mxu0
        %v4781 = vadd.f32 %v4606, %v4780
        %v4782 = vpop.f32.mrb[0].mxu0
        %v4783 = vadd.f32 %v4610, %v4782
        %v4784 = vpop.f32.mrb[0].mxu0
        %v4785 = vadd.f32 %v4606, %v4784
        %v4786 = vpop.f32.mrb[0].mxu0
        %v4787 = vadd.f32 %v4610, %v4786
        %4788 = vmatprep.mubr.bf16.mxu0 0
        %4789 = vmatmul.mubr.bf16.gmra.mrb[0].mxu0 0
        %v4790 = vpop.f32.mrb[0].mxu0
        %v4791 = vadd.f32 %v4606, %v4790
        %v4792 = vpop.f32.mrb[0].mxu0
        %v4793 = vadd.f32 %v4610, %v4792
        %v4794 = vpop.f32.mrb[0].mxu0
        %v4795 = vadd.f32 %v4606, %v4794
        %v4796 = vpop.f32.mrb[0].mxu0
        %v4797 = vadd.f32 %v4610, %v4796
        %4798 = vdwg.mxu0
        %4799 = vmatprep.subr.bf16.mxu0 0
        %4800 = vmatpush1.bf16.msra.mxu0 %v4700
        %4801 = vmatprep.subr.bf16.mxu0 0
        %4802 = vmatpush1.bf16.msra.mxu0 %v4703
        %4803 = vmatprep.subr.bf16.mxu0 0
        %4804 = vmatpush1.bf16.msra.mxu0 %v4706
        %4805 = vmatprep.subr.bf16.mxu0 0
        %4806 = vmatpush1.bf16.msra.mxu0 %v4709
        %4807 = vmatprep.subr.bf16.mxu0 0
        %4808 = vmatpush1.bf16.msra.mxu0 %v4712
        %4809 = vmatprep.subr.bf16.mxu0 0
        %4810 = vmatpush1.bf16.msra.mxu0 %v4715
        %4811 = vmatprep.subr.bf16.mxu0 0
        %4812 = vmatpush1.bf16.msra.mxu0 %v4718
        %4813 = vmatprep.subr.bf16.mxu0 0
        %4814 = vmatpush1.bf16.msra.mxu0 %v4721
        %4815 = vmatprep.subr.bf16.mxu0 0
        %4816 = vmatpush1.bf16.msra.mxu0 0
        %4817 = vmatprep.subr.bf16.mxu0 0
        %4818 = vmatpush1.bf16.msra.mxu0 0
        %4819 = vmatprep.subr.bf16.mxu0 0
        %4820 = vmatpush1.bf16.msra.mxu0 0
        %4821 = vmatprep.subr.bf16.mxu0 0
        %4822 = vmatpush1.bf16.msra.mxu0 0
        %4823 = vmatprep.subr.bf16.mxu0 0
        %4824 = vmatpush1.bf16.msra.mxu0 0
        %4825 = vmatprep.subr.bf16.mxu0 0
        %4826 = vmatpush1.bf16.msra.mxu0 0
        %4827 = vmatprep.subr.bf16.mxu0 0
        %4828 = vmatpush1.bf16.msra.mxu0 0
        %4829 = vmatprep.subr.bf16.mxu0 0
        %4830 = vmatpush1.bf16.msra.mxu0 0
        %4831 = vmatprep.mubr.bf16.mxu0 0
        %4832 = vmatmul.mubr.bf16.gmra.mrb[0].mxu0 0
        %v4833 = vpop.f32.mrb[0].mxu0
        %v4834 = vadd.f32 %v4614, %v4833
        %v4835 = vpop.f32.mrb[0].mxu0
        %v4836 = vpop.f32.mrb[0].mxu0
        %v4837 = vadd.f32 %v4614, %v4836
        %v4838 = vpop.f32.mrb[0].mxu0
        %4839 = vmatprep.mubr.bf16.mxu0 0
        %4840 = vmatmul.mubr.bf16.gmra.mrb[0].mxu0 0
        %v4841 = vpop.f32.mrb[0].mxu0
        %v4842 = vadd.f32 %v4614, %v4841
        %v4843 = vpop.f32.mrb[0].mxu0
        %v4844 = vpop.f32.mrb[0].mxu0
        %v4845 = vadd.f32 %v4614, %v4844
        %v4846 = vpop.f32.mrb[0].mxu0
        %4847 = vdwg.mxu0
        %v4848 = vunpack.c.l.bf16 %v4563
        %v4849 = vunpack.c.h.bf16 %v4563
        %v4850 = vunpack.c.l.bf16 %v4566
        %v4851 = vunpack.c.h.bf16 %v4566
        %v4852 = vadd.f32 %v4848, %v4781
        %v4853 = vadd.f32 %v4849, %v4785
        %v4854 = vadd.f32 %v4850, %v4791
        %v4855 = vadd.f32 %v4851, %v4795
        %v4856 = vmul.f32 %v4852, 0.5
        %v4857 = vmul.f32 %v4853, 0.5
        %v4858 = vmul.f32 %v4854, 0.5
        %v4859 = vmul.f32 %v4855, 0.5
        %v4860 = vtanh.pop %v4856
        %v4861 = vtanh.pop %v4857
        %v4862 = vtanh.pop %v4858
        %v4863 = vtanh.pop %v4859
        %v4864 = vadd.f32 %v4860, 1.0
        %v4865 = vadd.f32 %v4861, 1.0
        %v4866 = vadd.f32 %v4862, 1.0
        %v4867 = vadd.f32 %v4863, 1.0
        %v4868 = vmul.f32 %v4864, 0.5
        %v4869 = vmul.f32 %v4865, 0.5
        %v4870 = vmul.f32 %v4866, 0.5
        %v4871 = vmul.f32 %v4867, 0.5
        %v4872 = vunpack.c.l.bf16 %v4564
        %v4873 = vunpack.c.h.bf16 %v4564
        %v4874 = vunpack.c.l.bf16 %v4567
        %v4875 = vunpack.c.h.bf16 %v4567
        %v4876 = vadd.f32 %v4872, %v4783
        %v4877 = vadd.f32 %v4873, %v4787
        %v4878 = vadd.f32 %v4874, %v4793
        %v4879 = vadd.f32 %v4875, %v4797
        %v4880 = vmul.f32 %v4876, 0.5
        %v4881 = vmul.f32 %v4877, 0.5
        %v4882 = vmul.f32 %v4878, 0.5
        %v4883 = vmul.f32 %v4879, 0.5
        %v4884 = vtanh.pop %v4880
        %v4885 = vtanh.pop %v4881
        %v4886 = vtanh.pop %v4882
        %v4887 = vtanh.pop %v4883
        %v4888 = vadd.f32 %v4884, 1.0
        %v4889 = vadd.f32 %v4885, 1.0
        %v4890 = vadd.f32 %v4886, 1.0
        %v4891 = vadd.f32 %v4887, 1.0
        %v4892 = vmul.f32 %v4888, 0.5
        %v4893 = vmul.f32 %v4889, 0.5
        %v4894 = vmul.f32 %v4890, 0.5
        %v4895 = vmul.f32 %v4891, 0.5
        %v4896 = vmul.f32 %v4868, %v4834
        %v4897 = vmul.f32 %v4869, %v4837
        %v4898 = vmul.f32 %v4870, %v4842
        %v4899 = vmul.f32 %v4871, %v4845
        %v4900 = vunpack.c.l.bf16 %v4565
        %v4901 = vunpack.c.h.bf16 %v4565
        %v4902 = vunpack.c.l.bf16 %v4568
        %v4903 = vunpack.c.h.bf16 %v4568
        %v4904 = vadd.f32 %v4900, %v4896
        %v4905 = vadd.f32 %v4901, %v4897
        %v4906 = vadd.f32 %v4902, %v4898
        %v4907 = vadd.f32 %v4903, %v4899
        %v4908 = vtanh.pop %v4904
        %v4909 = vtanh.pop %v4905
        %v4910 = vtanh.pop %v4906
        %v4911 = vtanh.pop %v4907
        %v4912 = vsub.f32 1.0, %v4892
        %v4913 = vsub.f32 1.0, %v4893
        %v4914 = vsub.f32 1.0, %v4894
        %v4915 = vsub.f32 1.0, %v4895
        %v4916 = vmul.f32 %v4912, %v4908
        %v4917 = vmul.f32 %v4913, %v4909
        %v4918 = vmul.f32 %v4914, %v4910
        %v4919 = vmul.f32 %v4915, %v4911
        %v4920 = vmul.f32 %v4892, 0.0
        %v4921 = vmul.f32 %v4893, 0.0
        %v4922 = vmul.f32 %v4894, 0.0
        %v4923 = vmul.f32 %v4895, 0.0
        %v4924 = vadd.f32 %v4916, %v4920
        %v4925 = vadd.f32 %v4917, %v4921
        %v4926 = vadd.f32 %v4918, %v4922
        %v4927 = vadd.f32 %v4919, %v4923
        %v4928 = vpack.c.bf16 %v4925, %v4924
        %v4929 = vpack.c.bf16 0.0, 0.0
        %v4930 = vpack.c.bf16 %v4927, %v4926
        %v4931 = vld [vmem:[%s13] sm:$0xff]
        %v4932 = vld [vmem:[%s13 + $0x8] sm:$0xff]
        %v4933 = vld [vmem:[%s13 + $0x10] sm:$0xff]
        %v4934 = vld [vmem:[%s13 + $0x18] sm:$0xff]
        %v4935 = vld [vmem:[%s13 + $0x20] sm:$0xff]
        %v4936 = vld [vmem:[%s13 + $0x28] sm:$0xff]
        %v4937 = vld [vmem:[%s13 + $0x30] sm:$0xff]
        %v4938 = vld [vmem:[%s13 + $0x38] sm:$0xff]
        %v4939 = vld [vmem:[%s13 + $0x40] sm:$0xff]
        %v4940 = vld [vmem:[%s13 + $0x48] sm:$0xff]
        %v4941 = vld [vmem:[%s13 + $0x50] sm:$0xff]
        %v4942 = vld [vmem:[%s13 + $0x58] sm:$0xff]
        %v4943 = vld [vmem:[%s13 + $0x60] sm:$0xff]
        %v4944 = vld [vmem:[%s13 + $0x68] sm:$0xff]
        %v4945 = vld [vmem:[%s13 + $0x70] sm:$0xff]
        %v4946 = vld [vmem:[%s13 + $0x78] sm:$0xff]
        %v4947 = vld [vmem:[%s13 + $0x80] sm:$0xff]
        %v4948 = vld [vmem:[%s13 + $0x88] sm:$0xff]
        %v4949 = vld [vmem:[%s13 + $0x90] sm:$0xff]
        %v4950 = vld [vmem:[%s13 + $0x98] sm:$0xff]
        %v4951 = vld [vmem:[%s13 + $0xa0] sm:$0xff]
        %v4952 = vld [vmem:[%s13 + $0xa8] sm:$0xff]
        %v4953 = vld [vmem:[%s13 + $0xb0] sm:$0xff]
        %v4954 = vld [vmem:[%s13 + $0xb8] sm:$0xff]
        %v4955 = vld [vmem:[%s13 + $0xc0] sm:$0xff]
        %v4956 = vld [vmem:[%s13 + $0xc8] sm:$0xff]
        %v4957 = vld [vmem:[%s13 + $0xd0] sm:$0xff]
        %v4958 = vld [vmem:[%s13 + $0xd8] sm:$0xff]
        %v4959 = vld [vmem:[%s13 + $0xe0] sm:$0xff]
        %v4960 = vld [vmem:[%s13 + $0xe8] sm:$0xff]
        %v4961 = vld [vmem:[%s13 + $0xf0] sm:$0xff]
        %v4962 = vld [vmem:[%s13 + $0xf8] sm:$0xff]
        %v4963 = vld [vmem:[%s14] sm:$0x3]
        %v4965 = vlaneseq
        %v4966 = vshrl.u32 %v4965, 7
        %v4967 = vsub.s32 0, %v4966
        %v4968 = vrot.slane %v4963, %v4967
        %v4969 = vlaneseq
        %v4970 = vshrl.u32 %v4969, 7
        %v4971 = vsub.s32 1, %v4970
        %v4972 = vrot.slane %v4963, %v4971
        %v5007 = vunpack.c.l.b16 %v4931
        %v5008 = vunpack.c.h.b16 %v4931
        %v5009 = vunpack.c.l.b16 %v4932
        %v5010 = vunpack.c.h.b16 %v4932
        %v5011 = vunpack.c.l.b16 %v4933
        %v5012 = vunpack.c.h.b16 %v4933
        %v5013 = vunpack.c.l.b16 %v4934
        %v5014 = vunpack.c.h.b16 %v4934
        %v5015 = vunpack.c.l.b16 %v4935
        %v5016 = vunpack.c.h.b16 %v4935
        %v5017 = vunpack.c.l.b16 %v4936
        %v5018 = vunpack.c.h.b16 %v4936
        %v5019 = vunpack.c.l.b16 %v4937
        %v5020 = vunpack.c.h.b16 %v4937
        %v5021 = vunpack.c.l.b16 %v4938
        %v5022 = vunpack.c.h.b16 %v4938
        %v5023 = vunpack.c.l.b16 %v4939
        %v5024 = vunpack.c.h.b16 %v4939
        %v5025 = vunpack.c.l.b16 %v4940
        %v5026 = vunpack.c.h.b16 %v4940
        %v5027 = vunpack.c.l.b16 %v4941
        %v5028 = vunpack.c.h.b16 %v4941
        %v5029 = vunpack.c.l.b16 %v4942
        %v5030 = vunpack.c.h.b16 %v4942
        %v5031 = vunpack.c.l.b16 %v4943
        %v5032 = vunpack.c.h.b16 %v4943
        %v5033 = vunpack.c.l.b16 %v4944
        %v5034 = vunpack.c.h.b16 %v4944
        %v5035 = vunpack.c.l.b16 %v4945
        %v5036 = vunpack.c.h.b16 %v4945
        %v5037 = vunpack.c.l.b16 %v4946
        %v5038 = vunpack.c.h.b16 %v4946
        %v5039 = vunpack.c.l.b16 %v4947
        %v5040 = vunpack.c.h.b16 %v4947
        %v5041 = vunpack.c.l.b16 %v4948
        %v5042 = vunpack.c.h.b16 %v4948
        %v5043 = vunpack.c.l.b16 %v4949
        %v5044 = vunpack.c.h.b16 %v4949
        %v5045 = vunpack.c.l.b16 %v4950
        %v5046 = vunpack.c.h.b16 %v4950
        %v5047 = vunpack.c.l.b16 %v4951
        %v5048 = vunpack.c.h.b16 %v4951
        %v5049 = vunpack.c.l.b16 %v4952
        %v5050 = vunpack.c.h.b16 %v4952
        %v5051 = vunpack.c.l.b16 %v4953
        %v5052 = vunpack.c.h.b16 %v4953
        %v5053 = vunpack.c.l.b16 %v4954
        %v5054 = vunpack.c.h.b16 %v4954
        %v5055 = vunpack.c.l.b16 %v4955
        %v5056 = vunpack.c.h.b16 %v4955
        %v5057 = vunpack.c.l.b16 %v4956
        %v5058 = vunpack.c.h.b16 %v4956
        %v5059 = vunpack.c.l.b16 %v4957
        %v5060 = vunpack.c.h.b16 %v4957
        %v5061 = vunpack.c.l.b16 %v4958
        %v5062 = vunpack.c.h.b16 %v4958
        %v5063 = vunpack.c.l.b16 %v4959
        %v5064 = vunpack.c.h.b16 %v4959
        %v5065 = vunpack.c.l.b16 %v4960
        %v5066 = vunpack.c.h.b16 %v4960
        %v5067 = vunpack.c.l.b16 %v4961
        %v5068 = vunpack.c.h.b16 %v4961
        %v5069 = vunpack.c.l.b16 %v4962
        %v5070 = vunpack.c.h.b16 %v4962
        %v5071 = vpack.c.b16 %v5009, %v5007
        %v5072 = vpack.c.b16 %v5010, %v5008
        %v5073 = vpack.c.b16 %v5013, %v5011
        %v5074 = vpack.c.b16 %v5014, %v5012
        %v5075 = vpack.c.b16 %v5017, %v5015
        %v5076 = vpack.c.b16 %v5018, %v5016
        %v5077 = vpack.c.b16 %v5021, %v5019
        %v5078 = vpack.c.b16 %v5022, %v5020
        %v5079 = vpack.c.b16 %v5025, %v5023
        %v5080 = vpack.c.b16 %v5026, %v5024
        %v5081 = vpack.c.b16 %v5029, %v5027
        %v5082 = vpack.c.b16 %v5030, %v5028
        %v5083 = vpack.c.b16 %v5033, %v5031
        %v5084 = vpack.c.b16 %v5034, %v5032
        %v5085 = vpack.c.b16 %v5037, %v5035
        %v5086 = vpack.c.b16 %v5038, %v5036
        %v5087 = vpack.c.b16 %v5041, %v5039
        %v5088 = vpack.c.b16 %v5042, %v5040
        %v5089 = vpack.c.b16 %v5045, %v5043
        %v5090 = vpack.c.b16 %v5046, %v5044
        %v5091 = vpack.c.b16 %v5049, %v5047
        %v5092 = vpack.c.b16 %v5050, %v5048
        %v5093 = vpack.c.b16 %v5053, %v5051
        %v5094 = vpack.c.b16 %v5054, %v5052
        %v5095 = vpack.c.b16 %v5057, %v5055
        %v5096 = vpack.c.b16 %v5058, %v5056
        %v5097 = vpack.c.b16 %v5061, %v5059
        %v5098 = vpack.c.b16 %v5062, %v5060
        %v5099 = vpack.c.b16 %v5065, %v5063
        %v5100 = vpack.c.b16 %v5066, %v5064
        %v5101 = vpack.c.b16 %v5069, %v5067
        %v5102 = vpack.c.b16 %v5070, %v5068
        %5135 = vmatprep.subr.bf16.mxu0 %v5072
        %5136 = vmatpush1.bf16.msra.mxu0 %v5071
        %5137 = vmatprep.subr.bf16.mxu0 %v5074
        %5138 = vmatpush1.bf16.msra.mxu0 %v5073
        %5139 = vmatprep.subr.bf16.mxu0 %v5076
        %5140 = vmatpush1.bf16.msra.mxu0 %v5075
        %5141 = vmatprep.subr.bf16.mxu0 %v5078
        %5142 = vmatpush1.bf16.msra.mxu0 %v5077
        %5143 = vmatprep.subr.bf16.mxu0 %v5080
        %5144 = vmatpush1.bf16.msra.mxu0 %v5079
        %5145 = vmatprep.subr.bf16.mxu0 %v5082
        %5146 = vmatpush1.bf16.msra.mxu0 %v5081
        %5147 = vmatprep.subr.bf16.mxu0 %v5084
        %5148 = vmatpush1.bf16.msra.mxu0 %v5083
        %5149 = vmatprep.subr.bf16.mxu0 %v5086
        %5150 = vmatpush1.bf16.msra.mxu0 %v5085
        %5151 = vmatprep.subr.bf16.mxu0 %v5088
        %5152 = vmatpush1.bf16.msra.mxu0 %v5087
        %5153 = vmatprep.subr.bf16.mxu0 %v5090
        %5154 = vmatpush1.bf16.msra.mxu0 %v5089
        %5155 = vmatprep.subr.bf16.mxu0 %v5092
        %5156 = vmatpush1.bf16.msra.mxu0 %v5091
        %5157 = vmatprep.subr.bf16.mxu0 %v5094
        %5158 = vmatpush1.bf16.msra.mxu0 %v5093
        %5159 = vmatprep.subr.bf16.mxu0 %v5096
        %5160 = vmatpush1.bf16.msra.mxu0 %v5095
        %5161 = vmatprep.subr.bf16.mxu0 %v5098
        %5162 = vmatpush1.bf16.msra.mxu0 %v5097
        %5163 = vmatprep.subr.bf16.mxu0 %v5100
        %5164 = vmatpush1.bf16.msra.mxu0 %v5099
        %5165 = vmatprep.subr.bf16.mxu0 %v5102
        %5166 = vmatpush1.bf16.msra.mxu0 %v5101
        %5167 = vmatprep.mubr.bf16.mxu0 %v4929
        %5168 = vmatmul.mubr.bf16.gmra.mrb[0].mxu0 %v4928
        %v5169 = vpop.f32.mrb[0].mxu0
        %v5170 = vadd.f32 %v4968, %v5169
        %v5171 = vpop.f32.mrb[0].mxu0
        %v5172 = vadd.f32 %v4972, %v5171
        %v5173 = vpop.f32.mrb[0].mxu0
        %v5174 = vadd.f32 %v4968, %v5173
        %v5175 = vpop.f32.mrb[0].mxu0
        %v5176 = vadd.f32 %v4972, %v5175
        %5177 = vmatprep.mubr.bf16.mxu0 %v4929
        %5178 = vmatmul.mubr.bf16.gmra.mrb[0].mxu0 %v4930
        %v5179 = vpop.f32.mrb[0].mxu0
        %v5180 = vadd.f32 %v4968, %v5179
        %v5181 = vpop.f32.mrb[0].mxu0
        %v5182 = vadd.f32 %v4972, %v5181
        %v5183 = vpop.f32.mrb[0].mxu0
        %v5184 = vadd.f32 %v4968, %v5183
        %v5185 = vpop.f32.mrb[0].mxu0
        %v5186 = vadd.f32 %v4972, %v5185
        %5187 = vdwg.mxu0
        %v5188 = vld [vmem:[#allocation9] sm:$0xf]
        %v5189 = vld [vmem:[#allocation9 + $0x4] sm:$0xf]
        %v5190 = vld [vmem:[#allocation9 + $0x8] sm:$0xf]
        %v5191 = vld [vmem:[#allocation9 + $0xc] sm:$0xf]
        %v5192 = vld [vmem:[#allocation9 + $0x10] sm:$0xf]
        %v5193 = vld [vmem:[#allocation9 + $0x14] sm:$0xf]
        %v5194 = vld [vmem:[#allocation9 + $0x18] sm:$0xf]
        %v5195 = vld [vmem:[#allocation9 + $0x1c] sm:$0xf]
        %v5196 = vld [vmem:[#allocation9 + $0x20] sm:$0xf]
        %v5197 = vld [vmem:[#allocation9 + $0x24] sm:$0xf]
        %v5198 = vld [vmem:[#allocation9 + $0x28] sm:$0xf]
        %v5199 = vld [vmem:[#allocation9 + $0x2c] sm:$0xf]
        %v5200 = vld [vmem:[#allocation9 + $0x30] sm:$0xf]
        %v5201 = vld [vmem:[#allocation9 + $0x34] sm:$0xf]
        %v5202 = vld [vmem:[#allocation9 + $0x38] sm:$0xf]
        %v5203 = vld [vmem:[#allocation9 + $0x3c] sm:$0xf]
        %v5204 = vld [vmem:[%s16] sm:$0x1]
        %v5206 = vlaneseq
        %v5207 = vshrl.u32 %v5206, 7
        %v5208 = vsub.s32 0, %v5207
        %v5209 = vrot.slane %v5204, %v5208
        %v5227 = vunpack.c.l.b16 %v5188
        %v5228 = vunpack.c.l.b16 %v5189
        %v5229 = vunpack.c.l.b16 %v5190
        %v5230 = vunpack.c.l.b16 %v5191
        %v5231 = vunpack.c.l.b16 %v5192
        %v5232 = vunpack.c.l.b16 %v5193
        %v5233 = vunpack.c.l.b16 %v5194
        %v5234 = vunpack.c.l.b16 %v5195
        %v5235 = vunpack.c.l.b16 %v5196
        %v5236 = vunpack.c.l.b16 %v5197
        %v5237 = vunpack.c.l.b16 %v5198
        %v5238 = vunpack.c.l.b16 %v5199
        %v5239 = vunpack.c.l.b16 %v5200
        %v5240 = vunpack.c.l.b16 %v5201
        %v5241 = vunpack.c.l.b16 %v5202
        %v5242 = vunpack.c.l.b16 %v5203
        %v5243 = vpack.c.b16 %v5228, %v5227
        %v5244 = vpack.c.b16 %v5230, %v5229
        %v5245 = vpack.c.b16 %v5232, %v5231
        %v5246 = vpack.c.b16 %v5234, %v5233
        %v5247 = vpack.c.b16 %v5236, %v5235
        %v5248 = vpack.c.b16 %v5238, %v5237
        %v5249 = vpack.c.b16 %v5240, %v5239
        %v5250 = vpack.c.b16 %v5242, %v5241
        %5259 = vmatprep.subr.bf16.mxu0 0
        %5260 = vmatpush1.bf16.msra.mxu0 %v5243
        %5261 = vmatprep.subr.bf16.mxu0 0
        %5262 = vmatpush1.bf16.msra.mxu0 %v5244
        %5263 = vmatprep.subr.bf16.mxu0 0
        %5264 = vmatpush1.bf16.msra.mxu0 %v5245
        %5265 = vmatprep.subr.bf16.mxu0 0
        %5266 = vmatpush1.bf16.msra.mxu0 %v5246
        %5267 = vmatprep.subr.bf16.mxu0 0
        %5268 = vmatpush1.bf16.msra.mxu0 %v5247
        %5269 = vmatprep.subr.bf16.mxu0 0
        %5270 = vmatpush1.bf16.msra.mxu0 %v5248
        %5271 = vmatprep.subr.bf16.mxu0 0
        %5272 = vmatpush1.bf16.msra.mxu0 %v5249
        %5273 = vmatprep.subr.bf16.mxu0 0
        %5274 = vmatpush1.bf16.msra.mxu0 %v5250
        %5275 = vmatprep.subr.bf16.mxu0 0
        %5276 = vmatpush1.bf16.msra.mxu0 0
        %5277 = vmatprep.subr.bf16.mxu0 0
        %5278 = vmatpush1.bf16.msra.mxu0 0
        %5279 = vmatprep.subr.bf16.mxu0 0
        %5280 = vmatpush1.bf16.msra.mxu0 0
        %5281 = vmatprep.subr.bf16.mxu0 0
        %5282 = vmatpush1.bf16.msra.mxu0 0
        %5283 = vmatprep.subr.bf16.mxu0 0
        %5284 = vmatpush1.bf16.msra.mxu0 0
        %5285 = vmatprep.subr.bf16.mxu0 0
        %5286 = vmatpush1.bf16.msra.mxu0 0
        %5287 = vmatprep.subr.bf16.mxu0 0
        %5288 = vmatpush1.bf16.msra.mxu0 0
        %5289 = vmatprep.subr.bf16.mxu0 0
        %5290 = vmatpush1.bf16.msra.mxu0 0
        %5291 = vmatprep.mubr.bf16.mxu0 0
        %5292 = vmatmul.mubr.bf16.gmra.mrb[0].mxu0 %v4928
        %v5293 = vpop.f32.mrb[0].mxu0
        %v5294 = vadd.f32 %v5209, %v5293
        %v5295 = vpop.f32.mrb[0].mxu0
        %v5296 = vpop.f32.mrb[0].mxu0
        %v5297 = vadd.f32 %v5209, %v5296
        %v5298 = vpop.f32.mrb[0].mxu0
        %5299 = vmatprep.mubr.bf16.mxu0 0
        %5300 = vmatmul.mubr.bf16.gmra.mrb[0].mxu0 %v4930
        %v5301 = vpop.f32.mrb[0].mxu0
        %v5302 = vadd.f32 %v5209, %v5301
        %v5303 = vpop.f32.mrb[0].mxu0
        %v5304 = vpop.f32.mrb[0].mxu0
        %v5305 = vadd.f32 %v5209, %v5304
        %v5306 = vpop.f32.mrb[0].mxu0
        %5307 = vdwg.mxu0
        %v5308 = vld [vmem:[#allocation11] sm:$0xf]
        %v5309 = vld [vmem:[#allocation11 + $0x4] sm:$0xf]
        %v5310 = vld [vmem:[#allocation11 + $0x8] sm:$0xf]
        %v5311 = vld [vmem:[#allocation11 + $0xc] sm:$0xf]
        %v5312 = vld [vmem:[#allocation11 + $0x10] sm:$0xf]
        %v5313 = vld [vmem:[#allocation11 + $0x14] sm:$0xf]
        %v5314 = vld [vmem:[#allocation11 + $0x18] sm:$0xf]
        %v5315 = vld [vmem:[#allocation11 + $0x1c] sm:$0xf]
        %v5316 = vld [vmem:[#allocation11 + $0x20] sm:$0xf]
        %v5317 = vld [vmem:[#allocation11 + $0x24] sm:$0xf]
        %v5318 = vld [vmem:[#allocation11 + $0x28] sm:$0xf]
        %v5319 = vld [vmem:[#allocation11 + $0x2c] sm:$0xf]
        %v5320 = vld [vmem:[#allocation11 + $0x30] sm:$0xf]
        %v5321 = vld [vmem:[#allocation11 + $0x34] sm:$0xf]
        %v5322 = vld [vmem:[#allocation11 + $0x38] sm:$0xf]
        %v5323 = vld [vmem:[#allocation11 + $0x3c] sm:$0xf]
        %v5324 = vld [vmem:[%s18] sm:$0x1]
        %v5326 = vlaneseq
        %v5327 = vshrl.u32 %v5326, 7
        %v5328 = vsub.s32 0, %v5327
        %v5329 = vrot.slane %v5324, %v5328
        %v5347 = vunpack.c.l.b16 %v5308
        %v5348 = vunpack.c.l.b16 %v5309
        %v5349 = vunpack.c.l.b16 %v5310
        %v5350 = vunpack.c.l.b16 %v5311
        %v5351 = vunpack.c.l.b16 %v5312
        %v5352 = vunpack.c.l.b16 %v5313
        %v5353 = vunpack.c.l.b16 %v5314
        %v5354 = vunpack.c.l.b16 %v5315
        %v5355 = vunpack.c.l.b16 %v5316
        %v5356 = vunpack.c.l.b16 %v5317
        %v5357 = vunpack.c.l.b16 %v5318
        %v5358 = vunpack.c.l.b16 %v5319
        %v5359 = vunpack.c.l.b16 %v5320
        %v5360 = vunpack.c.l.b16 %v5321
        %v5361 = vunpack.c.l.b16 %v5322
        %v5362 = vunpack.c.l.b16 %v5323
        %v5363 = vpack.c.b16 %v5348, %v5347
        %v5364 = vpack.c.b16 %v5350, %v5349
        %v5365 = vpack.c.b16 %v5352, %v5351
        %v5366 = vpack.c.b16 %v5354, %v5353
        %v5367 = vpack.c.b16 %v5356, %v5355
        %v5368 = vpack.c.b16 %v5358, %v5357
        %v5369 = vpack.c.b16 %v5360, %v5359
        %v5370 = vpack.c.b16 %v5362, %v5361
        %5379 = vmatprep.subr.bf16.mxu0 0
        %5380 = vmatpush1.bf16.msra.mxu0 %v5363
        %5381 = vmatprep.subr.bf16.mxu0 0
        %5382 = vmatpush1.bf16.msra.mxu0 %v5364
        %5383 = vmatprep.subr.bf16.mxu0 0
        %5384 = vmatpush1.bf16.msra.mxu0 %v5365
        %5385 = vmatprep.subr.bf16.mxu0 0
        %5386 = vmatpush1.bf16.msra.mxu0 %v5366
        %5387 = vmatprep.subr.bf16.mxu0 0
        %5388 = vmatpush1.bf16.msra.mxu0 %v5367
        %5389 = vmatprep.subr.bf16.mxu0 0
        %5390 = vmatpush1.bf16.msra.mxu0 %v5368
        %5391 = vmatprep.subr.bf16.mxu0 0
        %5392 = vmatpush1.bf16.msra.mxu0 %v5369
        %5393 = vmatprep.subr.bf16.mxu0 0
        %5394 = vmatpush1.bf16.msra.mxu0 %v5370
        %5395 = vmatprep.subr.bf16.mxu0 0
        %5396 = vmatpush1.bf16.msra.mxu0 0
        %5397 = vmatprep.subr.bf16.mxu0 0
        %5398 = vmatpush1.bf16.msra.mxu0 0
        %5399 = vmatprep.subr.bf16.mxu0 0
        %5400 = vmatpush1.bf16.msra.mxu0 0
        %5401 = vmatprep.subr.bf16.mxu0 0
        %5402 = vmatpush1.bf16.msra.mxu0 0
        %5403 = vmatprep.subr.bf16.mxu0 0
        %5404 = vmatpush1.bf16.msra.mxu0 0
        %5405 = vmatprep.subr.bf16.mxu0 0
        %5406 = vmatpush1.bf16.msra.mxu0 0
        %5407 = vmatprep.subr.bf16.mxu0 0
        %5408 = vmatpush1.bf16.msra.mxu0 0
        %5409 = vmatprep.subr.bf16.mxu0 0
        %5410 = vmatpush1.bf16.msra.mxu0 0
        %5411 = vmatprep.mubr.bf16.mxu0 0
        %5412 = vmatmul.mubr.bf16.gmra.mrb[0].mxu0 0
        %v5413 = vpop.f32.mrb[0].mxu0
        %v5414 = vadd.f32 %v5329, %v5413
        %v5415 = vpop.f32.mrb[0].mxu0
        %v5416 = vpop.f32.mrb[0].mxu0
        %v5417 = vadd.f32 %v5329, %v5416
        %v5418 = vpop.f32.mrb[0].mxu0
        %5419 = vmatprep.mubr.bf16.mxu0 0
        %5420 = vmatmul.mubr.bf16.gmra.mrb[0].mxu0 0
        %v5421 = vpop.f32.mrb[0].mxu0
        %v5422 = vadd.f32 %v5329, %v5421
        %v5423 = vpop.f32.mrb[0].mxu0
        %v5424 = vpop.f32.mrb[0].mxu0
        %v5425 = vadd.f32 %v5329, %v5424
        %v5426 = vpop.f32.mrb[0].mxu0
        %5427 = vdwg.mxu0
        %v5428 = vmul.f32 %v5170, 0.5
        %v5429 = vmul.f32 %v5174, 0.5
        %v5430 = vmul.f32 %v5180, 0.5
        %v5431 = vmul.f32 %v5184, 0.5
        %v5432 = vtanh.pop %v5428
        %v5433 = vtanh.pop %v5429
        %v5434 = vtanh.pop %v5430
        %v5435 = vtanh.pop %v5431
        %v5436 = vadd.f32 %v5432, 1.0
        %v5437 = vadd.f32 %v5433, 1.0
        %v5438 = vadd.f32 %v5434, 1.0
        %v5439 = vadd.f32 %v5435, 1.0
        %v5440 = vmul.f32 %v5436, 0.5
        %v5441 = vmul.f32 %v5437, 0.5
        %v5442 = vmul.f32 %v5438, 0.5
        %v5443 = vmul.f32 %v5439, 0.5
        %v5444 = vmul.f32 %v5172, 0.5
        %v5445 = vmul.f32 %v5176, 0.5
        %v5446 = vmul.f32 %v5182, 0.5
        %v5447 = vmul.f32 %v5186, 0.5
        %v5448 = vtanh.pop %v5444
        %v5449 = vtanh.pop %v5445
        %v5450 = vtanh.pop %v5446
        %v5451 = vtanh.pop %v5447
        %v5452 = vadd.f32 %v5448, 1.0
        %v5453 = vadd.f32 %v5449, 1.0
        %v5454 = vadd.f32 %v5450, 1.0
        %v5455 = vadd.f32 %v5451, 1.0
        %v5456 = vmul.f32 %v5452, 0.5
        %v5457 = vmul.f32 %v5453, 0.5
        %v5458 = vmul.f32 %v5454, 0.5
        %v5459 = vmul.f32 %v5455, 0.5
        %v5460 = vmul.f32 %v5440, %v5414
        %v5461 = vmul.f32 %v5441, %v5417
        %v5462 = vmul.f32 %v5442, %v5422
        %v5463 = vmul.f32 %v5443, %v5425
        %v5464 = vadd.f32 %v5294, %v5460
        %v5465 = vadd.f32 %v5297, %v5461
        %v5466 = vadd.f32 %v5302, %v5462
        %v5467 = vadd.f32 %v5305, %v5463
        %v5468 = vtanh.pop %v5464
        %v5469 = vtanh.pop %v5465
        %v5470 = vtanh.pop %v5466
        %v5471 = vtanh.pop %v5467
        %v5472 = vsub.f32 1.0, %v5456
        %v5473 = vsub.f32 1.0, %v5457
        %v5474 = vsub.f32 1.0, %v5458
        %v5475 = vsub.f32 1.0, %v5459
        %v5476 = vmul.f32 %v5472, %v5468
        %v5477 = vmul.f32 %v5473, %v5469
        %v5478 = vmul.f32 %v5474, %v5470
        %v5479 = vmul.f32 %v5475, %v5471
        %v5480 = vmul.f32 %v5456, 0.0
        %v5481 = vmul.f32 %v5457, 0.0
        %v5482 = vmul.f32 %v5458, 0.0
        %v5483 = vmul.f32 %v5459, 0.0
        %v5484 = vadd.f32 %v5476, %v5480
        %v5485 = vadd.f32 %v5477, %v5481
        %v5486 = vadd.f32 %v5478, %v5482
        %v5487 = vadd.f32 %v5479, %v5483
        %v5488 = vld [vmem:[%s3434] sm:$0xff]
        %v5489 = vld [vmem:[%s3434 + $0x8] sm:$0xff]
        %v5490 = vld [vmem:[%s3434 + $0x10] sm:$0xff]
        %v5491 = vld [vmem:[%s3434 + $0x18] sm:$0xff]
        %v5492 = vld [vmem:[%s3434 + $0x20] sm:$0xff]
        %v5493 = vld [vmem:[%s3434 + $0x28] sm:$0xff]
        %5494 = vmatprep.subr.bf16.mxu0 %v4699
        %5495 = vmatpush1.bf16.msra.mxu0 %v4698
        %5496 = vmatprep.subr.bf16.mxu0 %v4702
        %5497 = vmatpush1.bf16.msra.mxu0 %v4701
        %5498 = vmatprep.subr.bf16.mxu0 %v4705
        %5499 = vmatpush1.bf16.msra.mxu0 %v4704
        %5500 = vmatprep.subr.bf16.mxu0 %v4708
        %5501 = vmatpush1.bf16.msra.mxu0 %v4707
        %5502 = vmatprep.subr.bf16.mxu0 %v4711
        %5503 = vmatpush1.bf16.msra.mxu0 %v4710
        %5504 = vmatprep.subr.bf16.mxu0 %v4714
        %5505 = vmatpush1.bf16.msra.mxu0 %v4713
        %5506 = vmatprep.subr.bf16.mxu0 %v4717
        %5507 = vmatpush1.bf16.msra.mxu0 %v4716
        %5508 = vmatprep.subr.bf16.mxu0 %v4720
        %5509 = vmatpush1.bf16.msra.mxu0 %v4719
        %5510 = vmatprep.subr.bf16.mxu0 0
        %5511 = vmatpush1.bf16.msra.mxu0 0
        %5512 = vmatprep.subr.bf16.mxu0 0
        %5513 = vmatpush1.bf16.msra.mxu0 0
        %5514 = vmatprep.subr.bf16.mxu0 0
        %5515 = vmatpush1.bf16.msra.mxu0 0
        %5516 = vmatprep.subr.bf16.mxu0 0
        %5517 = vmatpush1.bf16.msra.mxu0 0
        %5518 = vmatprep.subr.bf16.mxu0 0
        %5519 = vmatpush1.bf16.msra.mxu0 0
        %5520 = vmatprep.subr.bf16.mxu0 0
        %5521 = vmatpush1.bf16.msra.mxu0 0
        %5522 = vmatprep.subr.bf16.mxu0 0
        %5523 = vmatpush1.bf16.msra.mxu0 0
        %5524 = vmatprep.subr.bf16.mxu0 0
        %5525 = vmatpush1.bf16.msra.mxu0 0
        %5526 = vmatprep.mubr.bf16.mxu0 0
        %5527 = vmatmul.mubr.bf16.gmra.mrb[0].mxu0 %v4928
        %v5528 = vpop.f32.mrb[0].mxu0
        %v5529 = vadd.f32 %v4606, %v5528
        %v5530 = vpop.f32.mrb[0].mxu0
        %v5531 = vadd.f32 %v4610, %v5530
        %v5532 = vpop.f32.mrb[0].mxu0
        %v5533 = vadd.f32 %v4606, %v5532
        %v5534 = vpop.f32.mrb[0].mxu0
        %v5535 = vadd.f32 %v4610, %v5534
        %5536 = vmatprep.mubr.bf16.mxu0 0
        %5537 = vmatmul.mubr.bf16.gmra.mrb[0].mxu0 %v4930
        %v5538 = vpop.f32.mrb[0].mxu0
        %v5539 = vadd.f32 %v4606, %v5538
        %v5540 = vpop.f32.mrb[0].mxu0
        %v5541 = vadd.f32 %v4610, %v5540
        %v5542 = vpop.f32.mrb[0].mxu0
        %v5543 = vadd.f32 %v4606, %v5542
        %v5544 = vpop.f32.mrb[0].mxu0
        %v5545 = vadd.f32 %v4610, %v5544
        %5546 = vdwg.mxu0
        %5547 = vmatprep.subr.bf16.mxu0 0
        %5548 = vmatpush1.bf16.msra.mxu0 %v4700
        %5549 = vmatprep.subr.bf16.mxu0 0
        %5550 = vmatpush1.bf16.msra.mxu0 %v4703
        %5551 = vmatprep.subr.bf16.mxu0 0
        %5552 = vmatpush1.bf16.msra.mxu0 %v4706
        %5553 = vmatprep.subr.bf16.mxu0 0
        %5554 = vmatpush1.bf16.msra.mxu0 %v4709
        %5555 = vmatprep.subr.bf16.mxu0 0
        %5556 = vmatpush1.bf16.msra.mxu0 %v4712
        %5557 = vmatprep.subr.bf16.mxu0 0
        %5558 = vmatpush1.bf16.msra.mxu0 %v4715
        %5559 = vmatprep.subr.bf16.mxu0 0
        %5560 = vmatpush1.bf16.msra.mxu0 %v4718
        %5561 = vmatprep.subr.bf16.mxu0 0
        %5562 = vmatpush1.bf16.msra.mxu0 %v4721
        %5563 = vmatprep.subr.bf16.mxu0 0
        %5564 = vmatpush1.bf16.msra.mxu0 0
        %5565 = vmatprep.subr.bf16.mxu0 0
        %5566 = vmatpush1.bf16.msra.mxu0 0
        %5567 = vmatprep.subr.bf16.mxu0 0
        %5568 = vmatpush1.bf16.msra.mxu0 0
        %5569 = vmatprep.subr.bf16.mxu0 0
        %5570 = vmatpush1.bf16.msra.mxu0 0
        %5571 = vmatprep.subr.bf16.mxu0 0
        %5572 = vmatpush1.bf16.msra.mxu0 0
        %5573 = vmatprep.subr.bf16.mxu0 0
        %5574 = vmatpush1.bf16.msra.mxu0 0
        %5575 = vmatprep.subr.bf16.mxu0 0
        %5576 = vmatpush1.bf16.msra.mxu0 0
        %5577 = vmatprep.subr.bf16.mxu0 0
        %5578 = vmatpush1.bf16.msra.mxu0 0
        %5579 = vmatprep.mubr.bf16.mxu0 0
        %5580 = vmatmul.mubr.bf16.gmra.mrb[0].mxu0 %v4928
        %v5581 = vpop.f32.mrb[0].mxu0
        %v5582 = vadd.f32 %v4614, %v5581
        %v5583 = vpop.f32.mrb[0].mxu0
        %v5584 = vpop.f32.mrb[0].mxu0
        %v5585 = vadd.f32 %v4614, %v5584
        %v5586 = vpop.f32.mrb[0].mxu0
        %5587 = vmatprep.mubr.bf16.mxu0 0
        %5588 = vmatmul.mubr.bf16.gmra.mrb[0].mxu0 %v4930
        %v5589 = vpop.f32.mrb[0].mxu0
        %v5590 = vadd.f32 %v4614, %v5589
        %v5591 = vpop.f32.mrb[0].mxu0
        %v5592 = vpop.f32.mrb[0].mxu0
        %v5593 = vadd.f32 %v4614, %v5592
        %v5594 = vpop.f32.mrb[0].mxu0
        %5595 = vdwg.mxu0
        %v5596 = vunpack.c.l.bf16 %v5488
        %v5597 = vunpack.c.h.bf16 %v5488
        %v5598 = vunpack.c.l.bf16 %v5491
        %v5599 = vunpack.c.h.bf16 %v5491
        %v5600 = vadd.f32 %v5596, %v5529
        %v5601 = vadd.f32 %v5597, %v5533
        %v5602 = vadd.f32 %v5598, %v5539
        %v5603 = vadd.f32 %v5599, %v5543
        %v5604 = vmul.f32 %v5600, 0.5
        %v5605 = vmul.f32 %v5601, 0.5
        %v5606 = vmul.f32 %v5602, 0.5
        %v5607 = vmul.f32 %v5603, 0.5
        %v5608 = vtanh.pop %v5604
        %v5609 = vtanh.pop %v5605
        %v5610 = vtanh.pop %v5606
        %v5611 = vtanh.pop %v5607
        %v5612 = vadd.f32 %v5608, 1.0
        %v5613 = vadd.f32 %v5609, 1.0
        %v5614 = vadd.f32 %v5610, 1.0
        %v5615 = vadd.f32 %v5611, 1.0
        %v5616 = vmul.f32 %v5612, 0.5
        %v5617 = vmul.f32 %v5613, 0.5
        %v5618 = vmul.f32 %v5614, 0.5
        %v5619 = vmul.f32 %v5615, 0.5
        %v5620 = vunpack.c.l.bf16 %v5489
        %v5621 = vunpack.c.h.bf16 %v5489
        %v5622 = vunpack.c.l.bf16 %v5492
        %v5623 = vunpack.c.h.bf16 %v5492
        %v5624 = vadd.f32 %v5620, %v5531
        %v5625 = vadd.f32 %v5621, %v5535
        %v5626 = vadd.f32 %v5622, %v5541
        %v5627 = vadd.f32 %v5623, %v5545
        %v5628 = vmul.f32 %v5624, 0.5
        %v5629 = vmul.f32 %v5625, 0.5
        %v5630 = vmul.f32 %v5626, 0.5
        %v5631 = vmul.f32 %v5627, 0.5
        %v5632 = vtanh.pop %v5628
        %v5633 = vtanh.pop %v5629
        %v5634 = vtanh.pop %v5630
        %v5635 = vtanh.pop %v5631
        %v5636 = vadd.f32 %v5632, 1.0
        %v5637 = vadd.f32 %v5633, 1.0
        %v5638 = vadd.f32 %v5634, 1.0
        %v5639 = vadd.f32 %v5635, 1.0
        %v5640 = vmul.f32 %v5636, 0.5
        %v5641 = vmul.f32 %v5637, 0.5
        %v5642 = vmul.f32 %v5638, 0.5
        %v5643 = vmul.f32 %v5639, 0.5
        %v5644 = vmul.f32 %v5616, %v5582
        %v5645 = vmul.f32 %v5617, %v5585
        %v5646 = vmul.f32 %v5618, %v5590
        %v5647 = vmul.f32 %v5619, %v5593
        %v5648 = vunpack.c.l.bf16 %v5490
        %v5649 = vunpack.c.h.bf16 %v5490
        %v5650 = vunpack.c.l.bf16 %v5493
        %v5651 = vunpack.c.h.bf16 %v5493
        %v5652 = vadd.f32 %v5648, %v5644
        %v5653 = vadd.f32 %v5649, %v5645
        %v5654 = vadd.f32 %v5650, %v5646
        %v5655 = vadd.f32 %v5651, %v5647
        %v5656 = vtanh.pop %v5652
        %v5657 = vtanh.pop %v5653
        %v5658 = vtanh.pop %v5654
        %v5659 = vtanh.pop %v5655
        %v5660 = vsub.f32 1.0, %v5640
        %v5661 = vsub.f32 1.0, %v5641
        %v5662 = vsub.f32 1.0, %v5642
        %v5663 = vsub.f32 1.0, %v5643
        %v5664 = vmul.f32 %v5660, %v5656
        %v5665 = vmul.f32 %v5661, %v5657
        %v5666 = vmul.f32 %v5662, %v5658
        %v5667 = vmul.f32 %v5663, %v5659
        %v5668 = vmul.f32 %v5640, %v4924
        %v5669 = vmul.f32 %v5641, %v4925
        %v5670 = vmul.f32 %v5642, %v4926
        %v5671 = vmul.f32 %v5643, %v4927
        %v5672 = vadd.f32 %v5664, %v5668
        %v5673 = vadd.f32 %v5665, %v5669
        %v5674 = vadd.f32 %v5666, %v5670
        %v5675 = vadd.f32 %v5667, %v5671
        %v5676 = vpack.c.bf16 %v5673, %v5672
        %v5677 = vpack.c.bf16 %v5485, %v5484
        %v5678 = vpack.c.bf16 %v5675, %v5674
        %v5679 = vpack.c.bf16 %v5487, %v5486
        %5680 = vmatprep.subr.bf16.mxu0 %v5072
        %5681 = vmatpush1.bf16.msra.mxu0 %v5071
        %5682 = vmatprep.subr.bf16.mxu0 %v5074
        %5683 = vmatpush1.bf16.msra.mxu0 %v5073
        %5684 = vmatprep.subr.bf16.mxu0 %v5076
        %5685 = vmatpush1.bf16.msra.mxu0 %v5075
        %5686 = vmatprep.subr.bf16.mxu0 %v5078
        %5687 = vmatpush1.bf16.msra.mxu0 %v5077
        %5688 = vmatprep.subr.bf16.mxu0 %v5080
        %5689 = vmatpush1.bf16.msra.mxu0 %v5079
        %5690 = vmatprep.subr.bf16.mxu0 %v5082
        %5691 = vmatpush1.bf16.msra.mxu0 %v5081
        %5692 = vmatprep.subr.bf16.mxu0 %v5084
        %5693 = vmatpush1.bf16.msra.mxu0 %v5083
        %5694 = vmatprep.subr.bf16.mxu0 %v5086
        %5695 = vmatpush1.bf16.msra.mxu0 %v5085
        %5696 = vmatprep.subr.bf16.mxu0 %v5088
        %5697 = vmatpush1.bf16.msra.mxu0 %v5087
        %5698 = vmatprep.subr.bf16.mxu0 %v5090
        %5699 = vmatpush1.bf16.msra.mxu0 %v5089
        %5700 = vmatprep.subr.bf16.mxu0 %v5092
        %5701 = vmatpush1.bf16.msra.mxu0 %v5091
        %5702 = vmatprep.subr.bf16.mxu0 %v5094
        %5703 = vmatpush1.bf16.msra.mxu0 %v5093
        %5704 = vmatprep.subr.bf16.mxu0 %v5096
        %5705 = vmatpush1.bf16.msra.mxu0 %v5095
        %5706 = vmatprep.subr.bf16.mxu0 %v5098
        %5707 = vmatpush1.bf16.msra.mxu0 %v5097
        %5708 = vmatprep.subr.bf16.mxu0 %v5100
        %5709 = vmatpush1.bf16.msra.mxu0 %v5099
        %5710 = vmatprep.subr.bf16.mxu0 %v5102
        %5711 = vmatpush1.bf16.msra.mxu0 %v5101
        %5712 = vmatprep.mubr.bf16.mxu0 %v5677
        %5713 = vmatmul.mubr.bf16.gmra.mrb[0].mxu0 %v5676
        %v5714 = vpop.f32.mrb[0].mxu0
        %v5715 = vadd.f32 %v4968, %v5714
        %v5716 = vpop.f32.mrb[0].mxu0
        %v5717 = vadd.f32 %v4972, %v5716
        %v5718 = vpop.f32.mrb[0].mxu0
        %v5719 = vadd.f32 %v4968, %v5718
        %v5720 = vpop.f32.mrb[0].mxu0
        %v5721 = vadd.f32 %v4972, %v5720
        %5722 = vmatprep.mubr.bf16.mxu0 %v5679
        %5723 = vmatmul.mubr.bf16.gmra.mrb[0].mxu0 %v5678
        %v5724 = vpop.f32.mrb[0].mxu0
        %v5725 = vadd.f32 %v4968, %v5724
        %v5726 = vpop.f32.mrb[0].mxu0
        %v5727 = vadd.f32 %v4972, %v5726
        %v5728 = vpop.f32.mrb[0].mxu0
        %v5729 = vadd.f32 %v4968, %v5728
        %v5730 = vpop.f32.mrb[0].mxu0
        %v5731 = vadd.f32 %v4972, %v5730
        %5732 = vdwg.mxu0
        %5733 = vmatprep.subr.bf16.mxu0 0
        %5734 = vmatpush1.bf16.msra.mxu0 %v5243
        %5735 = vmatprep.subr.bf16.mxu0 0
        %5736 = vmatpush1.bf16.msra.mxu0 %v5244
        %5737 = vmatprep.subr.bf16.mxu0 0
        %5738 = vmatpush1.bf16.msra.mxu0 %v5245
        %5739 = vmatprep.subr.bf16.mxu0 0
        %5740 = vmatpush1.bf16.msra.mxu0 %v5246
        %5741 = vmatprep.subr.bf16.mxu0 0
        %5742 = vmatpush1.bf16.msra.mxu0 %v5247
        %5743 = vmatprep.subr.bf16.mxu0 0
        %5744 = vmatpush1.bf16.msra.mxu0 %v5248
        %5745 = vmatprep.subr.bf16.mxu0 0
        %5746 = vmatpush1.bf16.msra.mxu0 %v5249
        %5747 = vmatprep.subr.bf16.mxu0 0
        %5748 = vmatpush1.bf16.msra.mxu0 %v5250
        %5749 = vmatprep.subr.bf16.mxu0 0
        %5750 = vmatpush1.bf16.msra.mxu0 0
        %5751 = vmatprep.subr.bf16.mxu0 0
        %5752 = vmatpush1.bf16.msra.mxu0 0
        %5753 = vmatprep.subr.bf16.mxu0 0
        %5754 = vmatpush1.bf16.msra.mxu0 0
        %5755 = vmatprep.subr.bf16.mxu0 0
        %5756 = vmatpush1.bf16.msra.mxu0 0
        %5757 = vmatprep.subr.bf16.mxu0 0
        %5758 = vmatpush1.bf16.msra.mxu0 0
        %5759 = vmatprep.subr.bf16.mxu0 0
        %5760 = vmatpush1.bf16.msra.mxu0 0
        %5761 = vmatprep.subr.bf16.mxu0 0
        %5762 = vmatpush1.bf16.msra.mxu0 0
        %5763 = vmatprep.subr.bf16.mxu0 0
        %5764 = vmatpush1.bf16.msra.mxu0 0
        %5765 = vmatprep.mubr.bf16.mxu0 0
        %5766 = vmatmul.mubr.bf16.gmra.mrb[0].mxu0 %v5676
        %v5767 = vpop.f32.mrb[0].mxu0
        %v5768 = vadd.f32 %v5209, %v5767
        %v5769 = vpop.f32.mrb[0].mxu0
        %v5770 = vpop.f32.mrb[0].mxu0
        %v5771 = vadd.f32 %v5209, %v5770
        %v5772 = vpop.f32.mrb[0].mxu0
        %5773 = vmatprep.mubr.bf16.mxu0 0
        %5774 = vmatmul.mubr.bf16.gmra.mrb[0].mxu0 %v5678
        %v5775 = vpop.f32.mrb[0].mxu0
        %v5776 = vadd.f32 %v5209, %v5775
        %v5777 = vpop.f32.mrb[0].mxu0
        %v5778 = vpop.f32.mrb[0].mxu0
        %v5779 = vadd.f32 %v5209, %v5778
        %v5780 = vpop.f32.mrb[0].mxu0
        %5781 = vdwg.mxu0
        %5782 = vmatprep.subr.bf16.mxu0 0
        %5783 = vmatpush1.bf16.msra.mxu0 %v5363
        %5784 = vmatprep.subr.bf16.mxu0 0
        %5785 = vmatpush1.bf16.msra.mxu0 %v5364
        %5786 = vmatprep.subr.bf16.mxu0 0
        %5787 = vmatpush1.bf16.msra.mxu0 %v5365
        %5788 = vmatprep.subr.bf16.mxu0 0
        %5789 = vmatpush1.bf16.msra.mxu0 %v5366
        %5790 = vmatprep.subr.bf16.mxu0 0
        %5791 = vmatpush1.bf16.msra.mxu0 %v5367
        %5792 = vmatprep.subr.bf16.mxu0 0
        %5793 = vmatpush1.bf16.msra.mxu0 %v5368
        %5794 = vmatprep.subr.bf16.mxu0 0
        %5795 = vmatpush1.bf16.msra.mxu0 %v5369
        %5796 = vmatprep.subr.bf16.mxu0 0
        %5797 = vmatpush1.bf16.msra.mxu0 %v5370
        %5798 = vmatprep.subr.bf16.mxu0 0
        %5799 = vmatpush1.bf16.msra.mxu0 0
        %5800 = vmatprep.subr.bf16.mxu0 0
        %5801 = vmatpush1.bf16.msra.mxu0 0
        %5802 = vmatprep.subr.bf16.mxu0 0
        %5803 = vmatpush1.bf16.msra.mxu0 0
        %5804 = vmatprep.subr.bf16.mxu0 0
        %5805 = vmatpush1.bf16.msra.mxu0 0
        %5806 = vmatprep.subr.bf16.mxu0 0
        %5807 = vmatpush1.bf16.msra.mxu0 0
        %5808 = vmatprep.subr.bf16.mxu0 0
        %5809 = vmatpush1.bf16.msra.mxu0 0
        %5810 = vmatprep.subr.bf16.mxu0 0
        %5811 = vmatpush1.bf16.msra.mxu0 0
        %5812 = vmatprep.subr.bf16.mxu0 0
        %5813 = vmatpush1.bf16.msra.mxu0 0
        %5814 = vmatprep.mubr.bf16.mxu0 0
        %5815 = vmatmul.mubr.bf16.gmra.mrb[0].mxu0 %v5677
        %v5816 = vpop.f32.mrb[0].mxu0
        %v5817 = vadd.f32 %v5329, %v5816
        %v5818 = vpop.f32.mrb[0].mxu0
        %v5819 = vpop.f32.mrb[0].mxu0
        %v5820 = vadd.f32 %v5329, %v5819
        %v5821 = vpop.f32.mrb[0].mxu0
        %5822 = vmatprep.mubr.bf16.mxu0 0
        %5823 = vmatmul.mubr.bf16.gmra.mrb[0].mxu0 %v5679
        %v5824 = vpop.f32.mrb[0].mxu0
        %v5825 = vadd.f32 %v5329, %v5824
        %v5826 = vpop.f32.mrb[0].mxu0
        %v5827 = vpop.f32.mrb[0].mxu0
        %v5828 = vadd.f32 %v5329, %v5827
        %v5829 = vpop.f32.mrb[0].mxu0
        %5830 = vdwg.mxu0
        %v5831 = vmul.f32 %v5715, 0.5
        %v5832 = vmul.f32 %v5719, 0.5
        %v5833 = vmul.f32 %v5725, 0.5
        %v5834 = vmul.f32 %v5729, 0.5
        %v5835 = vtanh.pop %v5831
        %v5836 = vtanh.pop %v5832
        %v5837 = vtanh.pop %v5833
        %v5838 = vtanh.pop %v5834
        %v5839 = vadd.f32 %v5835, 1.0
        %v5840 = vadd.f32 %v5836, 1.0
        %v5841 = vadd.f32 %v5837, 1.0
        %v5842 = vadd.f32 %v5838, 1.0
        %v5843 = vmul.f32 %v5839, 0.5
        %v5844 = vmul.f32 %v5840, 0.5
        %v5845 = vmul.f32 %v5841, 0.5
        %v5846 = vmul.f32 %v5842, 0.5
        %v5847 = vmul.f32 %v5717, 0.5
        %v5848 = vmul.f32 %v5721, 0.5
        %v5849 = vmul.f32 %v5727, 0.5
        %v5850 = vmul.f32 %v5731, 0.5
        %v5851 = vtanh.pop %v5847
        %v5852 = vtanh.pop %v5848
        %v5853 = vtanh.pop %v5849
        %v5854 = vtanh.pop %v5850
        %v5855 = vadd.f32 %v5851, 1.0
        %v5856 = vadd.f32 %v5852, 1.0
        %v5857 = vadd.f32 %v5853, 1.0
        %v5858 = vadd.f32 %v5854, 1.0
        %v5859 = vmul.f32 %v5855, 0.5
        %v5860 = vmul.f32 %v5856, 0.5
        %v5861 = vmul.f32 %v5857, 0.5
        %v5862 = vmul.f32 %v5858, 0.5
        %v5863 = vmul.f32 %v5843, %v5817
        %v5864 = vmul.f32 %v5844, %v5820
        %v5865 = vmul.f32 %v5845, %v5825
        %v5866 = vmul.f32 %v5846, %v5828
        %v5867 = vadd.f32 %v5768, %v5863
        %v5868 = vadd.f32 %v5771, %v5864
        %v5869 = vadd.f32 %v5776, %v5865
        %v5870 = vadd.f32 %v5779, %v5866
        %v5871 = vtanh.pop %v5867
        %v5872 = vtanh.pop %v5868
        %v5873 = vtanh.pop %v5869
        %v5874 = vtanh.pop %v5870
        %v5875 = vsub.f32 1.0, %v5859
        %v5876 = vsub.f32 1.0, %v5860
        %v5877 = vsub.f32 1.0, %v5861
        %v5878 = vsub.f32 1.0, %v5862
        %v5879 = vmul.f32 %v5875, %v5871
        %v5880 = vmul.f32 %v5876, %v5872
        %v5881 = vmul.f32 %v5877, %v5873
        %v5882 = vmul.f32 %v5878, %v5874
        %v5883 = vmul.f32 %v5859, %v5484
        %v5884 = vmul.f32 %v5860, %v5485
        %v5885 = vmul.f32 %v5861, %v5486
        %v5886 = vmul.f32 %v5862, %v5487
        %v5887 = vadd.f32 %v5879, %v5883
        %v5888 = vadd.f32 %v5880, %v5884
        %v5889 = vadd.f32 %v5881, %v5885
        %v5890 = vadd.f32 %v5882, %v5886
        %v5891 = vld [vmem:[%s3621] sm:$0xff]
        %v5892 = vld [vmem:[%s3621 + $0x8] sm:$0xff]
        %v5893 = vld [vmem:[%s3621 + $0x10] sm:$0xff]
        %v5894 = vld [vmem:[%s3621 + $0x18] sm:$0xff]
        %v5895 = vld [vmem:[%s3621 + $0x20] sm:$0xff]
        %v5896 = vld [vmem:[%s3621 + $0x28] sm:$0xff]
        %5897 = vmatprep.subr.bf16.mxu0 %v4699
        %5898 = vmatpush1.bf16.msra.mxu0 %v4698
        %5899 = vmatprep.subr.bf16.mxu0 %v4702
        %5900 = vmatpush1.bf16.msra.mxu0 %v4701
        %5901 = vmatprep.subr.bf16.mxu0 %v4705
        %5902 = vmatpush1.bf16.msra.mxu0 %v4704
        %5903 = vmatprep.subr.bf16.mxu0 %v4708
        %5904 = vmatpush1.bf16.msra.mxu0 %v4707
        %5905 = vmatprep.subr.bf16.mxu0 %v4711
        %5906 = vmatpush1.bf16.msra.mxu0 %v4710
        %5907 = vmatprep.subr.bf16.mxu0 %v4714
        %5908 = vmatpush1.bf16.msra.mxu0 %v4713
        %5909 = vmatprep.subr.bf16.mxu0 %v4717
        %5910 = vmatpush1.bf16.msra.mxu0 %v4716
        %5911 = vmatprep.subr.bf16.mxu0 %v4720
        %5912 = vmatpush1.bf16.msra.mxu0 %v4719
        %5913 = vmatprep.subr.bf16.mxu0 0
        %5914 = vmatpush1.bf16.msra.mxu0 0
        %5915 = vmatprep.subr.bf16.mxu0 0
        %5916 = vmatpush1.bf16.msra.mxu0 0
        %5917 = vmatprep.subr.bf16.mxu0 0
        %5918 = vmatpush1.bf16.msra.mxu0 0
        %5919 = vmatprep.subr.bf16.mxu0 0
        %5920 = vmatpush1.bf16.msra.mxu0 0
        %5921 = vmatprep.subr.bf16.mxu0 0
        %5922 = vmatpush1.bf16.msra.mxu0 0
        %5923 = vmatprep.subr.bf16.mxu0 0
        %5924 = vmatpush1.bf16.msra.mxu0 0
        %5925 = vmatprep.subr.bf16.mxu0 0
        %5926 = vmatpush1.bf16.msra.mxu0 0
        %5927 = vmatprep.subr.bf16.mxu0 0
        %5928 = vmatpush1.bf16.msra.mxu0 0
        %5929 = vmatprep.mubr.bf16.mxu0 0
        %5930 = vmatmul.mubr.bf16.gmra.mrb[0].mxu0 %v5676
        %v5931 = vpop.f32.mrb[0].mxu0
        %v5932 = vadd.f32 %v4606, %v5931
        %v5933 = vpop.f32.mrb[0].mxu0
        %v5934 = vadd.f32 %v4610, %v5933
        %v5935 = vpop.f32.mrb[0].mxu0
        %v5936 = vadd.f32 %v4606, %v5935
        %v5937 = vpop.f32.mrb[0].mxu0
        %v5938 = vadd.f32 %v4610, %v5937
        %5939 = vmatprep.mubr.bf16.mxu0 0
        %5940 = vmatmul.mubr.bf16.gmra.mrb[0].mxu0 %v5678
        %v5941 = vpop.f32.mrb[0].mxu0
        %v5942 = vadd.f32 %v4606, %v5941
        %v5943 = vpop.f32.mrb[0].mxu0
        %v5944 = vadd.f32 %v4610, %v5943
        %v5945 = vpop.f32.mrb[0].mxu0
        %v5946 = vadd.f32 %v4606, %v5945
        %v5947 = vpop.f32.mrb[0].mxu0
        %v5948 = vadd.f32 %v4610, %v5947
        %5949 = vdwg.mxu0
        %5950 = vmatprep.subr.bf16.mxu0 0
        %5951 = vmatpush1.bf16.msra.mxu0 %v4700
        %5952 = vmatprep.subr.bf16.mxu0 0
        %5953 = vmatpush1.bf16.msra.mxu0 %v4703
        %5954 = vmatprep.subr.bf16.mxu0 0
        %5955 = vmatpush1.bf16.msra.mxu0 %v4706
        %5956 = vmatprep.subr.bf16.mxu0 0
        %5957 = vmatpush1.bf16.msra.mxu0 %v4709
        %5958 = vmatprep.subr.bf16.mxu0 0
        %5959 = vmatpush1.bf16.msra.mxu0 %v4712
        %5960 = vmatprep.subr.bf16.mxu0 0
        %5961 = vmatpush1.bf16.msra.mxu0 %v4715
        %5962 = vmatprep.subr.bf16.mxu0 0
        %5963 = vmatpush1.bf16.msra.mxu0 %v4718
        %5964 = vmatprep.subr.bf16.mxu0 0
        %5965 = vmatpush1.bf16.msra.mxu0 %v4721
        %5966 = vmatprep.subr.bf16.mxu0 0
        %5967 = vmatpush1.bf16.msra.mxu0 0
        %5968 = vmatprep.subr.bf16.mxu0 0
        %5969 = vmatpush1.bf16.msra.mxu0 0
        %5970 = vmatprep.subr.bf16.mxu0 0
        %5971 = vmatpush1.bf16.msra.mxu0 0
        %5972 = vmatprep.subr.bf16.mxu0 0
        %5973 = vmatpush1.bf16.msra.mxu0 0
        %5974 = vmatprep.subr.bf16.mxu0 0
        %5975 = vmatpush1.bf16.msra.mxu0 0
        %5976 = vmatprep.subr.bf16.mxu0 0
        %5977 = vmatpush1.bf16.msra.mxu0 0
        %5978 = vmatprep.subr.bf16.mxu0 0
        %5979 = vmatpush1.bf16.msra.mxu0 0
        %5980 = vmatprep.subr.bf16.mxu0 0
        %5981 = vmatpush1.bf16.msra.mxu0 0
        %5982 = vmatprep.mubr.bf16.mxu0 0
        %5983 = vmatmul.mubr.bf16.gmra.mrb[0].mxu0 %v5676
        %v5984 = vpop.f32.mrb[0].mxu0
        %v5985 = vadd.f32 %v4614, %v5984
        %v5986 = vpop.f32.mrb[0].mxu0
        %v5987 = vpop.f32.mrb[0].mxu0
        %v5988 = vadd.f32 %v4614, %v5987
        %v5989 = vpop.f32.mrb[0].mxu0
        %5990 = vmatprep.mubr.bf16.mxu0 0
        %5991 = vmatmul.mubr.bf16.gmra.mrb[0].mxu0 %v5678
        %v5992 = vpop.f32.mrb[0].mxu0
        %v5993 = vadd.f32 %v4614, %v5992
        %v5994 = vpop.f32.mrb[0].mxu0
        %v5995 = vpop.f32.mrb[0].mxu0
        %v5996 = vadd.f32 %v4614, %v5995
        %v5997 = vpop.f32.mrb[0].mxu0
        %5998 = vdwg.mxu0
        %v5999 = vunpack.c.l.bf16 %v5891
        %v6000 = vunpack.c.h.bf16 %v5891
        %v6001 = vunpack.c.l.bf16 %v5894
        %v6002 = vunpack.c.h.bf16 %v5894
        %v6003 = vadd.f32 %v5999, %v5932
        %v6004 = vadd.f32 %v6000, %v5936
        %v6005 = vadd.f32 %v6001, %v5942
        %v6006 = vadd.f32 %v6002, %v5946
        %v6007 = vmul.f32 %v6003, 0.5
        %v6008 = vmul.f32 %v6004, 0.5
        %v6009 = vmul.f32 %v6005, 0.5
        %v6010 = vmul.f32 %v6006, 0.5
        %v6011 = vtanh.pop %v6007
        %v6012 = vtanh.pop %v6008
        %v6013 = vtanh.pop %v6009
        %v6014 = vtanh.pop %v6010
        %v6015 = vadd.f32 %v6011, 1.0
        %v6016 = vadd.f32 %v6012, 1.0
        %v6017 = vadd.f32 %v6013, 1.0
        %v6018 = vadd.f32 %v6014, 1.0
        %v6019 = vmul.f32 %v6015, 0.5
        %v6020 = vmul.f32 %v6016, 0.5
        %v6021 = vmul.f32 %v6017, 0.5
        %v6022 = vmul.f32 %v6018, 0.5
        %v6023 = vunpack.c.l.bf16 %v5892
        %v6024 = vunpack.c.h.bf16 %v5892
        %v6025 = vunpack.c.l.bf16 %v5895
        %v6026 = vunpack.c.h.bf16 %v5895
        %v6027 = vadd.f32 %v6023, %v5934
        %v6028 = vadd.f32 %v6024, %v5938
        %v6029 = vadd.f32 %v6025, %v5944
        %v6030 = vadd.f32 %v6026, %v5948
        %v6031 = vmul.f32 %v6027, 0.5
        %v6032 = vmul.f32 %v6028, 0.5
        %v6033 = vmul.f32 %v6029, 0.5
        %v6034 = vmul.f32 %v6030, 0.5
        %v6035 = vtanh.pop %v6031
        %v6036 = vtanh.pop %v6032
        %v6037 = vtanh.pop %v6033
        %v6038 = vtanh.pop %v6034
        %v6039 = vadd.f32 %v6035, 1.0
        %v6040 = vadd.f32 %v6036, 1.0
        %v6041 = vadd.f32 %v6037, 1.0
        %v6042 = vadd.f32 %v6038, 1.0
        %v6043 = vmul.f32 %v6039, 0.5
        %v6044 = vmul.f32 %v6040, 0.5
        %v6045 = vmul.f32 %v6041, 0.5
        %v6046 = vmul.f32 %v6042, 0.5
        %v6047 = vmul.f32 %v6019, %v5985
        %v6048 = vmul.f32 %v6020, %v5988
        %v6049 = vmul.f32 %v6021, %v5993
        %v6050 = vmul.f32 %v6022, %v5996
        %v6051 = vunpack.c.l.bf16 %v5893
        %v6052 = vunpack.c.h.bf16 %v5893
        %v6053 = vunpack.c.l.bf16 %v5896
        %v6054 = vunpack.c.h.bf16 %v5896
        %v6055 = vadd.f32 %v6051, %v6047
        %v6056 = vadd.f32 %v6052, %v6048
        %v6057 = vadd.f32 %v6053, %v6049
        %v6058 = vadd.f32 %v6054, %v6050
        %v6059 = vtanh.pop %v6055
        %v6060 = vtanh.pop %v6056
        %v6061 = vtanh.pop %v6057
        %v6062 = vtanh.pop %v6058
        %v6063 = vsub.f32 1.0, %v6043
        %v6064 = vsub.f32 1.0, %v6044
        %v6065 = vsub.f32 1.0, %v6045
        %v6066 = vsub.f32 1.0, %v6046
        %v6067 = vmul.f32 %v6063, %v6059
        %v6068 = vmul.f32 %v6064, %v6060
        %v6069 = vmul.f32 %v6065, %v6061
        %v6070 = vmul.f32 %v6066, %v6062
        %v6071 = vmul.f32 %v6043, %v5672
        %v6072 = vmul.f32 %v6044, %v5673
        %v6073 = vmul.f32 %v6045, %v5674
        %v6074 = vmul.f32 %v6046, %v5675
        %v6075 = vadd.f32 %v6067, %v6071
        %v6076 = vadd.f32 %v6068, %v6072
        %v6077 = vadd.f32 %v6069, %v6073
        %v6078 = vadd.f32 %v6070, %v6074
        %v6079 = vpack.c.bf16 %v6076, %v6075
        %v6080 = vpack.c.bf16 %v5888, %v5887
        %v6081 = vpack.c.bf16 %v6078, %v6077
        %v6082 = vpack.c.bf16 %v5890, %v5889
        %6083 = vmatprep.subr.bf16.mxu0 %v5072
        %6084 = vmatpush1.bf16.msra.mxu0 %v5071
        %6085 = vmatprep.subr.bf16.mxu0 %v5074
        %6086 = vmatpush1.bf16.msra.mxu0 %v5073
        %6087 = vmatprep.subr.bf16.mxu0 %v5076
        %6088 = vmatpush1.bf16.msra.mxu0 %v5075
        %6089 = vmatprep.subr.bf16.mxu0 %v5078
        %6090 = vmatpush1.bf16.msra.mxu0 %v5077
        %6091 = vmatprep.subr.bf16.mxu0 %v5080
        %6092 = vmatpush1.bf16.msra.mxu0 %v5079
        %6093 = vmatprep.subr.bf16.mxu0 %v5082
        %6094 = vmatpush1.bf16.msra.mxu0 %v5081
        %6095 = vmatprep.subr.bf16.mxu0 %v5084
        %6096 = vmatpush1.bf16.msra.mxu0 %v5083
        %6097 = vmatprep.subr.bf16.mxu0 %v5086
        %6098 = vmatpush1.bf16.msra.mxu0 %v5085
        %6099 = vmatprep.subr.bf16.mxu0 %v5088
        %6100 = vmatpush1.bf16.msra.mxu0 %v5087
        %6101 = vmatprep.subr.bf16.mxu0 %v5090
        %6102 = vmatpush1.bf16.msra.mxu0 %v5089
        %6103 = vmatprep.subr.bf16.mxu0 %v5092
        %6104 = vmatpush1.bf16.msra.mxu0 %v5091
        %6105 = vmatprep.subr.bf16.mxu0 %v5094
        %6106 = vmatpush1.bf16.msra.mxu0 %v5093
        %6107 = vmatprep.subr.bf16.mxu0 %v5096
        %6108 = vmatpush1.bf16.msra.mxu0 %v5095
        %6109 = vmatprep.subr.bf16.mxu0 %v5098
        %6110 = vmatpush1.bf16.msra.mxu0 %v5097
        %6111 = vmatprep.subr.bf16.mxu0 %v5100
        %6112 = vmatpush1.bf16.msra.mxu0 %v5099
        %6113 = vmatprep.subr.bf16.mxu0 %v5102
        %6114 = vmatpush1.bf16.msra.mxu0 %v5101
        %6115 = vmatprep.mubr.bf16.mxu0 %v6080
        %6116 = vmatmul.mubr.bf16.gmra.mrb[0].mxu0 %v6079
        %v6117 = vpop.f32.mrb[0].mxu0
        %v6118 = vadd.f32 %v4968, %v6117
        %v6119 = vpop.f32.mrb[0].mxu0
        %v6120 = vadd.f32 %v4972, %v6119
        %v6121 = vpop.f32.mrb[0].mxu0
        %v6122 = vadd.f32 %v4968, %v6121
        %v6123 = vpop.f32.mrb[0].mxu0
        %v6124 = vadd.f32 %v4972, %v6123
        %6125 = vmatprep.mubr.bf16.mxu0 %v6082
        %6126 = vmatmul.mubr.bf16.gmra.mrb[0].mxu0 %v6081
        %v6127 = vpop.f32.mrb[0].mxu0
        %v6128 = vadd.f32 %v4968, %v6127
        %v6129 = vpop.f32.mrb[0].mxu0
        %v6130 = vadd.f32 %v4972, %v6129
        %v6131 = vpop.f32.mrb[0].mxu0
        %v6132 = vadd.f32 %v4968, %v6131
        %v6133 = vpop.f32.mrb[0].mxu0
        %v6134 = vadd.f32 %v4972, %v6133
        %6135 = vdwg.mxu0
        %6136 = vmatprep.subr.bf16.mxu0 0
        %6137 = vmatpush1.bf16.msra.mxu0 %v5243
        %6138 = vmatprep.subr.bf16.mxu0 0
        %6139 = vmatpush1.bf16.msra.mxu0 %v5244
        %6140 = vmatprep.subr.bf16.mxu0 0
        %6141 = vmatpush1.bf16.msra.mxu0 %v5245
        %6142 = vmatprep.subr.bf16.mxu0 0
        %6143 = vmatpush1.bf16.msra.mxu0 %v5246
        %6144 = vmatprep.subr.bf16.mxu0 0
        %6145 = vmatpush1.bf16.msra.mxu0 %v5247
        %6146 = vmatprep.subr.bf16.mxu0 0
        %6147 = vmatpush1.bf16.msra.mxu0 %v5248
        %6148 = vmatprep.subr.bf16.mxu0 0
        %6149 = vmatpush1.bf16.msra.mxu0 %v5249
        %6150 = vmatprep.subr.bf16.mxu0 0
        %6151 = vmatpush1.bf16.msra.mxu0 %v5250
        %6152 = vmatprep.subr.bf16.mxu0 0
        %6153 = vmatpush1.bf16.msra.mxu0 0
        %6154 = vmatprep.subr.bf16.mxu0 0
        %6155 = vmatpush1.bf16.msra.mxu0 0
        %6156 = vmatprep.subr.bf16.mxu0 0
        %6157 = vmatpush1.bf16.msra.mxu0 0
        %6158 = vmatprep.subr.bf16.mxu0 0
        %6159 = vmatpush1.bf16.msra.mxu0 0
        %6160 = vmatprep.subr.bf16.mxu0 0
        %6161 = vmatpush1.bf16.msra.mxu0 0
        %6162 = vmatprep.subr.bf16.mxu0 0
        %6163 = vmatpush1.bf16.msra.mxu0 0
        %6164 = vmatprep.subr.bf16.mxu0 0
        %6165 = vmatpush1.bf16.msra.mxu0 0
        %6166 = vmatprep.subr.bf16.mxu0 0
        %6167 = vmatpush1.bf16.msra.mxu0 0
        %6168 = vmatprep.mubr.bf16.mxu0 0
        %6169 = vmatmul.mubr.bf16.gmra.mrb[0].mxu0 %v6079
        %v6170 = vpop.f32.mrb[0].mxu0
        %v6171 = vadd.f32 %v5209, %v6170
        %v6172 = vpop.f32.mrb[0].mxu0
        %v6173 = vpop.f32.mrb[0].mxu0
        %v6174 = vadd.f32 %v5209, %v6173
        %v6175 = vpop.f32.mrb[0].mxu0
        %6176 = vmatprep.mubr.bf16.mxu0 0
        %6177 = vmatmul.mubr.bf16.gmra.mrb[0].mxu0 %v6081
        %v6178 = vpop.f32.mrb[0].mxu0
        %v6179 = vadd.f32 %v5209, %v6178
        %v6180 = vpop.f32.mrb[0].mxu0
        %v6181 = vpop.f32.mrb[0].mxu0
        %v6182 = vadd.f32 %v5209, %v6181
        %v6183 = vpop.f32.mrb[0].mxu0
        %6184 = vdwg.mxu0
        %6185 = vmatprep.subr.bf16.mxu0 0
        %6186 = vmatpush1.bf16.msra.mxu0 %v5363
        %6187 = vmatprep.subr.bf16.mxu0 0
        %6188 = vmatpush1.bf16.msra.mxu0 %v5364
        %6189 = vmatprep.subr.bf16.mxu0 0
        %6190 = vmatpush1.bf16.msra.mxu0 %v5365
        %6191 = vmatprep.subr.bf16.mxu0 0
        %6192 = vmatpush1.bf16.msra.mxu0 %v5366
        %6193 = vmatprep.subr.bf16.mxu0 0
        %6194 = vmatpush1.bf16.msra.mxu0 %v5367
        %6195 = vmatprep.subr.bf16.mxu0 0
        %6196 = vmatpush1.bf16.msra.mxu0 %v5368
        %6197 = vmatprep.subr.bf16.mxu0 0
        %6198 = vmatpush1.bf16.msra.mxu0 %v5369
        %6199 = vmatprep.subr.bf16.mxu0 0
        %6200 = vmatpush1.bf16.msra.mxu0 %v5370
        %6201 = vmatprep.subr.bf16.mxu0 0
        %6202 = vmatpush1.bf16.msra.mxu0 0
        %6203 = vmatprep.subr.bf16.mxu0 0
        %6204 = vmatpush1.bf16.msra.mxu0 0
        %6205 = vmatprep.subr.bf16.mxu0 0
        %6206 = vmatpush1.bf16.msra.mxu0 0
        %6207 = vmatprep.subr.bf16.mxu0 0
        %6208 = vmatpush1.bf16.msra.mxu0 0
        %6209 = vmatprep.subr.bf16.mxu0 0
        %6210 = vmatpush1.bf16.msra.mxu0 0
        %6211 = vmatprep.subr.bf16.mxu0 0
        %6212 = vmatpush1.bf16.msra.mxu0 0
        %6213 = vmatprep.subr.bf16.mxu0 0
        %6214 = vmatpush1.bf16.msra.mxu0 0
        %6215 = vmatprep.subr.bf16.mxu0 0
        %6216 = vmatpush1.bf16.msra.mxu0 0
        %6217 = vmatprep.mubr.bf16.mxu0 0
        %6218 = vmatmul.mubr.bf16.gmra.mrb[0].mxu0 %v6080
        %v6219 = vpop.f32.mrb[0].mxu0
        %v6220 = vadd.f32 %v5329, %v6219
        %v6221 = vpop.f32.mrb[0].mxu0
        %v6222 = vpop.f32.mrb[0].mxu0
        %v6223 = vadd.f32 %v5329, %v6222
        %v6224 = vpop.f32.mrb[0].mxu0
        %6225 = vmatprep.mubr.bf16.mxu0 0
        %6226 = vmatmul.mubr.bf16.gmra.mrb[0].mxu0 %v6082
        %v6227 = vpop.f32.mrb[0].mxu0
        %v6228 = vadd.f32 %v5329, %v6227
        %v6229 = vpop.f32.mrb[0].mxu0
        %v6230 = vpop.f32.mrb[0].mxu0
        %v6231 = vadd.f32 %v5329, %v6230
        %v6232 = vpop.f32.mrb[0].mxu0
        %6233 = vdwg.mxu0
        %v6234 = vmul.f32 %v6118, 0.5
        %v6235 = vmul.f32 %v6122, 0.5
        %v6236 = vmul.f32 %v6128, 0.5
        %v6237 = vmul.f32 %v6132, 0.5
        %v6238 = vtanh.pop %v6234
        %v6239 = vtanh.pop %v6235
        %v6240 = vtanh.pop %v6236
        %v6241 = vtanh.pop %v6237
        %v6242 = vadd.f32 %v6238, 1.0
        %v6243 = vadd.f32 %v6239, 1.0
        %v6244 = vadd.f32 %v6240, 1.0
        %v6245 = vadd.f32 %v6241, 1.0
        %v6246 = vmul.f32 %v6242, 0.5
        %v6247 = vmul.f32 %v6243, 0.5
        %v6248 = vmul.f32 %v6244, 0.5
        %v6249 = vmul.f32 %v6245, 0.5
        %v6250 = vmul.f32 %v6120, 0.5
        %v6251 = vmul.f32 %v6124, 0.5
        %v6252 = vmul.f32 %v6130, 0.5
        %v6253 = vmul.f32 %v6134, 0.5
        %v6254 = vtanh.pop %v6250
        %v6255 = vtanh.pop %v6251
        %v6256 = vtanh.pop %v6252
        %v6257 = vtanh.pop %v6253
        %v6258 = vadd.f32 %v6254, 1.0
        %v6259 = vadd.f32 %v6255, 1.0
        %v6260 = vadd.f32 %v6256, 1.0
        %v6261 = vadd.f32 %v6257, 1.0
        %v6262 = vmul.f32 %v6258, 0.5
        %v6263 = vmul.f32 %v6259, 0.5
        %v6264 = vmul.f32 %v6260, 0.5
        %v6265 = vmul.f32 %v6261, 0.5
        %v6266 = vmul.f32 %v6246, %v6220
        %v6267 = vmul.f32 %v6247, %v6223
        %v6268 = vmul.f32 %v6248, %v6228
        %v6269 = vmul.f32 %v6249, %v6231
        %v6270 = vadd.f32 %v6171, %v6266
        %v6271 = vadd.f32 %v6174, %v6267
        %v6272 = vadd.f32 %v6179, %v6268
        %v6273 = vadd.f32 %v6182, %v6269
        %v6274 = vtanh.pop %v6270
        %v6275 = vtanh.pop %v6271
        %v6276 = vtanh.pop %v6272
        %v6277 = vtanh.pop %v6273
        %v6278 = vsub.f32 1.0, %v6262
        %v6279 = vsub.f32 1.0, %v6263
        %v6280 = vsub.f32 1.0, %v6264
        %v6281 = vsub.f32 1.0, %v6265
        %v6282 = vmul.f32 %v6278, %v6274
        %v6283 = vmul.f32 %v6279, %v6275
        %v6284 = vmul.f32 %v6280, %v6276
        %v6285 = vmul.f32 %v6281, %v6277
        %v6286 = vmul.f32 %v6262, %v5887
        %v6287 = vmul.f32 %v6263, %v5888
        %v6288 = vmul.f32 %v6264, %v5889
        %v6289 = vmul.f32 %v6265, %v5890
        %v6290 = vadd.f32 %v6282, %v6286
        %v6291 = vadd.f32 %v6283, %v6287
        %v6292 = vadd.f32 %v6284, %v6288
        %v6293 = vadd.f32 %v6285, %v6289
        %v6294 = vld [vmem:[%s3808] sm:$0xff]
        %v6295 = vld [vmem:[%s3808 + $0x8] sm:$0xff]
        %v6296 = vld [vmem:[%s3808 + $0x10] sm:$0xff]
        %v6297 = vld [vmem:[%s3808 + $0x18] sm:$0xff]
        %v6298 = vld [vmem:[%s3808 + $0x20] sm:$0xff]
        %v6299 = vld [vmem:[%s3808 + $0x28] sm:$0xff]
        %6300 = vmatprep.subr.bf16.mxu0 %v4699
        %6301 = vmatpush1.bf16.msra.mxu0 %v4698
        %6302 = vmatprep.subr.bf16.mxu0 %v4702
        %6303 = vmatpush1.bf16.msra.mxu0 %v4701
        %6304 = vmatprep.subr.bf16.mxu0 %v4705
        %6305 = vmatpush1.bf16.msra.mxu0 %v4704
        %6306 = vmatprep.subr.bf16.mxu0 %v4708
        %6307 = vmatpush1.bf16.msra.mxu0 %v4707
        %6308 = vmatprep.subr.bf16.mxu0 %v4711
        %6309 = vmatpush1.bf16.msra.mxu0 %v4710
        %6310 = vmatprep.subr.bf16.mxu0 %v4714
        %6311 = vmatpush1.bf16.msra.mxu0 %v4713
        %6312 = vmatprep.subr.bf16.mxu0 %v4717
        %6313 = vmatpush1.bf16.msra.mxu0 %v4716
        %6314 = vmatprep.subr.bf16.mxu0 %v4720
        %6315 = vmatpush1.bf16.msra.mxu0 %v4719
        %6316 = vmatprep.subr.bf16.mxu0 0
        %6317 = vmatpush1.bf16.msra.mxu0 0
        %6318 = vmatprep.subr.bf16.mxu0 0
        %6319 = vmatpush1.bf16.msra.mxu0 0
        %6320 = vmatprep.subr.bf16.mxu0 0
        %6321 = vmatpush1.bf16.msra.mxu0 0
        %6322 = vmatprep.subr.bf16.mxu0 0
        %6323 = vmatpush1.bf16.msra.mxu0 0
        %6324 = vmatprep.subr.bf16.mxu0 0
        %6325 = vmatpush1.bf16.msra.mxu0 0
        %6326 = vmatprep.subr.bf16.mxu0 0
        %6327 = vmatpush1.bf16.msra.mxu0 0
        %6328 = vmatprep.subr.bf16.mxu0 0
        %6329 = vmatpush1.bf16.msra.mxu0 0
        %6330 = vmatprep.subr.bf16.mxu0 0
        %6331 = vmatpush1.bf16.msra.mxu0 0
        %6332 = vmatprep.mubr.bf16.mxu0 0
        %6333 = vmatmul.mubr.bf16.gmra.mrb[0].mxu0 %v6079
        %v6334 = vpop.f32.mrb[0].mxu0
        %v6335 = vadd.f32 %v4606, %v6334
        %v6336 = vpop.f32.mrb[0].mxu0
        %v6337 = vadd.f32 %v4610, %v6336
        %v6338 = vpop.f32.mrb[0].mxu0
        %v6339 = vadd.f32 %v4606, %v6338
        %v6340 = vpop.f32.mrb[0].mxu0
        %v6341 = vadd.f32 %v4610, %v6340
        %6342 = vmatprep.mubr.bf16.mxu0 0
        %6343 = vmatmul.mubr.bf16.gmra.mrb[0].mxu0 %v6081
        %v6344 = vpop.f32.mrb[0].mxu0
        %v6345 = vadd.f32 %v4606, %v6344
        %v6346 = vpop.f32.mrb[0].mxu0
        %v6347 = vadd.f32 %v4610, %v6346
        %v6348 = vpop.f32.mrb[0].mxu0
        %v6349 = vadd.f32 %v4606, %v6348
        %v6350 = vpop.f32.mrb[0].mxu0
        %v6351 = vadd.f32 %v4610, %v6350
        %6352 = vdwg.mxu0
        %6353 = vmatprep.subr.bf16.mxu0 0
        %6354 = vmatpush1.bf16.msra.mxu0 %v4700
        %6355 = vmatprep.subr.bf16.mxu0 0
        %6356 = vmatpush1.bf16.msra.mxu0 %v4703
        %6357 = vmatprep.subr.bf16.mxu0 0
        %6358 = vmatpush1.bf16.msra.mxu0 %v4706
        %6359 = vmatprep.subr.bf16.mxu0 0
        %6360 = vmatpush1.bf16.msra.mxu0 %v4709
        %6361 = vmatprep.subr.bf16.mxu0 0
        %6362 = vmatpush1.bf16.msra.mxu0 %v4712
        %6363 = vmatprep.subr.bf16.mxu0 0
        %6364 = vmatpush1.bf16.msra.mxu0 %v4715
        %6365 = vmatprep.subr.bf16.mxu0 0
        %6366 = vmatpush1.bf16.msra.mxu0 %v4718
        %6367 = vmatprep.subr.bf16.mxu0 0
        %6368 = vmatpush1.bf16.msra.mxu0 %v4721
        %6369 = vmatprep.subr.bf16.mxu0 0
        %6370 = vmatpush1.bf16.msra.mxu0 0
        %6371 = vmatprep.subr.bf16.mxu0 0
        %6372 = vmatpush1.bf16.msra.mxu0 0
        %6373 = vmatprep.subr.bf16.mxu0 0
        %6374 = vmatpush1.bf16.msra.mxu0 0
        %6375 = vmatprep.subr.bf16.mxu0 0
        %6376 = vmatpush1.bf16.msra.mxu0 0
        %6377 = vmatprep.subr.bf16.mxu0 0
        %6378 = vmatpush1.bf16.msra.mxu0 0
        %6379 = vmatprep.subr.bf16.mxu0 0
        %6380 = vmatpush1.bf16.msra.mxu0 0
        %6381 = vmatprep.subr.bf16.mxu0 0
        %6382 = vmatpush1.bf16.msra.mxu0 0
        %6383 = vmatprep.subr.bf16.mxu0 0
        %6384 = vmatpush1.bf16.msra.mxu0 0
        %6385 = vmatprep.mubr.bf16.mxu0 0
        %6386 = vmatmul.mubr.bf16.gmra.mrb[0].mxu0 %v6079
        %v6387 = vpop.f32.mrb[0].mxu0
        %v6388 = vadd.f32 %v4614, %v6387
        %v6389 = vpop.f32.mrb[0].mxu0
        %v6390 = vpop.f32.mrb[0].mxu0
        %v6391 = vadd.f32 %v4614, %v6390
        %v6392 = vpop.f32.mrb[0].mxu0
        %6393 = vmatprep.mubr.bf16.mxu0 0
        %6394 = vmatmul.mubr.bf16.gmra.mrb[0].mxu0 %v6081
        %v6395 = vpop.f32.mrb[0].mxu0
        %v6396 = vadd.f32 %v4614, %v6395
        %v6397 = vpop.f32.mrb[0].mxu0
        %v6398 = vpop.f32.mrb[0].mxu0
        %v6399 = vadd.f32 %v4614, %v6398
        %v6400 = vpop.f32.mrb[0].mxu0
        %6401 = vdwg.mxu0
        %v6402 = vunpack.c.l.bf16 %v6294
        %v6403 = vunpack.c.h.bf16 %v6294
        %v6404 = vunpack.c.l.bf16 %v6297
        %v6405 = vunpack.c.h.bf16 %v6297
        %v6406 = vadd.f32 %v6402, %v6335
        %v6407 = vadd.f32 %v6403, %v6339
        %v6408 = vadd.f32 %v6404, %v6345
        %v6409 = vadd.f32 %v6405, %v6349
        %v6410 = vmul.f32 %v6406, 0.5
        %v6411 = vmul.f32 %v6407, 0.5
        %v6412 = vmul.f32 %v6408, 0.5
        %v6413 = vmul.f32 %v6409, 0.5
        %v6414 = vtanh.pop %v6410
        %v6415 = vtanh.pop %v6411
        %v6416 = vtanh.pop %v6412
        %v6417 = vtanh.pop %v6413
        %v6418 = vadd.f32 %v6414, 1.0
        %v6419 = vadd.f32 %v6415, 1.0
        %v6420 = vadd.f32 %v6416, 1.0
        %v6421 = vadd.f32 %v6417, 1.0
        %v6422 = vmul.f32 %v6418, 0.5
        %v6423 = vmul.f32 %v6419, 0.5
        %v6424 = vmul.f32 %v6420, 0.5
        %v6425 = vmul.f32 %v6421, 0.5
        %v6426 = vunpack.c.l.bf16 %v6295
        %v6427 = vunpack.c.h.bf16 %v6295
        %v6428 = vunpack.c.l.bf16 %v6298
        %v6429 = vunpack.c.h.bf16 %v6298
        %v6430 = vadd.f32 %v6426, %v6337
        %v6431 = vadd.f32 %v6427, %v6341
        %v6432 = vadd.f32 %v6428, %v6347
        %v6433 = vadd.f32 %v6429, %v6351
        %v6434 = vmul.f32 %v6430, 0.5
        %v6435 = vmul.f32 %v6431, 0.5
        %v6436 = vmul.f32 %v6432, 0.5
        %v6437 = vmul.f32 %v6433, 0.5
        %v6438 = vtanh.pop %v6434
        %v6439 = vtanh.pop %v6435
        %v6440 = vtanh.pop %v6436
        %v6441 = vtanh.pop %v6437
        %v6442 = vadd.f32 %v6438, 1.0
        %v6443 = vadd.f32 %v6439, 1.0
        %v6444 = vadd.f32 %v6440, 1.0
        %v6445 = vadd.f32 %v6441, 1.0
        %v6446 = vmul.f32 %v6442, 0.5
        %v6447 = vmul.f32 %v6443, 0.5
        %v6448 = vmul.f32 %v6444, 0.5
        %v6449 = vmul.f32 %v6445, 0.5
        %v6450 = vmul.f32 %v6422, %v6388
        %v6451 = vmul.f32 %v6423, %v6391
        %v6452 = vmul.f32 %v6424, %v6396
        %v6453 = vmul.f32 %v6425, %v6399
        %v6454 = vunpack.c.l.bf16 %v6296
        %v6455 = vunpack.c.h.bf16 %v6296
        %v6456 = vunpack.c.l.bf16 %v6299
        %v6457 = vunpack.c.h.bf16 %v6299
        %v6458 = vadd.f32 %v6454, %v6450
        %v6459 = vadd.f32 %v6455, %v6451
        %v6460 = vadd.f32 %v6456, %v6452
        %v6461 = vadd.f32 %v6457, %v6453
        %v6462 = vtanh.pop %v6458
        %v6463 = vtanh.pop %v6459
        %v6464 = vtanh.pop %v6460
        %v6465 = vtanh.pop %v6461
        %v6466 = vsub.f32 1.0, %v6446
        %v6467 = vsub.f32 1.0, %v6447
        %v6468 = vsub.f32 1.0, %v6448
        %v6469 = vsub.f32 1.0, %v6449
        %v6470 = vmul.f32 %v6466, %v6462
        %v6471 = vmul.f32 %v6467, %v6463
        %v6472 = vmul.f32 %v6468, %v6464
        %v6473 = vmul.f32 %v6469, %v6465
        %v6474 = vmul.f32 %v6446, %v6075
        %v6475 = vmul.f32 %v6447, %v6076
        %v6476 = vmul.f32 %v6448, %v6077
        %v6477 = vmul.f32 %v6449, %v6078
        %v6478 = vadd.f32 %v6470, %v6474
        %v6479 = vadd.f32 %v6471, %v6475
        %v6480 = vadd.f32 %v6472, %v6476
        %v6481 = vadd.f32 %v6473, %v6477
        %v6482 = vpack.c.bf16 %v6479, %v6478
        %v6483 = vpack.c.bf16 %v6291, %v6290
        %v6484 = vpack.c.bf16 %v6481, %v6480
        %v6485 = vpack.c.bf16 %v6293, %v6292
        %6486 = vmatprep.subr.bf16.mxu0 %v5072
        %6487 = vmatpush1.bf16.msra.mxu0 %v5071
        %6488 = vmatprep.subr.bf16.mxu0 %v5074
        %6489 = vmatpush1.bf16.msra.mxu0 %v5073
        %6490 = vmatprep.subr.bf16.mxu0 %v5076
        %6491 = vmatpush1.bf16.msra.mxu0 %v5075
        %6492 = vmatprep.subr.bf16.mxu0 %v5078
        %6493 = vmatpush1.bf16.msra.mxu0 %v5077
        %6494 = vmatprep.subr.bf16.mxu0 %v5080
        %6495 = vmatpush1.bf16.msra.mxu0 %v5079
        %6496 = vmatprep.subr.bf16.mxu0 %v5082
        %6497 = vmatpush1.bf16.msra.mxu0 %v5081
        %6498 = vmatprep.subr.bf16.mxu0 %v5084
        %6499 = vmatpush1.bf16.msra.mxu0 %v5083
        %6500 = vmatprep.subr.bf16.mxu0 %v5086
        %6501 = vmatpush1.bf16.msra.mxu0 %v5085
        %6502 = vmatprep.subr.bf16.mxu0 %v5088
        %6503 = vmatpush1.bf16.msra.mxu0 %v5087
        %6504 = vmatprep.subr.bf16.mxu0 %v5090
        %6505 = vmatpush1.bf16.msra.mxu0 %v5089
        %6506 = vmatprep.subr.bf16.mxu0 %v5092
        %6507 = vmatpush1.bf16.msra.mxu0 %v5091
        %6508 = vmatprep.subr.bf16.mxu0 %v5094
        %6509 = vmatpush1.bf16.msra.mxu0 %v5093
        %6510 = vmatprep.subr.bf16.mxu0 %v5096
        %6511 = vmatpush1.bf16.msra.mxu0 %v5095
        %6512 = vmatprep.subr.bf16.mxu0 %v5098
        %6513 = vmatpush1.bf16.msra.mxu0 %v5097
        %6514 = vmatprep.subr.bf16.mxu0 %v5100
        %6515 = vmatpush1.bf16.msra.mxu0 %v5099
        %6516 = vmatprep.subr.bf16.mxu0 %v5102
        %6517 = vmatpush1.bf16.msra.mxu0 %v5101
        %6518 = vmatprep.mubr.bf16.mxu0 %v6483
        %6519 = vmatmul.mubr.bf16.gmra.mrb[0].mxu0 %v6482
        %v6520 = vpop.f32.mrb[0].mxu0
        %v6521 = vadd.f32 %v4968, %v6520
        %v6522 = vpop.f32.mrb[0].mxu0
        %v6523 = vadd.f32 %v4972, %v6522
        %v6524 = vpop.f32.mrb[0].mxu0
        %v6525 = vadd.f32 %v4968, %v6524
        %v6526 = vpop.f32.mrb[0].mxu0
        %v6527 = vadd.f32 %v4972, %v6526
        %6528 = vmatprep.mubr.bf16.mxu0 %v6485
        %6529 = vmatmul.mubr.bf16.gmra.mrb[0].mxu0 %v6484
        %v6530 = vpop.f32.mrb[0].mxu0
        %v6531 = vadd.f32 %v4968, %v6530
        %v6532 = vpop.f32.mrb[0].mxu0
        %v6533 = vadd.f32 %v4972, %v6532
        %v6534 = vpop.f32.mrb[0].mxu0
        %v6535 = vadd.f32 %v4968, %v6534
        %v6536 = vpop.f32.mrb[0].mxu0
        %v6537 = vadd.f32 %v4972, %v6536
        %6538 = vdwg.mxu0
        %6539 = vmatprep.subr.bf16.mxu0 0
        %6540 = vmatpush1.bf16.msra.mxu0 %v5243
        %6541 = vmatprep.subr.bf16.mxu0 0
        %6542 = vmatpush1.bf16.msra.mxu0 %v5244
        %6543 = vmatprep.subr.bf16.mxu0 0
        %6544 = vmatpush1.bf16.msra.mxu0 %v5245
        %6545 = vmatprep.subr.bf16.mxu0 0
        %6546 = vmatpush1.bf16.msra.mxu0 %v5246
        %6547 = vmatprep.subr.bf16.mxu0 0
        %6548 = vmatpush1.bf16.msra.mxu0 %v5247
        %6549 = vmatprep.subr.bf16.mxu0 0
        %6550 = vmatpush1.bf16.msra.mxu0 %v5248
        %6551 = vmatprep.subr.bf16.mxu0 0
        %6552 = vmatpush1.bf16.msra.mxu0 %v5249
        %6553 = vmatprep.subr.bf16.mxu0 0
        %6554 = vmatpush1.bf16.msra.mxu0 %v5250
        %6555 = vmatprep.subr.bf16.mxu0 0
        %6556 = vmatpush1.bf16.msra.mxu0 0
        %6557 = vmatprep.subr.bf16.mxu0 0
        %6558 = vmatpush1.bf16.msra.mxu0 0
        %6559 = vmatprep.subr.bf16.mxu0 0
        %6560 = vmatpush1.bf16.msra.mxu0 0
        %6561 = vmatprep.subr.bf16.mxu0 0
        %6562 = vmatpush1.bf16.msra.mxu0 0
        %6563 = vmatprep.subr.bf16.mxu0 0
        %6564 = vmatpush1.bf16.msra.mxu0 0
        %6565 = vmatprep.subr.bf16.mxu0 0
        %6566 = vmatpush1.bf16.msra.mxu0 0
        %6567 = vmatprep.subr.bf16.mxu0 0
        %6568 = vmatpush1.bf16.msra.mxu0 0
        %6569 = vmatprep.subr.bf16.mxu0 0
        %6570 = vmatpush1.bf16.msra.mxu0 0
        %6571 = vmatprep.mubr.bf16.mxu0 0
        %6572 = vmatmul.mubr.bf16.gmra.mrb[0].mxu0 %v6482
        %v6573 = vpop.f32.mrb[0].mxu0
        %v6574 = vadd.f32 %v5209, %v6573
        %v6575 = vpop.f32.mrb[0].mxu0
        %v6576 = vpop.f32.mrb[0].mxu0
        %v6577 = vadd.f32 %v5209, %v6576
        %v6578 = vpop.f32.mrb[0].mxu0
        %6579 = vmatprep.mubr.bf16.mxu0 0
        %6580 = vmatmul.mubr.bf16.gmra.mrb[0].mxu0 %v6484
        %v6581 = vpop.f32.mrb[0].mxu0
        %v6582 = vadd.f32 %v5209, %v6581
        %v6583 = vpop.f32.mrb[0].mxu0
        %v6584 = vpop.f32.mrb[0].mxu0
        %v6585 = vadd.f32 %v5209, %v6584
        %v6586 = vpop.f32.mrb[0].mxu0
        %6587 = vdwg.mxu0
        %6588 = vmatprep.subr.bf16.mxu0 0
        %6589 = vmatpush1.bf16.msra.mxu0 %v5363
        %6590 = vmatprep.subr.bf16.mxu0 0
        %6591 = vmatpush1.bf16.msra.mxu0 %v5364
        %6592 = vmatprep.subr.bf16.mxu0 0
        %6593 = vmatpush1.bf16.msra.mxu0 %v5365
        %6594 = vmatprep.subr.bf16.mxu0 0
        %6595 = vmatpush1.bf16.msra.mxu0 %v5366
        %6596 = vmatprep.subr.bf16.mxu0 0
        %6597 = vmatpush1.bf16.msra.mxu0 %v5367
        %6598 = vmatprep.subr.bf16.mxu0 0
        %6599 = vmatpush1.bf16.msra.mxu0 %v5368
        %6600 = vmatprep.subr.bf16.mxu0 0
        %6601 = vmatpush1.bf16.msra.mxu0 %v5369
        %6602 = vmatprep.subr.bf16.mxu0 0
        %6603 = vmatpush1.bf16.msra.mxu0 %v5370
        %6604 = vmatprep.subr.bf16.mxu0 0
        %6605 = vmatpush1.bf16.msra.mxu0 0
        %6606 = vmatprep.subr.bf16.mxu0 0
        %6607 = vmatpush1.bf16.msra.mxu0 0
        %6608 = vmatprep.subr.bf16.mxu0 0
        %6609 = vmatpush1.bf16.msra.mxu0 0
        %6610 = vmatprep.subr.bf16.mxu0 0
        %6611 = vmatpush1.bf16.msra.mxu0 0
        %6612 = vmatprep.subr.bf16.mxu0 0
        %6613 = vmatpush1.bf16.msra.mxu0 0
        %6614 = vmatprep.subr.bf16.mxu0 0
        %6615 = vmatpush1.bf16.msra.mxu0 0
        %6616 = vmatprep.subr.bf16.mxu0 0
        %6617 = vmatpush1.bf16.msra.mxu0 0
        %6618 = vmatprep.subr.bf16.mxu0 0
        %6619 = vmatpush1.bf16.msra.mxu0 0
        %6620 = vmatprep.mubr.bf16.mxu0 0
        %6621 = vmatmul.mubr.bf16.gmra.mrb[0].mxu0 %v6483
        %v6622 = vpop.f32.mrb[0].mxu0
        %v6623 = vadd.f32 %v5329, %v6622
        %v6624 = vpop.f32.mrb[0].mxu0
        %v6625 = vpop.f32.mrb[0].mxu0
        %v6626 = vadd.f32 %v5329, %v6625
        %v6627 = vpop.f32.mrb[0].mxu0
        %6628 = vmatprep.mubr.bf16.mxu0 0
        %6629 = vmatmul.mubr.bf16.gmra.mrb[0].mxu0 %v6485
        %v6630 = vpop.f32.mrb[0].mxu0
        %v6631 = vadd.f32 %v5329, %v6630
        %v6632 = vpop.f32.mrb[0].mxu0
        %v6633 = vpop.f32.mrb[0].mxu0
        %v6634 = vadd.f32 %v5329, %v6633
        %v6635 = vpop.f32.mrb[0].mxu0
        %6636 = vdwg.mxu0
        %v6637 = vmul.f32 %v6521, 0.5
        %v6638 = vmul.f32 %v6525, 0.5
        %v6639 = vmul.f32 %v6531, 0.5
        %v6640 = vmul.f32 %v6535, 0.5
        %v6641 = vtanh.pop %v6637
        %v6642 = vtanh.pop %v6638
        %v6643 = vtanh.pop %v6639
        %v6644 = vtanh.pop %v6640
        %v6645 = vadd.f32 %v6641, 1.0
        %v6646 = vadd.f32 %v6642, 1.0
        %v6647 = vadd.f32 %v6643, 1.0
        %v6648 = vadd.f32 %v6644, 1.0
        %v6649 = vmul.f32 %v6645, 0.5
        %v6650 = vmul.f32 %v6646, 0.5
        %v6651 = vmul.f32 %v6647, 0.5
        %v6652 = vmul.f32 %v6648, 0.5
        %v6653 = vmul.f32 %v6523, 0.5
        %v6654 = vmul.f32 %v6527, 0.5
        %v6655 = vmul.f32 %v6533, 0.5
        %v6656 = vmul.f32 %v6537, 0.5
        %v6657 = vtanh.pop %v6653
        %v6658 = vtanh.pop %v6654
        %v6659 = vtanh.pop %v6655
        %v6660 = vtanh.pop %v6656
        %v6661 = vadd.f32 %v6657, 1.0
        %v6662 = vadd.f32 %v6658, 1.0
        %v6663 = vadd.f32 %v6659, 1.0
        %v6664 = vadd.f32 %v6660, 1.0
        %v6665 = vmul.f32 %v6661, 0.5
        %v6666 = vmul.f32 %v6662, 0.5
        %v6667 = vmul.f32 %v6663, 0.5
        %v6668 = vmul.f32 %v6664, 0.5
        %v6669 = vmul.f32 %v6649, %v6623
        %v6670 = vmul.f32 %v6650, %v6626
        %v6671 = vmul.f32 %v6651, %v6631
        %v6672 = vmul.f32 %v6652, %v6634
        %v6673 = vadd.f32 %v6574, %v6669
        %v6674 = vadd.f32 %v6577, %v6670
        %v6675 = vadd.f32 %v6582, %v6671
        %v6676 = vadd.f32 %v6585, %v6672
        %v6677 = vtanh.pop %v6673
        %v6678 = vtanh.pop %v6674
        %v6679 = vtanh.pop %v6675
        %v6680 = vtanh.pop %v6676
        %v6681 = vsub.f32 1.0, %v6665
        %v6682 = vsub.f32 1.0, %v6666
        %v6683 = vsub.f32 1.0, %v6667
        %v6684 = vsub.f32 1.0, %v6668
        %v6685 = vmul.f32 %v6681, %v6677
        %v6686 = vmul.f32 %v6682, %v6678
        %v6687 = vmul.f32 %v6683, %v6679
        %v6688 = vmul.f32 %v6684, %v6680
        %v6689 = vmul.f32 %v6665, %v6290
        %v6690 = vmul.f32 %v6666, %v6291
        %v6691 = vmul.f32 %v6667, %v6292
        %v6692 = vmul.f32 %v6668, %v6293
        %v6693 = vadd.f32 %v6685, %v6689
        %v6694 = vadd.f32 %v6686, %v6690
        %v6695 = vadd.f32 %v6687, %v6691
        %v6696 = vadd.f32 %v6688, %v6692
        %v6697 = vld [vmem:[%s3995] sm:$0xff]
        %v6698 = vld [vmem:[%s3995 + $0x8] sm:$0xff]
        %v6699 = vld [vmem:[%s3995 + $0x10] sm:$0xff]
        %v6700 = vld [vmem:[%s3995 + $0x18] sm:$0xff]
        %v6701 = vld [vmem:[%s3995 + $0x20] sm:$0xff]
        %v6702 = vld [vmem:[%s3995 + $0x28] sm:$0xff]
        %6703 = vmatprep.subr.bf16.mxu0 %v4699
        %6704 = vmatpush1.bf16.msra.mxu0 %v4698
        %6705 = vmatprep.subr.bf16.mxu0 %v4702
        %6706 = vmatpush1.bf16.msra.mxu0 %v4701
        %6707 = vmatprep.subr.bf16.mxu0 %v4705
        %6708 = vmatpush1.bf16.msra.mxu0 %v4704
        %6709 = vmatprep.subr.bf16.mxu0 %v4708
        %6710 = vmatpush1.bf16.msra.mxu0 %v4707
        %6711 = vmatprep.subr.bf16.mxu0 %v4711
        %6712 = vmatpush1.bf16.msra.mxu0 %v4710
        %6713 = vmatprep.subr.bf16.mxu0 %v4714
        %6714 = vmatpush1.bf16.msra.mxu0 %v4713
        %6715 = vmatprep.subr.bf16.mxu0 %v4717
        %6716 = vmatpush1.bf16.msra.mxu0 %v4716
        %6717 = vmatprep.subr.bf16.mxu0 %v4720
        %6718 = vmatpush1.bf16.msra.mxu0 %v4719
        %6719 = vmatprep.subr.bf16.mxu0 0
        %6720 = vmatpush1.bf16.msra.mxu0 0
        %6721 = vmatprep.subr.bf16.mxu0 0
        %6722 = vmatpush1.bf16.msra.mxu0 0
        %6723 = vmatprep.subr.bf16.mxu0 0
        %6724 = vmatpush1.bf16.msra.mxu0 0
        %6725 = vmatprep.subr.bf16.mxu0 0
        %6726 = vmatpush1.bf16.msra.mxu0 0
        %6727 = vmatprep.subr.bf16.mxu0 0
        %6728 = vmatpush1.bf16.msra.mxu0 0
        %6729 = vmatprep.subr.bf16.mxu0 0
        %6730 = vmatpush1.bf16.msra.mxu0 0
        %6731 = vmatprep.subr.bf16.mxu0 0
        %6732 = vmatpush1.bf16.msra.mxu0 0
        %6733 = vmatprep.subr.bf16.mxu0 0
        %6734 = vmatpush1.bf16.msra.mxu0 0
        %6735 = vmatprep.mubr.bf16.mxu0 0
        %6736 = vmatmul.mubr.bf16.gmra.mrb[0].mxu0 %v6482
        %v6737 = vpop.f32.mrb[0].mxu0
        %v6738 = vadd.f32 %v4606, %v6737
        %v6739 = vpop.f32.mrb[0].mxu0
        %v6740 = vadd.f32 %v4610, %v6739
        %v6741 = vpop.f32.mrb[0].mxu0
        %v6742 = vadd.f32 %v4606, %v6741
        %v6743 = vpop.f32.mrb[0].mxu0
        %v6744 = vadd.f32 %v4610, %v6743
        %6745 = vmatprep.mubr.bf16.mxu0 0
        %6746 = vmatmul.mubr.bf16.gmra.mrb[0].mxu0 %v6484
        %v6747 = vpop.f32.mrb[0].mxu0
        %v6748 = vadd.f32 %v4606, %v6747
        %v6749 = vpop.f32.mrb[0].mxu0
        %v6750 = vadd.f32 %v4610, %v6749
        %v6751 = vpop.f32.mrb[0].mxu0
        %v6752 = vadd.f32 %v4606, %v6751
        %v6753 = vpop.f32.mrb[0].mxu0
        %v6754 = vadd.f32 %v4610, %v6753
        %6755 = vdwg.mxu0
        %6756 = vmatprep.subr.bf16.mxu0 0
        %6757 = vmatpush1.bf16.msra.mxu0 %v4700
        %6758 = vmatprep.subr.bf16.mxu0 0
        %6759 = vmatpush1.bf16.msra.mxu0 %v4703
        %6760 = vmatprep.subr.bf16.mxu0 0
        %6761 = vmatpush1.bf16.msra.mxu0 %v4706
        %6762 = vmatprep.subr.bf16.mxu0 0
        %6763 = vmatpush1.bf16.msra.mxu0 %v4709
        %6764 = vmatprep.subr.bf16.mxu0 0
        %6765 = vmatpush1.bf16.msra.mxu0 %v4712
        %6766 = vmatprep.subr.bf16.mxu0 0
        %6767 = vmatpush1.bf16.msra.mxu0 %v4715
        %6768 = vmatprep.subr.bf16.mxu0 0
        %6769 = vmatpush1.bf16.msra.mxu0 %v4718
        %6770 = vmatprep.subr.bf16.mxu0 0
        %6771 = vmatpush1.bf16.msra.mxu0 %v4721
        %6772 = vmatprep.subr.bf16.mxu0 0
        %6773 = vmatpush1.bf16.msra.mxu0 0
        %6774 = vmatprep.subr.bf16.mxu0 0
        %6775 = vmatpush1.bf16.msra.mxu0 0
        %6776 = vmatprep.subr.bf16.mxu0 0
        %6777 = vmatpush1.bf16.msra.mxu0 0
        %6778 = vmatprep.subr.bf16.mxu0 0
        %6779 = vmatpush1.bf16.msra.mxu0 0
        %6780 = vmatprep.subr.bf16.mxu0 0
        %6781 = vmatpush1.bf16.msra.mxu0 0
        %6782 = vmatprep.subr.bf16.mxu0 0
        %6783 = vmatpush1.bf16.msra.mxu0 0
        %6784 = vmatprep.subr.bf16.mxu0 0
        %6785 = vmatpush1.bf16.msra.mxu0 0
        %6786 = vmatprep.subr.bf16.mxu0 0
        %6787 = vmatpush1.bf16.msra.mxu0 0
        %6788 = vmatprep.mubr.bf16.mxu0 0
        %6789 = vmatmul.mubr.bf16.gmra.mrb[0].mxu0 %v6482
        %v6790 = vpop.f32.mrb[0].mxu0
        %v6791 = vadd.f32 %v4614, %v6790
        %v6792 = vpop.f32.mrb[0].mxu0
        %v6793 = vpop.f32.mrb[0].mxu0
        %v6794 = vadd.f32 %v4614, %v6793
        %v6795 = vpop.f32.mrb[0].mxu0
        %6796 = vmatprep.mubr.bf16.mxu0 0
        %6797 = vmatmul.mubr.bf16.gmra.mrb[0].mxu0 %v6484
        %v6798 = vpop.f32.mrb[0].mxu0
        %v6799 = vadd.f32 %v4614, %v6798
        %v6800 = vpop.f32.mrb[0].mxu0
        %v6801 = vpop.f32.mrb[0].mxu0
        %v6802 = vadd.f32 %v4614, %v6801
        %v6803 = vpop.f32.mrb[0].mxu0
        %6804 = vdwg.mxu0
        %v6805 = vunpack.c.l.bf16 %v6697
        %v6806 = vunpack.c.h.bf16 %v6697
        %v6807 = vunpack.c.l.bf16 %v6700
        %v6808 = vunpack.c.h.bf16 %v6700
        %v6809 = vadd.f32 %v6805, %v6738
        %v6810 = vadd.f32 %v6806, %v6742
        %v6811 = vadd.f32 %v6807, %v6748
        %v6812 = vadd.f32 %v6808, %v6752
        %v6813 = vmul.f32 %v6809, 0.5
        %v6814 = vmul.f32 %v6810, 0.5
        %v6815 = vmul.f32 %v6811, 0.5
        %v6816 = vmul.f32 %v6812, 0.5
        %v6817 = vtanh.pop %v6813
        %v6818 = vtanh.pop %v6814
        %v6819 = vtanh.pop %v6815
        %v6820 = vtanh.pop %v6816
        %v6821 = vadd.f32 %v6817, 1.0
        %v6822 = vadd.f32 %v6818, 1.0
        %v6823 = vadd.f32 %v6819, 1.0
        %v6824 = vadd.f32 %v6820, 1.0
        %v6825 = vmul.f32 %v6821, 0.5
        %v6826 = vmul.f32 %v6822, 0.5
        %v6827 = vmul.f32 %v6823, 0.5
        %v6828 = vmul.f32 %v6824, 0.5
        %v6829 = vunpack.c.l.bf16 %v6698
        %v6830 = vunpack.c.h.bf16 %v6698
        %v6831 = vunpack.c.l.bf16 %v6701
        %v6832 = vunpack.c.h.bf16 %v6701
        %v6833 = vadd.f32 %v6829, %v6740
        %v6834 = vadd.f32 %v6830, %v6744
        %v6835 = vadd.f32 %v6831, %v6750
        %v6836 = vadd.f32 %v6832, %v6754
        %v6837 = vmul.f32 %v6833, 0.5
        %v6838 = vmul.f32 %v6834, 0.5
        %v6839 = vmul.f32 %v6835, 0.5
        %v6840 = vmul.f32 %v6836, 0.5
        %v6841 = vtanh.pop %v6837
        %v6842 = vtanh.pop %v6838
        %v6843 = vtanh.pop %v6839
        %v6844 = vtanh.pop %v6840
        %v6845 = vadd.f32 %v6841, 1.0
        %v6846 = vadd.f32 %v6842, 1.0
        %v6847 = vadd.f32 %v6843, 1.0
        %v6848 = vadd.f32 %v6844, 1.0
        %v6849 = vmul.f32 %v6845, 0.5
        %v6850 = vmul.f32 %v6846, 0.5
        %v6851 = vmul.f32 %v6847, 0.5
        %v6852 = vmul.f32 %v6848, 0.5
        %v6853 = vmul.f32 %v6825, %v6791
        %v6854 = vmul.f32 %v6826, %v6794
        %v6855 = vmul.f32 %v6827, %v6799
        %v6856 = vmul.f32 %v6828, %v6802
        %v6857 = vunpack.c.l.bf16 %v6699
        %v6858 = vunpack.c.h.bf16 %v6699
        %v6859 = vunpack.c.l.bf16 %v6702
        %v6860 = vunpack.c.h.bf16 %v6702
        %v6861 = vadd.f32 %v6857, %v6853
        %v6862 = vadd.f32 %v6858, %v6854
        %v6863 = vadd.f32 %v6859, %v6855
        %v6864 = vadd.f32 %v6860, %v6856
        %v6865 = vtanh.pop %v6861
        %v6866 = vtanh.pop %v6862
        %v6867 = vtanh.pop %v6863
        %v6868 = vtanh.pop %v6864
        %v6869 = vsub.f32 1.0, %v6849
        %v6870 = vsub.f32 1.0, %v6850
        %v6871 = vsub.f32 1.0, %v6851
        %v6872 = vsub.f32 1.0, %v6852
        %v6873 = vmul.f32 %v6869, %v6865
        %v6874 = vmul.f32 %v6870, %v6866
        %v6875 = vmul.f32 %v6871, %v6867
        %v6876 = vmul.f32 %v6872, %v6868
        %v6877 = vmul.f32 %v6849, %v6478
        %v6878 = vmul.f32 %v6850, %v6479
        %v6879 = vmul.f32 %v6851, %v6480
        %v6880 = vmul.f32 %v6852, %v6481
        %v6881 = vadd.f32 %v6873, %v6877
        %v6882 = vadd.f32 %v6874, %v6878
        %v6883 = vadd.f32 %v6875, %v6879
        %v6884 = vadd.f32 %v6876, %v6880
        %v6885 = vpack.c.bf16 %v6882, %v6881
        %v6886 = vpack.c.bf16 %v6694, %v6693
        %v6887 = vpack.c.bf16 %v6884, %v6883
        %v6888 = vpack.c.bf16 %v6696, %v6695
        %6889 = vmatprep.subr.bf16.mxu0 %v5072
        %6890 = vmatpush1.bf16.msra.mxu0 %v5071
        %6891 = vmatprep.subr.bf16.mxu0 %v5074
        %6892 = vmatpush1.bf16.msra.mxu0 %v5073
        %6893 = vmatprep.subr.bf16.mxu0 %v5076
        %6894 = vmatpush1.bf16.msra.mxu0 %v5075
        %6895 = vmatprep.subr.bf16.mxu0 %v5078
        %6896 = vmatpush1.bf16.msra.mxu0 %v5077
        %6897 = vmatprep.subr.bf16.mxu0 %v5080
        %6898 = vmatpush1.bf16.msra.mxu0 %v5079
        %6899 = vmatprep.subr.bf16.mxu0 %v5082
        %6900 = vmatpush1.bf16.msra.mxu0 %v5081
        %6901 = vmatprep.subr.bf16.mxu0 %v5084
        %6902 = vmatpush1.bf16.msra.mxu0 %v5083
        %6903 = vmatprep.subr.bf16.mxu0 %v5086
        %6904 = vmatpush1.bf16.msra.mxu0 %v5085
        %6905 = vmatprep.subr.bf16.mxu0 %v5088
        %6906 = vmatpush1.bf16.msra.mxu0 %v5087
        %6907 = vmatprep.subr.bf16.mxu0 %v5090
        %6908 = vmatpush1.bf16.msra.mxu0 %v5089
        %6909 = vmatprep.subr.bf16.mxu0 %v5092
        %6910 = vmatpush1.bf16.msra.mxu0 %v5091
        %6911 = vmatprep.subr.bf16.mxu0 %v5094
        %6912 = vmatpush1.bf16.msra.mxu0 %v5093
        %6913 = vmatprep.subr.bf16.mxu0 %v5096
        %6914 = vmatpush1.bf16.msra.mxu0 %v5095
        %6915 = vmatprep.subr.bf16.mxu0 %v5098
        %6916 = vmatpush1.bf16.msra.mxu0 %v5097
        %6917 = vmatprep.subr.bf16.mxu0 %v5100
        %6918 = vmatpush1.bf16.msra.mxu0 %v5099
        %6919 = vmatprep.subr.bf16.mxu0 %v5102
        %6920 = vmatpush1.bf16.msra.mxu0 %v5101
        %6921 = vmatprep.mubr.bf16.mxu0 %v6886
        %6922 = vmatmul.mubr.bf16.gmra.mrb[0].mxu0 %v6885
        %v6923 = vpop.f32.mrb[0].mxu0
        %v6924 = vadd.f32 %v4968, %v6923
        %v6925 = vpop.f32.mrb[0].mxu0
        %v6926 = vadd.f32 %v4972, %v6925
        %v6927 = vpop.f32.mrb[0].mxu0
        %v6928 = vadd.f32 %v4968, %v6927
        %v6929 = vpop.f32.mrb[0].mxu0
        %v6930 = vadd.f32 %v4972, %v6929
        %6931 = vmatprep.mubr.bf16.mxu0 %v6888
        %6932 = vmatmul.mubr.bf16.gmra.mrb[0].mxu0 %v6887
        %v6933 = vpop.f32.mrb[0].mxu0
        %v6934 = vadd.f32 %v4968, %v6933
        %v6935 = vpop.f32.mrb[0].mxu0
        %v6936 = vadd.f32 %v4972, %v6935
        %v6937 = vpop.f32.mrb[0].mxu0
        %v6938 = vadd.f32 %v4968, %v6937
        %v6939 = vpop.f32.mrb[0].mxu0
        %v6940 = vadd.f32 %v4972, %v6939
        %6941 = vdwg.mxu0
        %6942 = vmatprep.subr.bf16.mxu0 0
        %6943 = vmatpush1.bf16.msra.mxu0 %v5243
        %6944 = vmatprep.subr.bf16.mxu0 0
        %6945 = vmatpush1.bf16.msra.mxu0 %v5244
        %6946 = vmatprep.subr.bf16.mxu0 0
        %6947 = vmatpush1.bf16.msra.mxu0 %v5245
        %6948 = vmatprep.subr.bf16.mxu0 0
        %6949 = vmatpush1.bf16.msra.mxu0 %v5246
        %6950 = vmatprep.subr.bf16.mxu0 0
        %6951 = vmatpush1.bf16.msra.mxu0 %v5247
        %6952 = vmatprep.subr.bf16.mxu0 0
        %6953 = vmatpush1.bf16.msra.mxu0 %v5248
        %6954 = vmatprep.subr.bf16.mxu0 0
        %6955 = vmatpush1.bf16.msra.mxu0 %v5249
        %6956 = vmatprep.subr.bf16.mxu0 0
        %6957 = vmatpush1.bf16.msra.mxu0 %v5250
        %6958 = vmatprep.subr.bf16.mxu0 0
        %6959 = vmatpush1.bf16.msra.mxu0 0
        %6960 = vmatprep.subr.bf16.mxu0 0
        %6961 = vmatpush1.bf16.msra.mxu0 0
        %6962 = vmatprep.subr.bf16.mxu0 0
        %6963 = vmatpush1.bf16.msra.mxu0 0
        %6964 = vmatprep.subr.bf16.mxu0 0
        %6965 = vmatpush1.bf16.msra.mxu0 0
        %6966 = vmatprep.subr.bf16.mxu0 0
        %6967 = vmatpush1.bf16.msra.mxu0 0
        %6968 = vmatprep.subr.bf16.mxu0 0
        %6969 = vmatpush1.bf16.msra.mxu0 0
        %6970 = vmatprep.subr.bf16.mxu0 0
        %6971 = vmatpush1.bf16.msra.mxu0 0
        %6972 = vmatprep.subr.bf16.mxu0 0
        %6973 = vmatpush1.bf16.msra.mxu0 0
        %6974 = vmatprep.mubr.bf16.mxu0 0
        %6975 = vmatmul.mubr.bf16.gmra.mrb[0].mxu0 %v6885
        %v6976 = vpop.f32.mrb[0].mxu0
        %v6977 = vadd.f32 %v5209, %v6976
        %v6978 = vpop.f32.mrb[0].mxu0
        %v6979 = vpop.f32.mrb[0].mxu0
        %v6980 = vadd.f32 %v5209, %v6979
        %v6981 = vpop.f32.mrb[0].mxu0
        %6982 = vmatprep.mubr.bf16.mxu0 0
        %6983 = vmatmul.mubr.bf16.gmra.mrb[0].mxu0 %v6887
        %v6984 = vpop.f32.mrb[0].mxu0
        %v6985 = vadd.f32 %v5209, %v6984
        %v6986 = vpop.f32.mrb[0].mxu0
        %v6987 = vpop.f32.mrb[0].mxu0
        %v6988 = vadd.f32 %v5209, %v6987
        %v6989 = vpop.f32.mrb[0].mxu0
        %6990 = vdwg.mxu0
        %6991 = vmatprep.subr.bf16.mxu0 0
        %6992 = vmatpush1.bf16.msra.mxu0 %v5363
        %6993 = vmatprep.subr.bf16.mxu0 0
        %6994 = vmatpush1.bf16.msra.mxu0 %v5364
        %6995 = vmatprep.subr.bf16.mxu0 0
        %6996 = vmatpush1.bf16.msra.mxu0 %v5365
        %6997 = vmatprep.subr.bf16.mxu0 0
        %6998 = vmatpush1.bf16.msra.mxu0 %v5366
        %6999 = vmatprep.subr.bf16.mxu0 0
        %7000 = vmatpush1.bf16.msra.mxu0 %v5367
        %7001 = vmatprep.subr.bf16.mxu0 0
        %7002 = vmatpush1.bf16.msra.mxu0 %v5368
        %7003 = vmatprep.subr.bf16.mxu0 0
        %7004 = vmatpush1.bf16.msra.mxu0 %v5369
        %7005 = vmatprep.subr.bf16.mxu0 0
        %7006 = vmatpush1.bf16.msra.mxu0 %v5370
        %7007 = vmatprep.subr.bf16.mxu0 0
        %7008 = vmatpush1.bf16.msra.mxu0 0
        %7009 = vmatprep.subr.bf16.mxu0 0
        %7010 = vmatpush1.bf16.msra.mxu0 0
        %7011 = vmatprep.subr.bf16.mxu0 0
        %7012 = vmatpush1.bf16.msra.mxu0 0
        %7013 = vmatprep.subr.bf16.mxu0 0
        %7014 = vmatpush1.bf16.msra.mxu0 0
        %7015 = vmatprep.subr.bf16.mxu0 0
        %7016 = vmatpush1.bf16.msra.mxu0 0
        %7017 = vmatprep.subr.bf16.mxu0 0
        %7018 = vmatpush1.bf16.msra.mxu0 0
        %7019 = vmatprep.subr.bf16.mxu0 0
        %7020 = vmatpush1.bf16.msra.mxu0 0
        %7021 = vmatprep.subr.bf16.mxu0 0
        %7022 = vmatpush1.bf16.msra.mxu0 0
        %7023 = vmatprep.mubr.bf16.mxu0 0
        %7024 = vmatmul.mubr.bf16.gmra.mrb[0].mxu0 %v6886
        %v7025 = vpop.f32.mrb[0].mxu0
        %v7026 = vadd.f32 %v5329, %v7025
        %v7027 = vpop.f32.mrb[0].mxu0
        %v7028 = vpop.f32.mrb[0].mxu0
        %v7029 = vadd.f32 %v5329, %v7028
        %v7030 = vpop.f32.mrb[0].mxu0
        %7031 = vmatprep.mubr.bf16.mxu0 0
        %7032 = vmatmul.mubr.bf16.gmra.mrb[0].mxu0 %v6888
        %v7033 = vpop.f32.mrb[0].mxu0
        %v7034 = vadd.f32 %v5329, %v7033
        %v7035 = vpop.f32.mrb[0].mxu0
        %v7036 = vpop.f32.mrb[0].mxu0
        %v7037 = vadd.f32 %v5329, %v7036
        %v7038 = vpop.f32.mrb[0].mxu0
        %7039 = vdwg.mxu0
        %v7040 = vmul.f32 %v6924, 0.5
        %v7041 = vmul.f32 %v6928, 0.5
        %v7042 = vmul.f32 %v6934, 0.5
        %v7043 = vmul.f32 %v6938, 0.5
        %v7044 = vtanh.pop %v7040
        %v7045 = vtanh.pop %v7041
        %v7046 = vtanh.pop %v7042
        %v7047 = vtanh.pop %v7043
        %v7048 = vadd.f32 %v7044, 1.0
        %v7049 = vadd.f32 %v7045, 1.0
        %v7050 = vadd.f32 %v7046, 1.0
        %v7051 = vadd.f32 %v7047, 1.0
        %v7052 = vmul.f32 %v7048, 0.5
        %v7053 = vmul.f32 %v7049, 0.5
        %v7054 = vmul.f32 %v7050, 0.5
        %v7055 = vmul.f32 %v7051, 0.5
        %v7056 = vmul.f32 %v6926, 0.5
        %v7057 = vmul.f32 %v6930, 0.5
        %v7058 = vmul.f32 %v6936, 0.5
        %v7059 = vmul.f32 %v6940, 0.5
        %v7060 = vtanh.pop %v7056
        %v7061 = vtanh.pop %v7057
        %v7062 = vtanh.pop %v7058
        %v7063 = vtanh.pop %v7059
        %v7064 = vadd.f32 %v7060, 1.0
        %v7065 = vadd.f32 %v7061, 1.0
        %v7066 = vadd.f32 %v7062, 1.0
        %v7067 = vadd.f32 %v7063, 1.0
        %v7068 = vmul.f32 %v7064, 0.5
        %v7069 = vmul.f32 %v7065, 0.5
        %v7070 = vmul.f32 %v7066, 0.5
        %v7071 = vmul.f32 %v7067, 0.5
        %v7072 = vmul.f32 %v7052, %v7026
        %v7073 = vmul.f32 %v7053, %v7029
        %v7074 = vmul.f32 %v7054, %v7034
        %v7075 = vmul.f32 %v7055, %v7037
        %v7076 = vadd.f32 %v6977, %v7072
        %v7077 = vadd.f32 %v6980, %v7073
        %v7078 = vadd.f32 %v6985, %v7074
        %v7079 = vadd.f32 %v6988, %v7075
        %v7080 = vtanh.pop %v7076
        %v7081 = vtanh.pop %v7077
        %v7082 = vtanh.pop %v7078
        %v7083 = vtanh.pop %v7079
        %v7084 = vsub.f32 1.0, %v7068
        %v7085 = vsub.f32 1.0, %v7069
        %v7086 = vsub.f32 1.0, %v7070
        %v7087 = vsub.f32 1.0, %v7071
        %v7088 = vmul.f32 %v7084, %v7080
        %v7089 = vmul.f32 %v7085, %v7081
        %v7090 = vmul.f32 %v7086, %v7082
        %v7091 = vmul.f32 %v7087, %v7083
        %v7092 = vmul.f32 %v7068, %v6693
        %v7093 = vmul.f32 %v7069, %v6694
        %v7094 = vmul.f32 %v7070, %v6695
        %v7095 = vmul.f32 %v7071, %v6696
        %v7096 = vadd.f32 %v7088, %v7092
        %v7097 = vadd.f32 %v7089, %v7093
        %v7098 = vadd.f32 %v7090, %v7094
        %v7099 = vadd.f32 %v7091, %v7095
        %v7100 = vld [vmem:[%s4182] sm:$0xff]
        %v7101 = vld [vmem:[%s4182 + $0x8] sm:$0xff]
        %v7102 = vld [vmem:[%s4182 + $0x10] sm:$0xff]
        %v7103 = vld [vmem:[%s4182 + $0x18] sm:$0xff]
        %v7104 = vld [vmem:[%s4182 + $0x20] sm:$0xff]
        %v7105 = vld [vmem:[%s4182 + $0x28] sm:$0xff]
        %7106 = vmatprep.subr.bf16.mxu0 %v4699
        %7107 = vmatpush1.bf16.msra.mxu0 %v4698
        %7108 = vmatprep.subr.bf16.mxu0 %v4702
        %7109 = vmatpush1.bf16.msra.mxu0 %v4701
        %7110 = vmatprep.subr.bf16.mxu0 %v4705
        %7111 = vmatpush1.bf16.msra.mxu0 %v4704
        %7112 = vmatprep.subr.bf16.mxu0 %v4708
        %7113 = vmatpush1.bf16.msra.mxu0 %v4707
        %7114 = vmatprep.subr.bf16.mxu0 %v4711
        %7115 = vmatpush1.bf16.msra.mxu0 %v4710
        %7116 = vmatprep.subr.bf16.mxu0 %v4714
        %7117 = vmatpush1.bf16.msra.mxu0 %v4713
        %7118 = vmatprep.subr.bf16.mxu0 %v4717
        %7119 = vmatpush1.bf16.msra.mxu0 %v4716
        %7120 = vmatprep.subr.bf16.mxu0 %v4720
        %7121 = vmatpush1.bf16.msra.mxu0 %v4719
        %7122 = vmatprep.subr.bf16.mxu0 0
        %7123 = vmatpush1.bf16.msra.mxu0 0
        %7124 = vmatprep.subr.bf16.mxu0 0
        %7125 = vmatpush1.bf16.msra.mxu0 0
        %7126 = vmatprep.subr.bf16.mxu0 0
        %7127 = vmatpush1.bf16.msra.mxu0 0
        %7128 = vmatprep.subr.bf16.mxu0 0
        %7129 = vmatpush1.bf16.msra.mxu0 0
        %7130 = vmatprep.subr.bf16.mxu0 0
        %7131 = vmatpush1.bf16.msra.mxu0 0
        %7132 = vmatprep.subr.bf16.mxu0 0
        %7133 = vmatpush1.bf16.msra.mxu0 0
        %7134 = vmatprep.subr.bf16.mxu0 0
        %7135 = vmatpush1.bf16.msra.mxu0 0
        %7136 = vmatprep.subr.bf16.mxu0 0
        %7137 = vmatpush1.bf16.msra.mxu0 0
        %7138 = vmatprep.mubr.bf16.mxu0 0
        %7139 = vmatmul.mubr.bf16.gmra.mrb[0].mxu0 %v6885
        %v7140 = vpop.f32.mrb[0].mxu0
        %v7141 = vadd.f32 %v4606, %v7140
        %v7142 = vpop.f32.mrb[0].mxu0
        %v7143 = vadd.f32 %v4610, %v7142
        %v7144 = vpop.f32.mrb[0].mxu0
        %v7145 = vadd.f32 %v4606, %v7144
        %v7146 = vpop.f32.mrb[0].mxu0
        %v7147 = vadd.f32 %v4610, %v7146
        %7148 = vmatprep.mubr.bf16.mxu0 0
        %7149 = vmatmul.mubr.bf16.gmra.mrb[0].mxu0 %v6887
        %v7150 = vpop.f32.mrb[0].mxu0
        %v7151 = vadd.f32 %v4606, %v7150
        %v7152 = vpop.f32.mrb[0].mxu0
        %v7153 = vadd.f32 %v4610, %v7152
        %v7154 = vpop.f32.mrb[0].mxu0
        %v7155 = vadd.f32 %v4606, %v7154
        %v7156 = vpop.f32.mrb[0].mxu0
        %v7157 = vadd.f32 %v4610, %v7156
        %7158 = vdwg.mxu0
        %7159 = vmatprep.subr.bf16.mxu0 0
        %7160 = vmatpush1.bf16.msra.mxu0 %v4700
        %7161 = vmatprep.subr.bf16.mxu0 0
        %7162 = vmatpush1.bf16.msra.mxu0 %v4703
        %7163 = vmatprep.subr.bf16.mxu0 0
        %7164 = vmatpush1.bf16.msra.mxu0 %v4706
        %7165 = vmatprep.subr.bf16.mxu0 0
        %7166 = vmatpush1.bf16.msra.mxu0 %v4709
        %7167 = vmatprep.subr.bf16.mxu0 0
        %7168 = vmatpush1.bf16.msra.mxu0 %v4712
        %7169 = vmatprep.subr.bf16.mxu0 0
        %7170 = vmatpush1.bf16.msra.mxu0 %v4715
        %7171 = vmatprep.subr.bf16.mxu0 0
        %7172 = vmatpush1.bf16.msra.mxu0 %v4718
        %7173 = vmatprep.subr.bf16.mxu0 0
        %7174 = vmatpush1.bf16.msra.mxu0 %v4721
        %7175 = vmatprep.subr.bf16.mxu0 0
        %7176 = vmatpush1.bf16.msra.mxu0 0
        %7177 = vmatprep.subr.bf16.mxu0 0
        %7178 = vmatpush1.bf16.msra.mxu0 0
        %7179 = vmatprep.subr.bf16.mxu0 0
        %7180 = vmatpush1.bf16.msra.mxu0 0
        %7181 = vmatprep.subr.bf16.mxu0 0
        %7182 = vmatpush1.bf16.msra.mxu0 0
        %7183 = vmatprep.subr.bf16.mxu0 0
        %7184 = vmatpush1.bf16.msra.mxu0 0
        %7185 = vmatprep.subr.bf16.mxu0 0
        %7186 = vmatpush1.bf16.msra.mxu0 0
        %7187 = vmatprep.subr.bf16.mxu0 0
        %7188 = vmatpush1.bf16.msra.mxu0 0
        %7189 = vmatprep.subr.bf16.mxu0 0
        %7190 = vmatpush1.bf16.msra.mxu0 0
        %7191 = vmatprep.mubr.bf16.mxu0 0
        %7192 = vmatmul.mubr.bf16.gmra.mrb[0].mxu0 %v6885
        %v7193 = vpop.f32.mrb[0].mxu0
        %v7194 = vadd.f32 %v4614, %v7193
        %v7195 = vpop.f32.mrb[0].mxu0
        %v7196 = vpop.f32.mrb[0].mxu0
        %v7197 = vadd.f32 %v4614, %v7196
        %v7198 = vpop.f32.mrb[0].mxu0
        %7199 = vmatprep.mubr.bf16.mxu0 0
        %7200 = vmatmul.mubr.bf16.gmra.mrb[0].mxu0 %v6887
        %v7201 = vpop.f32.mrb[0].mxu0
        %v7202 = vadd.f32 %v4614, %v7201
        %v7203 = vpop.f32.mrb[0].mxu0
        %v7204 = vpop.f32.mrb[0].mxu0
        %v7205 = vadd.f32 %v4614, %v7204
        %v7206 = vpop.f32.mrb[0].mxu0
        %7207 = vdwg.mxu0
        %v7208 = vunpack.c.l.bf16 %v7100
        %v7209 = vunpack.c.h.bf16 %v7100
        %v7210 = vunpack.c.l.bf16 %v7103
        %v7211 = vunpack.c.h.bf16 %v7103
        %v7212 = vadd.f32 %v7208, %v7141
        %v7213 = vadd.f32 %v7209, %v7145
        %v7214 = vadd.f32 %v7210, %v7151
        %v7215 = vadd.f32 %v7211, %v7155
        %v7216 = vmul.f32 %v7212, 0.5
        %v7217 = vmul.f32 %v7213, 0.5
        %v7218 = vmul.f32 %v7214, 0.5
        %v7219 = vmul.f32 %v7215, 0.5
        %v7220 = vtanh.pop %v7216
        %v7221 = vtanh.pop %v7217
        %v7222 = vtanh.pop %v7218
        %v7223 = vtanh.pop %v7219
        %v7224 = vadd.f32 %v7220, 1.0
        %v7225 = vadd.f32 %v7221, 1.0
        %v7226 = vadd.f32 %v7222, 1.0
        %v7227 = vadd.f32 %v7223, 1.0
        %v7228 = vmul.f32 %v7224, 0.5
        %v7229 = vmul.f32 %v7225, 0.5
        %v7230 = vmul.f32 %v7226, 0.5
        %v7231 = vmul.f32 %v7227, 0.5
        %v7232 = vunpack.c.l.bf16 %v7101
        %v7233 = vunpack.c.h.bf16 %v7101
        %v7234 = vunpack.c.l.bf16 %v7104
        %v7235 = vunpack.c.h.bf16 %v7104
        %v7236 = vadd.f32 %v7232, %v7143
        %v7237 = vadd.f32 %v7233, %v7147
        %v7238 = vadd.f32 %v7234, %v7153
        %v7239 = vadd.f32 %v7235, %v7157
        %v7240 = vmul.f32 %v7236, 0.5
        %v7241 = vmul.f32 %v7237, 0.5
        %v7242 = vmul.f32 %v7238, 0.5
        %v7243 = vmul.f32 %v7239, 0.5
        %v7244 = vtanh.pop %v7240
        %v7245 = vtanh.pop %v7241
        %v7246 = vtanh.pop %v7242
        %v7247 = vtanh.pop %v7243
        %v7248 = vadd.f32 %v7244, 1.0
        %v7249 = vadd.f32 %v7245, 1.0
        %v7250 = vadd.f32 %v7246, 1.0
        %v7251 = vadd.f32 %v7247, 1.0
        %v7252 = vmul.f32 %v7248, 0.5
        %v7253 = vmul.f32 %v7249, 0.5
        %v7254 = vmul.f32 %v7250, 0.5
        %v7255 = vmul.f32 %v7251, 0.5
        %v7256 = vmul.f32 %v7228, %v7194
        %v7257 = vmul.f32 %v7229, %v7197
        %v7258 = vmul.f32 %v7230, %v7202
        %v7259 = vmul.f32 %v7231, %v7205
        %v7260 = vunpack.c.l.bf16 %v7102
        %v7261 = vunpack.c.h.bf16 %v7102
        %v7262 = vunpack.c.l.bf16 %v7105
        %v7263 = vunpack.c.h.bf16 %v7105
        %v7264 = vadd.f32 %v7260, %v7256
        %v7265 = vadd.f32 %v7261, %v7257
        %v7266 = vadd.f32 %v7262, %v7258
        %v7267 = vadd.f32 %v7263, %v7259
        %v7268 = vtanh.pop %v7264
        %v7269 = vtanh.pop %v7265
        %v7270 = vtanh.pop %v7266
        %v7271 = vtanh.pop %v7267
        %v7272 = vsub.f32 1.0, %v7252
        %v7273 = vsub.f32 1.0, %v7253
        %v7274 = vsub.f32 1.0, %v7254
        %v7275 = vsub.f32 1.0, %v7255
        %v7276 = vmul.f32 %v7272, %v7268
        %v7277 = vmul.f32 %v7273, %v7269
        %v7278 = vmul.f32 %v7274, %v7270
        %v7279 = vmul.f32 %v7275, %v7271
        %v7280 = vmul.f32 %v7252, %v6881
        %v7281 = vmul.f32 %v7253, %v6882
        %v7282 = vmul.f32 %v7254, %v6883
        %v7283 = vmul.f32 %v7255, %v6884
        %v7284 = vadd.f32 %v7276, %v7280
        %v7285 = vadd.f32 %v7277, %v7281
        %v7286 = vadd.f32 %v7278, %v7282
        %v7287 = vadd.f32 %v7279, %v7283
        %v7288 = vpack.c.bf16 %v7285, %v7284
        %v7289 = vpack.c.bf16 %v7097, %v7096
        %v7290 = vpack.c.bf16 %v7287, %v7286
        %v7291 = vpack.c.bf16 %v7099, %v7098
        %7292 = vmatprep.subr.bf16.mxu0 %v5072
        %7293 = vmatpush1.bf16.msra.mxu0 %v5071
        %7294 = vmatprep.subr.bf16.mxu0 %v5074
        %7295 = vmatpush1.bf16.msra.mxu0 %v5073
        %7296 = vmatprep.subr.bf16.mxu0 %v5076
        %7297 = vmatpush1.bf16.msra.mxu0 %v5075
        %7298 = vmatprep.subr.bf16.mxu0 %v5078
        %7299 = vmatpush1.bf16.msra.mxu0 %v5077
        %7300 = vmatprep.subr.bf16.mxu0 %v5080
        %7301 = vmatpush1.bf16.msra.mxu0 %v5079
        %7302 = vmatprep.subr.bf16.mxu0 %v5082
        %7303 = vmatpush1.bf16.msra.mxu0 %v5081
        %7304 = vmatprep.subr.bf16.mxu0 %v5084
        %7305 = vmatpush1.bf16.msra.mxu0 %v5083
        %7306 = vmatprep.subr.bf16.mxu0 %v5086
        %7307 = vmatpush1.bf16.msra.mxu0 %v5085
        %7308 = vmatprep.subr.bf16.mxu0 %v5088
        %7309 = vmatpush1.bf16.msra.mxu0 %v5087
        %7310 = vmatprep.subr.bf16.mxu0 %v5090
        %7311 = vmatpush1.bf16.msra.mxu0 %v5089
        %7312 = vmatprep.subr.bf16.mxu0 %v5092
        %7313 = vmatpush1.bf16.msra.mxu0 %v5091
        %7314 = vmatprep.subr.bf16.mxu0 %v5094
        %7315 = vmatpush1.bf16.msra.mxu0 %v5093
        %7316 = vmatprep.subr.bf16.mxu0 %v5096
        %7317 = vmatpush1.bf16.msra.mxu0 %v5095
        %7318 = vmatprep.subr.bf16.mxu0 %v5098
        %7319 = vmatpush1.bf16.msra.mxu0 %v5097
        %7320 = vmatprep.subr.bf16.mxu0 %v5100
        %7321 = vmatpush1.bf16.msra.mxu0 %v5099
        %7322 = vmatprep.subr.bf16.mxu0 %v5102
        %7323 = vmatpush1.bf16.msra.mxu0 %v5101
        %7324 = vmatprep.mubr.bf16.mxu0 %v7289
        %7325 = vmatmul.mubr.bf16.gmra.mrb[0].mxu0 %v7288
        %v7326 = vpop.f32.mrb[0].mxu0
        %v7327 = vadd.f32 %v4968, %v7326
        %v7328 = vpop.f32.mrb[0].mxu0
        %v7329 = vadd.f32 %v4972, %v7328
        %v7330 = vpop.f32.mrb[0].mxu0
        %v7331 = vadd.f32 %v4968, %v7330
        %v7332 = vpop.f32.mrb[0].mxu0
        %v7333 = vadd.f32 %v4972, %v7332
        %7334 = vmatprep.mubr.bf16.mxu0 %v7291
        %7335 = vmatmul.mubr.bf16.gmra.mrb[0].mxu0 %v7290
        %v7336 = vpop.f32.mrb[0].mxu0
        %v7337 = vadd.f32 %v4968, %v7336
        %v7338 = vpop.f32.mrb[0].mxu0
        %v7339 = vadd.f32 %v4972, %v7338
        %v7340 = vpop.f32.mrb[0].mxu0
        %v7341 = vadd.f32 %v4968, %v7340
        %v7342 = vpop.f32.mrb[0].mxu0
        %v7343 = vadd.f32 %v4972, %v7342
        %7344 = vdwg.mxu0
        %7345 = vmatprep.subr.bf16.mxu0 0
        %7346 = vmatpush1.bf16.msra.mxu0 %v5243
        %7347 = vmatprep.subr.bf16.mxu0 0
        %7348 = vmatpush1.bf16.msra.mxu0 %v5244
        %7349 = vmatprep.subr.bf16.mxu0 0
        %7350 = vmatpush1.bf16.msra.mxu0 %v5245
        %7351 = vmatprep.subr.bf16.mxu0 0
        %7352 = vmatpush1.bf16.msra.mxu0 %v5246
        %7353 = vmatprep.subr.bf16.mxu0 0
        %7354 = vmatpush1.bf16.msra.mxu0 %v5247
        %7355 = vmatprep.subr.bf16.mxu0 0
        %7356 = vmatpush1.bf16.msra.mxu0 %v5248
        %7357 = vmatprep.subr.bf16.mxu0 0
        %7358 = vmatpush1.bf16.msra.mxu0 %v5249
        %7359 = vmatprep.subr.bf16.mxu0 0
        %7360 = vmatpush1.bf16.msra.mxu0 %v5250
        %7361 = vmatprep.subr.bf16.mxu0 0
        %7362 = vmatpush1.bf16.msra.mxu0 0
        %7363 = vmatprep.subr.bf16.mxu0 0
        %7364 = vmatpush1.bf16.msra.mxu0 0
        %7365 = vmatprep.subr.bf16.mxu0 0
        %7366 = vmatpush1.bf16.msra.mxu0 0
        %7367 = vmatprep.subr.bf16.mxu0 0
        %7368 = vmatpush1.bf16.msra.mxu0 0
        %7369 = vmatprep.subr.bf16.mxu0 0
        %7370 = vmatpush1.bf16.msra.mxu0 0
        %7371 = vmatprep.subr.bf16.mxu0 0
        %7372 = vmatpush1.bf16.msra.mxu0 0
        %7373 = vmatprep.subr.bf16.mxu0 0
        %7374 = vmatpush1.bf16.msra.mxu0 0
        %7375 = vmatprep.subr.bf16.mxu0 0
        %7376 = vmatpush1.bf16.msra.mxu0 0
        %7377 = vmatprep.mubr.bf16.mxu0 0
        %7378 = vmatmul.mubr.bf16.gmra.mrb[0].mxu0 %v7288
        %v7379 = vpop.f32.mrb[0].mxu0
        %v7380 = vadd.f32 %v5209, %v7379
        %v7381 = vpop.f32.mrb[0].mxu0
        %v7382 = vpop.f32.mrb[0].mxu0
        %v7383 = vadd.f32 %v5209, %v7382
        %v7384 = vpop.f32.mrb[0].mxu0
        %7385 = vmatprep.mubr.bf16.mxu0 0
        %7386 = vmatmul.mubr.bf16.gmra.mrb[0].mxu0 %v7290
        %v7387 = vpop.f32.mrb[0].mxu0
        %v7388 = vadd.f32 %v5209, %v7387
        %v7389 = vpop.f32.mrb[0].mxu0
        %v7390 = vpop.f32.mrb[0].mxu0
        %v7391 = vadd.f32 %v5209, %v7390
        %v7392 = vpop.f32.mrb[0].mxu0
        %7393 = vdwg.mxu0
        %7394 = vmatprep.subr.bf16.mxu0 0
        %7395 = vmatpush1.bf16.msra.mxu0 %v5363
        %7396 = vmatprep.subr.bf16.mxu0 0
        %7397 = vmatpush1.bf16.msra.mxu0 %v5364
        %7398 = vmatprep.subr.bf16.mxu0 0
        %7399 = vmatpush1.bf16.msra.mxu0 %v5365
        %7400 = vmatprep.subr.bf16.mxu0 0
        %7401 = vmatpush1.bf16.msra.mxu0 %v5366
        %7402 = vmatprep.subr.bf16.mxu0 0
        %7403 = vmatpush1.bf16.msra.mxu0 %v5367
        %7404 = vmatprep.subr.bf16.mxu0 0
        %7405 = vmatpush1.bf16.msra.mxu0 %v5368
        %7406 = vmatprep.subr.bf16.mxu0 0
        %7407 = vmatpush1.bf16.msra.mxu0 %v5369
        %7408 = vmatprep.subr.bf16.mxu0 0
        %7409 = vmatpush1.bf16.msra.mxu0 %v5370
        %7410 = vmatprep.subr.bf16.mxu0 0
        %7411 = vmatpush1.bf16.msra.mxu0 0
        %7412 = vmatprep.subr.bf16.mxu0 0
        %7413 = vmatpush1.bf16.msra.mxu0 0
        %7414 = vmatprep.subr.bf16.mxu0 0
        %7415 = vmatpush1.bf16.msra.mxu0 0
        %7416 = vmatprep.subr.bf16.mxu0 0
        %7417 = vmatpush1.bf16.msra.mxu0 0
        %7418 = vmatprep.subr.bf16.mxu0 0
        %7419 = vmatpush1.bf16.msra.mxu0 0
        %7420 = vmatprep.subr.bf16.mxu0 0
        %7421 = vmatpush1.bf16.msra.mxu0 0
        %7422 = vmatprep.subr.bf16.mxu0 0
        %7423 = vmatpush1.bf16.msra.mxu0 0
        %7424 = vmatprep.subr.bf16.mxu0 0
        %7425 = vmatpush1.bf16.msra.mxu0 0
        %7426 = vmatprep.mubr.bf16.mxu0 0
        %7427 = vmatmul.mubr.bf16.gmra.mrb[0].mxu0 %v7289
        %v7428 = vpop.f32.mrb[0].mxu0
        %v7429 = vadd.f32 %v5329, %v7428
        %v7430 = vpop.f32.mrb[0].mxu0
        %v7431 = vpop.f32.mrb[0].mxu0
        %v7432 = vadd.f32 %v5329, %v7431
        %v7433 = vpop.f32.mrb[0].mxu0
        %7434 = vmatprep.mubr.bf16.mxu0 0
        %7435 = vmatmul.mubr.bf16.gmra.mrb[0].mxu0 %v7291
        %v7436 = vpop.f32.mrb[0].mxu0
        %v7437 = vadd.f32 %v5329, %v7436
        %v7438 = vpop.f32.mrb[0].mxu0
        %v7439 = vpop.f32.mrb[0].mxu0
        %v7440 = vadd.f32 %v5329, %v7439
        %v7441 = vpop.f32.mrb[0].mxu0
        %7442 = vdwg.mxu0
        %v7443 = vmul.f32 %v7327, 0.5
        %v7444 = vmul.f32 %v7331, 0.5
        %v7445 = vmul.f32 %v7337, 0.5
        %v7446 = vmul.f32 %v7341, 0.5
        %v7447 = vtanh.pop %v7443
        %v7448 = vtanh.pop %v7444
        %v7449 = vtanh.pop %v7445
        %v7450 = vtanh.pop %v7446
        %v7451 = vadd.f32 %v7447, 1.0
        %v7452 = vadd.f32 %v7448, 1.0
        %v7453 = vadd.f32 %v7449, 1.0
        %v7454 = vadd.f32 %v7450, 1.0
        %v7455 = vmul.f32 %v7451, 0.5
        %v7456 = vmul.f32 %v7452, 0.5
        %v7457 = vmul.f32 %v7453, 0.5
        %v7458 = vmul.f32 %v7454, 0.5
        %v7459 = vmul.f32 %v7329, 0.5
        %v7460 = vmul.f32 %v7333, 0.5
        %v7461 = vmul.f32 %v7339, 0.5
        %v7462 = vmul.f32 %v7343, 0.5
        %v7463 = vtanh.pop %v7459
        %v7464 = vtanh.pop %v7460
        %v7465 = vtanh.pop %v7461
        %v7466 = vtanh.pop %v7462
        %v7467 = vadd.f32 %v7463, 1.0
        %v7468 = vadd.f32 %v7464, 1.0
        %v7469 = vadd.f32 %v7465, 1.0
        %v7470 = vadd.f32 %v7466, 1.0
        %v7471 = vmul.f32 %v7467, 0.5
        %v7472 = vmul.f32 %v7468, 0.5
        %v7473 = vmul.f32 %v7469, 0.5
        %v7474 = vmul.f32 %v7470, 0.5
        %v7475 = vmul.f32 %v7455, %v7429
        %v7476 = vmul.f32 %v7456, %v7432
        %v7477 = vmul.f32 %v7457, %v7437
        %v7478 = vmul.f32 %v7458, %v7440
        %v7479 = vadd.f32 %v7380, %v7475
        %v7480 = vadd.f32 %v7383, %v7476
        %v7481 = vadd.f32 %v7388, %v7477
        %v7482 = vadd.f32 %v7391, %v7478
        %v7483 = vtanh.pop %v7479
        %v7484 = vtanh.pop %v7480
        %v7485 = vtanh.pop %v7481
        %v7486 = vtanh.pop %v7482
        %v7487 = vsub.f32 1.0, %v7471
        %v7488 = vsub.f32 1.0, %v7472
        %v7489 = vsub.f32 1.0, %v7473
        %v7490 = vsub.f32 1.0, %v7474
        %v7491 = vmul.f32 %v7487, %v7483
        %v7492 = vmul.f32 %v7488, %v7484
        %v7493 = vmul.f32 %v7489, %v7485
        %v7494 = vmul.f32 %v7490, %v7486
        %v7495 = vmul.f32 %v7471, %v7096
        %v7496 = vmul.f32 %v7472, %v7097
        %v7497 = vmul.f32 %v7473, %v7098
        %v7498 = vmul.f32 %v7474, %v7099
        %v7499 = vadd.f32 %v7491, %v7495
        %v7500 = vadd.f32 %v7492, %v7496
        %v7501 = vadd.f32 %v7493, %v7497
        %v7502 = vadd.f32 %v7494, %v7498
        %v7503 = vld [vmem:[%s4369] sm:$0xff]
        %v7504 = vld [vmem:[%s4369 + $0x8] sm:$0xff]
        %v7505 = vld [vmem:[%s4369 + $0x10] sm:$0xff]
        %v7506 = vld [vmem:[%s4369 + $0x18] sm:$0xff]
        %v7507 = vld [vmem:[%s4369 + $0x20] sm:$0xff]
        %v7508 = vld [vmem:[%s4369 + $0x28] sm:$0xff]
        %7509 = vmatprep.subr.bf16.mxu0 %v4699
        %7510 = vmatpush1.bf16.msra.mxu0 %v4698
        %7511 = vmatprep.subr.bf16.mxu0 %v4702
        %7512 = vmatpush1.bf16.msra.mxu0 %v4701
        %7513 = vmatprep.subr.bf16.mxu0 %v4705
        %7514 = vmatpush1.bf16.msra.mxu0 %v4704
        %7515 = vmatprep.subr.bf16.mxu0 %v4708
        %7516 = vmatpush1.bf16.msra.mxu0 %v4707
        %7517 = vmatprep.subr.bf16.mxu0 %v4711
        %7518 = vmatpush1.bf16.msra.mxu0 %v4710
        %7519 = vmatprep.subr.bf16.mxu0 %v4714
        %7520 = vmatpush1.bf16.msra.mxu0 %v4713
        %7521 = vmatprep.subr.bf16.mxu0 %v4717
        %7522 = vmatpush1.bf16.msra.mxu0 %v4716
        %7523 = vmatprep.subr.bf16.mxu0 %v4720
        %7524 = vmatpush1.bf16.msra.mxu0 %v4719
        %7525 = vmatprep.subr.bf16.mxu0 0
        %7526 = vmatpush1.bf16.msra.mxu0 0
        %7527 = vmatprep.subr.bf16.mxu0 0
        %7528 = vmatpush1.bf16.msra.mxu0 0
        %7529 = vmatprep.subr.bf16.mxu0 0
        %7530 = vmatpush1.bf16.msra.mxu0 0
        %7531 = vmatprep.subr.bf16.mxu0 0
        %7532 = vmatpush1.bf16.msra.mxu0 0
        %7533 = vmatprep.subr.bf16.mxu0 0
        %7534 = vmatpush1.bf16.msra.mxu0 0
        %7535 = vmatprep.subr.bf16.mxu0 0
        %7536 = vmatpush1.bf16.msra.mxu0 0
        %7537 = vmatprep.subr.bf16.mxu0 0
        %7538 = vmatpush1.bf16.msra.mxu0 0
        %7539 = vmatprep.subr.bf16.mxu0 0
        %7540 = vmatpush1.bf16.msra.mxu0 0
        %7541 = vmatprep.mubr.bf16.mxu0 0
        %7542 = vmatmul.mubr.bf16.gmra.mrb[0].mxu0 %v7288
        %v7543 = vpop.f32.mrb[0].mxu0
        %v7544 = vadd.f32 %v4606, %v7543
        %v7545 = vpop.f32.mrb[0].mxu0
        %v7546 = vadd.f32 %v4610, %v7545
        %v7547 = vpop.f32.mrb[0].mxu0
        %v7548 = vadd.f32 %v4606, %v7547
        %v7549 = vpop.f32.mrb[0].mxu0
        %v7550 = vadd.f32 %v4610, %v7549
        %7551 = vmatprep.mubr.bf16.mxu0 0
        %7552 = vmatmul.mubr.bf16.gmra.mrb[0].mxu0 %v7290
        %v7553 = vpop.f32.mrb[0].mxu0
        %v7554 = vadd.f32 %v4606, %v7553
        %v7555 = vpop.f32.mrb[0].mxu0
        %v7556 = vadd.f32 %v4610, %v7555
        %v7557 = vpop.f32.mrb[0].mxu0
        %v7558 = vadd.f32 %v4606, %v7557
        %v7559 = vpop.f32.mrb[0].mxu0
        %v7560 = vadd.f32 %v4610, %v7559
        %7561 = vdwg.mxu0
        %7562 = vmatprep.subr.bf16.mxu0 0
        %7563 = vmatpush1.bf16.msra.mxu0 %v4700
        %7564 = vmatprep.subr.bf16.mxu0 0
        %7565 = vmatpush1.bf16.msra.mxu0 %v4703
        %7566 = vmatprep.subr.bf16.mxu0 0
        %7567 = vmatpush1.bf16.msra.mxu0 %v4706
        %7568 = vmatprep.subr.bf16.mxu0 0
        %7569 = vmatpush1.bf16.msra.mxu0 %v4709
        %7570 = vmatprep.subr.bf16.mxu0 0
        %7571 = vmatpush1.bf16.msra.mxu0 %v4712
        %7572 = vmatprep.subr.bf16.mxu0 0
        %7573 = vmatpush1.bf16.msra.mxu0 %v4715
        %7574 = vmatprep.subr.bf16.mxu0 0
        %7575 = vmatpush1.bf16.msra.mxu0 %v4718
        %7576 = vmatprep.subr.bf16.mxu0 0
        %7577 = vmatpush1.bf16.msra.mxu0 %v4721
        %7578 = vmatprep.subr.bf16.mxu0 0
        %7579 = vmatpush1.bf16.msra.mxu0 0
        %7580 = vmatprep.subr.bf16.mxu0 0
        %7581 = vmatpush1.bf16.msra.mxu0 0
        %7582 = vmatprep.subr.bf16.mxu0 0
        %7583 = vmatpush1.bf16.msra.mxu0 0
        %7584 = vmatprep.subr.bf16.mxu0 0
        %7585 = vmatpush1.bf16.msra.mxu0 0
        %7586 = vmatprep.subr.bf16.mxu0 0
        %7587 = vmatpush1.bf16.msra.mxu0 0
        %7588 = vmatprep.subr.bf16.mxu0 0
        %7589 = vmatpush1.bf16.msra.mxu0 0
        %7590 = vmatprep.subr.bf16.mxu0 0
        %7591 = vmatpush1.bf16.msra.mxu0 0
        %7592 = vmatprep.subr.bf16.mxu0 0
        %7593 = vmatpush1.bf16.msra.mxu0 0
        %7594 = vmatprep.mubr.bf16.mxu0 0
        %7595 = vmatmul.mubr.bf16.gmra.mrb[0].mxu0 %v7288
        %v7596 = vpop.f32.mrb[0].mxu0
        %v7597 = vadd.f32 %v4614, %v7596
        %v7598 = vpop.f32.mrb[0].mxu0
        %v7599 = vpop.f32.mrb[0].mxu0
        %v7600 = vadd.f32 %v4614, %v7599
        %v7601 = vpop.f32.mrb[0].mxu0
        %7602 = vmatprep.mubr.bf16.mxu0 0
        %7603 = vmatmul.mubr.bf16.gmra.mrb[0].mxu0 %v7290
        %v7604 = vpop.f32.mrb[0].mxu0
        %v7605 = vadd.f32 %v4614, %v7604
        %v7606 = vpop.f32.mrb[0].mxu0
        %v7607 = vpop.f32.mrb[0].mxu0
        %v7608 = vadd.f32 %v4614, %v7607
        %v7609 = vpop.f32.mrb[0].mxu0
        %7610 = vdwg.mxu0
        %v7611 = vunpack.c.l.bf16 %v7503
        %v7612 = vunpack.c.h.bf16 %v7503
        %v7613 = vunpack.c.l.bf16 %v7506
        %v7614 = vunpack.c.h.bf16 %v7506
        %v7615 = vadd.f32 %v7611, %v7544
        %v7616 = vadd.f32 %v7612, %v7548
        %v7617 = vadd.f32 %v7613, %v7554
        %v7618 = vadd.f32 %v7614, %v7558
        %v7619 = vmul.f32 %v7615, 0.5
        %v7620 = vmul.f32 %v7616, 0.5
        %v7621 = vmul.f32 %v7617, 0.5
        %v7622 = vmul.f32 %v7618, 0.5
        %v7623 = vtanh.pop %v7619
        %v7624 = vtanh.pop %v7620
        %v7625 = vtanh.pop %v7621
        %v7626 = vtanh.pop %v7622
        %v7627 = vadd.f32 %v7623, 1.0
        %v7628 = vadd.f32 %v7624, 1.0
        %v7629 = vadd.f32 %v7625, 1.0
        %v7630 = vadd.f32 %v7626, 1.0
        %v7631 = vmul.f32 %v7627, 0.5
        %v7632 = vmul.f32 %v7628, 0.5
        %v7633 = vmul.f32 %v7629, 0.5
        %v7634 = vmul.f32 %v7630, 0.5
        %v7635 = vunpack.c.l.bf16 %v7504
        %v7636 = vunpack.c.h.bf16 %v7504
        %v7637 = vunpack.c.l.bf16 %v7507
        %v7638 = vunpack.c.h.bf16 %v7507
        %v7639 = vadd.f32 %v7635, %v7546
        %v7640 = vadd.f32 %v7636, %v7550
        %v7641 = vadd.f32 %v7637, %v7556
        %v7642 = vadd.f32 %v7638, %v7560
        %v7643 = vmul.f32 %v7639, 0.5
        %v7644 = vmul.f32 %v7640, 0.5
        %v7645 = vmul.f32 %v7641, 0.5
        %v7646 = vmul.f32 %v7642, 0.5
        %v7647 = vtanh.pop %v7643
        %v7648 = vtanh.pop %v7644
        %v7649 = vtanh.pop %v7645
        %v7650 = vtanh.pop %v7646
        %v7651 = vadd.f32 %v7647, 1.0
        %v7652 = vadd.f32 %v7648, 1.0
        %v7653 = vadd.f32 %v7649, 1.0
        %v7654 = vadd.f32 %v7650, 1.0
        %v7655 = vmul.f32 %v7651, 0.5
        %v7656 = vmul.f32 %v7652, 0.5
        %v7657 = vmul.f32 %v7653, 0.5
        %v7658 = vmul.f32 %v7654, 0.5
        %v7659 = vmul.f32 %v7631, %v7597
        %v7660 = vmul.f32 %v7632, %v7600
        %v7661 = vmul.f32 %v7633, %v7605
        %v7662 = vmul.f32 %v7634, %v7608
        %v7663 = vunpack.c.l.bf16 %v7505
        %v7664 = vunpack.c.h.bf16 %v7505
        %v7665 = vunpack.c.l.bf16 %v7508
        %v7666 = vunpack.c.h.bf16 %v7508
        %v7667 = vadd.f32 %v7663, %v7659
        %v7668 = vadd.f32 %v7664, %v7660
        %v7669 = vadd.f32 %v7665, %v7661
        %v7670 = vadd.f32 %v7666, %v7662
        %v7671 = vtanh.pop %v7667
        %v7672 = vtanh.pop %v7668
        %v7673 = vtanh.pop %v7669
        %v7674 = vtanh.pop %v7670
        %v7675 = vsub.f32 1.0, %v7655
        %v7676 = vsub.f32 1.0, %v7656
        %v7677 = vsub.f32 1.0, %v7657
        %v7678 = vsub.f32 1.0, %v7658
        %v7679 = vmul.f32 %v7675, %v7671
        %v7680 = vmul.f32 %v7676, %v7672
        %v7681 = vmul.f32 %v7677, %v7673
        %v7682 = vmul.f32 %v7678, %v7674
        %v7683 = vmul.f32 %v7655, %v7284
        %v7684 = vmul.f32 %v7656, %v7285
        %v7685 = vmul.f32 %v7657, %v7286
        %v7686 = vmul.f32 %v7658, %v7287
        %v7687 = vadd.f32 %v7679, %v7683
        %v7688 = vadd.f32 %v7680, %v7684
        %v7689 = vadd.f32 %v7681, %v7685
        %v7690 = vadd.f32 %v7682, %v7686
        %v7691 = vpack.c.bf16 %v7688, %v7687
        %v7692 = vpack.c.bf16 %v7500, %v7499
        %v7693 = vpack.c.bf16 %v7690, %v7689
        %v7694 = vpack.c.bf16 %v7502, %v7501
        %7695 = vmatprep.subr.bf16.mxu0 %v5072
        %7696 = vmatpush1.bf16.msra.mxu0 %v5071
        %7697 = vmatprep.subr.bf16.mxu0 %v5074
        %7698 = vmatpush1.bf16.msra.mxu0 %v5073
        %7699 = vmatprep.subr.bf16.mxu0 %v5076
        %7700 = vmatpush1.bf16.msra.mxu0 %v5075
        %7701 = vmatprep.subr.bf16.mxu0 %v5078
        %7702 = vmatpush1.bf16.msra.mxu0 %v5077
        %7703 = vmatprep.subr.bf16.mxu0 %v5080
        %7704 = vmatpush1.bf16.msra.mxu0 %v5079
        %7705 = vmatprep.subr.bf16.mxu0 %v5082
        %7706 = vmatpush1.bf16.msra.mxu0 %v5081
        %7707 = vmatprep.subr.bf16.mxu0 %v5084
        %7708 = vmatpush1.bf16.msra.mxu0 %v5083
        %7709 = vmatprep.subr.bf16.mxu0 %v5086
        %7710 = vmatpush1.bf16.msra.mxu0 %v5085
        %7711 = vmatprep.subr.bf16.mxu0 %v5088
        %7712 = vmatpush1.bf16.msra.mxu0 %v5087
        %7713 = vmatprep.subr.bf16.mxu0 %v5090
        %7714 = vmatpush1.bf16.msra.mxu0 %v5089
        %7715 = vmatprep.subr.bf16.mxu0 %v5092
        %7716 = vmatpush1.bf16.msra.mxu0 %v5091
        %7717 = vmatprep.subr.bf16.mxu0 %v5094
        %7718 = vmatpush1.bf16.msra.mxu0 %v5093
        %7719 = vmatprep.subr.bf16.mxu0 %v5096
        %7720 = vmatpush1.bf16.msra.mxu0 %v5095
        %7721 = vmatprep.subr.bf16.mxu0 %v5098
        %7722 = vmatpush1.bf16.msra.mxu0 %v5097
        %7723 = vmatprep.subr.bf16.mxu0 %v5100
        %7724 = vmatpush1.bf16.msra.mxu0 %v5099
        %7725 = vmatprep.subr.bf16.mxu0 %v5102
        %7726 = vmatpush1.bf16.msra.mxu0 %v5101
        %7727 = vmatprep.mubr.bf16.mxu0 %v7692
        %7728 = vmatmul.mubr.bf16.gmra.mrb[0].mxu0 %v7691
        %v7729 = vpop.f32.mrb[0].mxu0
        %v7730 = vadd.f32 %v4968, %v7729
        %v7731 = vpop.f32.mrb[0].mxu0
        %v7732 = vadd.f32 %v4972, %v7731
        %v7733 = vpop.f32.mrb[0].mxu0
        %v7734 = vadd.f32 %v4968, %v7733
        %v7735 = vpop.f32.mrb[0].mxu0
        %v7736 = vadd.f32 %v4972, %v7735
        %7737 = vmatprep.mubr.bf16.mxu0 %v7694
        %7738 = vmatmul.mubr.bf16.gmra.mrb[0].mxu0 %v7693
        %v7739 = vpop.f32.mrb[0].mxu0
        %v7740 = vadd.f32 %v4968, %v7739
        %v7741 = vpop.f32.mrb[0].mxu0
        %v7742 = vadd.f32 %v4972, %v7741
        %v7743 = vpop.f32.mrb[0].mxu0
        %v7744 = vadd.f32 %v4968, %v7743
        %v7745 = vpop.f32.mrb[0].mxu0
        %v7746 = vadd.f32 %v4972, %v7745
        %7747 = vdwg.mxu0
        %7748 = vmatprep.subr.bf16.mxu0 0
        %7749 = vmatpush1.bf16.msra.mxu0 %v5243
        %7750 = vmatprep.subr.bf16.mxu0 0
        %7751 = vmatpush1.bf16.msra.mxu0 %v5244
        %7752 = vmatprep.subr.bf16.mxu0 0
        %7753 = vmatpush1.bf16.msra.mxu0 %v5245
        %7754 = vmatprep.subr.bf16.mxu0 0
        %7755 = vmatpush1.bf16.msra.mxu0 %v5246
        %7756 = vmatprep.subr.bf16.mxu0 0
        %7757 = vmatpush1.bf16.msra.mxu0 %v5247
        %7758 = vmatprep.subr.bf16.mxu0 0
        %7759 = vmatpush1.bf16.msra.mxu0 %v5248
        %7760 = vmatprep.subr.bf16.mxu0 0
        %7761 = vmatpush1.bf16.msra.mxu0 %v5249
        %7762 = vmatprep.subr.bf16.mxu0 0
        %7763 = vmatpush1.bf16.msra.mxu0 %v5250
        %7764 = vmatprep.subr.bf16.mxu0 0
        %7765 = vmatpush1.bf16.msra.mxu0 0
        %7766 = vmatprep.subr.bf16.mxu0 0
        %7767 = vmatpush1.bf16.msra.mxu0 0
        %7768 = vmatprep.subr.bf16.mxu0 0
        %7769 = vmatpush1.bf16.msra.mxu0 0
        %7770 = vmatprep.subr.bf16.mxu0 0
        %7771 = vmatpush1.bf16.msra.mxu0 0
        %7772 = vmatprep.subr.bf16.mxu0 0
        %7773 = vmatpush1.bf16.msra.mxu0 0
        %7774 = vmatprep.subr.bf16.mxu0 0
        %7775 = vmatpush1.bf16.msra.mxu0 0
        %7776 = vmatprep.subr.bf16.mxu0 0
        %7777 = vmatpush1.bf16.msra.mxu0 0
        %7778 = vmatprep.subr.bf16.mxu0 0
        %7779 = vmatpush1.bf16.msra.mxu0 0
        %7780 = vmatprep.mubr.bf16.mxu0 0
        %7781 = vmatmul.mubr.bf16.gmra.mrb[0].mxu0 %v7691
        %v7782 = vpop.f32.mrb[0].mxu0
        %v7783 = vadd.f32 %v5209, %v7782
        %v7784 = vpop.f32.mrb[0].mxu0
        %v7785 = vpop.f32.mrb[0].mxu0
        %v7786 = vadd.f32 %v5209, %v7785
        %v7787 = vpop.f32.mrb[0].mxu0
        %7788 = vmatprep.mubr.bf16.mxu0 0
        %7789 = vmatmul.mubr.bf16.gmra.mrb[0].mxu0 %v7693
        %v7790 = vpop.f32.mrb[0].mxu0
        %v7791 = vadd.f32 %v5209, %v7790
        %v7792 = vpop.f32.mrb[0].mxu0
        %v7793 = vpop.f32.mrb[0].mxu0
        %v7794 = vadd.f32 %v5209, %v7793
        %v7795 = vpop.f32.mrb[0].mxu0
        %7796 = vdwg.mxu0
        %7797 = vmatprep.subr.bf16.mxu0 0
        %7798 = vmatpush1.bf16.msra.mxu0 %v5363
        %7799 = vmatprep.subr.bf16.mxu0 0
        %7800 = vmatpush1.bf16.msra.mxu0 %v5364
        %7801 = vmatprep.subr.bf16.mxu0 0
        %7802 = vmatpush1.bf16.msra.mxu0 %v5365
        %7803 = vmatprep.subr.bf16.mxu0 0
        %7804 = vmatpush1.bf16.msra.mxu0 %v5366
        %7805 = vmatprep.subr.bf16.mxu0 0
        %7806 = vmatpush1.bf16.msra.mxu0 %v5367
        %7807 = vmatprep.subr.bf16.mxu0 0
        %7808 = vmatpush1.bf16.msra.mxu0 %v5368
        %7809 = vmatprep.subr.bf16.mxu0 0
        %7810 = vmatpush1.bf16.msra.mxu0 %v5369
        %7811 = vmatprep.subr.bf16.mxu0 0
        %7812 = vmatpush1.bf16.msra.mxu0 %v5370
        %7813 = vmatprep.subr.bf16.mxu0 0
        %7814 = vmatpush1.bf16.msra.mxu0 0
        %7815 = vmatprep.subr.bf16.mxu0 0
        %7816 = vmatpush1.bf16.msra.mxu0 0
        %7817 = vmatprep.subr.bf16.mxu0 0
        %7818 = vmatpush1.bf16.msra.mxu0 0
        %7819 = vmatprep.subr.bf16.mxu0 0
        %7820 = vmatpush1.bf16.msra.mxu0 0
        %7821 = vmatprep.subr.bf16.mxu0 0
        %7822 = vmatpush1.bf16.msra.mxu0 0
        %7823 = vmatprep.subr.bf16.mxu0 0
        %7824 = vmatpush1.bf16.msra.mxu0 0
        %7825 = vmatprep.subr.bf16.mxu0 0
        %7826 = vmatpush1.bf16.msra.mxu0 0
        %7827 = vmatprep.subr.bf16.mxu0 0
        %7828 = vmatpush1.bf16.msra.mxu0 0
        %7829 = vmatprep.mubr.bf16.mxu0 0
        %7830 = vmatmul.mubr.bf16.gmra.mrb[0].mxu0 %v7692
        %v7831 = vpop.f32.mrb[0].mxu0
        %v7832 = vadd.f32 %v5329, %v7831
        %v7833 = vpop.f32.mrb[0].mxu0
        %v7834 = vpop.f32.mrb[0].mxu0
        %v7835 = vadd.f32 %v5329, %v7834
        %v7836 = vpop.f32.mrb[0].mxu0
        %7837 = vmatprep.mubr.bf16.mxu0 0
        %7838 = vmatmul.mubr.bf16.gmra.mrb[0].mxu0 %v7694
        %v7839 = vpop.f32.mrb[0].mxu0
        %v7840 = vadd.f32 %v5329, %v7839
        %v7841 = vpop.f32.mrb[0].mxu0
        %v7842 = vpop.f32.mrb[0].mxu0
        %v7843 = vadd.f32 %v5329, %v7842
        %v7844 = vpop.f32.mrb[0].mxu0
        %7845 = vdwg.mxu0
        %v7846 = vmul.f32 %v7730, 0.5
        %v7847 = vmul.f32 %v7734, 0.5
        %v7848 = vmul.f32 %v7740, 0.5
        %v7849 = vmul.f32 %v7744, 0.5
        %v7850 = vtanh.pop %v7846
        %v7851 = vtanh.pop %v7847
        %v7852 = vtanh.pop %v7848
        %v7853 = vtanh.pop %v7849
        %v7854 = vadd.f32 %v7850, 1.0
        %v7855 = vadd.f32 %v7851, 1.0
        %v7856 = vadd.f32 %v7852, 1.0
        %v7857 = vadd.f32 %v7853, 1.0
        %v7858 = vmul.f32 %v7854, 0.5
        %v7859 = vmul.f32 %v7855, 0.5
        %v7860 = vmul.f32 %v7856, 0.5
        %v7861 = vmul.f32 %v7857, 0.5
        %v7862 = vmul.f32 %v7732, 0.5
        %v7863 = vmul.f32 %v7736, 0.5
        %v7864 = vmul.f32 %v7742, 0.5
        %v7865 = vmul.f32 %v7746, 0.5
        %v7866 = vtanh.pop %v7862
        %v7867 = vtanh.pop %v7863
        %v7868 = vtanh.pop %v7864
        %v7869 = vtanh.pop %v7865
        %v7870 = vadd.f32 %v7866, 1.0
        %v7871 = vadd.f32 %v7867, 1.0
        %v7872 = vadd.f32 %v7868, 1.0
        %v7873 = vadd.f32 %v7869, 1.0
        %v7874 = vmul.f32 %v7870, 0.5
        %v7875 = vmul.f32 %v7871, 0.5
        %v7876 = vmul.f32 %v7872, 0.5
        %v7877 = vmul.f32 %v7873, 0.5
        %v7878 = vmul.f32 %v7858, %v7832
        %v7879 = vmul.f32 %v7859, %v7835
        %v7880 = vmul.f32 %v7860, %v7840
        %v7881 = vmul.f32 %v7861, %v7843
        %v7882 = vadd.f32 %v7783, %v7878
        %v7883 = vadd.f32 %v7786, %v7879
        %v7884 = vadd.f32 %v7791, %v7880
        %v7885 = vadd.f32 %v7794, %v7881
        %v7886 = vtanh.pop %v7882
        %v7887 = vtanh.pop %v7883
        %v7888 = vtanh.pop %v7884
        %v7889 = vtanh.pop %v7885
        %v7890 = vsub.f32 1.0, %v7874
        %v7891 = vsub.f32 1.0, %v7875
        %v7892 = vsub.f32 1.0, %v7876
        %v7893 = vsub.f32 1.0, %v7877
        %v7894 = vmul.f32 %v7890, %v7886
        %v7895 = vmul.f32 %v7891, %v7887
        %v7896 = vmul.f32 %v7892, %v7888
        %v7897 = vmul.f32 %v7893, %v7889
        %v7898 = vmul.f32 %v7874, %v7499
        %v7899 = vmul.f32 %v7875, %v7500
        %v7900 = vmul.f32 %v7876, %v7501
        %v7901 = vmul.f32 %v7877, %v7502
        %v7902 = vadd.f32 %v7894, %v7898
        %v7903 = vadd.f32 %v7895, %v7899
        %v7904 = vadd.f32 %v7896, %v7900
        %v7905 = vadd.f32 %v7897, %v7901
        %v7906 = vld [vmem:[%s4556] sm:$0xff]
        %v7907 = vld [vmem:[%s4556 + $0x8] sm:$0xff]
        %v7908 = vld [vmem:[%s4556 + $0x10] sm:$0xff]
        %v7909 = vld [vmem:[%s4556 + $0x18] sm:$0xff]
        %v7910 = vld [vmem:[%s4556 + $0x20] sm:$0xff]
        %v7911 = vld [vmem:[%s4556 + $0x28] sm:$0xff]
        %7912 = vmatprep.subr.bf16.mxu0 %v4699
        %7913 = vmatpush1.bf16.msra.mxu0 %v4698
        %7914 = vmatprep.subr.bf16.mxu0 %v4702
        %7915 = vmatpush1.bf16.msra.mxu0 %v4701
        %7916 = vmatprep.subr.bf16.mxu0 %v4705
        %7917 = vmatpush1.bf16.msra.mxu0 %v4704
        %7918 = vmatprep.subr.bf16.mxu0 %v4708
        %7919 = vmatpush1.bf16.msra.mxu0 %v4707
        %7920 = vmatprep.subr.bf16.mxu0 %v4711
        %7921 = vmatpush1.bf16.msra.mxu0 %v4710
        %7922 = vmatprep.subr.bf16.mxu0 %v4714
        %7923 = vmatpush1.bf16.msra.mxu0 %v4713
        %7924 = vmatprep.subr.bf16.mxu0 %v4717
        %7925 = vmatpush1.bf16.msra.mxu0 %v4716
        %7926 = vmatprep.subr.bf16.mxu0 %v4720
        %7927 = vmatpush1.bf16.msra.mxu0 %v4719
        %7928 = vmatprep.subr.bf16.mxu0 0
        %7929 = vmatpush1.bf16.msra.mxu0 0
        %7930 = vmatprep.subr.bf16.mxu0 0
        %7931 = vmatpush1.bf16.msra.mxu0 0
        %7932 = vmatprep.subr.bf16.mxu0 0
        %7933 = vmatpush1.bf16.msra.mxu0 0
        %7934 = vmatprep.subr.bf16.mxu0 0
        %7935 = vmatpush1.bf16.msra.mxu0 0
        %7936 = vmatprep.subr.bf16.mxu0 0
        %7937 = vmatpush1.bf16.msra.mxu0 0
        %7938 = vmatprep.subr.bf16.mxu0 0
        %7939 = vmatpush1.bf16.msra.mxu0 0
        %7940 = vmatprep.subr.bf16.mxu0 0
        %7941 = vmatpush1.bf16.msra.mxu0 0
        %7942 = vmatprep.subr.bf16.mxu0 0
        %7943 = vmatpush1.bf16.msra.mxu0 0
        %7944 = vmatprep.mubr.bf16.mxu0 0
        %7945 = vmatmul.mubr.bf16.gmra.mrb[0].mxu0 %v7691
        %v7946 = vpop.f32.mrb[0].mxu0
        %v7947 = vadd.f32 %v4606, %v7946
        %v7948 = vpop.f32.mrb[0].mxu0
        %v7949 = vadd.f32 %v4610, %v7948
        %v7950 = vpop.f32.mrb[0].mxu0
        %v7951 = vadd.f32 %v4606, %v7950
        %v7952 = vpop.f32.mrb[0].mxu0
        %v7953 = vadd.f32 %v4610, %v7952
        %7954 = vmatprep.mubr.bf16.mxu0 0
        %7955 = vmatmul.mubr.bf16.gmra.mrb[0].mxu0 %v7693
        %v7956 = vpop.f32.mrb[0].mxu0
        %v7957 = vadd.f32 %v4606, %v7956
        %v7958 = vpop.f32.mrb[0].mxu0
        %v7959 = vadd.f32 %v4610, %v7958
        %v7960 = vpop.f32.mrb[0].mxu0
        %v7961 = vadd.f32 %v4606, %v7960
        %v7962 = vpop.f32.mrb[0].mxu0
        %v7963 = vadd.f32 %v4610, %v7962
        %7964 = vdwg.mxu0
        %7965 = vmatprep.subr.bf16.mxu0 0
        %7966 = vmatpush1.bf16.msra.mxu0 %v4700
        %7967 = vmatprep.subr.bf16.mxu0 0
        %7968 = vmatpush1.bf16.msra.mxu0 %v4703
        %7969 = vmatprep.subr.bf16.mxu0 0
        %7970 = vmatpush1.bf16.msra.mxu0 %v4706
        %7971 = vmatprep.subr.bf16.mxu0 0
        %7972 = vmatpush1.bf16.msra.mxu0 %v4709
        %7973 = vmatprep.subr.bf16.mxu0 0
        %7974 = vmatpush1.bf16.msra.mxu0 %v4712
        %7975 = vmatprep.subr.bf16.mxu0 0
        %7976 = vmatpush1.bf16.msra.mxu0 %v4715
        %7977 = vmatprep.subr.bf16.mxu0 0
        %7978 = vmatpush1.bf16.msra.mxu0 %v4718
        %7979 = vmatprep.subr.bf16.mxu0 0
        %7980 = vmatpush1.bf16.msra.mxu0 %v4721
        %7981 = vmatprep.subr.bf16.mxu0 0
        %7982 = vmatpush1.bf16.msra.mxu0 0
        %7983 = vmatprep.subr.bf16.mxu0 0
        %7984 = vmatpush1.bf16.msra.mxu0 0
        %7985 = vmatprep.subr.bf16.mxu0 0
        %7986 = vmatpush1.bf16.msra.mxu0 0
        %7987 = vmatprep.subr.bf16.mxu0 0
        %7988 = vmatpush1.bf16.msra.mxu0 0
        %7989 = vmatprep.subr.bf16.mxu0 0
        %7990 = vmatpush1.bf16.msra.mxu0 0
        %7991 = vmatprep.subr.bf16.mxu0 0
        %7992 = vmatpush1.bf16.msra.mxu0 0
        %7993 = vmatprep.subr.bf16.mxu0 0
        %7994 = vmatpush1.bf16.msra.mxu0 0
        %7995 = vmatprep.subr.bf16.mxu0 0
        %7996 = vmatpush1.bf16.msra.mxu0 0
        %7997 = vmatprep.mubr.bf16.mxu0 0
        %7998 = vmatmul.mubr.bf16.gmra.mrb[0].mxu0 %v7691
        %v7999 = vpop.f32.mrb[0].mxu0
        %v8000 = vadd.f32 %v4614, %v7999
        %v8001 = vpop.f32.mrb[0].mxu0
        %v8002 = vpop.f32.mrb[0].mxu0
        %v8003 = vadd.f32 %v4614, %v8002
        %v8004 = vpop.f32.mrb[0].mxu0
        %8005 = vmatprep.mubr.bf16.mxu0 0
        %8006 = vmatmul.mubr.bf16.gmra.mrb[0].mxu0 %v7693
        %v8007 = vpop.f32.mrb[0].mxu0
        %v8008 = vadd.f32 %v4614, %v8007
        %v8009 = vpop.f32.mrb[0].mxu0
        %v8010 = vpop.f32.mrb[0].mxu0
        %v8011 = vadd.f32 %v4614, %v8010
        %v8012 = vpop.f32.mrb[0].mxu0
        %8013 = vdwg.mxu0
        %v8014 = vunpack.c.l.bf16 %v7906
        %v8015 = vunpack.c.h.bf16 %v7906
        %v8016 = vunpack.c.l.bf16 %v7909
        %v8017 = vunpack.c.h.bf16 %v7909
        %v8018 = vadd.f32 %v8014, %v7947
        %v8019 = vadd.f32 %v8015, %v7951
        %v8020 = vadd.f32 %v8016, %v7957
        %v8021 = vadd.f32 %v8017, %v7961
        %v8022 = vmul.f32 %v8018, 0.5
        %v8023 = vmul.f32 %v8019, 0.5
        %v8024 = vmul.f32 %v8020, 0.5
        %v8025 = vmul.f32 %v8021, 0.5
        %v8026 = vtanh.pop %v8022
        %v8027 = vtanh.pop %v8023
        %v8028 = vtanh.pop %v8024
        %v8029 = vtanh.pop %v8025
        %v8030 = vadd.f32 %v8026, 1.0
        %v8031 = vadd.f32 %v8027, 1.0
        %v8032 = vadd.f32 %v8028, 1.0
        %v8033 = vadd.f32 %v8029, 1.0
        %v8034 = vmul.f32 %v8030, 0.5
        %v8035 = vmul.f32 %v8031, 0.5
        %v8036 = vmul.f32 %v8032, 0.5
        %v8037 = vmul.f32 %v8033, 0.5
        %v8038 = vunpack.c.l.bf16 %v7907
        %v8039 = vunpack.c.h.bf16 %v7907
        %v8040 = vunpack.c.l.bf16 %v7910
        %v8041 = vunpack.c.h.bf16 %v7910
        %v8042 = vadd.f32 %v8038, %v7949
        %v8043 = vadd.f32 %v8039, %v7953
        %v8044 = vadd.f32 %v8040, %v7959
        %v8045 = vadd.f32 %v8041, %v7963
        %v8046 = vmul.f32 %v8042, 0.5
        %v8047 = vmul.f32 %v8043, 0.5
        %v8048 = vmul.f32 %v8044, 0.5
        %v8049 = vmul.f32 %v8045, 0.5
        %v8050 = vtanh.pop %v8046
        %v8051 = vtanh.pop %v8047
        %v8052 = vtanh.pop %v8048
        %v8053 = vtanh.pop %v8049
        %v8054 = vadd.f32 %v8050, 1.0
        %v8055 = vadd.f32 %v8051, 1.0
        %v8056 = vadd.f32 %v8052, 1.0
        %v8057 = vadd.f32 %v8053, 1.0
        %v8058 = vmul.f32 %v8054, 0.5
        %v8059 = vmul.f32 %v8055, 0.5
        %v8060 = vmul.f32 %v8056, 0.5
        %v8061 = vmul.f32 %v8057, 0.5
        %v8062 = vmul.f32 %v8034, %v8000
        %v8063 = vmul.f32 %v8035, %v8003
        %v8064 = vmul.f32 %v8036, %v8008
        %v8065 = vmul.f32 %v8037, %v8011
        %v8066 = vunpack.c.l.bf16 %v7908
        %v8067 = vunpack.c.h.bf16 %v7908
        %v8068 = vunpack.c.l.bf16 %v7911
        %v8069 = vunpack.c.h.bf16 %v7911
        %v8070 = vadd.f32 %v8066, %v8062
        %v8071 = vadd.f32 %v8067, %v8063
        %v8072 = vadd.f32 %v8068, %v8064
        %v8073 = vadd.f32 %v8069, %v8065
        %v8074 = vtanh.pop %v8070
        %v8075 = vtanh.pop %v8071
        %v8076 = vtanh.pop %v8072
        %v8077 = vtanh.pop %v8073
        %v8078 = vsub.f32 1.0, %v8058
        %v8079 = vsub.f32 1.0, %v8059
        %v8080 = vsub.f32 1.0, %v8060
        %v8081 = vsub.f32 1.0, %v8061
        %v8082 = vmul.f32 %v8078, %v8074
        %v8083 = vmul.f32 %v8079, %v8075
        %v8084 = vmul.f32 %v8080, %v8076
        %v8085 = vmul.f32 %v8081, %v8077
        %v8086 = vmul.f32 %v8058, %v7687
        %v8087 = vmul.f32 %v8059, %v7688
        %v8088 = vmul.f32 %v8060, %v7689
        %v8089 = vmul.f32 %v8061, %v7690
        %v8090 = vadd.f32 %v8082, %v8086
        %v8091 = vadd.f32 %v8083, %v8087
        %v8092 = vadd.f32 %v8084, %v8088
        %v8093 = vadd.f32 %v8085, %v8089
        %v8094 = vpack.c.bf16 %v8091, %v8090
        %v8095 = vpack.c.bf16 %v7903, %v7902
        %v8096 = vpack.c.bf16 %v8093, %v8092
        %v8097 = vpack.c.bf16 %v7905, %v7904
        %8098 = vmatprep.subr.bf16.mxu0 %v5072
        %8099 = vmatpush1.bf16.msra.mxu0 %v5071
        %8100 = vmatprep.subr.bf16.mxu0 %v5074
        %8101 = vmatpush1.bf16.msra.mxu0 %v5073
        %8102 = vmatprep.subr.bf16.mxu0 %v5076
        %8103 = vmatpush1.bf16.msra.mxu0 %v5075
        %8104 = vmatprep.subr.bf16.mxu0 %v5078
        %8105 = vmatpush1.bf16.msra.mxu0 %v5077
        %8106 = vmatprep.subr.bf16.mxu0 %v5080
        %8107 = vmatpush1.bf16.msra.mxu0 %v5079
        %8108 = vmatprep.subr.bf16.mxu0 %v5082
        %8109 = vmatpush1.bf16.msra.mxu0 %v5081
        %8110 = vmatprep.subr.bf16.mxu0 %v5084
        %8111 = vmatpush1.bf16.msra.mxu0 %v5083
        %8112 = vmatprep.subr.bf16.mxu0 %v5086
        %8113 = vmatpush1.bf16.msra.mxu0 %v5085
        %8114 = vmatprep.subr.bf16.mxu0 %v5088
        %8115 = vmatpush1.bf16.msra.mxu0 %v5087
        %8116 = vmatprep.subr.bf16.mxu0 %v5090
        %8117 = vmatpush1.bf16.msra.mxu0 %v5089
        %8118 = vmatprep.subr.bf16.mxu0 %v5092
        %8119 = vmatpush1.bf16.msra.mxu0 %v5091
        %8120 = vmatprep.subr.bf16.mxu0 %v5094
        %8121 = vmatpush1.bf16.msra.mxu0 %v5093
        %8122 = vmatprep.subr.bf16.mxu0 %v5096
        %8123 = vmatpush1.bf16.msra.mxu0 %v5095
        %8124 = vmatprep.subr.bf16.mxu0 %v5098
        %8125 = vmatpush1.bf16.msra.mxu0 %v5097
        %8126 = vmatprep.subr.bf16.mxu0 %v5100
        %8127 = vmatpush1.bf16.msra.mxu0 %v5099
        %8128 = vmatprep.subr.bf16.mxu0 %v5102
        %8129 = vmatpush1.bf16.msra.mxu0 %v5101
        %8130 = vmatprep.mubr.bf16.mxu0 %v8095
        %8131 = vmatmul.mubr.bf16.gmra.mrb[0].mxu0 %v8094
        %v8132 = vpop.f32.mrb[0].mxu0
        %v8133 = vadd.f32 %v4968, %v8132
        %v8134 = vpop.f32.mrb[0].mxu0
        %v8135 = vadd.f32 %v4972, %v8134
        %v8136 = vpop.f32.mrb[0].mxu0
        %v8137 = vadd.f32 %v4968, %v8136
        %v8138 = vpop.f32.mrb[0].mxu0
        %v8139 = vadd.f32 %v4972, %v8138
        %8140 = vmatprep.mubr.bf16.mxu0 %v8097
        %8141 = vmatmul.mubr.bf16.gmra.mrb[0].mxu0 %v8096
        %v8142 = vpop.f32.mrb[0].mxu0
        %v8143 = vadd.f32 %v4968, %v8142
        %v8144 = vpop.f32.mrb[0].mxu0
        %v8145 = vadd.f32 %v4972, %v8144
        %v8146 = vpop.f32.mrb[0].mxu0
        %v8147 = vadd.f32 %v4968, %v8146
        %v8148 = vpop.f32.mrb[0].mxu0
        %v8149 = vadd.f32 %v4972, %v8148
        %8150 = vdwg.mxu0
        %8151 = vmatprep.subr.bf16.mxu0 0
        %8152 = vmatpush1.bf16.msra.mxu0 %v5243
        %8153 = vmatprep.subr.bf16.mxu0 0
        %8154 = vmatpush1.bf16.msra.mxu0 %v5244
        %8155 = vmatprep.subr.bf16.mxu0 0
        %8156 = vmatpush1.bf16.msra.mxu0 %v5245
        %8157 = vmatprep.subr.bf16.mxu0 0
        %8158 = vmatpush1.bf16.msra.mxu0 %v5246
        %8159 = vmatprep.subr.bf16.mxu0 0
        %8160 = vmatpush1.bf16.msra.mxu0 %v5247
        %8161 = vmatprep.subr.bf16.mxu0 0
        %8162 = vmatpush1.bf16.msra.mxu0 %v5248
        %8163 = vmatprep.subr.bf16.mxu0 0
        %8164 = vmatpush1.bf16.msra.mxu0 %v5249
        %8165 = vmatprep.subr.bf16.mxu0 0
        %8166 = vmatpush1.bf16.msra.mxu0 %v5250
        %8167 = vmatprep.subr.bf16.mxu0 0
        %8168 = vmatpush1.bf16.msra.mxu0 0
        %8169 = vmatprep.subr.bf16.mxu0 0
        %8170 = vmatpush1.bf16.msra.mxu0 0
        %8171 = vmatprep.subr.bf16.mxu0 0
        %8172 = vmatpush1.bf16.msra.mxu0 0
        %8173 = vmatprep.subr.bf16.mxu0 0
        %8174 = vmatpush1.bf16.msra.mxu0 0
        %8175 = vmatprep.subr.bf16.mxu0 0
        %8176 = vmatpush1.bf16.msra.mxu0 0
        %8177 = vmatprep.subr.bf16.mxu0 0
        %8178 = vmatpush1.bf16.msra.mxu0 0
        %8179 = vmatprep.subr.bf16.mxu0 0
        %8180 = vmatpush1.bf16.msra.mxu0 0
        %8181 = vmatprep.subr.bf16.mxu0 0
        %8182 = vmatpush1.bf16.msra.mxu0 0
        %8183 = vmatprep.mubr.bf16.mxu0 0
        %8184 = vmatmul.mubr.bf16.gmra.mrb[0].mxu0 %v8094
        %v8185 = vpop.f32.mrb[0].mxu0
        %v8186 = vadd.f32 %v5209, %v8185
        %v8187 = vpop.f32.mrb[0].mxu0
        %v8188 = vpop.f32.mrb[0].mxu0
        %v8189 = vadd.f32 %v5209, %v8188
        %v8190 = vpop.f32.mrb[0].mxu0
        %8191 = vmatprep.mubr.bf16.mxu0 0
        %8192 = vmatmul.mubr.bf16.gmra.mrb[0].mxu0 %v8096
        %v8193 = vpop.f32.mrb[0].mxu0
        %v8194 = vadd.f32 %v5209, %v8193
        %v8195 = vpop.f32.mrb[0].mxu0
        %v8196 = vpop.f32.mrb[0].mxu0
        %v8197 = vadd.f32 %v5209, %v8196
        %v8198 = vpop.f32.mrb[0].mxu0
        %8199 = vdwg.mxu0
        %8200 = vmatprep.subr.bf16.mxu0 0
        %8201 = vmatpush1.bf16.msra.mxu0 %v5363
        %8202 = vmatprep.subr.bf16.mxu0 0
        %8203 = vmatpush1.bf16.msra.mxu0 %v5364
        %8204 = vmatprep.subr.bf16.mxu0 0
        %8205 = vmatpush1.bf16.msra.mxu0 %v5365
        %8206 = vmatprep.subr.bf16.mxu0 0
        %8207 = vmatpush1.bf16.msra.mxu0 %v5366
        %8208 = vmatprep.subr.bf16.mxu0 0
        %8209 = vmatpush1.bf16.msra.mxu0 %v5367
        %8210 = vmatprep.subr.bf16.mxu0 0
        %8211 = vmatpush1.bf16.msra.mxu0 %v5368
        %8212 = vmatprep.subr.bf16.mxu0 0
        %8213 = vmatpush1.bf16.msra.mxu0 %v5369
        %8214 = vmatprep.subr.bf16.mxu0 0
        %8215 = vmatpush1.bf16.msra.mxu0 %v5370
        %8216 = vmatprep.subr.bf16.mxu0 0
        %8217 = vmatpush1.bf16.msra.mxu0 0
        %8218 = vmatprep.subr.bf16.mxu0 0
        %8219 = vmatpush1.bf16.msra.mxu0 0
        %8220 = vmatprep.subr.bf16.mxu0 0
        %8221 = vmatpush1.bf16.msra.mxu0 0
        %8222 = vmatprep.subr.bf16.mxu0 0
        %8223 = vmatpush1.bf16.msra.mxu0 0
        %8224 = vmatprep.subr.bf16.mxu0 0
        %8225 = vmatpush1.bf16.msra.mxu0 0
        %8226 = vmatprep.subr.bf16.mxu0 0
        %8227 = vmatpush1.bf16.msra.mxu0 0
        %8228 = vmatprep.subr.bf16.mxu0 0
        %8229 = vmatpush1.bf16.msra.mxu0 0
        %8230 = vmatprep.subr.bf16.mxu0 0
        %8231 = vmatpush1.bf16.msra.mxu0 0
        %8232 = vmatprep.mubr.bf16.mxu0 0
        %8233 = vmatmul.mubr.bf16.gmra.mrb[0].mxu0 %v8095
        %v8234 = vpop.f32.mrb[0].mxu0
        %v8235 = vadd.f32 %v5329, %v8234
        %v8236 = vpop.f32.mrb[0].mxu0
        %v8237 = vpop.f32.mrb[0].mxu0
        %v8238 = vadd.f32 %v5329, %v8237
        %v8239 = vpop.f32.mrb[0].mxu0
        %8240 = vmatprep.mubr.bf16.mxu0 0
        %8241 = vmatmul.mubr.bf16.gmra.mrb[0].mxu0 %v8097
        %v8242 = vpop.f32.mrb[0].mxu0
        %v8243 = vadd.f32 %v5329, %v8242
        %v8244 = vpop.f32.mrb[0].mxu0
        %v8245 = vpop.f32.mrb[0].mxu0
        %v8246 = vadd.f32 %v5329, %v8245
        %v8247 = vpop.f32.mrb[0].mxu0
        %8248 = vdwg.mxu0
        %v8249 = vmul.f32 %v8133, 0.5
        %v8250 = vmul.f32 %v8137, 0.5
        %v8251 = vmul.f32 %v8143, 0.5
        %v8252 = vmul.f32 %v8147, 0.5
        %v8253 = vtanh.pop %v8249
        %v8254 = vtanh.pop %v8250
        %v8255 = vtanh.pop %v8251
        %v8256 = vtanh.pop %v8252
        %v8257 = vadd.f32 %v8253, 1.0
        %v8258 = vadd.f32 %v8254, 1.0
        %v8259 = vadd.f32 %v8255, 1.0
        %v8260 = vadd.f32 %v8256, 1.0
        %v8261 = vmul.f32 %v8257, 0.5
        %v8262 = vmul.f32 %v8258, 0.5
        %v8263 = vmul.f32 %v8259, 0.5
        %v8264 = vmul.f32 %v8260, 0.5
        %v8265 = vmul.f32 %v8135, 0.5
        %v8266 = vmul.f32 %v8139, 0.5
        %v8267 = vmul.f32 %v8145, 0.5
        %v8268 = vmul.f32 %v8149, 0.5
        %v8269 = vtanh.pop %v8265
        %v8270 = vtanh.pop %v8266
        %v8271 = vtanh.pop %v8267
        %v8272 = vtanh.pop %v8268
        %v8273 = vadd.f32 %v8269, 1.0
        %v8274 = vadd.f32 %v8270, 1.0
        %v8275 = vadd.f32 %v8271, 1.0
        %v8276 = vadd.f32 %v8272, 1.0
        %v8277 = vmul.f32 %v8273, 0.5
        %v8278 = vmul.f32 %v8274, 0.5
        %v8279 = vmul.f32 %v8275, 0.5
        %v8280 = vmul.f32 %v8276, 0.5
        %v8281 = vmul.f32 %v8261, %v8235
        %v8282 = vmul.f32 %v8262, %v8238
        %v8283 = vmul.f32 %v8263, %v8243
        %v8284 = vmul.f32 %v8264, %v8246
        %v8285 = vadd.f32 %v8186, %v8281
        %v8286 = vadd.f32 %v8189, %v8282
        %v8287 = vadd.f32 %v8194, %v8283
        %v8288 = vadd.f32 %v8197, %v8284
        %v8289 = vtanh.pop %v8285
        %v8290 = vtanh.pop %v8286
        %v8291 = vtanh.pop %v8287
        %v8292 = vtanh.pop %v8288
        %v8293 = vsub.f32 1.0, %v8277
        %v8294 = vsub.f32 1.0, %v8278
        %v8295 = vsub.f32 1.0, %v8279
        %v8296 = vsub.f32 1.0, %v8280
        %v8297 = vmul.f32 %v8293, %v8289
        %v8298 = vmul.f32 %v8294, %v8290
        %v8299 = vmul.f32 %v8295, %v8291
        %v8300 = vmul.f32 %v8296, %v8292
        %v8301 = vmul.f32 %v8277, %v7902
        %v8302 = vmul.f32 %v8278, %v7903
        %v8303 = vmul.f32 %v8279, %v7904
        %v8304 = vmul.f32 %v8280, %v7905
        %v8305 = vadd.f32 %v8297, %v8301
        %v8306 = vadd.f32 %v8298, %v8302
        %v8307 = vadd.f32 %v8299, %v8303
        %v8308 = vadd.f32 %v8300, %v8304
        %8309 = vst [vmem:[%s667] sm:$0xff] %v8305
        %8310 = vst [vmem:[%s667 + $0x8] sm:$0xff] %v8306
        %8311 = vst [vmem:[%s667 + $0x10] sm:$0xff] %v8307
        %8312 = vst [vmem:[%s667 + $0x18] sm:$0xff] %v8308
        %s8313 = sand.u32 %s448, 1
        %s8314 = scalar_lea.sflag [#allocation5], %s8313
        %s8315 = sand.u32 %s448, 1
        %s8316 = smul.addr %s8315, 32
        %s8317 = scalar_lea.vmem [#allocation12], %s8316
        // Predicated region
        $region117: #{tpu_custom_call.1} parent=95 // pred_check
          %p8318 = pneg %p458
        $region118: #{tpu_custom_call.1} parent=95 // pred_check_branch
          %8320 = sbr.rel (%p8318) target = $region120
        $region119: #{tpu_custom_call.1} parent=95 // pred_region
          %s8321 = smul.u32 4, %s36
          %s8323 = ssub.s32 512, 512
          %8324 = vsyncadd %s8314, %s8323
          %s8325 = smul.addr %s8321, 128
          %s8326 = scalar_lea.hbm %s19, %s8325
          %s8327 = sshll.u32 %s8317, 4
          %s8328 = int_to_ptr.vmem [resolvable:$true] %s8327
          %8333 = dma.vmem_to_hbm [thread:$0]  %s8328, 512, %s8326, %s8314, 128, 128, 8
        $region120: #{tpu_custom_call.1} parent=95 // pred_fallthru
          _
      $region96: #{tpu_custom_call.1} parent=5 // pred_fallthru
        _
      %p8334 = scmp.le.s32.totalorder 2, %s31
      // Predicated region
      $region121: #{tpu_custom_call.1} parent=5 // pred_check
        %p8335 = pneg %p8334
      $region122: #{tpu_custom_call.1} parent=5 // pred_check_branch
        %8337 = sbr.rel (%p8335) target = $region124
      $region123: #{tpu_custom_call.1} parent=5 // pred_region
        %s8338 = ssub.s32 %s31, 2
        // Predicated region
        $region125: #{tpu_custom_call.1} parent=123 // pred_check
          %p8339 = pneg %p464
        $region126: #{tpu_custom_call.1} parent=123 // pred_check_branch
          %8341 = sbr.rel (%p8339) target = $region128
        $region127: #{tpu_custom_call.1} parent=123 // pred_region
          %s8342 = sand.u32 %s449, 1
          %s8343 = scalar_lea.sflag [#allocation5], %s8342
          %s8344 = sand.u32 %s449, 1
          %s8345 = smul.addr %s8344, 32
          %s8346 = scalar_lea.vmem [#allocation12], %s8345
          %8347 = dma.done %s8343, 512
        $region128: #{tpu_custom_call.1} parent=123 // pred_fallthru
          _
      $region124: #{tpu_custom_call.1} parent=5 // pred_fallthru
        _
    $region6: #{tpu_custom_call.1} parent=1 // loop_footer
      %s35 = sadd.s32 1, %s31
    $region7: #{tpu_custom_call.1} parent=1 // loop_footer_branch
      %30 = sbr.rel target = $region3
    $region8: #{tpu_custom_call.1} parent=1 // loop_exit
      _
    %8348 = vsyncpa [#allocation4], 1
    %s8349 = scalar_lea.sflag [#allocation4], 1
    %8350 = vsyncpa %s8349, 1
    %8351 = vsyncpa [#allocation7], 1
    %8352 = vsyncpa [#allocation10], 1
    %8353 = vsyncpa [#allocation5], 1
    %s8354 = scalar_lea.sflag [#allocation5], 1
    %8355 = vsyncpa %s8354, 1

</llo_original>
